<compile_context>
chip_gen: v5e
topology: v5e:2x2
jax: 0.10.0
libtpu: 0.0.40
codegen_flags: <defaults>
</compile_context>

<pallas_src>
import math

import jax
import jax.numpy as jnp
from jax.experimental import pallas as pl
from jax.experimental.pallas import tpu as pltpu

EMBED_DIM = 32
NUMP = 4
BATCH = 2
H = W = 16
BN_EPS = 1e-5

PADDED = 24                      # 16 + 3 (conv2 left/top padding) + 5 trailing zeros
IMG_PIX = PADDED * PADDED        # 576 padded pixels per image
IMG_STRIDE = 640                 # 5 * 128: lane-aligned per-image stride
N_IMG = BATCH * NUMP             # 8 images per encoder stream
NPIX = N_IMG * IMG_STRIDE        # 5120 flattened padded pixels per stream
SCRATCH_W = NPIX + 128           # room for the largest conv tap shift (2*24 + 2 = 50)
OUT_HW = 20                      # conv2 output spatial extent (16 + 2*3 - 3 + 1)
KDIM = 32                        # conv2 contraction: 27 (tap, c_in) + 1 BN-shift + 4 zero pad
ROW_ONES = 27                    # all-ones im2col row (folds the BatchNorm shift)


# ----------------------------- Pallas kernel -----------------------------

def _lineage_kernel(x_ref, w1_ref, w2_ref, mask_ref, wkv_ref, aux_ref, hrow_ref,
                    wtail_ref, o_ref, col_ref):
    E = EMBED_DIM
    f32 = jnp.float32

    # Stream-independent im2col scratch rows (set once).
    col_ref[ROW_ONES:ROW_ONES + 1, 0:NPIX] = jnp.ones((1, NPIX), f32)
    col_ref[ROW_ONES + 1:KDIM, 0:NPIX] = jnp.zeros((KDIM - ROW_ONES - 1, NPIX), f32)
    col_ref[0:3, NPIX:SCRATCH_W] = jnp.zeros((3, SCRATCH_W - NPIX), f32)

    mask = mask_ref[...]                                    # (1, 640), includes the 1/400 factor

    pooled_streams = []
    for s in range(2):                                      # weightEnc, featureEnc (serial)
        w1 = w1_ref[s]                                      # (3, 2) [c_out, c_in]
        w10 = w1[:, 0:1]
        w11 = w1[:, 1:2]

        # conv1 (1x1, 2->3, no bias) + ReLU: one 3-row store per lane-aligned image chunk.
        for n in range(N_IMG):
            a = n * IMG_STRIDE
            x0 = x_ref[s, 0:1, a:a + IMG_STRIDE]            # (1, 640)
            x1 = x_ref[s, 1:2, a:a + IMG_STRIDE]            # (1, 640)
            col_ref[0:3, a:a + IMG_STRIDE] = jnp.maximum(w10 * x0 + w11 * x1, 0.0)

        # In-scratch im2col: 8 statically shifted copies of the 3 conv1 rows (tap 0 is rows 0:3).
        for t in range(1, 9):
            off = (t // 3) * PADDED + (t % 3)
            col_ref[3 * t:3 * t + 3, 0:NPIX] = col_ref[0:3, off:off + NPIX]

        # conv2 (3x3, pad=3, 3->E) + BatchNorm(eval, folded) + ReLU + AdaptiveAvgPool2d((1,1)):
        # one K=32 bf16 MXU dot + masked lane reduction per image chunk; everything stays in regs.
        w2 = w2_ref[s]                                      # (E, 32) bf16, BN scale folded
        cols = []
        for n in range(N_IMG):
            a = n * IMG_STRIDE
            rhs = col_ref[:, a:a + IMG_STRIDE].astype(jnp.bfloat16)       # (32, 640)
            y = jnp.dot(w2, rhs, preferred_element_type=f32)              # (E, 640), incl. BN shift
            y = jnp.maximum(y, 0.0) * mask                                # ReLU + valid-mask/400
            cols.append(jnp.sum(y, axis=1, keepdims=True))                # (E, 1)
        pooled_streams.append(jnp.concatenate(cols, axis=1))              # (E, 8)

    pooled = jnp.concatenate(pooled_streams, axis=1)        # (E, 16): weight tokens | feature tokens

    # ---------------- head: tokenization + 1-head attention (cls query) + norm + fc ----------------
    inv_sqrt_e = 1.0 / math.sqrt(E)
    pkv = jnp.dot(wkv_ref[...], pooled, preferred_element_type=f32)       # (2E, 16) = [K; V] (transposed)
    kv_c = aux_ref[:, 0:1]                                  # cls token K/V (precomputed)
    kv_w = pkv[:, 0:N_IMG] + aux_ref[:, 1:2]                # + (Wkv @ type0 + bkv)
    kv_f = pkv[:, N_IMG:2 * N_IMG] + aux_ref[:, 2:3]        # + (Wkv @ type1 + bkv)
    k0, v0 = kv_c[0:E, :], kv_c[E:2 * E, :]                 # (E, 1)
    k1, v1 = kv_w[0:E, :], kv_w[E:2 * E, :]                 # (E, 8)
    k2, v2 = kv_f[0:E, :], kv_f[E:2 * E, :]                 # (E, 8)

    q = hrow_ref[0:1, 0:E]                                  # (1, E) shared cls query (precomputed)
    k_all = jnp.concatenate([k0, k1, k2], axis=1)           # (E, 17)
    s_all = jnp.dot(q, k_all, preferred_element_type=f32) * inv_sqrt_e    # (1, 17)
    s0 = s_all[:, 0:1]
    s1 = s_all[:, 1:1 + N_IMG]
    s2 = s_all[:, 1 + N_IMG:1 + 2 * N_IMG]
    m = jnp.maximum(jnp.maximum(s1, s2), s0)
    e0 = jnp.exp(s0 - m)
    e1 = jnp.exp(s1 - m)
    e2 = jnp.exp(s2 - m)
    attn = (e0 * v0 + e1 * v1 + e2 * v2) / (e0 + e1 + e2)   # (E, 8): per-sample 3-key softmax

    wo = wtail_ref[:, 0:E]                                  # (E, E) out_proj weight (torch layout)
    bo = wtail_ref[:, E:E + 1]                              # (E, 1) out_proj bias
    out_t = jnp.dot(wo, attn, preferred_element_type=f32) + bo            # (E, 8)

    # Per-batch standardization over (nump, E) with unbiased std (torch.std), then Linear(E, 1).
    n_el = NUMP * E
    nrm_blocks = []
    for b in range(BATCH):
        blk = out_t[:, b * NUMP:(b + 1) * NUMP]             # (E, nump)
        mu = jnp.mean(blk, keepdims=True)                   # (1, 1)
        d = blk - mu
        var = jnp.sum(d * d, keepdims=True) * (1.0 / (n_el - 1))
        nrm_blocks.append(d * jax.lax.rsqrt(var))
    nrm = jnp.concatenate(nrm_blocks, axis=1)               # (E, 8)
    fcw = hrow_ref[1:2, 0:E]                                # (1, E)
    fcb = hrow_ref[1:2, E:E + 1]                            # (1, 1)
    o_ref[...] = jnp.dot(fcw, nrm, preferred_element_type=f32) + fcb      # (1, 8)


def lineage_pallas(x_all, w1_all, w2_all, mask, wkv, aux, hrow, wtail):
    return pl.pallas_call(
        _lineage_kernel,
        out_shape=jax.ShapeDtypeStruct((1, BATCH * NUMP), jnp.float32),
        scratch_shapes=[pltpu.VMEM((KDIM, SCRATCH_W), jnp.float32)],
    )(x_all, w1_all, w2_all, mask, wkv, aux, hrow, wtail)


# ----------------------------- Model glue (weight/layout preprocessing only) -----------------------------

def _prep_stream_input(x_nchw):
    # (N, 2, 16, 16) -> pad like conv2's padding=3 (extra right/bottom zeros are only read at
    # masked output positions) -> lane-aligned 640-pixel stride per image -> channels-major.
    xp = jnp.pad(x_nchw, ((0, 0), (0, 0), (3, PADDED - H - 3), (3, PADDED - W - 3)))
    xp = xp.reshape(N_IMG, 2, IMG_PIX)
    xp = jnp.pad(xp, ((0, 0), (0, 0), (0, IMG_STRIDE - IMG_PIX)))
    return jnp.transpose(xp, (1, 0, 2)).reshape(2, NPIX)                  # (2, 5120)


def _prep_encoder_params(p):
    E = EMBED_DIM
    w1t = p["conv1"].reshape(3, 2)                                        # (c_out, c_in)
    scale = p["bn_gamma"] * jax.lax.rsqrt(p["bn_var"] + BN_EPS)
    shift = p["bn_beta"] - p["bn_mean"] * scale
    # (E, c_in, ky, kx) -> (E, ky, kx, c_in) -> (E, 27); column index = 3*(ky*3+kx) + c_in.
    w2 = jnp.transpose(p["conv2"], (0, 2, 3, 1)).reshape(E, 27)
    w2 = w2 * scale[:, None]                                              # fold BN scale
    w2 = jnp.concatenate([w2, shift[:, None],
                          jnp.zeros((E, KDIM - 28), jnp.float32)], axis=1)    # (E, 32)
    return w1t.astype(jnp.float32), w2.astype(jnp.bfloat16)


def _pool_mask():
    ri = jnp.arange(IMG_STRIDE)
    oy = ri // PADDED
    ox = ri % PADDED
    valid = (ri < IMG_PIX) & (oy < OUT_HW) & (ox < OUT_HW)
    m = jnp.where(valid, 1.0 / (OUT_HW * OUT_HW), 0.0)
    return m.astype(jnp.float32).reshape(1, IMG_STRIDE)                   # (1, 640)


def lineage_detector_forward(weight, feature, params):
    B, P = weight.shape[0], weight.shape[1]
    assert B == BATCH and P == NUMP and weight.shape[2:] == (2, H, W)
    E = EMBED_DIM

    w_flat = weight.reshape((B * P,) + weight.shape[2:])
    f_flat = feature.reshape((B * P,) + feature.shape[2:])
    x_all = jnp.stack([_prep_stream_input(w_flat),
                       _prep_stream_input(f_flat)], axis=0)               # (2, 2, NPIX)

    w1w, w2w = _prep_encoder_params(params["weightEnc"])
    w1f, w2f = _prep_encoder_params(params["featureEnc"])
    w1_all = jnp.stack([w1w, w1f], axis=0)                                # (2, 3, 2)
    w2_all = jnp.stack([w2w, w2f], axis=0)                                # (2, E, 32) bf16

    mask = _pool_mask()                                                   # (1, 640)

    # Attention parameter preprocessing (pure weight folding, done once in glue).
    wkv = jnp.concatenate([params["wk"], params["wv"]], axis=0)           # (2E, E)  [Wk; Wv]
    bkv = jnp.concatenate([params["bk"], params["bv"]]).reshape(2 * E, 1)
    cls_col = params["cls_token"].reshape(E, 1)
    t0_col = params["type_emb"][0].reshape(E, 1)
    t1_col = params["type_emb"][1].reshape(E, 1)
    aux = jnp.concatenate([wkv @ cls_col + bkv,
                           wkv @ t0_col + bkv,
                           wkv @ t1_col + bkv], axis=1)                   # (2E, 3)
    q_cls = params["cls_token"] @ params["wq"].T + params["bq"].reshape(1, E)   # (1, E)
    hrow = jnp.concatenate(
        [jnp.concatenate([q_cls, jnp.zeros((1, 1), jnp.float32)], axis=1),
         jnp.concatenate([params["fc_w"].reshape(1, E),
                          params["fc_b"].reshape(1, 1)], axis=1)], axis=0)      # (2, E+1)
    wtail = jnp.concatenate([params["wo"], params["bo"].reshape(E, 1)], axis=1)  # (E, E+1)

    out = lineage_pallas(x_all, w1_all, w2_all, mask, wkv, aux, hrow, wtail)     # (1, B*P)
    return out.reshape(B, P)


# ----------------------------- Parameters -----------------------------

def init_params(key, embed_dim):
    E = embed_dim
    ks = jax.random.split(key, 9)

    def enc_params(k):
        k1, k2 = jax.random.split(k)
        return dict(
            conv1=jax.random.normal(k1, (3, 2, 1, 1), jnp.float32) * 0.5,
            conv2=jax.random.normal(k2, (E, 3, 3, 3), jnp.float32) * 0.2,
            bn_gamma=jnp.ones((E,), jnp.float32),
            bn_beta=jnp.zeros((E,), jnp.float32),
            bn_mean=jnp.zeros((E,), jnp.float32),
            bn_var=jnp.ones((E,), jnp.float32),
        )

    in_proj = jax.random.normal(ks[2], (3 * E, E), jnp.float32) * 0.1
    in_bias = jax.random.normal(ks[3], (3 * E,), jnp.float32) * 0.01
    return dict(
        weightEnc=enc_params(ks[0]),
        featureEnc=enc_params(ks[1]),
        cls_token=jnp.ones((1, E), jnp.float32) * 0.01,
        type_emb=jax.random.normal(ks[4], (2, E), jnp.float32),
        wq=in_proj[:E], wk=in_proj[E:2 * E], wv=in_proj[2 * E:],
        bq=in_bias[:E], bk=in_bias[E:2 * E], bv=in_bias[2 * E:],
        wo=jax.random.normal(ks[5], (E, E), jnp.float32) * 0.1,
        bo=jax.random.normal(ks[6], (E,), jnp.float32) * 0.01,
        fc_w=jax.random.normal(ks[7], (1, E), jnp.float32) * 0.1,
        fc_b=jax.random.normal(ks[8], (1,), jnp.float32) * 0.01,
    )


if __name__ == "__main__":
    key = jax.random.PRNGKey(0)
    kp, kw, kf = jax.random.split(key, 3)
    params = init_params(kp, EMBED_DIM)

    weight = jax.random.normal(kw, (BATCH, NUMP, 2, H, W), jnp.float32)
    feature = jax.random.normal(kf, (BATCH, NUMP, 2, H, W), jnp.float32)

    out = jax.jit(lineage_detector_forward)(weight, feature, params)
    out = jax.block_until_ready(out)
    assert out.shape == (BATCH, NUMP), out.shape
    assert bool(jnp.all(jnp.isfinite(out)))
    print("KERNEL_OK")
</pallas_src>

<mosaic_0001>
module attributes {stable_mosaic.version = 11 : i64} {
  func.func @_lineage_kernel(%arg0: memref<2x2x5120xf32, #tpu.memory_space<vmem>>, %arg1: memref<2x3x2xf32, #tpu.memory_space<vmem>>, %arg2: memref<2x32x32xbf16, #tpu.memory_space<vmem>>, %arg3: memref<1x640xf32, #tpu.memory_space<vmem>>, %arg4: memref<64x32xf32, #tpu.memory_space<vmem>>, %arg5: memref<64x3xf32, #tpu.memory_space<vmem>>, %arg6: memref<2x33xf32, #tpu.memory_space<vmem>>, %arg7: memref<32x33xf32, #tpu.memory_space<vmem>>, %arg8: memref<1x8xf32, #tpu.memory_space<vmem>>, %arg9: memref<32x5248xf32, #tpu.memory_space<vmem>>) attributes {dimension_semantics = [], scalar_prefetch = 0 : i64, scratch_operands = 1 : i64, tpu.core_type = #tpu.core_type<tc>} {
    %cst = arith.constant 1.000000e+00 : f32
    %0 = vector.broadcast %cst : f32 to vector<1x5120xf32>
    %c27 = arith.constant 27 : index
    %c0 = arith.constant 0 : index
    %1 = vector.load %arg9[%c27, %c0] : memref<32x5248xf32, #tpu.memory_space<vmem>>, vector<1x5120xf32>
    tpu.vector_store %arg9[%c27, %c0], %0 {strides = array<i32>} : memref<32x5248xf32, #tpu.memory_space<vmem>>, vector<1x5120xf32>,
    %cst_0 = arith.constant 0.000000e+00 : f32
    %2 = vector.broadcast %cst_0 : f32 to vector<4x5120xf32>
    %c28 = arith.constant 28 : index
    %c0_1 = arith.constant 0 : index
    %3 = vector.load %arg9[%c28, %c0_1] : memref<32x5248xf32, #tpu.memory_space<vmem>>, vector<4x5120xf32>
    tpu.vector_store %arg9[%c28, %c0_1], %2 {strides = array<i32>} : memref<32x5248xf32, #tpu.memory_space<vmem>>, vector<4x5120xf32>,
    %cst_2 = arith.constant 0.000000e+00 : f32
    %4 = vector.broadcast %cst_2 : f32 to vector<3x128xf32>
    %c0_3 = arith.constant 0 : index
    %c5120 = arith.constant 5120 : index
    %5 = vector.load %arg9[%c0_3, %c5120] : memref<32x5248xf32, #tpu.memory_space<vmem>>, vector<3x128xf32>
    tpu.vector_store %arg9[%c0_3, %c5120], %4 {strides = array<i32>} : memref<32x5248xf32, #tpu.memory_space<vmem>>, vector<3x128xf32>,
    %c0_4 = arith.constant 0 : index
    %c0_5 = arith.constant 0 : index
    %6 = vector.load %arg3[%c0_4, %c0_5] : memref<1x640xf32, #tpu.memory_space<vmem>>, vector<1x640xf32>
    %c0_6 = arith.constant 0 : index
    %c0_7 = arith.constant 0 : index
    %c0_8 = arith.constant 0 : index
    %7 = vector.load %arg1[%c0_6, %c0_7, %c0_8] : memref<2x3x2xf32, #tpu.memory_space<vmem>>, vector<1x3x2xf32>
    %8 = vector.shape_cast %7 : vector<1x3x2xf32> to vector<3x2xf32>
    %9 = vector.extract_strided_slice %8 {offsets = [0, 0], sizes = [3, 1], strides = [1, 1]} : vector<3x2xf32> to vector<3x1xf32>
    %10 = vector.extract_strided_slice %8 {offsets = [0, 1], sizes = [3, 1], strides = [1, 1]} : vector<3x2xf32> to vector<3x1xf32>
    %c0_9 = arith.constant 0 : index
    %c0_10 = arith.constant 0 : index
    %c0_11 = arith.constant 0 : index
    %11 = vector.load %arg0[%c0_9, %c0_10, %c0_11] : memref<2x2x5120xf32, #tpu.memory_space<vmem>>, vector<1x1x640xf32>
    %12 = vector.shape_cast %11 : vector<1x1x640xf32> to vector<1x640xf32>
    %c0_12 = arith.constant 0 : index
    %c1 = arith.constant 1 : index
    %c0_13 = arith.constant 0 : index
    %13 = vector.load %arg0[%c0_12, %c1, %c0_13] : memref<2x2x5120xf32, #tpu.memory_space<vmem>>, vector<1x1x640xf32>
    %14 = vector.shape_cast %13 : vector<1x1x640xf32> to vector<1x640xf32>
    %15 = vector.broadcast %9 : vector<3x1xf32> to vector<3x640xf32>
    %16 = vector.broadcast %12 : vector<1x640xf32> to vector<3x640xf32>
    %17 = arith.mulf %15, %16 : vector<3x640xf32>
    %18 = vector.broadcast %10 : vector<3x1xf32> to vector<3x640xf32>
    %19 = vector.broadcast %14 : vector<1x640xf32> to vector<3x640xf32>
    %20 = arith.mulf %18, %19 : vector<3x640xf32>
    %21 = arith.addf %17, %20 : vector<3x640xf32>
    %cst_14 = arith.constant 0.000000e+00 : f32
    %22 = vector.broadcast %cst_14 : f32 to vector<3x640xf32>
    %23 = arith.maximumf %21, %22 : vector<3x640xf32>
    %c0_15 = arith.constant 0 : index
    %c0_16 = arith.constant 0 : index
    %24 = vector.load %arg9[%c0_15, %c0_16] : memref<32x5248xf32, #tpu.memory_space<vmem>>, vector<3x640xf32>
    tpu.vector_store %arg9[%c0_15, %c0_16], %23 {strides = array<i32>} : memref<32x5248xf32, #tpu.memory_space<vmem>>, vector<3x640xf32>,
    %c0_17 = arith.constant 0 : index
    %c0_18 = arith.constant 0 : index
    %c640 = arith.constant 640 : index
    %25 = vector.load %arg0[%c0_17, %c0_18, %c640] : memref<2x2x5120xf32, #tpu.memory_space<vmem>>, vector<1x1x640xf32>
    %26 = vector.shape_cast %25 : vector<1x1x640xf32> to vector<1x640xf32>
    %c0_19 = arith.constant 0 : index
    %c1_20 = arith.constant 1 : index
    %c640_21 = arith.constant 640 : index
    %27 = vector.load %arg0[%c0_19, %c1_20, %c640_21] : memref<2x2x5120xf32, #tpu.memory_space<vmem>>, vector<1x1x640xf32>
    %28 = vector.shape_cast %27 : vector<1x1x640xf32> to vector<1x640xf32>
    %29 = vector.broadcast %9 : vector<3x1xf32> to vector<3x640xf32>
    %30 = vector.broadcast %26 : vector<1x640xf32> to vector<3x640xf32>
    %31 = arith.mulf %29, %30 : vector<3x640xf32>
    %32 = vector.broadcast %10 : vector<3x1xf32> to vector<3x640xf32>
    %33 = vector.broadcast %28 : vector<1x640xf32> to vector<3x640xf32>
    %34 = arith.mulf %32, %33 : vector<3x640xf32>
    %35 = arith.addf %31, %34 : vector<3x640xf32>
    %cst_22 = arith.constant 0.000000e+00 : f32
    %36 = vector.broadcast %cst_22 : f32 to vector<3x640xf32>
    %37 = arith.maximumf %35, %36 : vector<3x640xf32>
    %c0_23 = arith.constant 0 : index
    %c640_24 = arith.constant 640 : index
    %38 = vector.load %arg9[%c0_23, %c640_24] : memref<32x5248xf32, #tpu.memory_space<vmem>>, vector<3x640xf32>
    tpu.vector_store %arg9[%c0_23, %c640_24], %37 {strides = array<i32>} : memref<32x5248xf32, #tpu.memory_space<vmem>>, vector<3x640xf32>,
    %c0_25 = arith.constant 0 : index
    %c0_26 = arith.constant 0 : index
    %c1280 = arith.constant 1280 : index
    %39 = vector.load %arg0[%c0_25, %c0_26, %c1280] : memref<2x2x5120xf32, #tpu.memory_space<vmem>>, vector<1x1x640xf32>
    %40 = vector.shape_cast %39 : vector<1x1x640xf32> to vector<1x640xf32>
    %c0_27 = arith.constant 0 : index
    %c1_28 = arith.constant 1 : index
    %c1280_29 = arith.constant 1280 : index
    %41 = vector.load %arg0[%c0_27, %c1_28, %c1280_29] : memref<2x2x5120xf32, #tpu.memory_space<vmem>>, vector<1x1x640xf32>
    %42 = vector.shape_cast %41 : vector<1x1x640xf32> to vector<1x640xf32>
    %43 = vector.broadcast %9 : vector<3x1xf32> to vector<3x640xf32>
    %44 = vector.broadcast %40 : vector<1x640xf32> to vector<3x640xf32>
    %45 = arith.mulf %43, %44 : vector<3x640xf32>
    %46 = vector.broadcast %10 : vector<3x1xf32> to vector<3x640xf32>
    %47 = vector.broadcast %42 : vector<1x640xf32> to vector<3x640xf32>
    %48 = arith.mulf %46, %47 : vector<3x640xf32>
    %49 = arith.addf %45, %48 : vector<3x640xf32>
    %cst_30 = arith.constant 0.000000e+00 : f32
    %50 = vector.broadcast %cst_30 : f32 to vector<3x640xf32>
    %51 = arith.maximumf %49, %50 : vector<3x640xf32>
    %c0_31 = arith.constant 0 : index
    %c1280_32 = arith.constant 1280 : index
    %52 = vector.load %arg9[%c0_31, %c1280_32] : memref<32x5248xf32, #tpu.memory_space<vmem>>, vector<3x640xf32>
    tpu.vector_store %arg9[%c0_31, %c1280_32], %51 {strides = array<i32>} : memref<32x5248xf32, #tpu.memory_space<vmem>>, vector<3x640xf32>,
    %c0_33 = arith.constant 0 : index
    %c0_34 = arith.constant 0 : index
    %c1920 = arith.constant 1920 : index
    %53 = vector.load %arg0[%c0_33, %c0_34, %c1920] : memref<2x2x5120xf32, #tpu.memory_space<vmem>>, vector<1x1x640xf32>
    %54 = vector.shape_cast %53 : vector<1x1x640xf32> to vector<1x640xf32>
    %c0_35 = arith.constant 0 : index
    %c1_36 = arith.constant 1 : index
    %c1920_37 = arith.constant 1920 : index
    %55 = vector.load %arg0[%c0_35, %c1_36, %c1920_37] : memref<2x2x5120xf32, #tpu.memory_space<vmem>>, vector<1x1x640xf32>
    %56 = vector.shape_cast %55 : vector<1x1x640xf32> to vector<1x640xf32>
    %57 = vector.broadcast %9 : vector<3x1xf32> to vector<3x640xf32>
    %58 = vector.broadcast %54 : vector<1x640xf32> to vector<3x640xf32>
    %59 = arith.mulf %57, %58 : vector<3x640xf32>
    %60 = vector.broadcast %10 : vector<3x1xf32> to vector<3x640xf32>
    %61 = vector.broadcast %56 : vector<1x640xf32> to vector<3x640xf32>
    %62 = arith.mulf %60, %61 : vector<3x640xf32>
    %63 = arith.addf %59, %62 : vector<3x640xf32>
    %cst_38 = arith.constant 0.000000e+00 : f32
    %64 = vector.broadcast %cst_38 : f32 to vector<3x640xf32>
    %65 = arith.maximumf %63, %64 : vector<3x640xf32>
    %c0_39 = arith.constant 0 : index
    %c1920_40 = arith.constant 1920 : index
    %66 = vector.load %arg9[%c0_39, %c1920_40] : memref<32x5248xf32, #tpu.memory_space<vmem>>, vector<3x640xf32>
    tpu.vector_store %arg9[%c0_39, %c1920_40], %65 {strides = array<i32>} : memref<32x5248xf32, #tpu.memory_space<vmem>>, vector<3x640xf32>,
    %c0_41 = arith.constant 0 : index
    %c0_42 = arith.constant 0 : index
    %c2560 = arith.constant 2560 : index
    %67 = vector.load %arg0[%c0_41, %c0_42, %c2560] : memref<2x2x5120xf32, #tpu.memory_space<vmem>>, vector<1x1x640xf32>
    %68 = vector.shape_cast %67 : vector<1x1x640xf32> to vector<1x640xf32>
    %c0_43 = arith.constant 0 : index
    %c1_44 = arith.constant 1 : index
    %c2560_45 = arith.constant 2560 : index
    %69 = vector.load %arg0[%c0_43, %c1_44, %c2560_45] : memref<2x2x5120xf32, #tpu.memory_space<vmem>>, vector<1x1x640xf32>
    %70 = vector.shape_cast %69 : vector<1x1x640xf32> to vector<1x640xf32>
    %71 = vector.broadcast %9 : vector<3x1xf32> to vector<3x640xf32>
    %72 = vector.broadcast %68 : vector<1x640xf32> to vector<3x640xf32>
    %73 = arith.mulf %71, %72 : vector<3x640xf32>
    %74 = vector.broadcast %10 : vector<3x1xf32> to vector<3x640xf32>
    %75 = vector.broadcast %70 : vector<1x640xf32> to vector<3x640xf32>
    %76 = arith.mulf %74, %75 : vector<3x640xf32>
    %77 = arith.addf %73, %76 : vector<3x640xf32>
    %cst_46 = arith.constant 0.000000e+00 : f32
    %78 = vector.broadcast %cst_46 : f32 to vector<3x640xf32>
    %79 = arith.maximumf %77, %78 : vector<3x640xf32>
    %c0_47 = arith.constant 0 : index
    %c2560_48 = arith.constant 2560 : index
    %80 = vector.load %arg9[%c0_47, %c2560_48] : memref<32x5248xf32, #tpu.memory_space<vmem>>, vector<3x640xf32>
    tpu.vector_store %arg9[%c0_47, %c2560_48], %79 {strides = array<i32>} : memref<32x5248xf32, #tpu.memory_space<vmem>>, vector<3x640xf32>,
    %c0_49 = arith.constant 0 : index
    %c0_50 = arith.constant 0 : index
    %c3200 = arith.constant 3200 : index
    %81 = vector.load %arg0[%c0_49, %c0_50, %c3200] : memref<2x2x5120xf32, #tpu.memory_space<vmem>>, vector<1x1x640xf32>
    %82 = vector.shape_cast %81 : vector<1x1x640xf32> to vector<1x640xf32>
    %c0_51 = arith.constant 0 : index
    %c1_52 = arith.constant 1 : index
    %c3200_53 = arith.constant 3200 : index
    %83 = vector.load %arg0[%c0_51, %c1_52, %c3200_53] : memref<2x2x5120xf32, #tpu.memory_space<vmem>>, vector<1x1x640xf32>
    %84 = vector.shape_cast %83 : vector<1x1x640xf32> to vector<1x640xf32>
    %85 = vector.broadcast %9 : vector<3x1xf32> to vector<3x640xf32>
    %86 = vector.broadcast %82 : vector<1x640xf32> to vector<3x640xf32>
    %87 = arith.mulf %85, %86 : vector<3x640xf32>
    %88 = vector.broadcast %10 : vector<3x1xf32> to vector<3x640xf32>
    %89 = vector.broadcast %84 : vector<1x640xf32> to vector<3x640xf32>
    %90 = arith.mulf %88, %89 : vector<3x640xf32>
    %91 = arith.addf %87, %90 : vector<3x640xf32>
    %cst_54 = arith.constant 0.000000e+00 : f32
    %92 = vector.broadcast %cst_54 : f32 to vector<3x640xf32>
    %93 = arith.maximumf %91, %92 : vector<3x640xf32>
    %c0_55 = arith.constant 0 : index
    %c3200_56 = arith.constant 3200 : index
    %94 = vector.load %arg9[%c0_55, %c3200_56] : memref<32x5248xf32, #tpu.memory_space<vmem>>, vector<3x640xf32>
    tpu.vector_store %arg9[%c0_55, %c3200_56], %93 {strides = array<i32>} : memref<32x5248xf32, #tpu.memory_space<vmem>>, vector<3x640xf32>,
    %c0_57 = arith.constant 0 : index
    %c0_58 = arith.constant 0 : index
    %c3840 = arith.constant 3840 : index
    %95 = vector.load %arg0[%c0_57, %c0_58, %c3840] : memref<2x2x5120xf32, #tpu.memory_space<vmem>>, vector<1x1x640xf32>
    %96 = vector.shape_cast %95 : vector<1x1x640xf32> to vector<1x640xf32>
    %c0_59 = arith.constant 0 : index
    %c1_60 = arith.constant 1 : index
    %c3840_61 = arith.constant 3840 : index
    %97 = vector.load %arg0[%c0_59, %c1_60, %c3840_61] : memref<2x2x5120xf32, #tpu.memory_space<vmem>>, vector<1x1x640xf32>
    %98 = vector.shape_cast %97 : vector<1x1x640xf32> to vector<1x640xf32>
    %99 = vector.broadcast %9 : vector<3x1xf32> to vector<3x640xf32>
    %100 = vector.broadcast %96 : vector<1x640xf32> to vector<3x640xf32>
    %101 = arith.mulf %99, %100 : vector<3x640xf32>
    %102 = vector.broadcast %10 : vector<3x1xf32> to vector<3x640xf32>
    %103 = vector.broadcast %98 : vector<1x640xf32> to vector<3x640xf32>
    %104 = arith.mulf %102, %103 : vector<3x640xf32>
    %105 = arith.addf %101, %104 : vector<3x640xf32>
    %cst_62 = arith.constant 0.000000e+00 : f32
    %106 = vector.broadcast %cst_62 : f32 to vector<3x640xf32>
    %107 = arith.maximumf %105, %106 : vector<3x640xf32>
    %c0_63 = arith.constant 0 : index
    %c3840_64 = arith.constant 3840 : index
    %108 = vector.load %arg9[%c0_63, %c3840_64] : memref<32x5248xf32, #tpu.memory_space<vmem>>, vector<3x640xf32>
    tpu.vector_store %arg9[%c0_63, %c3840_64], %107 {strides = array<i32>} : memref<32x5248xf32, #tpu.memory_space<vmem>>, vector<3x640xf32>,
    %c0_65 = arith.constant 0 : index
    %c0_66 = arith.constant 0 : index
    %c4480 = arith.constant 4480 : index
    %109 = vector.load %arg0[%c0_65, %c0_66, %c4480] : memref<2x2x5120xf32, #tpu.memory_space<vmem>>, vector<1x1x640xf32>
    %110 = vector.shape_cast %109 : vector<1x1x640xf32> to vector<1x640xf32>
    %c0_67 = arith.constant 0 : index
    %c1_68 = arith.constant 1 : index
    %c4480_69 = arith.constant 4480 : index
    %111 = vector.load %arg0[%c0_67, %c1_68, %c4480_69] : memref<2x2x5120xf32, #tpu.memory_space<vmem>>, vector<1x1x640xf32>
    %112 = vector.shape_cast %111 : vector<1x1x640xf32> to vector<1x640xf32>
    %113 = vector.broadcast %9 : vector<3x1xf32> to vector<3x640xf32>
    %114 = vector.broadcast %110 : vector<1x640xf32> to vector<3x640xf32>
    %115 = arith.mulf %113, %114 : vector<3x640xf32>
    %116 = vector.broadcast %10 : vector<3x1xf32> to vector<3x640xf32>
    %117 = vector.broadcast %112 : vector<1x640xf32> to vector<3x640xf32>
    %118 = arith.mulf %116, %117 : vector<3x640xf32>
    %119 = arith.addf %115, %118 : vector<3x640xf32>
    %cst_70 = arith.constant 0.000000e+00 : f32
    %120 = vector.broadcast %cst_70 : f32 to vector<3x640xf32>
    %121 = arith.maximumf %119, %120 : vector<3x640xf32>
    %c0_71 = arith.constant 0 : index
    %c4480_72 = arith.constant 4480 : index
    %122 = vector.load %arg9[%c0_71, %c4480_72] : memref<32x5248xf32, #tpu.memory_space<vmem>>, vector<3x640xf32>
    tpu.vector_store %arg9[%c0_71, %c4480_72], %121 {strides = array<i32>} : memref<32x5248xf32, #tpu.memory_space<vmem>>, vector<3x640xf32>,
    %c0_73 = arith.constant 0 : index
    %c1_74 = arith.constant 1 : index
    %123 = vector.load %arg9[%c0_73, %c1_74] : memref<32x5248xf32, #tpu.memory_space<vmem>>, vector<3x5120xf32>
    %c3 = arith.constant 3 : index
    %c0_75 = arith.constant 0 : index
    %124 = vector.load %arg9[%c3, %c0_75] : memref<32x5248xf32, #tpu.memory_space<vmem>>, vector<3x5120xf32>
    tpu.vector_store %arg9[%c3, %c0_75], %123 {strides = array<i32>} : memref<32x5248xf32, #tpu.memory_space<vmem>>, vector<3x5120xf32>,
    %c0_76 = arith.constant 0 : index
    %c2 = arith.constant 2 : index
    %125 = vector.load %arg9[%c0_76, %c2] : memref<32x5248xf32, #tpu.memory_space<vmem>>, vector<3x5120xf32>
    %c6 = arith.constant 6 : index
    %c0_77 = arith.constant 0 : index
    %126 = vector.load %arg9[%c6, %c0_77] : memref<32x5248xf32, #tpu.memory_space<vmem>>, vector<3x5120xf32>
    tpu.vector_store %arg9[%c6, %c0_77], %125 {strides = array<i32>} : memref<32x5248xf32, #tpu.memory_space<vmem>>, vector<3x5120xf32>,
    %c0_78 = arith.constant 0 : index
    %c24 = arith.constant 24 : index
    %127 = vector.load %arg9[%c0_78, %c24] : memref<32x5248xf32, #tpu.memory_space<vmem>>, vector<3x5120xf32>
    %c9 = arith.constant 9 : index
    %c0_79 = arith.constant 0 : index
    %128 = vector.load %arg9[%c9, %c0_79] : memref<32x5248xf32, #tpu.memory_space<vmem>>, vector<3x5120xf32>
    tpu.vector_store %arg9[%c9, %c0_79], %127 {strides = array<i32>} : memref<32x5248xf32, #tpu.memory_space<vmem>>, vector<3x5120xf32>,
    %c0_80 = arith.constant 0 : index
    %c25 = arith.constant 25 : index
    %129 = vector.load %arg9[%c0_80, %c25] : memref<32x5248xf32, #tpu.memory_space<vmem>>, vector<3x5120xf32>
    %c12 = arith.constant 12 : index
    %c0_81 = arith.constant 0 : index
    %130 = vector.load %arg9[%c12, %c0_81] : memref<32x5248xf32, #tpu.memory_space<vmem>>, vector<3x5120xf32>
    tpu.vector_store %arg9[%c12, %c0_81], %129 {strides = array<i32>} : memref<32x5248xf32, #tpu.memory_space<vmem>>, vector<3x5120xf32>,
    %c0_82 = arith.constant 0 : index
    %c26 = arith.constant 26 : index
    %131 = vector.load %arg9[%c0_82, %c26] : memref<32x5248xf32, #tpu.memory_space<vmem>>, vector<3x5120xf32>
    %c15 = arith.constant 15 : index
    %c0_83 = arith.constant 0 : index
    %132 = vector.load %arg9[%c15, %c0_83] : memref<32x5248xf32, #tpu.memory_space<vmem>>, vector<3x5120xf32>
    tpu.vector_store %arg9[%c15, %c0_83], %131 {strides = array<i32>} : memref<32x5248xf32, #tpu.memory_space<vmem>>, vector<3x5120xf32>,
    %c0_84 = arith.constant 0 : index
    %c48 = arith.constant 48 : index
    %133 = vector.load %arg9[%c0_84, %c48] : memref<32x5248xf32, #tpu.memory_space<vmem>>, vector<3x5120xf32>
    %c18 = arith.constant 18 : index
    %c0_85 = arith.constant 0 : index
    %134 = vector.load %arg9[%c18, %c0_85] : memref<32x5248xf32, #tpu.memory_space<vmem>>, vector<3x5120xf32>
    tpu.vector_store %arg9[%c18, %c0_85], %133 {strides = array<i32>} : memref<32x5248xf32, #tpu.memory_space<vmem>>, vector<3x5120xf32>,
    %c0_86 = arith.constant 0 : index
    %c49 = arith.constant 49 : index
    %135 = vector.load %arg9[%c0_86, %c49] : memref<32x5248xf32, #tpu.memory_space<vmem>>, vector<3x5120xf32>
    %c21 = arith.constant 21 : index
    %c0_87 = arith.constant 0 : index
    %136 = vector.load %arg9[%c21, %c0_87] : memref<32x5248xf32, #tpu.memory_space<vmem>>, vector<3x5120xf32>
    tpu.vector_store %arg9[%c21, %c0_87], %135 {strides = array<i32>} : memref<32x5248xf32, #tpu.memory_space<vmem>>, vector<3x5120xf32>,
    %c0_88 = arith.constant 0 : index
    %c50 = arith.constant 50 : index
    %137 = vector.load %arg9[%c0_88, %c50] : memref<32x5248xf32, #tpu.memory_space<vmem>>, vector<3x5120xf32>
    %c24_89 = arith.constant 24 : index
    %c0_90 = arith.constant 0 : index
    %138 = vector.load %arg9[%c24_89, %c0_90] : memref<32x5248xf32, #tpu.memory_space<vmem>>, vector<3x5120xf32>
    tpu.vector_store %arg9[%c24_89, %c0_90], %137 {strides = array<i32>} : memref<32x5248xf32, #tpu.memory_space<vmem>>, vector<3x5120xf32>,
    %c0_91 = arith.constant 0 : index
    %c0_92 = arith.constant 0 : index
    %c0_93 = arith.constant 0 : index
    %139 = vector.load %arg2[%c0_91, %c0_92, %c0_93] : memref<2x32x32xbf16, #tpu.memory_space<vmem>>, vector<1x32x32xbf16>
    %140 = vector.shape_cast %139 : vector<1x32x32xbf16> to vector<32x32xbf16>
    %c0_94 = arith.constant 0 : index
    %c0_95 = arith.constant 0 : index
    %141 = vector.load %arg9[%c0_94, %c0_95] : memref<32x5248xf32, #tpu.memory_space<vmem>>, vector<32x640xf32>
    %142 = arith.truncf %141 : vector<32x640xf32> to vector<32x640xbf16>
    %cst_96 = arith.constant dense<0.000000e+00> : vector<32x640xf32>
    %143 = tpu.matmul %140, %142, %cst_96 {dimension_numbers = #tpu.dot_dimension_numbers<[1], [0], [0], [1], [0, 0, 1, 1], [], []>} : vector<32x32xbf16>, vector<32x640xbf16>, vector<32x640xf32> -> vector<32x640xf32>
    %cst_97 = arith.constant 0.000000e+00 : f32
    %144 = vector.broadcast %cst_97 : f32 to vector<32x640xf32>
    %145 = arith.maximumf %143, %144 : vector<32x640xf32>
    %146 = vector.broadcast %6 : vector<1x640xf32> to vector<32x640xf32>
    %147 = arith.mulf %145, %146 : vector<32x640xf32>
    %cst_98 = arith.constant dense<0.000000e+00> : vector<32xf32>
    %148 = vector.multi_reduction <add>, %147, %cst_98 [1] : vector<32x640xf32> to vector<32xf32>
    %149 = vector.shape_cast %148 : vector<32xf32> to vector<32x1xf32>
    %c0_99 = arith.constant 0 : index
    %c640_100 = arith.constant 640 : index
    %150 = vector.load %arg9[%c0_99, %c640_100] : memref<32x5248xf32, #tpu.memory_space<vmem>>, vector<32x640xf32>
    %151 = arith.truncf %150 : vector<32x640xf32> to vector<32x640xbf16>
    %cst_101 = arith.constant dense<0.000000e+00> : vector<32x640xf32>
    %152 = tpu.matmul %140, %151, %cst_101 {dimension_numbers = #tpu.dot_dimension_numbers<[1], [0], [0], [1], [0, 0, 1, 1], [], []>} : vector<32x32xbf16>, vector<32x640xbf16>, vector<32x640xf32> -> vector<32x640xf32>
    %cst_102 = arith.constant 0.000000e+00 : f32
    %153 = vector.broadcast %cst_102 : f32 to vector<32x640xf32>
    %154 = arith.maximumf %152, %153 : vector<32x640xf32>
    %155 = vector.broadcast %6 : vector<1x640xf32> to vector<32x640xf32>
    %156 = arith.mulf %154, %155 : vector<32x640xf32>
    %cst_103 = arith.constant dense<0.000000e+00> : vector<32xf32>
    %157 = vector.multi_reduction <add>, %156, %cst_103 [1] : vector<32x640xf32> to vector<32xf32>
    %158 = vector.shape_cast %157 : vector<32xf32> to vector<32x1xf32>
    %c0_104 = arith.constant 0 : index
    %c1280_105 = arith.constant 1280 : index
    %159 = vector.load %arg9[%c0_104, %c1280_105] : memref<32x5248xf32, #tpu.memory_space<vmem>>, vector<32x640xf32>
    %160 = arith.truncf %159 : vector<32x640xf32> to vector<32x640xbf16>
    %cst_106 = arith.constant dense<0.000000e+00> : vector<32x640xf32>
    %161 = tpu.matmul %140, %160, %cst_106 {dimension_numbers = #tpu.dot_dimension_numbers<[1], [0], [0], [1], [0, 0, 1, 1], [], []>} : vector<32x32xbf16>, vector<32x640xbf16>, vector<32x640xf32> -> vector<32x640xf32>
    %cst_107 = arith.constant 0.000000e+00 : f32
    %162 = vector.broadcast %cst_107 : f32 to vector<32x640xf32>
    %163 = arith.maximumf %161, %162 : vector<32x640xf32>
    %164 = vector.broadcast %6 : vector<1x640xf32> to vector<32x640xf32>
    %165 = arith.mulf %163, %164 : vector<32x640xf32>
    %cst_108 = arith.constant dense<0.000000e+00> : vector<32xf32>
    %166 = vector.multi_reduction <add>, %165, %cst_108 [1] : vector<32x640xf32> to vector<32xf32>
    %167 = vector.shape_cast %166 : vector<32xf32> to vector<32x1xf32>
    %c0_109 = arith.constant 0 : index
    %c1920_110 = arith.constant 1920 : index
    %168 = vector.load %arg9[%c0_109, %c1920_110] : memref<32x5248xf32, #tpu.memory_space<vmem>>, vector<32x640xf32>
    %169 = arith.truncf %168 : vector<32x640xf32> to vector<32x640xbf16>
    %cst_111 = arith.constant dense<0.000000e+00> : vector<32x640xf32>
    %170 = tpu.matmul %140, %169, %cst_111 {dimension_numbers = #tpu.dot_dimension_numbers<[1], [0], [0], [1], [0, 0, 1, 1], [], []>} : vector<32x32xbf16>, vector<32x640xbf16>, vector<32x640xf32> -> vector<32x640xf32>
    %cst_112 = arith.constant 0.000000e+00 : f32
    %171 = vector.broadcast %cst_112 : f32 to vector<32x640xf32>
    %172 = arith.maximumf %170, %171 : vector<32x640xf32>
    %173 = vector.broadcast %6 : vector<1x640xf32> to vector<32x640xf32>
    %174 = arith.mulf %172, %173 : vector<32x640xf32>
    %cst_113 = arith.constant dense<0.000000e+00> : vector<32xf32>
    %175 = vector.multi_reduction <add>, %174, %cst_113 [1] : vector<32x640xf32> to vector<32xf32>
    %176 = vector.shape_cast %175 : vector<32xf32> to vector<32x1xf32>
    %c0_114 = arith.constant 0 : index
    %c2560_115 = arith.constant 2560 : index
    %177 = vector.load %arg9[%c0_114, %c2560_115] : memref<32x5248xf32, #tpu.memory_space<vmem>>, vector<32x640xf32>
    %178 = arith.truncf %177 : vector<32x640xf32> to vector<32x640xbf16>
    %cst_116 = arith.constant dense<0.000000e+00> : vector<32x640xf32>
    %179 = tpu.matmul %140, %178, %cst_116 {dimension_numbers = #tpu.dot_dimension_numbers<[1], [0], [0], [1], [0, 0, 1, 1], [], []>} : vector<32x32xbf16>, vector<32x640xbf16>, vector<32x640xf32> -> vector<32x640xf32>
    %cst_117 = arith.constant 0.000000e+00 : f32
    %180 = vector.broadcast %cst_117 : f32 to vector<32x640xf32>
    %181 = arith.maximumf %179, %180 : vector<32x640xf32>
    %182 = vector.broadcast %6 : vector<1x640xf32> to vector<32x640xf32>
    %183 = arith.mulf %181, %182 : vector<32x640xf32>
    %cst_118 = arith.constant dense<0.000000e+00> : vector<32xf32>
    %184 = vector.multi_reduction <add>, %183, %cst_118 [1] : vector<32x640xf32> to vector<32xf32>
    %185 = vector.shape_cast %184 : vector<32xf32> to vector<32x1xf32>
    %c0_119 = arith.constant 0 : index
    %c3200_120 = arith.constant 3200 : index
    %186 = vector.load %arg9[%c0_119, %c3200_120] : memref<32x5248xf32, #tpu.memory_space<vmem>>, vector<32x640xf32>
    %187 = arith.truncf %186 : vector<32x640xf32> to vector<32x640xbf16>
    %cst_121 = arith.constant dense<0.000000e+00> : vector<32x640xf32>
    %188 = tpu.matmul %140, %187, %cst_121 {dimension_numbers = #tpu.dot_dimension_numbers<[1], [0], [0], [1], [0, 0, 1, 1], [], []>} : vector<32x32xbf16>, vector<32x640xbf16>, vector<32x640xf32> -> vector<32x640xf32>
    %cst_122 = arith.constant 0.000000e+00 : f32
    %189 = vector.broadcast %cst_122 : f32 to vector<32x640xf32>
    %190 = arith.maximumf %188, %189 : vector<32x640xf32>
    %191 = vector.broadcast %6 : vector<1x640xf32> to vector<32x640xf32>
    %192 = arith.mulf %190, %191 : vector<32x640xf32>
    %cst_123 = arith.constant dense<0.000000e+00> : vector<32xf32>
    %193 = vector.multi_reduction <add>, %192, %cst_123 [1] : vector<32x640xf32> to vector<32xf32>
    %194 = vector.shape_cast %193 : vector<32xf32> to vector<32x1xf32>
    %c0_124 = arith.constant 0 : index
    %c3840_125 = arith.constant 3840 : index
    %195 = vector.load %arg9[%c0_124, %c3840_125] : memref<32x5248xf32, #tpu.memory_space<vmem>>, vector<32x640xf32>
    %196 = arith.truncf %195 : vector<32x640xf32> to vector<32x640xbf16>
    %cst_126 = arith.constant dense<0.000000e+00> : vector<32x640xf32>
    %197 = tpu.matmul %140, %196, %cst_126 {dimension_numbers = #tpu.dot_dimension_numbers<[1], [0], [0], [1], [0, 0, 1, 1], [], []>} : vector<32x32xbf16>, vector<32x640xbf16>, vector<32x640xf32> -> vector<32x640xf32>
    %cst_127 = arith.constant 0.000000e+00 : f32
    %198 = vector.broadcast %cst_127 : f32 to vector<32x640xf32>
    %199 = arith.maximumf %197, %198 : vector<32x640xf32>
    %200 = vector.broadcast %6 : vector<1x640xf32> to vector<32x640xf32>
    %201 = arith.mulf %199, %200 : vector<32x640xf32>
    %cst_128 = arith.constant dense<0.000000e+00> : vector<32xf32>
    %202 = vector.multi_reduction <add>, %201, %cst_128 [1] : vector<32x640xf32> to vector<32xf32>
    %203 = vector.shape_cast %202 : vector<32xf32> to vector<32x1xf32>
    %c0_129 = arith.constant 0 : index
    %c4480_130 = arith.constant 4480 : index
    %204 = vector.load %arg9[%c0_129, %c4480_130] : memref<32x5248xf32, #tpu.memory_space<vmem>>, vector<32x640xf32>
    %205 = arith.truncf %204 : vector<32x640xf32> to vector<32x640xbf16>
    %cst_131 = arith.constant dense<0.000000e+00> : vector<32x640xf32>
    %206 = tpu.matmul %140, %205, %cst_131 {dimension_numbers = #tpu.dot_dimension_numbers<[1], [0], [0], [1], [0, 0, 1, 1], [], []>} : vector<32x32xbf16>, vector<32x640xbf16>, vector<32x640xf32> -> vector<32x640xf32>
    %cst_132 = arith.constant 0.000000e+00 : f32
    %207 = vector.broadcast %cst_132 : f32 to vector<32x640xf32>
    %208 = arith.maximumf %206, %207 : vector<32x640xf32>
    %209 = vector.broadcast %6 : vector<1x640xf32> to vector<32x640xf32>
    %210 = arith.mulf %208, %209 : vector<32x640xf32>
    %cst_133 = arith.constant dense<0.000000e+00> : vector<32xf32>
    %211 = vector.multi_reduction <add>, %210, %cst_133 [1] : vector<32x640xf32> to vector<32xf32>
    %212 = vector.shape_cast %211 : vector<32xf32> to vector<32x1xf32>
    %213 = tpu.concatenate %149, %158, %167, %176, %185, %194, %203, %212 in 1 : vector<32x1xf32>, vector<32x1xf32>, vector<32x1xf32>, vector<32x1xf32>, vector<32x1xf32>, vector<32x1xf32>, vector<32x1xf32>, vector<32x1xf32> -> vector<32x8xf32>
    %c1_134 = arith.constant 1 : index
    %c0_135 = arith.constant 0 : index
    %c0_136 = arith.constant 0 : index
    %214 = vector.load %arg1[%c1_134, %c0_135, %c0_136] : memref<2x3x2xf32, #tpu.memory_space<vmem>>, vector<1x3x2xf32>
    %215 = vector.shape_cast %214 : vector<1x3x2xf32> to vector<3x2xf32>
    %216 = vector.extract_strided_slice %215 {offsets = [0, 0], sizes = [3, 1], strides = [1, 1]} : vector<3x2xf32> to vector<3x1xf32>
    %217 = vector.extract_strided_slice %215 {offsets = [0, 1], sizes = [3, 1], strides = [1, 1]} : vector<3x2xf32> to vector<3x1xf32>
    %c1_137 = arith.constant 1 : index
    %c0_138 = arith.constant 0 : index
    %c0_139 = arith.constant 0 : index
    %218 = vector.load %arg0[%c1_137, %c0_138, %c0_139] : memref<2x2x5120xf32, #tpu.memory_space<vmem>>, vector<1x1x640xf32>
    %219 = vector.shape_cast %218 : vector<1x1x640xf32> to vector<1x640xf32>
    %c1_140 = arith.constant 1 : index
    %c1_141 = arith.constant 1 : index
    %c0_142 = arith.constant 0 : index
    %220 = vector.load %arg0[%c1_140, %c1_141, %c0_142] : memref<2x2x5120xf32, #tpu.memory_space<vmem>>, vector<1x1x640xf32>
    %221 = vector.shape_cast %220 : vector<1x1x640xf32> to vector<1x640xf32>
    %222 = vector.broadcast %216 : vector<3x1xf32> to vector<3x640xf32>
    %223 = vector.broadcast %219 : vector<1x640xf32> to vector<3x640xf32>
    %224 = arith.mulf %222, %223 : vector<3x640xf32>
    %225 = vector.broadcast %217 : vector<3x1xf32> to vector<3x640xf32>
    %226 = vector.broadcast %221 : vector<1x640xf32> to vector<3x640xf32>
    %227 = arith.mulf %225, %226 : vector<3x640xf32>
    %228 = arith.addf %224, %227 : vector<3x640xf32>
    %cst_143 = arith.constant 0.000000e+00 : f32
    %229 = vector.broadcast %cst_143 : f32 to vector<3x640xf32>
    %230 = arith.maximumf %228, %229 : vector<3x640xf32>
    %c0_144 = arith.constant 0 : index
    %c0_145 = arith.constant 0 : index
    %231 = vector.load %arg9[%c0_144, %c0_145] : memref<32x5248xf32, #tpu.memory_space<vmem>>, vector<3x640xf32>
    tpu.vector_store %arg9[%c0_144, %c0_145], %230 {strides = array<i32>} : memref<32x5248xf32, #tpu.memory_space<vmem>>, vector<3x640xf32>,
    %c1_146 = arith.constant 1 : index
    %c0_147 = arith.constant 0 : index
    %c640_148 = arith.constant 640 : index
    %232 = vector.load %arg0[%c1_146, %c0_147, %c640_148] : memref<2x2x5120xf32, #tpu.memory_space<vmem>>, vector<1x1x640xf32>
    %233 = vector.shape_cast %232 : vector<1x1x640xf32> to vector<1x640xf32>
    %c1_149 = arith.constant 1 : index
    %c1_150 = arith.constant 1 : index
    %c640_151 = arith.constant 640 : index
    %234 = vector.load %arg0[%c1_149, %c1_150, %c640_151] : memref<2x2x5120xf32, #tpu.memory_space<vmem>>, vector<1x1x640xf32>
    %235 = vector.shape_cast %234 : vector<1x1x640xf32> to vector<1x640xf32>
    %236 = vector.broadcast %216 : vector<3x1xf32> to vector<3x640xf32>
    %237 = vector.broadcast %233 : vector<1x640xf32> to vector<3x640xf32>
    %238 = arith.mulf %236, %237 : vector<3x640xf32>
    %239 = vector.broadcast %217 : vector<3x1xf32> to vector<3x640xf32>
    %240 = vector.broadcast %235 : vector<1x640xf32> to vector<3x640xf32>
    %241 = arith.mulf %239, %240 : vector<3x640xf32>
    %242 = arith.addf %238, %241 : vector<3x640xf32>
    %cst_152 = arith.constant 0.000000e+00 : f32
    %243 = vector.broadcast %cst_152 : f32 to vector<3x640xf32>
    %244 = arith.maximumf %242, %243 : vector<3x640xf32>
    %c0_153 = arith.constant 0 : index
    %c640_154 = arith.constant 640 : index
    %245 = vector.load %arg9[%c0_153, %c640_154] : memref<32x5248xf32, #tpu.memory_space<vmem>>, vector<3x640xf32>
    tpu.vector_store %arg9[%c0_153, %c640_154], %244 {strides = array<i32>} : memref<32x5248xf32, #tpu.memory_space<vmem>>, vector<3x640xf32>,
    %c1_155 = arith.constant 1 : index
    %c0_156 = arith.constant 0 : index
    %c1280_157 = arith.constant 1280 : index
    %246 = vector.load %arg0[%c1_155, %c0_156, %c1280_157] : memref<2x2x5120xf32, #tpu.memory_space<vmem>>, vector<1x1x640xf32>
    %247 = vector.shape_cast %246 : vector<1x1x640xf32> to vector<1x640xf32>
    %c1_158 = arith.constant 1 : index
    %c1_159 = arith.constant 1 : index
    %c1280_160 = arith.constant 1280 : index
    %248 = vector.load %arg0[%c1_158, %c1_159, %c1280_160] : memref<2x2x5120xf32, #tpu.memory_space<vmem>>, vector<1x1x640xf32>
    %249 = vector.shape_cast %248 : vector<1x1x640xf32> to vector<1x640xf32>
    %250 = vector.broadcast %216 : vector<3x1xf32> to vector<3x640xf32>
    %251 = vector.broadcast %247 : vector<1x640xf32> to vector<3x640xf32>
    %252 = arith.mulf %250, %251 : vector<3x640xf32>
    %253 = vector.broadcast %217 : vector<3x1xf32> to vector<3x640xf32>
    %254 = vector.broadcast %249 : vector<1x640xf32> to vector<3x640xf32>
    %255 = arith.mulf %253, %254 : vector<3x640xf32>
    %256 = arith.addf %252, %255 : vector<3x640xf32>
    %cst_161 = arith.constant 0.000000e+00 : f32
    %257 = vector.broadcast %cst_161 : f32 to vector<3x640xf32>
    %258 = arith.maximumf %256, %257 : vector<3x640xf32>
    %c0_162 = arith.constant 0 : index
    %c1280_163 = arith.constant 1280 : index
    %259 = vector.load %arg9[%c0_162, %c1280_163] : memref<32x5248xf32, #tpu.memory_space<vmem>>, vector<3x640xf32>
    tpu.vector_store %arg9[%c0_162, %c1280_163], %258 {strides = array<i32>} : memref<32x5248xf32, #tpu.memory_space<vmem>>, vector<3x640xf32>,
    %c1_164 = arith.constant 1 : index
    %c0_165 = arith.constant 0 : index
    %c1920_166 = arith.constant 1920 : index
    %260 = vector.load %arg0[%c1_164, %c0_165, %c1920_166] : memref<2x2x5120xf32, #tpu.memory_space<vmem>>, vector<1x1x640xf32>
    %261 = vector.shape_cast %260 : vector<1x1x640xf32> to vector<1x640xf32>
    %c1_167 = arith.constant 1 : index
    %c1_168 = arith.constant 1 : index
    %c1920_169 = arith.constant 1920 : index
    %262 = vector.load %arg0[%c1_167, %c1_168, %c1920_169] : memref<2x2x5120xf32, #tpu.memory_space<vmem>>, vector<1x1x640xf32>
    %263 = vector.shape_cast %262 : vector<1x1x640xf32> to vector<1x640xf32>
    %264 = vector.broadcast %216 : vector<3x1xf32> to vector<3x640xf32>
    %265 = vector.broadcast %261 : vector<1x640xf32> to vector<3x640xf32>
    %266 = arith.mulf %264, %265 : vector<3x640xf32>
    %267 = vector.broadcast %217 : vector<3x1xf32> to vector<3x640xf32>
    %268 = vector.broadcast %263 : vector<1x640xf32> to vector<3x640xf32>
    %269 = arith.mulf %267, %268 : vector<3x640xf32>
    %270 = arith.addf %266, %269 : vector<3x640xf32>
    %cst_170 = arith.constant 0.000000e+00 : f32
    %271 = vector.broadcast %cst_170 : f32 to vector<3x640xf32>
    %272 = arith.maximumf %270, %271 : vector<3x640xf32>
    %c0_171 = arith.constant 0 : index
    %c1920_172 = arith.constant 1920 : index
    %273 = vector.load %arg9[%c0_171, %c1920_172] : memref<32x5248xf32, #tpu.memory_space<vmem>>, vector<3x640xf32>
    tpu.vector_store %arg9[%c0_171, %c1920_172], %272 {strides = array<i32>} : memref<32x5248xf32, #tpu.memory_space<vmem>>, vector<3x640xf32>,
    %c1_173 = arith.constant 1 : index
    %c0_174 = arith.constant 0 : index
    %c2560_175 = arith.constant 2560 : index
    %274 = vector.load %arg0[%c1_173, %c0_174, %c2560_175] : memref<2x2x5120xf32, #tpu.memory_space<vmem>>, vector<1x1x640xf32>
    %275 = vector.shape_cast %274 : vector<1x1x640xf32> to vector<1x640xf32>
    %c1_176 = arith.constant 1 : index
    %c1_177 = arith.constant 1 : index
    %c2560_178 = arith.constant 2560 : index
    %276 = vector.load %arg0[%c1_176, %c1_177, %c2560_178] : memref<2x2x5120xf32, #tpu.memory_space<vmem>>, vector<1x1x640xf32>
    %277 = vector.shape_cast %276 : vector<1x1x640xf32> to vector<1x640xf32>
    %278 = vector.broadcast %216 : vector<3x1xf32> to vector<3x640xf32>
    %279 = vector.broadcast %275 : vector<1x640xf32> to vector<3x640xf32>
    %280 = arith.mulf %278, %279 : vector<3x640xf32>
    %281 = vector.broadcast %217 : vector<3x1xf32> to vector<3x640xf32>
    %282 = vector.broadcast %277 : vector<1x640xf32> to vector<3x640xf32>
    %283 = arith.mulf %281, %282 : vector<3x640xf32>
    %284 = arith.addf %280, %283 : vector<3x640xf32>
    %cst_179 = arith.constant 0.000000e+00 : f32
    %285 = vector.broadcast %cst_179 : f32 to vector<3x640xf32>
    %286 = arith.maximumf %284, %285 : vector<3x640xf32>
    %c0_180 = arith.constant 0 : index
    %c2560_181 = arith.constant 2560 : index
    %287 = vector.load %arg9[%c0_180, %c2560_181] : memref<32x5248xf32, #tpu.memory_space<vmem>>, vector<3x640xf32>
    tpu.vector_store %arg9[%c0_180, %c2560_181], %286 {strides = array<i32>} : memref<32x5248xf32, #tpu.memory_space<vmem>>, vector<3x640xf32>,
    %c1_182 = arith.constant 1 : index
    %c0_183 = arith.constant 0 : index
    %c3200_184 = arith.constant 3200 : index
    %288 = vector.load %arg0[%c1_182, %c0_183, %c3200_184] : memref<2x2x5120xf32, #tpu.memory_space<vmem>>, vector<1x1x640xf32>
    %289 = vector.shape_cast %288 : vector<1x1x640xf32> to vector<1x640xf32>
    %c1_185 = arith.constant 1 : index
    %c1_186 = arith.constant 1 : index
    %c3200_187 = arith.constant 3200 : index
    %290 = vector.load %arg0[%c1_185, %c1_186, %c3200_187] : memref<2x2x5120xf32, #tpu.memory_space<vmem>>, vector<1x1x640xf32>
    %291 = vector.shape_cast %290 : vector<1x1x640xf32> to vector<1x640xf32>
    %292 = vector.broadcast %216 : vector<3x1xf32> to vector<3x640xf32>
    %293 = vector.broadcast %289 : vector<1x640xf32> to vector<3x640xf32>
    %294 = arith.mulf %292, %293 : vector<3x640xf32>
    %295 = vector.broadcast %217 : vector<3x1xf32> to vector<3x640xf32>
    %296 = vector.broadcast %291 : vector<1x640xf32> to vector<3x640xf32>
    %297 = arith.mulf %295, %296 : vector<3x640xf32>
    %298 = arith.addf %294, %297 : vector<3x640xf32>
    %cst_188 = arith.constant 0.000000e+00 : f32
    %299 = vector.broadcast %cst_188 : f32 to vector<3x640xf32>
    %300 = arith.maximumf %298, %299 : vector<3x640xf32>
    %c0_189 = arith.constant 0 : index
    %c3200_190 = arith.constant 3200 : index
    %301 = vector.load %arg9[%c0_189, %c3200_190] : memref<32x5248xf32, #tpu.memory_space<vmem>>, vector<3x640xf32>
    tpu.vector_store %arg9[%c0_189, %c3200_190], %300 {strides = array<i32>} : memref<32x5248xf32, #tpu.memory_space<vmem>>, vector<3x640xf32>,
    %c1_191 = arith.constant 1 : index
    %c0_192 = arith.constant 0 : index
    %c3840_193 = arith.constant 3840 : index
    %302 = vector.load %arg0[%c1_191, %c0_192, %c3840_193] : memref<2x2x5120xf32, #tpu.memory_space<vmem>>, vector<1x1x640xf32>
    %303 = vector.shape_cast %302 : vector<1x1x640xf32> to vector<1x640xf32>
    %c1_194 = arith.constant 1 : index
    %c1_195 = arith.constant 1 : index
    %c3840_196 = arith.constant 3840 : index
    %304 = vector.load %arg0[%c1_194, %c1_195, %c3840_196] : memref<2x2x5120xf32, #tpu.memory_space<vmem>>, vector<1x1x640xf32>
    %305 = vector.shape_cast %304 : vector<1x1x640xf32> to vector<1x640xf32>
    %306 = vector.broadcast %216 : vector<3x1xf32> to vector<3x640xf32>
    %307 = vector.broadcast %303 : vector<1x640xf32> to vector<3x640xf32>
    %308 = arith.mulf %306, %307 : vector<3x640xf32>
    %309 = vector.broadcast %217 : vector<3x1xf32> to vector<3x640xf32>
    %310 = vector.broadcast %305 : vector<1x640xf32> to vector<3x640xf32>
    %311 = arith.mulf %309, %310 : vector<3x640xf32>
    %312 = arith.addf %308, %311 : vector<3x640xf32>
    %cst_197 = arith.constant 0.000000e+00 : f32
    %313 = vector.broadcast %cst_197 : f32 to vector<3x640xf32>
    %314 = arith.maximumf %312, %313 : vector<3x640xf32>
    %c0_198 = arith.constant 0 : index
    %c3840_199 = arith.constant 3840 : index
    %315 = vector.load %arg9[%c0_198, %c3840_199] : memref<32x5248xf32, #tpu.memory_space<vmem>>, vector<3x640xf32>
    tpu.vector_store %arg9[%c0_198, %c3840_199], %314 {strides = array<i32>} : memref<32x5248xf32, #tpu.memory_space<vmem>>, vector<3x640xf32>,
    %c1_200 = arith.constant 1 : index
    %c0_201 = arith.constant 0 : index
    %c4480_202 = arith.constant 4480 : index
    %316 = vector.load %arg0[%c1_200, %c0_201, %c4480_202] : memref<2x2x5120xf32, #tpu.memory_space<vmem>>, vector<1x1x640xf32>
    %317 = vector.shape_cast %316 : vector<1x1x640xf32> to vector<1x640xf32>
    %c1_203 = arith.constant 1 : index
    %c1_204 = arith.constant 1 : index
    %c4480_205 = arith.constant 4480 : index
    %318 = vector.load %arg0[%c1_203, %c1_204, %c4480_205] : memref<2x2x5120xf32, #tpu.memory_space<vmem>>, vector<1x1x640xf32>
    %319 = vector.shape_cast %318 : vector<1x1x640xf32> to vector<1x640xf32>
    %320 = vector.broadcast %216 : vector<3x1xf32> to vector<3x640xf32>
    %321 = vector.broadcast %317 : vector<1x640xf32> to vector<3x640xf32>
    %322 = arith.mulf %320, %321 : vector<3x640xf32>
    %323 = vector.broadcast %217 : vector<3x1xf32> to vector<3x640xf32>
    %324 = vector.broadcast %319 : vector<1x640xf32> to vector<3x640xf32>
    %325 = arith.mulf %323, %324 : vector<3x640xf32>
    %326 = arith.addf %322, %325 : vector<3x640xf32>
    %cst_206 = arith.constant 0.000000e+00 : f32
    %327 = vector.broadcast %cst_206 : f32 to vector<3x640xf32>
    %328 = arith.maximumf %326, %327 : vector<3x640xf32>
    %c0_207 = arith.constant 0 : index
    %c4480_208 = arith.constant 4480 : index
    %329 = vector.load %arg9[%c0_207, %c4480_208] : memref<32x5248xf32, #tpu.memory_space<vmem>>, vector<3x640xf32>
    tpu.vector_store %arg9[%c0_207, %c4480_208], %328 {strides = array<i32>} : memref<32x5248xf32, #tpu.memory_space<vmem>>, vector<3x640xf32>,
    %c0_209 = arith.constant 0 : index
    %c1_210 = arith.constant 1 : index
    %330 = vector.load %arg9[%c0_209, %c1_210] : memref<32x5248xf32, #tpu.memory_space<vmem>>, vector<3x5120xf32>
    %c3_211 = arith.constant 3 : index
    %c0_212 = arith.constant 0 : index
    %331 = vector.load %arg9[%c3_211, %c0_212] : memref<32x5248xf32, #tpu.memory_space<vmem>>, vector<3x5120xf32>
    tpu.vector_store %arg9[%c3_211, %c0_212], %330 {strides = array<i32>} : memref<32x5248xf32, #tpu.memory_space<vmem>>, vector<3x5120xf32>,
    %c0_213 = arith.constant 0 : index
    %c2_214 = arith.constant 2 : index
    %332 = vector.load %arg9[%c0_213, %c2_214] : memref<32x5248xf32, #tpu.memory_space<vmem>>, vector<3x5120xf32>
    %c6_215 = arith.constant 6 : index
    %c0_216 = arith.constant 0 : index
    %333 = vector.load %arg9[%c6_215, %c0_216] : memref<32x5248xf32, #tpu.memory_space<vmem>>, vector<3x5120xf32>
    tpu.vector_store %arg9[%c6_215, %c0_216], %332 {strides = array<i32>} : memref<32x5248xf32, #tpu.memory_space<vmem>>, vector<3x5120xf32>,
    %c0_217 = arith.constant 0 : index
    %c24_218 = arith.constant 24 : index
    %334 = vector.load %arg9[%c0_217, %c24_218] : memref<32x5248xf32, #tpu.memory_space<vmem>>, vector<3x5120xf32>
    %c9_219 = arith.constant 9 : index
    %c0_220 = arith.constant 0 : index
    %335 = vector.load %arg9[%c9_219, %c0_220] : memref<32x5248xf32, #tpu.memory_space<vmem>>, vector<3x5120xf32>
    tpu.vector_store %arg9[%c9_219, %c0_220], %334 {strides = array<i32>} : memref<32x5248xf32, #tpu.memory_space<vmem>>, vector<3x5120xf32>,
    %c0_221 = arith.constant 0 : index
    %c25_222 = arith.constant 25 : index
    %336 = vector.load %arg9[%c0_221, %c25_222] : memref<32x5248xf32, #tpu.memory_space<vmem>>, vector<3x5120xf32>
    %c12_223 = arith.constant 12 : index
    %c0_224 = arith.constant 0 : index
    %337 = vector.load %arg9[%c12_223, %c0_224] : memref<32x5248xf32, #tpu.memory_space<vmem>>, vector<3x5120xf32>
    tpu.vector_store %arg9[%c12_223, %c0_224], %336 {strides = array<i32>} : memref<32x5248xf32, #tpu.memory_space<vmem>>, vector<3x5120xf32>,
    %c0_225 = arith.constant 0 : index
    %c26_226 = arith.constant 26 : index
    %338 = vector.load %arg9[%c0_225, %c26_226] : memref<32x5248xf32, #tpu.memory_space<vmem>>, vector<3x5120xf32>
    %c15_227 = arith.constant 15 : index
    %c0_228 = arith.constant 0 : index
    %339 = vector.load %arg9[%c15_227, %c0_228] : memref<32x5248xf32, #tpu.memory_space<vmem>>, vector<3x5120xf32>
    tpu.vector_store %arg9[%c15_227, %c0_228], %338 {strides = array<i32>} : memref<32x5248xf32, #tpu.memory_space<vmem>>, vector<3x5120xf32>,
    %c0_229 = arith.constant 0 : index
    %c48_230 = arith.constant 48 : index
    %340 = vector.load %arg9[%c0_229, %c48_230] : memref<32x5248xf32, #tpu.memory_space<vmem>>, vector<3x5120xf32>
    %c18_231 = arith.constant 18 : index
    %c0_232 = arith.constant 0 : index
    %341 = vector.load %arg9[%c18_231, %c0_232] : memref<32x5248xf32, #tpu.memory_space<vmem>>, vector<3x5120xf32>
    tpu.vector_store %arg9[%c18_231, %c0_232], %340 {strides = array<i32>} : memref<32x5248xf32, #tpu.memory_space<vmem>>, vector<3x5120xf32>,
    %c0_233 = arith.constant 0 : index
    %c49_234 = arith.constant 49 : index
    %342 = vector.load %arg9[%c0_233, %c49_234] : memref<32x5248xf32, #tpu.memory_space<vmem>>, vector<3x5120xf32>
    %c21_235 = arith.constant 21 : index
    %c0_236 = arith.constant 0 : index
    %343 = vector.load %arg9[%c21_235, %c0_236] : memref<32x5248xf32, #tpu.memory_space<vmem>>, vector<3x5120xf32>
    tpu.vector_store %arg9[%c21_235, %c0_236], %342 {strides = array<i32>} : memref<32x5248xf32, #tpu.memory_space<vmem>>, vector<3x5120xf32>,
    %c0_237 = arith.constant 0 : index
    %c50_238 = arith.constant 50 : index
    %344 = vector.load %arg9[%c0_237, %c50_238] : memref<32x5248xf32, #tpu.memory_space<vmem>>, vector<3x5120xf32>
    %c24_239 = arith.constant 24 : index
    %c0_240 = arith.constant 0 : index
    %345 = vector.load %arg9[%c24_239, %c0_240] : memref<32x5248xf32, #tpu.memory_space<vmem>>, vector<3x5120xf32>
    tpu.vector_store %arg9[%c24_239, %c0_240], %344 {strides = array<i32>} : memref<32x5248xf32, #tpu.memory_space<vmem>>, vector<3x5120xf32>,
    %c1_241 = arith.constant 1 : index
    %c0_242 = arith.constant 0 : index
    %c0_243 = arith.constant 0 : index
    %346 = vector.load %arg2[%c1_241, %c0_242, %c0_243] : memref<2x32x32xbf16, #tpu.memory_space<vmem>>, vector<1x32x32xbf16>
    %347 = vector.shape_cast %346 : vector<1x32x32xbf16> to vector<32x32xbf16>
    %c0_244 = arith.constant 0 : index
    %c0_245 = arith.constant 0 : index
    %348 = vector.load %arg9[%c0_244, %c0_245] : memref<32x5248xf32, #tpu.memory_space<vmem>>, vector<32x640xf32>
    %349 = arith.truncf %348 : vector<32x640xf32> to vector<32x640xbf16>
    %cst_246 = arith.constant dense<0.000000e+00> : vector<32x640xf32>
    %350 = tpu.matmul %347, %349, %cst_246 {dimension_numbers = #tpu.dot_dimension_numbers<[1], [0], [0], [1], [0, 0, 1, 1], [], []>} : vector<32x32xbf16>, vector<32x640xbf16>, vector<32x640xf32> -> vector<32x640xf32>
    %cst_247 = arith.constant 0.000000e+00 : f32
    %351 = vector.broadcast %cst_247 : f32 to vector<32x640xf32>
    %352 = arith.maximumf %350, %351 : vector<32x640xf32>
    %353 = vector.broadcast %6 : vector<1x640xf32> to vector<32x640xf32>
    %354 = arith.mulf %352, %353 : vector<32x640xf32>
    %cst_248 = arith.constant dense<0.000000e+00> : vector<32xf32>
    %355 = vector.multi_reduction <add>, %354, %cst_248 [1] : vector<32x640xf32> to vector<32xf32>
    %356 = vector.shape_cast %355 : vector<32xf32> to vector<32x1xf32>
    %c0_249 = arith.constant 0 : index
    %c640_250 = arith.constant 640 : index
    %357 = vector.load %arg9[%c0_249, %c640_250] : memref<32x5248xf32, #tpu.memory_space<vmem>>, vector<32x640xf32>
    %358 = arith.truncf %357 : vector<32x640xf32> to vector<32x640xbf16>
    %cst_251 = arith.constant dense<0.000000e+00> : vector<32x640xf32>
    %359 = tpu.matmul %347, %358, %cst_251 {dimension_numbers = #tpu.dot_dimension_numbers<[1], [0], [0], [1], [0, 0, 1, 1], [], []>} : vector<32x32xbf16>, vector<32x640xbf16>, vector<32x640xf32> -> vector<32x640xf32>
    %cst_252 = arith.constant 0.000000e+00 : f32
    %360 = vector.broadcast %cst_252 : f32 to vector<32x640xf32>
    %361 = arith.maximumf %359, %360 : vector<32x640xf32>
    %362 = vector.broadcast %6 : vector<1x640xf32> to vector<32x640xf32>
    %363 = arith.mulf %361, %362 : vector<32x640xf32>
    %cst_253 = arith.constant dense<0.000000e+00> : vector<32xf32>
    %364 = vector.multi_reduction <add>, %363, %cst_253 [1] : vector<32x640xf32> to vector<32xf32>
    %365 = vector.shape_cast %364 : vector<32xf32> to vector<32x1xf32>
    %c0_254 = arith.constant 0 : index
    %c1280_255 = arith.constant 1280 : index
    %366 = vector.load %arg9[%c0_254, %c1280_255] : memref<32x5248xf32, #tpu.memory_space<vmem>>, vector<32x640xf32>
    %367 = arith.truncf %366 : vector<32x640xf32> to vector<32x640xbf16>
    %cst_256 = arith.constant dense<0.000000e+00> : vector<32x640xf32>
    %368 = tpu.matmul %347, %367, %cst_256 {dimension_numbers = #tpu.dot_dimension_numbers<[1], [0], [0], [1], [0, 0, 1, 1], [], []>} : vector<32x32xbf16>, vector<32x640xbf16>, vector<32x640xf32> -> vector<32x640xf32>
    %cst_257 = arith.constant 0.000000e+00 : f32
    %369 = vector.broadcast %cst_257 : f32 to vector<32x640xf32>
    %370 = arith.maximumf %368, %369 : vector<32x640xf32>
    %371 = vector.broadcast %6 : vector<1x640xf32> to vector<32x640xf32>
    %372 = arith.mulf %370, %371 : vector<32x640xf32>
    %cst_258 = arith.constant dense<0.000000e+00> : vector<32xf32>
    %373 = vector.multi_reduction <add>, %372, %cst_258 [1] : vector<32x640xf32> to vector<32xf32>
    %374 = vector.shape_cast %373 : vector<32xf32> to vector<32x1xf32>
    %c0_259 = arith.constant 0 : index
    %c1920_260 = arith.constant 1920 : index
    %375 = vector.load %arg9[%c0_259, %c1920_260] : memref<32x5248xf32, #tpu.memory_space<vmem>>, vector<32x640xf32>
    %376 = arith.truncf %375 : vector<32x640xf32> to vector<32x640xbf16>
    %cst_261 = arith.constant dense<0.000000e+00> : vector<32x640xf32>
    %377 = tpu.matmul %347, %376, %cst_261 {dimension_numbers = #tpu.dot_dimension_numbers<[1], [0], [0], [1], [0, 0, 1, 1], [], []>} : vector<32x32xbf16>, vector<32x640xbf16>, vector<32x640xf32> -> vector<32x640xf32>
    %cst_262 = arith.constant 0.000000e+00 : f32
    %378 = vector.broadcast %cst_262 : f32 to vector<32x640xf32>
    %379 = arith.maximumf %377, %378 : vector<32x640xf32>
    %380 = vector.broadcast %6 : vector<1x640xf32> to vector<32x640xf32>
    %381 = arith.mulf %379, %380 : vector<32x640xf32>
    %cst_263 = arith.constant dense<0.000000e+00> : vector<32xf32>
    %382 = vector.multi_reduction <add>, %381, %cst_263 [1] : vector<32x640xf32> to vector<32xf32>
    %383 = vector.shape_cast %382 : vector<32xf32> to vector<32x1xf32>
    %c0_264 = arith.constant 0 : index
    %c2560_265 = arith.constant 2560 : index
    %384 = vector.load %arg9[%c0_264, %c2560_265] : memref<32x5248xf32, #tpu.memory_space<vmem>>, vector<32x640xf32>
    %385 = arith.truncf %384 : vector<32x640xf32> to vector<32x640xbf16>
    %cst_266 = arith.constant dense<0.000000e+00> : vector<32x640xf32>
    %386 = tpu.matmul %347, %385, %cst_266 {dimension_numbers = #tpu.dot_dimension_numbers<[1], [0], [0], [1], [0, 0, 1, 1], [], []>} : vector<32x32xbf16>, vector<32x640xbf16>, vector<32x640xf32> -> vector<32x640xf32>
    %cst_267 = arith.constant 0.000000e+00 : f32
    %387 = vector.broadcast %cst_267 : f32 to vector<32x640xf32>
    %388 = arith.maximumf %386, %387 : vector<32x640xf32>
    %389 = vector.broadcast %6 : vector<1x640xf32> to vector<32x640xf32>
    %390 = arith.mulf %388, %389 : vector<32x640xf32>
    %cst_268 = arith.constant dense<0.000000e+00> : vector<32xf32>
    %391 = vector.multi_reduction <add>, %390, %cst_268 [1] : vector<32x640xf32> to vector<32xf32>
    %392 = vector.shape_cast %391 : vector<32xf32> to vector<32x1xf32>
    %c0_269 = arith.constant 0 : index
    %c3200_270 = arith.constant 3200 : index
    %393 = vector.load %arg9[%c0_269, %c3200_270] : memref<32x5248xf32, #tpu.memory_space<vmem>>, vector<32x640xf32>
    %394 = arith.truncf %393 : vector<32x640xf32> to vector<32x640xbf16>
    %cst_271 = arith.constant dense<0.000000e+00> : vector<32x640xf32>
    %395 = tpu.matmul %347, %394, %cst_271 {dimension_numbers = #tpu.dot_dimension_numbers<[1], [0], [0], [1], [0, 0, 1, 1], [], []>} : vector<32x32xbf16>, vector<32x640xbf16>, vector<32x640xf32> -> vector<32x640xf32>
    %cst_272 = arith.constant 0.000000e+00 : f32
    %396 = vector.broadcast %cst_272 : f32 to vector<32x640xf32>
    %397 = arith.maximumf %395, %396 : vector<32x640xf32>
    %398 = vector.broadcast %6 : vector<1x640xf32> to vector<32x640xf32>
    %399 = arith.mulf %397, %398 : vector<32x640xf32>
    %cst_273 = arith.constant dense<0.000000e+00> : vector<32xf32>
    %400 = vector.multi_reduction <add>, %399, %cst_273 [1] : vector<32x640xf32> to vector<32xf32>
    %401 = vector.shape_cast %400 : vector<32xf32> to vector<32x1xf32>
    %c0_274 = arith.constant 0 : index
    %c3840_275 = arith.constant 3840 : index
    %402 = vector.load %arg9[%c0_274, %c3840_275] : memref<32x5248xf32, #tpu.memory_space<vmem>>, vector<32x640xf32>
    %403 = arith.truncf %402 : vector<32x640xf32> to vector<32x640xbf16>
    %cst_276 = arith.constant dense<0.000000e+00> : vector<32x640xf32>
    %404 = tpu.matmul %347, %403, %cst_276 {dimension_numbers = #tpu.dot_dimension_numbers<[1], [0], [0], [1], [0, 0, 1, 1], [], []>} : vector<32x32xbf16>, vector<32x640xbf16>, vector<32x640xf32> -> vector<32x640xf32>
    %cst_277 = arith.constant 0.000000e+00 : f32
    %405 = vector.broadcast %cst_277 : f32 to vector<32x640xf32>
    %406 = arith.maximumf %404, %405 : vector<32x640xf32>
    %407 = vector.broadcast %6 : vector<1x640xf32> to vector<32x640xf32>
    %408 = arith.mulf %406, %407 : vector<32x640xf32>
    %cst_278 = arith.constant dense<0.000000e+00> : vector<32xf32>
    %409 = vector.multi_reduction <add>, %408, %cst_278 [1] : vector<32x640xf32> to vector<32xf32>
    %410 = vector.shape_cast %409 : vector<32xf32> to vector<32x1xf32>
    %c0_279 = arith.constant 0 : index
    %c4480_280 = arith.constant 4480 : index
    %411 = vector.load %arg9[%c0_279, %c4480_280] : memref<32x5248xf32, #tpu.memory_space<vmem>>, vector<32x640xf32>
    %412 = arith.truncf %411 : vector<32x640xf32> to vector<32x640xbf16>
    %cst_281 = arith.constant dense<0.000000e+00> : vector<32x640xf32>
    %413 = tpu.matmul %347, %412, %cst_281 {dimension_numbers = #tpu.dot_dimension_numbers<[1], [0], [0], [1], [0, 0, 1, 1], [], []>} : vector<32x32xbf16>, vector<32x640xbf16>, vector<32x640xf32> -> vector<32x640xf32>
    %cst_282 = arith.constant 0.000000e+00 : f32
    %414 = vector.broadcast %cst_282 : f32 to vector<32x640xf32>
    %415 = arith.maximumf %413, %414 : vector<32x640xf32>
    %416 = vector.broadcast %6 : vector<1x640xf32> to vector<32x640xf32>
    %417 = arith.mulf %415, %416 : vector<32x640xf32>
    %cst_283 = arith.constant dense<0.000000e+00> : vector<32xf32>
    %418 = vector.multi_reduction <add>, %417, %cst_283 [1] : vector<32x640xf32> to vector<32xf32>
    %419 = vector.shape_cast %418 : vector<32xf32> to vector<32x1xf32>
    %420 = tpu.concatenate %356, %365, %374, %383, %392, %401, %410, %419 in 1 : vector<32x1xf32>, vector<32x1xf32>, vector<32x1xf32>, vector<32x1xf32>, vector<32x1xf32>, vector<32x1xf32>, vector<32x1xf32>, vector<32x1xf32> -> vector<32x8xf32>
    %421 = tpu.concatenate %213, %420 in 1 : vector<32x8xf32>, vector<32x8xf32> -> vector<32x16xf32>
    %c0_284 = arith.constant 0 : index
    %c0_285 = arith.constant 0 : index
    %422 = vector.load %arg4[%c0_284, %c0_285] : memref<64x32xf32, #tpu.memory_space<vmem>>, vector<64x32xf32>
    %cst_286 = arith.constant dense<0.000000e+00> : vector<64x16xf32>
    %423 = tpu.matmul %422, %421, %cst_286 {dimension_numbers = #tpu.dot_dimension_numbers<[1], [0], [0], [1], [0, 0, 1, 1], [], []>} : vector<64x32xf32>, vector<32x16xf32>, vector<64x16xf32> -> vector<64x16xf32>
    %c0_287 = arith.constant 0 : index
    %c0_288 = arith.constant 0 : index
    %424 = vector.load %arg5[%c0_287, %c0_288] : memref<64x3xf32, #tpu.memory_space<vmem>>, vector<64x1xf32>
    %425 = vector.extract_strided_slice %423 {offsets = [0, 0], sizes = [64, 8], strides = [1, 1]} : vector<64x16xf32> to vector<64x8xf32>
    %c0_289 = arith.constant 0 : index
    %c1_290 = arith.constant 1 : index
    %426 = vector.load %arg5[%c0_289, %c1_290] : memref<64x3xf32, #tpu.memory_space<vmem>>, vector<64x1xf32>
    %427 = vector.broadcast %426 : vector<64x1xf32> to vector<64x8xf32>
    %428 = arith.addf %425, %427 : vector<64x8xf32>
    %429 = vector.extract_strided_slice %423 {offsets = [0, 8], sizes = [64, 8], strides = [1, 1]} : vector<64x16xf32> to vector<64x8xf32>
    %c0_291 = arith.constant 0 : index
    %c2_292 = arith.constant 2 : index
    %430 = vector.load %arg5[%c0_291, %c2_292] : memref<64x3xf32, #tpu.memory_space<vmem>>, vector<64x1xf32>
    %431 = vector.broadcast %430 : vector<64x1xf32> to vector<64x8xf32>
    %432 = arith.addf %429, %431 : vector<64x8xf32>
    %433 = vector.extract_strided_slice %424 {offsets = [0, 0], sizes = [32, 1], strides = [1, 1]} : vector<64x1xf32> to vector<32x1xf32>
    %434 = vector.extract_strided_slice %424 {offsets = [32, 0], sizes = [32, 1], strides = [1, 1]} : vector<64x1xf32> to vector<32x1xf32>
    %435 = vector.extract_strided_slice %428 {offsets = [0, 0], sizes = [32, 8], strides = [1, 1]} : vector<64x8xf32> to vector<32x8xf32>
    %436 = vector.extract_strided_slice %428 {offsets = [32, 0], sizes = [32, 8], strides = [1, 1]} : vector<64x8xf32> to vector<32x8xf32>
    %437 = vector.extract_strided_slice %432 {offsets = [0, 0], sizes = [32, 8], strides = [1, 1]} : vector<64x8xf32> to vector<32x8xf32>
    %438 = vector.extract_strided_slice %432 {offsets = [32, 0], sizes = [32, 8], strides = [1, 1]} : vector<64x8xf32> to vector<32x8xf32>
    %c0_293 = arith.constant 0 : index
    %c0_294 = arith.constant 0 : index
    %439 = vector.load %arg6[%c0_293, %c0_294] : memref<2x33xf32, #tpu.memory_space<vmem>>, vector<1x32xf32>
    %440 = tpu.concatenate %433, %435, %437 in 1 : vector<32x1xf32>, vector<32x8xf32>, vector<32x8xf32> -> vector<32x17xf32>
    %cst_295 = arith.constant dense<0.000000e+00> : vector<1x17xf32>
    %441 = tpu.matmul %439, %440, %cst_295 {dimension_numbers = #tpu.dot_dimension_numbers<[1], [0], [0], [1], [0, 0, 1, 1], [], []>} : vector<1x32xf32>, vector<32x17xf32>, vector<1x17xf32> -> vector<1x17xf32>
    %cst_296 = arith.constant 0.176776692 : f32
    %442 = vector.broadcast %cst_296 : f32 to vector<1x17xf32>
    %443 = arith.mulf %441, %442 : vector<1x17xf32>
    %444 = vector.extract_strided_slice %443 {offsets = [0, 0], sizes = [1, 1], strides = [1, 1]} : vector<1x17xf32> to vector<1x1xf32>
    %445 = vector.extract_strided_slice %443 {offsets = [0, 1], sizes = [1, 8], strides = [1, 1]} : vector<1x17xf32> to vector<1x8xf32>
    %446 = vector.extract_strided_slice %443 {offsets = [0, 9], sizes = [1, 8], strides = [1, 1]} : vector<1x17xf32> to vector<1x8xf32>
    %447 = arith.maximumf %445, %446 : vector<1x8xf32>
    %448 = vector.broadcast %444 : vector<1x1xf32> to vector<1x8xf32>
    %449 = arith.maximumf %447, %448 : vector<1x8xf32>
    %450 = vector.broadcast %444 : vector<1x1xf32> to vector<1x8xf32>
    %451 = arith.subf %450, %449 : vector<1x8xf32>
    %452 = math.exp %451 : vector<1x8xf32>
    %453 = arith.subf %445, %449 : vector<1x8xf32>
    %454 = math.exp %453 : vector<1x8xf32>
    %455 = arith.subf %446, %449 : vector<1x8xf32>
    %456 = math.exp %455 : vector<1x8xf32>
    %457 = vector.broadcast %452 : vector<1x8xf32> to vector<32x8xf32>
    %458 = vector.broadcast %434 : vector<32x1xf32> to vector<32x8xf32>
    %459 = arith.mulf %457, %458 : vector<32x8xf32>
    %460 = vector.broadcast %454 : vector<1x8xf32> to vector<32x8xf32>
    %461 = arith.mulf %460, %436 : vector<32x8xf32>
    %462 = arith.addf %459, %461 : vector<32x8xf32>
    %463 = vector.broadcast %456 : vector<1x8xf32> to vector<32x8xf32>
    %464 = arith.mulf %463, %438 : vector<32x8xf32>
    %465 = arith.addf %462, %464 : vector<32x8xf32>
    %466 = arith.addf %452, %454 : vector<1x8xf32>
    %467 = arith.addf %466, %456 : vector<1x8xf32>
    %468 = vector.broadcast %467 : vector<1x8xf32> to vector<32x8xf32>
    %469 = arith.divf %465, %468 : vector<32x8xf32>
    %c0_297 = arith.constant 0 : index
    %c0_298 = arith.constant 0 : index
    %470 = vector.load %arg7[%c0_297, %c0_298] : memref<32x33xf32, #tpu.memory_space<vmem>>, vector<32x32xf32>
    %c0_299 = arith.constant 0 : index
    %c32 = arith.constant 32 : index
    %471 = vector.load %arg7[%c0_299, %c32] : memref<32x33xf32, #tpu.memory_space<vmem>>, vector<32x1xf32>
    %cst_300 = arith.constant dense<0.000000e+00> : vector<32x8xf32>
    %472 = tpu.matmul %470, %469, %cst_300 {dimension_numbers = #tpu.dot_dimension_numbers<[1], [0], [0], [1], [0, 0, 1, 1], [], []>} : vector<32x32xf32>, vector<32x8xf32>, vector<32x8xf32> -> vector<32x8xf32>
    %473 = vector.broadcast %471 : vector<32x1xf32> to vector<32x8xf32>
    %474 = arith.addf %472, %473 : vector<32x8xf32>
    %475 = vector.extract_strided_slice %474 {offsets = [0, 0], sizes = [32, 4], strides = [1, 1]} : vector<32x8xf32> to vector<32x4xf32>
    %476 = vector.shape_cast %475 : vector<32x4xf32> to vector<1x32x4xf32>
    %cst_301 = arith.constant dense<0.000000e+00> : vector<1xf32>
    %477 = vector.multi_reduction <add>, %476, %cst_301 [1, 2] : vector<1x32x4xf32> to vector<1xf32>
    %478 = vector.shape_cast %477 : vector<1xf32> to vector<1x1x1xf32>
    %479 = vector.extract %478[0, 0, 0] : f32 from vector<1x1x1xf32>
    %480 = vector.broadcast %479 : f32 to vector<1x1xf32>
    %cst_302 = arith.constant 1.280000e+02 : f32
    %481 = vector.broadcast %cst_302 : f32 to vector<1x1xf32>
    %482 = arith.divf %480, %481 : vector<1x1xf32>
    %483 = vector.broadcast %482 : vector<1x1xf32> to vector<32x4xf32>
    %484 = arith.subf %475, %483 : vector<32x4xf32>
    %485 = arith.mulf %484, %484 : vector<32x4xf32>
    %486 = vector.shape_cast %485 : vector<32x4xf32> to vector<1x32x4xf32>
    %cst_303 = arith.constant dense<0.000000e+00> : vector<1xf32>
    %487 = vector.multi_reduction <add>, %486, %cst_303 [1, 2] : vector<1x32x4xf32> to vector<1xf32>
    %488 = vector.shape_cast %487 : vector<1xf32> to vector<1x1x1xf32>
    %489 = vector.extract %488[0, 0, 0] : f32 from vector<1x1x1xf32>
    %490 = vector.broadcast %489 : f32 to vector<1x1xf32>
    %cst_304 = arith.constant 0.00787401571 : f32
    %491 = vector.broadcast %cst_304 : f32 to vector<1x1xf32>
    %492 = arith.mulf %490, %491 : vector<1x1xf32>
    %493 = math.rsqrt %492 : vector<1x1xf32>
    %494 = vector.broadcast %493 : vector<1x1xf32> to vector<32x4xf32>
    %495 = arith.mulf %484, %494 : vector<32x4xf32>
    %496 = vector.extract_strided_slice %474 {offsets = [0, 4], sizes = [32, 4], strides = [1, 1]} : vector<32x8xf32> to vector<32x4xf32>
    %497 = vector.shape_cast %496 : vector<32x4xf32> to vector<1x32x4xf32>
    %cst_305 = arith.constant dense<0.000000e+00> : vector<1xf32>
    %498 = vector.multi_reduction <add>, %497, %cst_305 [1, 2] : vector<1x32x4xf32> to vector<1xf32>
    %499 = vector.shape_cast %498 : vector<1xf32> to vector<1x1x1xf32>
    %500 = vector.extract %499[0, 0, 0] : f32 from vector<1x1x1xf32>
    %501 = vector.broadcast %500 : f32 to vector<1x1xf32>
    %cst_306 = arith.constant 1.280000e+02 : f32
    %502 = vector.broadcast %cst_306 : f32 to vector<1x1xf32>
    %503 = arith.divf %501, %502 : vector<1x1xf32>
    %504 = vector.broadcast %503 : vector<1x1xf32> to vector<32x4xf32>
    %505 = arith.subf %496, %504 : vector<32x4xf32>
    %506 = arith.mulf %505, %505 : vector<32x4xf32>
    %507 = vector.shape_cast %506 : vector<32x4xf32> to vector<1x32x4xf32>
    %cst_307 = arith.constant dense<0.000000e+00> : vector<1xf32>
    %508 = vector.multi_reduction <add>, %507, %cst_307 [1, 2] : vector<1x32x4xf32> to vector<1xf32>
    %509 = vector.shape_cast %508 : vector<1xf32> to vector<1x1x1xf32>
    %510 = vector.extract %509[0, 0, 0] : f32 from vector<1x1x1xf32>
    %511 = vector.broadcast %510 : f32 to vector<1x1xf32>
    %cst_308 = arith.constant 0.00787401571 : f32
    %512 = vector.broadcast %cst_308 : f32 to vector<1x1xf32>
    %513 = arith.mulf %511, %512 : vector<1x1xf32>
    %514 = math.rsqrt %513 : vector<1x1xf32>
    %515 = vector.broadcast %514 : vector<1x1xf32> to vector<32x4xf32>
    %516 = arith.mulf %505, %515 : vector<32x4xf32>
    %517 = tpu.concatenate %495, %516 in 1 : vector<32x4xf32>, vector<32x4xf32> -> vector<32x8xf32>
    %c1_309 = arith.constant 1 : index
    %c0_310 = arith.constant 0 : index
    %518 = vector.load %arg6[%c1_309, %c0_310] : memref<2x33xf32, #tpu.memory_space<vmem>>, vector<1x32xf32>
    %c1_311 = arith.constant 1 : index
    %c32_312 = arith.constant 32 : index
    %519 = vector.load %arg6[%c1_311, %c32_312] : memref<2x33xf32, #tpu.memory_space<vmem>>, vector<1x1xf32>
    %cst_313 = arith.constant dense<0.000000e+00> : vector<1x8xf32>
    %520 = tpu.matmul %518, %517, %cst_313 {dimension_numbers = #tpu.dot_dimension_numbers<[1], [0], [0], [1], [0, 0, 1, 1], [], []>} : vector<1x32xf32>, vector<32x8xf32>, vector<1x8xf32> -> vector<1x8xf32>
    %521 = vector.broadcast %519 : vector<1x1xf32> to vector<1x8xf32>
    %522 = arith.addf %520, %521 : vector<1x8xf32>
    %c0_314 = arith.constant 0 : index
    %c0_315 = arith.constant 0 : index
    %523 = vector.load %arg8[%c0_314, %c0_315] : memref<1x8xf32, #tpu.memory_space<vmem>>, vector<1x8xf32>
    tpu.vector_store %arg8[%c0_314, %c0_315], %522 {strides = array<i32>} : memref<1x8xf32, #tpu.memory_space<vmem>>, vector<1x8xf32>,
    return
  }
}

</mosaic_0001>

<llo_original>
// kernel: lineage_detector_forward.1
$region0: #{lineage_detector_forward.1}
  #allocation0 [shape = 'u32[]', space=smem, size = 0x4, offset = 0x4, fixed_abs, tag = 'smem constant byte address 0x4 - core index']
  #allocation1 [shape = 'u32[72,128]{1,0:T(1,128)}', space=vmem, size = 0x9000, scoped, tag = 'internal scratch']
  #allocation2 [shape = 'f32[32,5248]{1,0:T(8,128)}', space=vmem, size = 0xa4000, scoped, tag = 'scratch operand']
  %s0 = inlined_call_operand.vmem [shape: f32[2,2,5120], index: 0, kind: input, shape index: {}]
  %s1 = inlined_call_operand.vmem [shape: f32[2,3,2], index: 1, kind: input, shape index: {}]
  %s2 = inlined_call_operand.vmem [shape: bf16[2,32,32], index: 2, kind: input, shape index: {}]
  %s3 = inlined_call_operand.vmem [shape: f32[1,640], index: 3, kind: input, shape index: {}]
  %s4 = inlined_call_operand.vmem [shape: f32[64,32], index: 4, kind: input, shape index: {}]
  %s5 = inlined_call_operand.vmem [shape: f32[64,3], index: 5, kind: input, shape index: {}]
  %s6 = inlined_call_operand.vmem [shape: f32[2,33], index: 6, kind: input, shape index: {}]
  %s7 = inlined_call_operand.vmem [shape: f32[32,33], index: 7, kind: input, shape index: {}]
  %s8 = inlined_call_operand.vmem [shape: f32[1,8], index: 8, kind: output, shape index: {}]
  %s9 = sld [smem:[#allocation0]]
  $region42: #{lineage_detector_forward.1} parent=0
    _
  %s11 = ssub.s32 1, %s9
  %s12 = scalar_select 0, %s11, %s9
  // Predicated region
  $region2: #{lineage_detector_forward.1} parent=0 // pred_check
    _
  $region3: #{lineage_detector_forward.1} parent=0 // pred_check_branch
    %14 = sbr.rel (0) target = $region5
  $region4: #{lineage_detector_forward.1} parent=0 // pred_region
    _
  $region5: #{lineage_detector_forward.1} parent=0 // pred_fallthru
    _
  // Predicated region
  $region6: #{lineage_detector_forward.1} parent=0 // pred_check
    _
  $region7: #{lineage_detector_forward.1} parent=0 // pred_check_branch
    %16 = sbr.rel (0) target = $region9
  $region8: #{lineage_detector_forward.1} parent=0 // pred_region
    _
  $region9: #{lineage_detector_forward.1} parent=0 // pred_fallthru
    _
  // Predicated region
  $region10: #{lineage_detector_forward.1} parent=0 // pred_check
    _
  $region11: #{lineage_detector_forward.1} parent=0 // pred_check_branch
    %18 = sbr.rel (0) target = $region13
  $region12: #{lineage_detector_forward.1} parent=0 // pred_region
    _
  $region13: #{lineage_detector_forward.1} parent=0 // pred_fallthru
    _
  // Predicated region
  $region14: #{lineage_detector_forward.1} parent=0 // pred_check
    _
  $region15: #{lineage_detector_forward.1} parent=0 // pred_check_branch
    %20 = sbr.rel (0) target = $region17
  $region16: #{lineage_detector_forward.1} parent=0 // pred_region
    _
  $region17: #{lineage_detector_forward.1} parent=0 // pred_fallthru
    _
  // Predicated region
  $region18: #{lineage_detector_forward.1} parent=0 // pred_check
    _
  $region19: #{lineage_detector_forward.1} parent=0 // pred_check_branch
    %22 = sbr.rel (0) target = $region21
  $region20: #{lineage_detector_forward.1} parent=0 // pred_region
    _
  $region21: #{lineage_detector_forward.1} parent=0 // pred_fallthru
    _
  // Predicated region
  $region22: #{lineage_detector_forward.1} parent=0 // pred_check
    _
  $region23: #{lineage_detector_forward.1} parent=0 // pred_check_branch
    %24 = sbr.rel (0) target = $region25
  $region24: #{lineage_detector_forward.1} parent=0 // pred_region
    _
  $region25: #{lineage_detector_forward.1} parent=0 // pred_fallthru
    _
  // Predicated region
  $region26: #{lineage_detector_forward.1} parent=0 // pred_check
    _
  $region27: #{lineage_detector_forward.1} parent=0 // pred_check_branch
    %26 = sbr.rel (0) target = $region29
  $region28: #{lineage_detector_forward.1} parent=0 // pred_region
    _
  $region29: #{lineage_detector_forward.1} parent=0 // pred_fallthru
    _
  // Predicated region
  $region30: #{lineage_detector_forward.1} parent=0 // pred_check
    _
  $region31: #{lineage_detector_forward.1} parent=0 // pred_check_branch
    %28 = sbr.rel (0) target = $region33
  $region32: #{lineage_detector_forward.1} parent=0 // pred_region
    _
  $region33: #{lineage_detector_forward.1} parent=0 // pred_fallthru
    _
  %s30 = scalar_lea.vmem [#allocation2], 987
  %31 = vst [vmem:[%s30] ss:$8 sm:$0xf] 1.0
  %32 = vst [vmem:[%s30] ss:$8 sm:$0xf0] 1.0
  %s33 = scalar_lea.vmem [#allocation2], 1051
  %34 = vst [vmem:[%s33] ss:$8 sm:$0xf] 1.0
  %35 = vst [vmem:[%s33] ss:$8 sm:$0xf0] 1.0
  %s36 = scalar_lea.vmem [#allocation2], 1115
  %37 = vst [vmem:[%s36] ss:$8 sm:$0xf] 1.0
  %38 = vst [vmem:[%s36] ss:$8 sm:$0xf0] 1.0
  %s39 = scalar_lea.vmem [#allocation2], 1179
  %40 = vst [vmem:[%s39] ss:$8 sm:$0xf] 1.0
  %41 = vst [vmem:[%s39] ss:$8 sm:$0xf0] 1.0
  %s42 = scalar_lea.vmem [#allocation2], 1243
  %43 = vst [vmem:[%s42] ss:$8 sm:$0xf] 1.0
  %44 = vst [vmem:[%s42] ss:$8 sm:$0xf0] 1.0
  %45 = vst [vmem:[#allocation2 + $0x3d8] sm:$0xf0] 0.0
  %46 = vst [vmem:[#allocation2 + $0x3e0] sm:$0xf0] 0.0
  %47 = vst [vmem:[#allocation2 + $0x3e8] sm:$0xf0] 0.0
  %48 = vst [vmem:[#allocation2 + $0x3f0] sm:$0xf0] 0.0
  %49 = vst [vmem:[#allocation2 + $0x3f8] sm:$0xf0] 0.0
  %50 = vst [vmem:[#allocation2 + $0x400] sm:$0xf0] 0.0
  %51 = vst [vmem:[#allocation2 + $0x408] sm:$0xf0] 0.0
  %52 = vst [vmem:[#allocation2 + $0x410] sm:$0xf0] 0.0
  %53 = vst [vmem:[#allocation2 + $0x418] sm:$0xf0] 0.0
  %54 = vst [vmem:[#allocation2 + $0x420] sm:$0xf0] 0.0
  %55 = vst [vmem:[#allocation2 + $0x428] sm:$0xf0] 0.0
  %56 = vst [vmem:[#allocation2 + $0x430] sm:$0xf0] 0.0
  %57 = vst [vmem:[#allocation2 + $0x438] sm:$0xf0] 0.0
  %58 = vst [vmem:[#allocation2 + $0x440] sm:$0xf0] 0.0
  %59 = vst [vmem:[#allocation2 + $0x448] sm:$0xf0] 0.0
  %60 = vst [vmem:[#allocation2 + $0x450] sm:$0xf0] 0.0
  %61 = vst [vmem:[#allocation2 + $0x458] sm:$0xf0] 0.0
  %62 = vst [vmem:[#allocation2 + $0x460] sm:$0xf0] 0.0
  %63 = vst [vmem:[#allocation2 + $0x468] sm:$0xf0] 0.0
  %64 = vst [vmem:[#allocation2 + $0x470] sm:$0xf0] 0.0
  %65 = vst [vmem:[#allocation2 + $0x478] sm:$0xf0] 0.0
  %66 = vst [vmem:[#allocation2 + $0x480] sm:$0xf0] 0.0
  %67 = vst [vmem:[#allocation2 + $0x488] sm:$0xf0] 0.0
  %68 = vst [vmem:[#allocation2 + $0x490] sm:$0xf0] 0.0
  %69 = vst [vmem:[#allocation2 + $0x498] sm:$0xf0] 0.0
  %70 = vst [vmem:[#allocation2 + $0x4a0] sm:$0xf0] 0.0
  %71 = vst [vmem:[#allocation2 + $0x4a8] sm:$0xf0] 0.0
  %72 = vst [vmem:[#allocation2 + $0x4b0] sm:$0xf0] 0.0
  %73 = vst [vmem:[#allocation2 + $0x4b8] sm:$0xf0] 0.0
  %74 = vst [vmem:[#allocation2 + $0x4c0] sm:$0xf0] 0.0
  %75 = vst [vmem:[#allocation2 + $0x4c8] sm:$0xf0] 0.0
  %76 = vst [vmem:[#allocation2 + $0x4d0] sm:$0xf0] 0.0
  %77 = vst [vmem:[#allocation2 + $0x4d8] sm:$0xf0] 0.0
  %78 = vst [vmem:[#allocation2 + $0x4e0] sm:$0xf0] 0.0
  %79 = vst [vmem:[#allocation2 + $0x4e8] sm:$0xf0] 0.0
  %80 = vst [vmem:[#allocation2 + $0x4f0] sm:$0xf0] 0.0
  %81 = vst [vmem:[#allocation2 + $0x4f8] sm:$0xf0] 0.0
  %82 = vst [vmem:[#allocation2 + $0x500] sm:$0xf0] 0.0
  %83 = vst [vmem:[#allocation2 + $0x508] sm:$0xf0] 0.0
  %84 = vst [vmem:[#allocation2 + $0x510] sm:$0xf0] 0.0
  %85 = vst [vmem:[#allocation2 + $0x140] sm:$0x7] 0.0
  %v86 = vld [vmem:[%s3] sm:$0x1f]
  %v87 = vld [vmem:[%s1] sm:$0x7]
  %v88 = vld [vmem:[%s0] ss:$2 sm:$0x1f]
  %s89 = scalar_lea.vmem %s0, 1
  %v90 = vld [vmem:[%s89] ss:$2 sm:$0x1f]
  %92 = vset.pattern.permute.xlu0 0
  %93 = vperm.xlu0 %92, %v87
  %v94 = vpop.permute.xlu0 %93
  %v97 = vperm.slane %v88, 0
  %v98 = vperm.slane %v88, 1
  %v99 = vperm.slane %v88, 2
  %v100 = vperm.slane %v88, 3
  %v101 = vperm.slane %v88, 4
  %v107 = vmul.f32 %v94, %v97
  %v108 = vmul.f32 %v94, %v98
  %v109 = vmul.f32 %v94, %v99
  %v110 = vmul.f32 %v94, %v100
  %v111 = vmul.f32 %v94, %v101
  %112 = vset.pattern.permute.xlu0 1
  %113 = vperm.xlu0 %112, %v87
  %v114 = vpop.permute.xlu0 %113
  %v117 = vperm.slane %v90, 0
  %v118 = vperm.slane %v90, 1
  %v119 = vperm.slane %v90, 2
  %v120 = vperm.slane %v90, 3
  %v121 = vperm.slane %v90, 4
  %v127 = vmul.f32 %v114, %v117
  %v128 = vmul.f32 %v114, %v118
  %v129 = vmul.f32 %v114, %v119
  %v130 = vmul.f32 %v114, %v120
  %v131 = vmul.f32 %v114, %v121
  %v132 = vadd.f32 %v107, %v127
  %v133 = vadd.f32 %v108, %v128
  %v134 = vadd.f32 %v109, %v129
  %v135 = vadd.f32 %v110, %v130
  %v136 = vadd.f32 %v111, %v131
  %v137 = vmax.f32 %v132, 0.0
  %v138 = vmax.f32 %v133, 0.0
  %v139 = vmax.f32 %v134, 0.0
  %v140 = vmax.f32 %v135, 0.0
  %v141 = vmax.f32 %v136, 0.0
  %142 = vst [vmem:[#allocation2] sm:$0x7] %v137
  %143 = vst [vmem:[#allocation2 + $0x8] sm:$0x7] %v138
  %144 = vst [vmem:[#allocation2 + $0x10] sm:$0x7] %v139
  %145 = vst [vmem:[#allocation2 + $0x18] sm:$0x7] %v140
  %146 = vst [vmem:[#allocation2 + $0x20] sm:$0x7] %v141
  %s147 = scalar_lea.vmem %s0, 10
  %v148 = vld [vmem:[%s147] ss:$2 sm:$0x1f]
  %s149 = scalar_lea.vmem %s0, 11
  %v150 = vld [vmem:[%s149] ss:$2 sm:$0x1f]
  %v152 = vperm.slane %v148, 0
  %v153 = vperm.slane %v148, 1
  %v154 = vperm.slane %v148, 2
  %v155 = vperm.slane %v148, 3
  %v156 = vperm.slane %v148, 4
  %v162 = vmul.f32 %v94, %v152
  %v163 = vmul.f32 %v94, %v153
  %v164 = vmul.f32 %v94, %v154
  %v165 = vmul.f32 %v94, %v155
  %v166 = vmul.f32 %v94, %v156
  %v168 = vperm.slane %v150, 0
  %v169 = vperm.slane %v150, 1
  %v170 = vperm.slane %v150, 2
  %v171 = vperm.slane %v150, 3
  %v172 = vperm.slane %v150, 4
  %v178 = vmul.f32 %v114, %v168
  %v179 = vmul.f32 %v114, %v169
  %v180 = vmul.f32 %v114, %v170
  %v181 = vmul.f32 %v114, %v171
  %v182 = vmul.f32 %v114, %v172
  %v183 = vadd.f32 %v162, %v178
  %v184 = vadd.f32 %v163, %v179
  %v185 = vadd.f32 %v164, %v180
  %v186 = vadd.f32 %v165, %v181
  %v187 = vadd.f32 %v166, %v182
  %v188 = vmax.f32 %v183, 0.0
  %v189 = vmax.f32 %v184, 0.0
  %v190 = vmax.f32 %v185, 0.0
  %v191 = vmax.f32 %v186, 0.0
  %v192 = vmax.f32 %v187, 0.0
  %193 = vst [vmem:[#allocation2 + $0x28] sm:$0x7] %v188
  %194 = vst [vmem:[#allocation2 + $0x30] sm:$0x7] %v189
  %195 = vst [vmem:[#allocation2 + $0x38] sm:$0x7] %v190
  %196 = vst [vmem:[#allocation2 + $0x40] sm:$0x7] %v191
  %197 = vst [vmem:[#allocation2 + $0x48] sm:$0x7] %v192
  %s198 = scalar_lea.vmem %s0, 20
  %v199 = vld [vmem:[%s198] ss:$2 sm:$0x1f]
  %s200 = scalar_lea.vmem %s0, 21
  %v201 = vld [vmem:[%s200] ss:$2 sm:$0x1f]
  %v203 = vperm.slane %v199, 0
  %v204 = vperm.slane %v199, 1
  %v205 = vperm.slane %v199, 2
  %v206 = vperm.slane %v199, 3
  %v207 = vperm.slane %v199, 4
  %v213 = vmul.f32 %v94, %v203
  %v214 = vmul.f32 %v94, %v204
  %v215 = vmul.f32 %v94, %v205
  %v216 = vmul.f32 %v94, %v206
  %v217 = vmul.f32 %v94, %v207
  %v219 = vperm.slane %v201, 0
  %v220 = vperm.slane %v201, 1
  %v221 = vperm.slane %v201, 2
  %v222 = vperm.slane %v201, 3
  %v223 = vperm.slane %v201, 4
  %v229 = vmul.f32 %v114, %v219
  %v230 = vmul.f32 %v114, %v220
  %v231 = vmul.f32 %v114, %v221
  %v232 = vmul.f32 %v114, %v222
  %v233 = vmul.f32 %v114, %v223
  %v234 = vadd.f32 %v213, %v229
  %v235 = vadd.f32 %v214, %v230
  %v236 = vadd.f32 %v215, %v231
  %v237 = vadd.f32 %v216, %v232
  %v238 = vadd.f32 %v217, %v233
  %v239 = vmax.f32 %v234, 0.0
  %v240 = vmax.f32 %v235, 0.0
  %v241 = vmax.f32 %v236, 0.0
  %v242 = vmax.f32 %v237, 0.0
  %v243 = vmax.f32 %v238, 0.0
  %244 = vst [vmem:[#allocation2 + $0x50] sm:$0x7] %v239
  %245 = vst [vmem:[#allocation2 + $0x58] sm:$0x7] %v240
  %246 = vst [vmem:[#allocation2 + $0x60] sm:$0x7] %v241
  %247 = vst [vmem:[#allocation2 + $0x68] sm:$0x7] %v242
  %248 = vst [vmem:[#allocation2 + $0x70] sm:$0x7] %v243
  %s249 = scalar_lea.vmem %s0, 30
  %v250 = vld [vmem:[%s249] ss:$2 sm:$0x1f]
  %s251 = scalar_lea.vmem %s0, 31
  %v252 = vld [vmem:[%s251] ss:$2 sm:$0x1f]
  %v254 = vperm.slane %v250, 0
  %v255 = vperm.slane %v250, 1
  %v256 = vperm.slane %v250, 2
  %v257 = vperm.slane %v250, 3
  %v258 = vperm.slane %v250, 4
  %v264 = vmul.f32 %v94, %v254
  %v265 = vmul.f32 %v94, %v255
  %v266 = vmul.f32 %v94, %v256
  %v267 = vmul.f32 %v94, %v257
  %v268 = vmul.f32 %v94, %v258
  %v270 = vperm.slane %v252, 0
  %v271 = vperm.slane %v252, 1
  %v272 = vperm.slane %v252, 2
  %v273 = vperm.slane %v252, 3
  %v274 = vperm.slane %v252, 4
  %v280 = vmul.f32 %v114, %v270
  %v281 = vmul.f32 %v114, %v271
  %v282 = vmul.f32 %v114, %v272
  %v283 = vmul.f32 %v114, %v273
  %v284 = vmul.f32 %v114, %v274
  %v285 = vadd.f32 %v264, %v280
  %v286 = vadd.f32 %v265, %v281
  %v287 = vadd.f32 %v266, %v282
  %v288 = vadd.f32 %v267, %v283
  %v289 = vadd.f32 %v268, %v284
  %v290 = vmax.f32 %v285, 0.0
  %v291 = vmax.f32 %v286, 0.0
  %v292 = vmax.f32 %v287, 0.0
  %v293 = vmax.f32 %v288, 0.0
  %v294 = vmax.f32 %v289, 0.0
  %295 = vst [vmem:[#allocation2 + $0x78] sm:$0x7] %v290
  %296 = vst [vmem:[#allocation2 + $0x80] sm:$0x7] %v291
  %297 = vst [vmem:[#allocation2 + $0x88] sm:$0x7] %v292
  %298 = vst [vmem:[#allocation2 + $0x90] sm:$0x7] %v293
  %299 = vst [vmem:[#allocation2 + $0x98] sm:$0x7] %v294
  %s300 = scalar_lea.vmem %s0, 40
  %v301 = vld [vmem:[%s300] ss:$2 sm:$0x1f]
  %s302 = scalar_lea.vmem %s0, 41
  %v303 = vld [vmem:[%s302] ss:$2 sm:$0x1f]
  %v305 = vperm.slane %v301, 0
  %v306 = vperm.slane %v301, 1
  %v307 = vperm.slane %v301, 2
  %v308 = vperm.slane %v301, 3
  %v309 = vperm.slane %v301, 4
  %v315 = vmul.f32 %v94, %v305
  %v316 = vmul.f32 %v94, %v306
  %v317 = vmul.f32 %v94, %v307
  %v318 = vmul.f32 %v94, %v308
  %v319 = vmul.f32 %v94, %v309
  %v321 = vperm.slane %v303, 0
  %v322 = vperm.slane %v303, 1
  %v323 = vperm.slane %v303, 2
  %v324 = vperm.slane %v303, 3
  %v325 = vperm.slane %v303, 4
  %v331 = vmul.f32 %v114, %v321
  %v332 = vmul.f32 %v114, %v322
  %v333 = vmul.f32 %v114, %v323
  %v334 = vmul.f32 %v114, %v324
  %v335 = vmul.f32 %v114, %v325
  %v336 = vadd.f32 %v315, %v331
  %v337 = vadd.f32 %v316, %v332
  %v338 = vadd.f32 %v317, %v333
  %v339 = vadd.f32 %v318, %v334
  %v340 = vadd.f32 %v319, %v335
  %v341 = vmax.f32 %v336, 0.0
  %v342 = vmax.f32 %v337, 0.0
  %v343 = vmax.f32 %v338, 0.0
  %v344 = vmax.f32 %v339, 0.0
  %v345 = vmax.f32 %v340, 0.0
  %346 = vst [vmem:[#allocation2 + $0xa0] sm:$0x7] %v341
  %347 = vst [vmem:[#allocation2 + $0xa8] sm:$0x7] %v342
  %348 = vst [vmem:[#allocation2 + $0xb0] sm:$0x7] %v343
  %349 = vst [vmem:[#allocation2 + $0xb8] sm:$0x7] %v344
  %350 = vst [vmem:[#allocation2 + $0xc0] sm:$0x7] %v345
  %s351 = scalar_lea.vmem %s0, 50
  %v352 = vld [vmem:[%s351] ss:$2 sm:$0x1f]
  %s353 = scalar_lea.vmem %s0, 51
  %v354 = vld [vmem:[%s353] ss:$2 sm:$0x1f]
  %v356 = vperm.slane %v352, 0
  %v357 = vperm.slane %v352, 1
  %v358 = vperm.slane %v352, 2
  %v359 = vperm.slane %v352, 3
  %v360 = vperm.slane %v352, 4
  %v366 = vmul.f32 %v94, %v356
  %v367 = vmul.f32 %v94, %v357
  %v368 = vmul.f32 %v94, %v358
  %v369 = vmul.f32 %v94, %v359
  %v370 = vmul.f32 %v94, %v360
  %v372 = vperm.slane %v354, 0
  %v373 = vperm.slane %v354, 1
  %v374 = vperm.slane %v354, 2
  %v375 = vperm.slane %v354, 3
  %v376 = vperm.slane %v354, 4
  %v382 = vmul.f32 %v114, %v372
  %v383 = vmul.f32 %v114, %v373
  %v384 = vmul.f32 %v114, %v374
  %v385 = vmul.f32 %v114, %v375
  %v386 = vmul.f32 %v114, %v376
  %v387 = vadd.f32 %v366, %v382
  %v388 = vadd.f32 %v367, %v383
  %v389 = vadd.f32 %v368, %v384
  %v390 = vadd.f32 %v369, %v385
  %v391 = vadd.f32 %v370, %v386
  %v392 = vmax.f32 %v387, 0.0
  %v393 = vmax.f32 %v388, 0.0
  %v394 = vmax.f32 %v389, 0.0
  %v395 = vmax.f32 %v390, 0.0
  %v396 = vmax.f32 %v391, 0.0
  %397 = vst [vmem:[#allocation2 + $0xc8] sm:$0x7] %v392
  %398 = vst [vmem:[#allocation2 + $0xd0] sm:$0x7] %v393
  %399 = vst [vmem:[#allocation2 + $0xd8] sm:$0x7] %v394
  %400 = vst [vmem:[#allocation2 + $0xe0] sm:$0x7] %v395
  %401 = vst [vmem:[#allocation2 + $0xe8] sm:$0x7] %v396
  %s402 = scalar_lea.vmem %s0, 60
  %v403 = vld [vmem:[%s402] ss:$2 sm:$0x1f]
  %s404 = scalar_lea.vmem %s0, 61
  %v405 = vld [vmem:[%s404] ss:$2 sm:$0x1f]
  %v407 = vperm.slane %v403, 0
  %v408 = vperm.slane %v403, 1
  %v409 = vperm.slane %v403, 2
  %v410 = vperm.slane %v403, 3
  %v411 = vperm.slane %v403, 4
  %v417 = vmul.f32 %v94, %v407
  %v418 = vmul.f32 %v94, %v408
  %v419 = vmul.f32 %v94, %v409
  %v420 = vmul.f32 %v94, %v410
  %v421 = vmul.f32 %v94, %v411
  %v423 = vperm.slane %v405, 0
  %v424 = vperm.slane %v405, 1
  %v425 = vperm.slane %v405, 2
  %v426 = vperm.slane %v405, 3
  %v427 = vperm.slane %v405, 4
  %v433 = vmul.f32 %v114, %v423
  %v434 = vmul.f32 %v114, %v424
  %v435 = vmul.f32 %v114, %v425
  %v436 = vmul.f32 %v114, %v426
  %v437 = vmul.f32 %v114, %v427
  %v438 = vadd.f32 %v417, %v433
  %v439 = vadd.f32 %v418, %v434
  %v440 = vadd.f32 %v419, %v435
  %v441 = vadd.f32 %v420, %v436
  %v442 = vadd.f32 %v421, %v437
  %v443 = vmax.f32 %v438, 0.0
  %v444 = vmax.f32 %v439, 0.0
  %v445 = vmax.f32 %v440, 0.0
  %v446 = vmax.f32 %v441, 0.0
  %v447 = vmax.f32 %v442, 0.0
  %448 = vst [vmem:[#allocation2 + $0xf0] sm:$0x7] %v443
  %449 = vst [vmem:[#allocation2 + $0xf8] sm:$0x7] %v444
  %450 = vst [vmem:[#allocation2 + $0x100] sm:$0x7] %v445
  %451 = vst [vmem:[#allocation2 + $0x108] sm:$0x7] %v446
  %452 = vst [vmem:[#allocation2 + $0x110] sm:$0x7] %v447
  %s453 = scalar_lea.vmem %s0, 70
  %v454 = vld [vmem:[%s453] ss:$2 sm:$0x1f]
  %s455 = scalar_lea.vmem %s0, 71
  %v456 = vld [vmem:[%s455] ss:$2 sm:$0x1f]
  %v458 = vperm.slane %v454, 0
  %v459 = vperm.slane %v454, 1
  %v460 = vperm.slane %v454, 2
  %v461 = vperm.slane %v454, 3
  %v462 = vperm.slane %v454, 4
  %v468 = vmul.f32 %v94, %v458
  %v469 = vmul.f32 %v94, %v459
  %v470 = vmul.f32 %v94, %v460
  %v471 = vmul.f32 %v94, %v461
  %v472 = vmul.f32 %v94, %v462
  %v474 = vperm.slane %v456, 0
  %v475 = vperm.slane %v456, 1
  %v476 = vperm.slane %v456, 2
  %v477 = vperm.slane %v456, 3
  %v478 = vperm.slane %v456, 4
  %v484 = vmul.f32 %v114, %v474
  %v485 = vmul.f32 %v114, %v475
  %v486 = vmul.f32 %v114, %v476
  %v487 = vmul.f32 %v114, %v477
  %v488 = vmul.f32 %v114, %v478
  %v489 = vadd.f32 %v468, %v484
  %v490 = vadd.f32 %v469, %v485
  %v491 = vadd.f32 %v470, %v486
  %v492 = vadd.f32 %v471, %v487
  %v493 = vadd.f32 %v472, %v488
  %v494 = vmax.f32 %v489, 0.0
  %v495 = vmax.f32 %v490, 0.0
  %v496 = vmax.f32 %v491, 0.0
  %v497 = vmax.f32 %v492, 0.0
  %v498 = vmax.f32 %v493, 0.0
  %499 = vst [vmem:[#allocation2 + $0x118] sm:$0x7] %v494
  %500 = vst [vmem:[#allocation2 + $0x120] sm:$0x7] %v495
  %501 = vst [vmem:[#allocation2 + $0x128] sm:$0x7] %v496
  %502 = vst [vmem:[#allocation2 + $0x130] sm:$0x7] %v497
  %503 = vst [vmem:[#allocation2 + $0x138] sm:$0x7] %v498
  %v504 = vld [vmem:[#allocation2] sm:$0x7]
  %v505 = vld [vmem:[#allocation2 + $0x8] sm:$0x7]
  %v506 = vld [vmem:[#allocation2 + $0x10] sm:$0x7]
  %v507 = vld [vmem:[#allocation2 + $0x18] sm:$0x7]
  %v508 = vld [vmem:[#allocation2 + $0x20] sm:$0x7]
  %v509 = vld [vmem:[#allocation2 + $0x28] sm:$0x7]
  %v510 = vld [vmem:[#allocation2 + $0x30] sm:$0x7]
  %v511 = vld [vmem:[#allocation2 + $0x38] sm:$0x7]
  %v512 = vld [vmem:[#allocation2 + $0x40] sm:$0x7]
  %v513 = vld [vmem:[#allocation2 + $0x48] sm:$0x7]
  %v514 = vld [vmem:[#allocation2 + $0x50] sm:$0x7]
  %v515 = vld [vmem:[#allocation2 + $0x58] sm:$0x7]
  %v516 = vld [vmem:[#allocation2 + $0x60] sm:$0x7]
  %v517 = vld [vmem:[#allocation2 + $0x68] sm:$0x7]
  %v518 = vld [vmem:[#allocation2 + $0x70] sm:$0x7]
  %v519 = vld [vmem:[#allocation2 + $0x78] sm:$0x7]
  %v520 = vld [vmem:[#allocation2 + $0x80] sm:$0x7]
  %v521 = vld [vmem:[#allocation2 + $0x88] sm:$0x7]
  %v522 = vld [vmem:[#allocation2 + $0x90] sm:$0x7]
  %v523 = vld [vmem:[#allocation2 + $0x98] sm:$0x7]
  %v524 = vld [vmem:[#allocation2 + $0xa0] sm:$0x7]
  %v525 = vld [vmem:[#allocation2 + $0xa8] sm:$0x7]
  %v526 = vld [vmem:[#allocation2 + $0xb0] sm:$0x7]
  %v527 = vld [vmem:[#allocation2 + $0xb8] sm:$0x7]
  %v528 = vld [vmem:[#allocation2 + $0xc0] sm:$0x7]
  %v529 = vld [vmem:[#allocation2 + $0xc8] sm:$0x7]
  %v530 = vld [vmem:[#allocation2 + $0xd0] sm:$0x7]
  %v531 = vld [vmem:[#allocation2 + $0xd8] sm:$0x7]
  %v532 = vld [vmem:[#allocation2 + $0xe0] sm:$0x7]
  %v533 = vld [vmem:[#allocation2 + $0xe8] sm:$0x7]
  %v534 = vld [vmem:[#allocation2 + $0xf0] sm:$0x7]
  %v535 = vld [vmem:[#allocation2 + $0xf8] sm:$0x7]
  %v536 = vld [vmem:[#allocation2 + $0x100] sm:$0x7]
  %v537 = vld [vmem:[#allocation2 + $0x108] sm:$0x7]
  %v538 = vld [vmem:[#allocation2 + $0x110] sm:$0x7]
  %v539 = vld [vmem:[#allocation2 + $0x118] sm:$0x7]
  %v540 = vld [vmem:[#allocation2 + $0x120] sm:$0x7]
  %v541 = vld [vmem:[#allocation2 + $0x128] sm:$0x7]
  %v542 = vld [vmem:[#allocation2 + $0x130] sm:$0x7]
  %v543 = vld [vmem:[#allocation2 + $0x138] sm:$0x7]
  %v544 = vld [vmem:[#allocation2 + $0x140] sm:$0x7]
  %v586 = vrot.slane %v504, 5
  %v587 = vrot.slane %v505, 5
  %v588 = vrot.slane %v506, 5
  %v589 = vrot.slane %v507, 5
  %v590 = vrot.slane %v508, 5
  %v591 = vrot.slane %v509, 5
  %v592 = vrot.slane %v510, 5
  %v593 = vrot.slane %v511, 5
  %v594 = vrot.slane %v512, 5
  %v595 = vrot.slane %v513, 5
  %v596 = vrot.slane %v514, 5
  %v597 = vrot.slane %v515, 5
  %v598 = vrot.slane %v516, 5
  %v599 = vrot.slane %v517, 5
  %v600 = vrot.slane %v518, 5
  %v601 = vrot.slane %v519, 5
  %v602 = vrot.slane %v520, 5
  %v603 = vrot.slane %v521, 5
  %v604 = vrot.slane %v522, 5
  %v605 = vrot.slane %v523, 5
  %v606 = vrot.slane %v524, 5
  %v607 = vrot.slane %v525, 5
  %v608 = vrot.slane %v526, 5
  %v609 = vrot.slane %v527, 5
  %v610 = vrot.slane %v528, 5
  %v611 = vrot.slane %v529, 5
  %v612 = vrot.slane %v530, 5
  %v613 = vrot.slane %v531, 5
  %v614 = vrot.slane %v532, 5
  %v615 = vrot.slane %v533, 5
  %v616 = vrot.slane %v534, 5
  %v617 = vrot.slane %v535, 5
  %v618 = vrot.slane %v536, 5
  %v619 = vrot.slane %v537, 5
  %v620 = vrot.slane %v538, 5
  %v621 = vrot.slane %v539, 5
  %v622 = vrot.slane %v540, 5
  %v623 = vrot.slane %v541, 5
  %v624 = vrot.slane %v542, 5
  %v625 = vrot.slane %v543, 5
  %v626 = vrot.slane %v544, 5
  %627 = vrot.lane.b32.xlu0 %v586, 127
  %v628 = vpop.permute.xlu0 %627
  %629 = vrot.lane.b32.xlu0 %v587, 127
  %v630 = vpop.permute.xlu0 %629
  %631 = vrot.lane.b32.xlu0 %v588, 127
  %v632 = vpop.permute.xlu0 %631
  %633 = vrot.lane.b32.xlu0 %v589, 127
  %v634 = vpop.permute.xlu0 %633
  %635 = vrot.lane.b32.xlu0 %v590, 127
  %v636 = vpop.permute.xlu0 %635
  %637 = vrot.lane.b32.xlu0 %v591, 127
  %v638 = vpop.permute.xlu0 %637
  %639 = vrot.lane.b32.xlu0 %v592, 127
  %v640 = vpop.permute.xlu0 %639
  %641 = vrot.lane.b32.xlu0 %v593, 127
  %v642 = vpop.permute.xlu0 %641
  %643 = vrot.lane.b32.xlu0 %v594, 127
  %v644 = vpop.permute.xlu0 %643
  %645 = vrot.lane.b32.xlu0 %v595, 127
  %v646 = vpop.permute.xlu0 %645
  %647 = vrot.lane.b32.xlu0 %v596, 127
  %v648 = vpop.permute.xlu0 %647
  %649 = vrot.lane.b32.xlu0 %v597, 127
  %v650 = vpop.permute.xlu0 %649
  %651 = vrot.lane.b32.xlu0 %v598, 127
  %v652 = vpop.permute.xlu0 %651
  %653 = vrot.lane.b32.xlu0 %v599, 127
  %v654 = vpop.permute.xlu0 %653
  %655 = vrot.lane.b32.xlu0 %v600, 127
  %v656 = vpop.permute.xlu0 %655
  %657 = vrot.lane.b32.xlu0 %v601, 127
  %v658 = vpop.permute.xlu0 %657
  %659 = vrot.lane.b32.xlu0 %v602, 127
  %v660 = vpop.permute.xlu0 %659
  %661 = vrot.lane.b32.xlu0 %v603, 127
  %v662 = vpop.permute.xlu0 %661
  %663 = vrot.lane.b32.xlu0 %v604, 127
  %v664 = vpop.permute.xlu0 %663
  %665 = vrot.lane.b32.xlu0 %v605, 127
  %v666 = vpop.permute.xlu0 %665
  %667 = vrot.lane.b32.xlu0 %v606, 127
  %v668 = vpop.permute.xlu0 %667
  %669 = vrot.lane.b32.xlu0 %v607, 127
  %v670 = vpop.permute.xlu0 %669
  %671 = vrot.lane.b32.xlu0 %v608, 127
  %v672 = vpop.permute.xlu0 %671
  %673 = vrot.lane.b32.xlu0 %v609, 127
  %v674 = vpop.permute.xlu0 %673
  %675 = vrot.lane.b32.xlu0 %v610, 127
  %v676 = vpop.permute.xlu0 %675
  %677 = vrot.lane.b32.xlu0 %v611, 127
  %v678 = vpop.permute.xlu0 %677
  %679 = vrot.lane.b32.xlu0 %v612, 127
  %v680 = vpop.permute.xlu0 %679
  %681 = vrot.lane.b32.xlu0 %v613, 127
  %v682 = vpop.permute.xlu0 %681
  %683 = vrot.lane.b32.xlu0 %v614, 127
  %v684 = vpop.permute.xlu0 %683
  %685 = vrot.lane.b32.xlu0 %v615, 127
  %v686 = vpop.permute.xlu0 %685
  %687 = vrot.lane.b32.xlu0 %v616, 127
  %v688 = vpop.permute.xlu0 %687
  %689 = vrot.lane.b32.xlu0 %v617, 127
  %v690 = vpop.permute.xlu0 %689
  %691 = vrot.lane.b32.xlu0 %v618, 127
  %v692 = vpop.permute.xlu0 %691
  %693 = vrot.lane.b32.xlu0 %v619, 127
  %v694 = vpop.permute.xlu0 %693
  %695 = vrot.lane.b32.xlu0 %v620, 127
  %v696 = vpop.permute.xlu0 %695
  %697 = vrot.lane.b32.xlu0 %v621, 127
  %v698 = vpop.permute.xlu0 %697
  %699 = vrot.lane.b32.xlu0 %v622, 127
  %v700 = vpop.permute.xlu0 %699
  %701 = vrot.lane.b32.xlu0 %v623, 127
  %v702 = vpop.permute.xlu0 %701
  %703 = vrot.lane.b32.xlu0 %v624, 127
  %v704 = vpop.permute.xlu0 %703
  %705 = vrot.lane.b32.xlu0 %v625, 127
  %v706 = vpop.permute.xlu0 %705
  %707 = vrot.lane.b32.xlu0 %v626, 127
  %v708 = vpop.permute.xlu0 %707
  %vm709 = vcmask 1039360
  %v710 = vsel %vm709, %v628, %v630
  %v711 = vsel %vm709, %v630, %v632
  %v712 = vsel %vm709, %v632, %v634
  %v713 = vsel %vm709, %v634, %v636
  %v714 = vsel %vm709, %v636, %v638
  %v715 = vsel %vm709, %v638, %v640
  %v716 = vsel %vm709, %v640, %v642
  %v717 = vsel %vm709, %v642, %v644
  %v718 = vsel %vm709, %v644, %v646
  %v719 = vsel %vm709, %v646, %v648
  %v720 = vsel %vm709, %v648, %v650
  %v721 = vsel %vm709, %v650, %v652
  %v722 = vsel %vm709, %v652, %v654
  %v723 = vsel %vm709, %v654, %v656
  %v724 = vsel %vm709, %v656, %v658
  %v725 = vsel %vm709, %v658, %v660
  %v726 = vsel %vm709, %v660, %v662
  %v727 = vsel %vm709, %v662, %v664
  %v728 = vsel %vm709, %v664, %v666
  %v729 = vsel %vm709, %v666, %v668
  %v730 = vsel %vm709, %v668, %v670
  %v731 = vsel %vm709, %v670, %v672
  %v732 = vsel %vm709, %v672, %v674
  %v733 = vsel %vm709, %v674, %v676
  %v734 = vsel %vm709, %v676, %v678
  %v735 = vsel %vm709, %v678, %v680
  %v736 = vsel %vm709, %v680, %v682
  %v737 = vsel %vm709, %v682, %v684
  %v738 = vsel %vm709, %v684, %v686
  %v739 = vsel %vm709, %v686, %v688
  %v740 = vsel %vm709, %v688, %v690
  %v741 = vsel %vm709, %v690, %v692
  %v742 = vsel %vm709, %v692, %v694
  %v743 = vsel %vm709, %v694, %v696
  %v744 = vsel %vm709, %v696, %v698
  %v745 = vsel %vm709, %v698, %v700
  %v746 = vsel %vm709, %v700, %v702
  %v747 = vsel %vm709, %v702, %v704
  %v748 = vsel %vm709, %v704, %v706
  %v749 = vsel %vm709, %v706, %v708
  %790 = vst [vmem:[#allocation2] sm:$0x38] %v710
  %791 = vst [vmem:[#allocation2 + $0x8] sm:$0x38] %v711
  %792 = vst [vmem:[#allocation2 + $0x10] sm:$0x38] %v712
  %793 = vst [vmem:[#allocation2 + $0x18] sm:$0x38] %v713
  %794 = vst [vmem:[#allocation2 + $0x20] sm:$0x38] %v714
  %795 = vst [vmem:[#allocation2 + $0x28] sm:$0x38] %v715
  %796 = vst [vmem:[#allocation2 + $0x30] sm:$0x38] %v716
  %797 = vst [vmem:[#allocation2 + $0x38] sm:$0x38] %v717
  %798 = vst [vmem:[#allocation2 + $0x40] sm:$0x38] %v718
  %799 = vst [vmem:[#allocation2 + $0x48] sm:$0x38] %v719
  %800 = vst [vmem:[#allocation2 + $0x50] sm:$0x38] %v720
  %801 = vst [vmem:[#allocation2 + $0x58] sm:$0x38] %v721
  %802 = vst [vmem:[#allocation2 + $0x60] sm:$0x38] %v722
  %803 = vst [vmem:[#allocation2 + $0x68] sm:$0x38] %v723
  %804 = vst [vmem:[#allocation2 + $0x70] sm:$0x38] %v724
  %805 = vst [vmem:[#allocation2 + $0x78] sm:$0x38] %v725
  %806 = vst [vmem:[#allocation2 + $0x80] sm:$0x38] %v726
  %807 = vst [vmem:[#allocation2 + $0x88] sm:$0x38] %v727
  %808 = vst [vmem:[#allocation2 + $0x90] sm:$0x38] %v728
  %809 = vst [vmem:[#allocation2 + $0x98] sm:$0x38] %v729
  %810 = vst [vmem:[#allocation2 + $0xa0] sm:$0x38] %v730
  %811 = vst [vmem:[#allocation2 + $0xa8] sm:$0x38] %v731
  %812 = vst [vmem:[#allocation2 + $0xb0] sm:$0x38] %v732
  %813 = vst [vmem:[#allocation2 + $0xb8] sm:$0x38] %v733
  %814 = vst [vmem:[#allocation2 + $0xc0] sm:$0x38] %v734
  %815 = vst [vmem:[#allocation2 + $0xc8] sm:$0x38] %v735
  %816 = vst [vmem:[#allocation2 + $0xd0] sm:$0x38] %v736
  %817 = vst [vmem:[#allocation2 + $0xd8] sm:$0x38] %v737
  %818 = vst [vmem:[#allocation2 + $0xe0] sm:$0x38] %v738
  %819 = vst [vmem:[#allocation2 + $0xe8] sm:$0x38] %v739
  %820 = vst [vmem:[#allocation2 + $0xf0] sm:$0x38] %v740
  %821 = vst [vmem:[#allocation2 + $0xf8] sm:$0x38] %v741
  %822 = vst [vmem:[#allocation2 + $0x100] sm:$0x38] %v742
  %823 = vst [vmem:[#allocation2 + $0x108] sm:$0x38] %v743
  %824 = vst [vmem:[#allocation2 + $0x110] sm:$0x38] %v744
  %825 = vst [vmem:[#allocation2 + $0x118] sm:$0x38] %v745
  %826 = vst [vmem:[#allocation2 + $0x120] sm:$0x38] %v746
  %827 = vst [vmem:[#allocation2 + $0x128] sm:$0x38] %v747
  %828 = vst [vmem:[#allocation2 + $0x130] sm:$0x38] %v748
  %829 = vst [vmem:[#allocation2 + $0x138] sm:$0x38] %v749
  %v830 = vld [vmem:[#allocation2] sm:$0x7]
  %v831 = vld [vmem:[#allocation2 + $0x8] sm:$0x7]
  %v832 = vld [vmem:[#allocation2 + $0x10] sm:$0x7]
  %v833 = vld [vmem:[#allocation2 + $0x18] sm:$0x7]
  %v834 = vld [vmem:[#allocation2 + $0x20] sm:$0x7]
  %v835 = vld [vmem:[#allocation2 + $0x28] sm:$0x7]
  %v836 = vld [vmem:[#allocation2 + $0x30] sm:$0x7]
  %v837 = vld [vmem:[#allocation2 + $0x38] sm:$0x7]
  %v838 = vld [vmem:[#allocation2 + $0x40] sm:$0x7]
  %v839 = vld [vmem:[#allocation2 + $0x48] sm:$0x7]
  %v840 = vld [vmem:[#allocation2 + $0x50] sm:$0x7]
  %v841 = vld [vmem:[#allocation2 + $0x58] sm:$0x7]
  %v842 = vld [vmem:[#allocation2 + $0x60] sm:$0x7]
  %v843 = vld [vmem:[#allocation2 + $0x68] sm:$0x7]
  %v844 = vld [vmem:[#allocation2 + $0x70] sm:$0x7]
  %v845 = vld [vmem:[#allocation2 + $0x78] sm:$0x7]
  %v846 = vld [vmem:[#allocation2 + $0x80] sm:$0x7]
  %v847 = vld [vmem:[#allocation2 + $0x88] sm:$0x7]
  %v848 = vld [vmem:[#allocation2 + $0x90] sm:$0x7]
  %v849 = vld [vmem:[#allocation2 + $0x98] sm:$0x7]
  %v850 = vld [vmem:[#allocation2 + $0xa0] sm:$0x7]
  %v851 = vld [vmem:[#allocation2 + $0xa8] sm:$0x7]
  %v852 = vld [vmem:[#allocation2 + $0xb0] sm:$0x7]
  %v853 = vld [vmem:[#allocation2 + $0xb8] sm:$0x7]
  %v854 = vld [vmem:[#allocation2 + $0xc0] sm:$0x7]
  %v855 = vld [vmem:[#allocation2 + $0xc8] sm:$0x7]
  %v856 = vld [vmem:[#allocation2 + $0xd0] sm:$0x7]
  %v857 = vld [vmem:[#allocation2 + $0xd8] sm:$0x7]
  %v858 = vld [vmem:[#allocation2 + $0xe0] sm:$0x7]
  %v859 = vld [vmem:[#allocation2 + $0xe8] sm:$0x7]
  %v860 = vld [vmem:[#allocation2 + $0xf0] sm:$0x7]
  %v861 = vld [vmem:[#allocation2 + $0xf8] sm:$0x7]
  %v862 = vld [vmem:[#allocation2 + $0x100] sm:$0x7]
  %v863 = vld [vmem:[#allocation2 + $0x108] sm:$0x7]
  %v864 = vld [vmem:[#allocation2 + $0x110] sm:$0x7]
  %v865 = vld [vmem:[#allocation2 + $0x118] sm:$0x7]
  %v866 = vld [vmem:[#allocation2 + $0x120] sm:$0x7]
  %v867 = vld [vmem:[#allocation2 + $0x128] sm:$0x7]
  %v868 = vld [vmem:[#allocation2 + $0x130] sm:$0x7]
  %v869 = vld [vmem:[#allocation2 + $0x138] sm:$0x7]
  %v870 = vld [vmem:[#allocation2 + $0x140] sm:$0x7]
  %v912 = vrot.slane %v830, 2
  %v913 = vrot.slane %v831, 2
  %v914 = vrot.slane %v832, 2
  %v915 = vrot.slane %v833, 2
  %v916 = vrot.slane %v834, 2
  %v917 = vrot.slane %v835, 2
  %v918 = vrot.slane %v836, 2
  %v919 = vrot.slane %v837, 2
  %v920 = vrot.slane %v838, 2
  %v921 = vrot.slane %v839, 2
  %v922 = vrot.slane %v840, 2
  %v923 = vrot.slane %v841, 2
  %v924 = vrot.slane %v842, 2
  %v925 = vrot.slane %v843, 2
  %v926 = vrot.slane %v844, 2
  %v927 = vrot.slane %v845, 2
  %v928 = vrot.slane %v846, 2
  %v929 = vrot.slane %v847, 2
  %v930 = vrot.slane %v848, 2
  %v931 = vrot.slane %v849, 2
  %v932 = vrot.slane %v850, 2
  %v933 = vrot.slane %v851, 2
  %v934 = vrot.slane %v852, 2
  %v935 = vrot.slane %v853, 2
  %v936 = vrot.slane %v854, 2
  %v937 = vrot.slane %v855, 2
  %v938 = vrot.slane %v856, 2
  %v939 = vrot.slane %v857, 2
  %v940 = vrot.slane %v858, 2
  %v941 = vrot.slane %v859, 2
  %v942 = vrot.slane %v860, 2
  %v943 = vrot.slane %v861, 2
  %v944 = vrot.slane %v862, 2
  %v945 = vrot.slane %v863, 2
  %v946 = vrot.slane %v864, 2
  %v947 = vrot.slane %v865, 2
  %v948 = vrot.slane %v866, 2
  %v949 = vrot.slane %v867, 2
  %v950 = vrot.slane %v868, 2
  %v951 = vrot.slane %v869, 2
  %v952 = vrot.slane %v870, 2
  %953 = vrot.lane.b32.xlu0 %v912, 126
  %v954 = vpop.permute.xlu0 %953
  %955 = vrot.lane.b32.xlu0 %v913, 126
  %v956 = vpop.permute.xlu0 %955
  %957 = vrot.lane.b32.xlu0 %v914, 126
  %v958 = vpop.permute.xlu0 %957
  %959 = vrot.lane.b32.xlu0 %v915, 126
  %v960 = vpop.permute.xlu0 %959
  %961 = vrot.lane.b32.xlu0 %v916, 126
  %v962 = vpop.permute.xlu0 %961
  %963 = vrot.lane.b32.xlu0 %v917, 126
  %v964 = vpop.permute.xlu0 %963
  %965 = vrot.lane.b32.xlu0 %v918, 126
  %v966 = vpop.permute.xlu0 %965
  %967 = vrot.lane.b32.xlu0 %v919, 126
  %v968 = vpop.permute.xlu0 %967
  %969 = vrot.lane.b32.xlu0 %v920, 126
  %v970 = vpop.permute.xlu0 %969
  %971 = vrot.lane.b32.xlu0 %v921, 126
  %v972 = vpop.permute.xlu0 %971
  %973 = vrot.lane.b32.xlu0 %v922, 126
  %v974 = vpop.permute.xlu0 %973
  %975 = vrot.lane.b32.xlu0 %v923, 126
  %v976 = vpop.permute.xlu0 %975
  %977 = vrot.lane.b32.xlu0 %v924, 126
  %v978 = vpop.permute.xlu0 %977
  %979 = vrot.lane.b32.xlu0 %v925, 126
  %v980 = vpop.permute.xlu0 %979
  %981 = vrot.lane.b32.xlu0 %v926, 126
  %v982 = vpop.permute.xlu0 %981
  %983 = vrot.lane.b32.xlu0 %v927, 126
  %v984 = vpop.permute.xlu0 %983
  %985 = vrot.lane.b32.xlu0 %v928, 126
  %v986 = vpop.permute.xlu0 %985
  %987 = vrot.lane.b32.xlu0 %v929, 126
  %v988 = vpop.permute.xlu0 %987
  %989 = vrot.lane.b32.xlu0 %v930, 126
  %v990 = vpop.permute.xlu0 %989
  %991 = vrot.lane.b32.xlu0 %v931, 126
  %v992 = vpop.permute.xlu0 %991
  %993 = vrot.lane.b32.xlu0 %v932, 126
  %v994 = vpop.permute.xlu0 %993
  %995 = vrot.lane.b32.xlu0 %v933, 126
  %v996 = vpop.permute.xlu0 %995
  %997 = vrot.lane.b32.xlu0 %v934, 126
  %v998 = vpop.permute.xlu0 %997
  %999 = vrot.lane.b32.xlu0 %v935, 126
  %v1000 = vpop.permute.xlu0 %999
  %1001 = vrot.lane.b32.xlu0 %v936, 126
  %v1002 = vpop.permute.xlu0 %1001
  %1003 = vrot.lane.b32.xlu0 %v937, 126
  %v1004 = vpop.permute.xlu0 %1003
  %1005 = vrot.lane.b32.xlu0 %v938, 126
  %v1006 = vpop.permute.xlu0 %1005
  %1007 = vrot.lane.b32.xlu0 %v939, 126
  %v1008 = vpop.permute.xlu0 %1007
  %1009 = vrot.lane.b32.xlu0 %v940, 126
  %v1010 = vpop.permute.xlu0 %1009
  %1011 = vrot.lane.b32.xlu0 %v941, 126
  %v1012 = vpop.permute.xlu0 %1011
  %1013 = vrot.lane.b32.xlu0 %v942, 126
  %v1014 = vpop.permute.xlu0 %1013
  %1015 = vrot.lane.b32.xlu0 %v943, 126
  %v1016 = vpop.permute.xlu0 %1015
  %1017 = vrot.lane.b32.xlu0 %v944, 126
  %v1018 = vpop.permute.xlu0 %1017
  %1019 = vrot.lane.b32.xlu0 %v945, 126
  %v1020 = vpop.permute.xlu0 %1019
  %1021 = vrot.lane.b32.xlu0 %v946, 126
  %v1022 = vpop.permute.xlu0 %1021
  %1023 = vrot.lane.b32.xlu0 %v947, 126
  %v1024 = vpop.permute.xlu0 %1023
  %1025 = vrot.lane.b32.xlu0 %v948, 126
  %v1026 = vpop.permute.xlu0 %1025
  %1027 = vrot.lane.b32.xlu0 %v949, 126
  %v1028 = vpop.permute.xlu0 %1027
  %1029 = vrot.lane.b32.xlu0 %v950, 126
  %v1030 = vpop.permute.xlu0 %1029
  %1031 = vrot.lane.b32.xlu0 %v951, 126
  %v1032 = vpop.permute.xlu0 %1031
  %1033 = vrot.lane.b32.xlu0 %v952, 126
  %v1034 = vpop.permute.xlu0 %1033
  %vm1035 = vcmask 1031168
  %v1036 = vsel %vm1035, %v954, %v956
  %v1037 = vsel %vm1035, %v956, %v958
  %v1038 = vsel %vm1035, %v958, %v960
  %v1039 = vsel %vm1035, %v960, %v962
  %v1040 = vsel %vm1035, %v962, %v964
  %v1041 = vsel %vm1035, %v964, %v966
  %v1042 = vsel %vm1035, %v966, %v968
  %v1043 = vsel %vm1035, %v968, %v970
  %v1044 = vsel %vm1035, %v970, %v972
  %v1045 = vsel %vm1035, %v972, %v974
  %v1046 = vsel %vm1035, %v974, %v976
  %v1047 = vsel %vm1035, %v976, %v978
  %v1048 = vsel %vm1035, %v978, %v980
  %v1049 = vsel %vm1035, %v980, %v982
  %v1050 = vsel %vm1035, %v982, %v984
  %v1051 = vsel %vm1035, %v984, %v986
  %v1052 = vsel %vm1035, %v986, %v988
  %v1053 = vsel %vm1035, %v988, %v990
  %v1054 = vsel %vm1035, %v990, %v992
  %v1055 = vsel %vm1035, %v992, %v994
  %v1056 = vsel %vm1035, %v994, %v996
  %v1057 = vsel %vm1035, %v996, %v998
  %v1058 = vsel %vm1035, %v998, %v1000
  %v1059 = vsel %vm1035, %v1000, %v1002
  %v1060 = vsel %vm1035, %v1002, %v1004
  %v1061 = vsel %vm1035, %v1004, %v1006
  %v1062 = vsel %vm1035, %v1006, %v1008
  %v1063 = vsel %vm1035, %v1008, %v1010
  %v1064 = vsel %vm1035, %v1010, %v1012
  %v1065 = vsel %vm1035, %v1012, %v1014
  %v1066 = vsel %vm1035, %v1014, %v1016
  %v1067 = vsel %vm1035, %v1016, %v1018
  %v1068 = vsel %vm1035, %v1018, %v1020
  %v1069 = vsel %vm1035, %v1020, %v1022
  %v1070 = vsel %vm1035, %v1022, %v1024
  %v1071 = vsel %vm1035, %v1024, %v1026
  %v1072 = vsel %vm1035, %v1026, %v1028
  %v1073 = vsel %vm1035, %v1028, %v1030
  %v1074 = vsel %vm1035, %v1030, %v1032
  %v1075 = vsel %vm1035, %v1032, %v1034
  %1116 = vst [vmem:[#allocation2] sm:$0xc0] %v1036
  %1117 = vst [vmem:[#allocation2 + $0x8] sm:$0xc0] %v1037
  %1118 = vst [vmem:[#allocation2 + $0x10] sm:$0xc0] %v1038
  %1119 = vst [vmem:[#allocation2 + $0x18] sm:$0xc0] %v1039
  %1120 = vst [vmem:[#allocation2 + $0x20] sm:$0xc0] %v1040
  %1121 = vst [vmem:[#allocation2 + $0x28] sm:$0xc0] %v1041
  %1122 = vst [vmem:[#allocation2 + $0x30] sm:$0xc0] %v1042
  %1123 = vst [vmem:[#allocation2 + $0x38] sm:$0xc0] %v1043
  %1124 = vst [vmem:[#allocation2 + $0x40] sm:$0xc0] %v1044
  %1125 = vst [vmem:[#allocation2 + $0x48] sm:$0xc0] %v1045
  %1126 = vst [vmem:[#allocation2 + $0x50] sm:$0xc0] %v1046
  %1127 = vst [vmem:[#allocation2 + $0x58] sm:$0xc0] %v1047
  %1128 = vst [vmem:[#allocation2 + $0x60] sm:$0xc0] %v1048
  %1129 = vst [vmem:[#allocation2 + $0x68] sm:$0xc0] %v1049
  %1130 = vst [vmem:[#allocation2 + $0x70] sm:$0xc0] %v1050
  %1131 = vst [vmem:[#allocation2 + $0x78] sm:$0xc0] %v1051
  %1132 = vst [vmem:[#allocation2 + $0x80] sm:$0xc0] %v1052
  %1133 = vst [vmem:[#allocation2 + $0x88] sm:$0xc0] %v1053
  %1134 = vst [vmem:[#allocation2 + $0x90] sm:$0xc0] %v1054
  %1135 = vst [vmem:[#allocation2 + $0x98] sm:$0xc0] %v1055
  %1136 = vst [vmem:[#allocation2 + $0xa0] sm:$0xc0] %v1056
  %1137 = vst [vmem:[#allocation2 + $0xa8] sm:$0xc0] %v1057
  %1138 = vst [vmem:[#allocation2 + $0xb0] sm:$0xc0] %v1058
  %1139 = vst [vmem:[#allocation2 + $0xb8] sm:$0xc0] %v1059
  %1140 = vst [vmem:[#allocation2 + $0xc0] sm:$0xc0] %v1060
  %1141 = vst [vmem:[#allocation2 + $0xc8] sm:$0xc0] %v1061
  %1142 = vst [vmem:[#allocation2 + $0xd0] sm:$0xc0] %v1062
  %1143 = vst [vmem:[#allocation2 + $0xd8] sm:$0xc0] %v1063
  %1144 = vst [vmem:[#allocation2 + $0xe0] sm:$0xc0] %v1064
  %1145 = vst [vmem:[#allocation2 + $0xe8] sm:$0xc0] %v1065
  %1146 = vst [vmem:[#allocation2 + $0xf0] sm:$0xc0] %v1066
  %1147 = vst [vmem:[#allocation2 + $0xf8] sm:$0xc0] %v1067
  %1148 = vst [vmem:[#allocation2 + $0x100] sm:$0xc0] %v1068
  %1149 = vst [vmem:[#allocation2 + $0x108] sm:$0xc0] %v1069
  %1150 = vst [vmem:[#allocation2 + $0x110] sm:$0xc0] %v1070
  %1151 = vst [vmem:[#allocation2 + $0x118] sm:$0xc0] %v1071
  %1152 = vst [vmem:[#allocation2 + $0x120] sm:$0xc0] %v1072
  %1153 = vst [vmem:[#allocation2 + $0x128] sm:$0xc0] %v1073
  %1154 = vst [vmem:[#allocation2 + $0x130] sm:$0xc0] %v1074
  %1155 = vst [vmem:[#allocation2 + $0x138] sm:$0xc0] %v1075
  %1156 = vst [vmem:[#allocation2 + $0x148] sm:$0x1] %v1036
  %1157 = vst [vmem:[#allocation2 + $0x150] sm:$0x1] %v1037
  %1158 = vst [vmem:[#allocation2 + $0x158] sm:$0x1] %v1038
  %1159 = vst [vmem:[#allocation2 + $0x160] sm:$0x1] %v1039
  %1160 = vst [vmem:[#allocation2 + $0x168] sm:$0x1] %v1040
  %1161 = vst [vmem:[#allocation2 + $0x170] sm:$0x1] %v1041
  %1162 = vst [vmem:[#allocation2 + $0x178] sm:$0x1] %v1042
  %1163 = vst [vmem:[#allocation2 + $0x180] sm:$0x1] %v1043
  %1164 = vst [vmem:[#allocation2 + $0x188] sm:$0x1] %v1044
  %1165 = vst [vmem:[#allocation2 + $0x190] sm:$0x1] %v1045
  %1166 = vst [vmem:[#allocation2 + $0x198] sm:$0x1] %v1046
  %1167 = vst [vmem:[#allocation2 + $0x1a0] sm:$0x1] %v1047
  %1168 = vst [vmem:[#allocation2 + $0x1a8] sm:$0x1] %v1048
  %1169 = vst [vmem:[#allocation2 + $0x1b0] sm:$0x1] %v1049
  %1170 = vst [vmem:[#allocation2 + $0x1b8] sm:$0x1] %v1050
  %1171 = vst [vmem:[#allocation2 + $0x1c0] sm:$0x1] %v1051
  %1172 = vst [vmem:[#allocation2 + $0x1c8] sm:$0x1] %v1052
  %1173 = vst [vmem:[#allocation2 + $0x1d0] sm:$0x1] %v1053
  %1174 = vst [vmem:[#allocation2 + $0x1d8] sm:$0x1] %v1054
  %1175 = vst [vmem:[#allocation2 + $0x1e0] sm:$0x1] %v1055
  %1176 = vst [vmem:[#allocation2 + $0x1e8] sm:$0x1] %v1056
  %1177 = vst [vmem:[#allocation2 + $0x1f0] sm:$0x1] %v1057
  %1178 = vst [vmem:[#allocation2 + $0x1f8] sm:$0x1] %v1058
  %1179 = vst [vmem:[#allocation2 + $0x200] sm:$0x1] %v1059
  %1180 = vst [vmem:[#allocation2 + $0x208] sm:$0x1] %v1060
  %1181 = vst [vmem:[#allocation2 + $0x210] sm:$0x1] %v1061
  %1182 = vst [vmem:[#allocation2 + $0x218] sm:$0x1] %v1062
  %1183 = vst [vmem:[#allocation2 + $0x220] sm:$0x1] %v1063
  %1184 = vst [vmem:[#allocation2 + $0x228] sm:$0x1] %v1064
  %1185 = vst [vmem:[#allocation2 + $0x230] sm:$0x1] %v1065
  %1186 = vst [vmem:[#allocation2 + $0x238] sm:$0x1] %v1066
  %1187 = vst [vmem:[#allocation2 + $0x240] sm:$0x1] %v1067
  %1188 = vst [vmem:[#allocation2 + $0x248] sm:$0x1] %v1068
  %1189 = vst [vmem:[#allocation2 + $0x250] sm:$0x1] %v1069
  %1190 = vst [vmem:[#allocation2 + $0x258] sm:$0x1] %v1070
  %1191 = vst [vmem:[#allocation2 + $0x260] sm:$0x1] %v1071
  %1192 = vst [vmem:[#allocation2 + $0x268] sm:$0x1] %v1072
  %1193 = vst [vmem:[#allocation2 + $0x270] sm:$0x1] %v1073
  %1194 = vst [vmem:[#allocation2 + $0x278] sm:$0x1] %v1074
  %1195 = vst [vmem:[#allocation2 + $0x280] sm:$0x1] %v1075
  %v1196 = vld [vmem:[#allocation2] sm:$0x7]
  %v1197 = vld [vmem:[#allocation2 + $0x8] sm:$0x7]
  %v1198 = vld [vmem:[#allocation2 + $0x10] sm:$0x7]
  %v1199 = vld [vmem:[#allocation2 + $0x18] sm:$0x7]
  %v1200 = vld [vmem:[#allocation2 + $0x20] sm:$0x7]
  %v1201 = vld [vmem:[#allocation2 + $0x28] sm:$0x7]
  %v1202 = vld [vmem:[#allocation2 + $0x30] sm:$0x7]
  %v1203 = vld [vmem:[#allocation2 + $0x38] sm:$0x7]
  %v1204 = vld [vmem:[#allocation2 + $0x40] sm:$0x7]
  %v1205 = vld [vmem:[#allocation2 + $0x48] sm:$0x7]
  %v1206 = vld [vmem:[#allocation2 + $0x50] sm:$0x7]
  %v1207 = vld [vmem:[#allocation2 + $0x58] sm:$0x7]
  %v1208 = vld [vmem:[#allocation2 + $0x60] sm:$0x7]
  %v1209 = vld [vmem:[#allocation2 + $0x68] sm:$0x7]
  %v1210 = vld [vmem:[#allocation2 + $0x70] sm:$0x7]
  %v1211 = vld [vmem:[#allocation2 + $0x78] sm:$0x7]
  %v1212 = vld [vmem:[#allocation2 + $0x80] sm:$0x7]
  %v1213 = vld [vmem:[#allocation2 + $0x88] sm:$0x7]
  %v1214 = vld [vmem:[#allocation2 + $0x90] sm:$0x7]
  %v1215 = vld [vmem:[#allocation2 + $0x98] sm:$0x7]
  %v1216 = vld [vmem:[#allocation2 + $0xa0] sm:$0x7]
  %v1217 = vld [vmem:[#allocation2 + $0xa8] sm:$0x7]
  %v1218 = vld [vmem:[#allocation2 + $0xb0] sm:$0x7]
  %v1219 = vld [vmem:[#allocation2 + $0xb8] sm:$0x7]
  %v1220 = vld [vmem:[#allocation2 + $0xc0] sm:$0x7]
  %v1221 = vld [vmem:[#allocation2 + $0xc8] sm:$0x7]
  %v1222 = vld [vmem:[#allocation2 + $0xd0] sm:$0x7]
  %v1223 = vld [vmem:[#allocation2 + $0xd8] sm:$0x7]
  %v1224 = vld [vmem:[#allocation2 + $0xe0] sm:$0x7]
  %v1225 = vld [vmem:[#allocation2 + $0xe8] sm:$0x7]
  %v1226 = vld [vmem:[#allocation2 + $0xf0] sm:$0x7]
  %v1227 = vld [vmem:[#allocation2 + $0xf8] sm:$0x7]
  %v1228 = vld [vmem:[#allocation2 + $0x100] sm:$0x7]
  %v1229 = vld [vmem:[#allocation2 + $0x108] sm:$0x7]
  %v1230 = vld [vmem:[#allocation2 + $0x110] sm:$0x7]
  %v1231 = vld [vmem:[#allocation2 + $0x118] sm:$0x7]
  %v1232 = vld [vmem:[#allocation2 + $0x120] sm:$0x7]
  %v1233 = vld [vmem:[#allocation2 + $0x128] sm:$0x7]
  %v1234 = vld [vmem:[#allocation2 + $0x130] sm:$0x7]
  %v1235 = vld [vmem:[#allocation2 + $0x138] sm:$0x7]
  %v1236 = vld [vmem:[#allocation2 + $0x140] sm:$0x7]
  %v1278 = vrot.slane %v1196, 7
  %v1279 = vrot.slane %v1197, 7
  %v1280 = vrot.slane %v1198, 7
  %v1281 = vrot.slane %v1199, 7
  %v1282 = vrot.slane %v1200, 7
  %v1283 = vrot.slane %v1201, 7
  %v1284 = vrot.slane %v1202, 7
  %v1285 = vrot.slane %v1203, 7
  %v1286 = vrot.slane %v1204, 7
  %v1287 = vrot.slane %v1205, 7
  %v1288 = vrot.slane %v1206, 7
  %v1289 = vrot.slane %v1207, 7
  %v1290 = vrot.slane %v1208, 7
  %v1291 = vrot.slane %v1209, 7
  %v1292 = vrot.slane %v1210, 7
  %v1293 = vrot.slane %v1211, 7
  %v1294 = vrot.slane %v1212, 7
  %v1295 = vrot.slane %v1213, 7
  %v1296 = vrot.slane %v1214, 7
  %v1297 = vrot.slane %v1215, 7
  %v1298 = vrot.slane %v1216, 7
  %v1299 = vrot.slane %v1217, 7
  %v1300 = vrot.slane %v1218, 7
  %v1301 = vrot.slane %v1219, 7
  %v1302 = vrot.slane %v1220, 7
  %v1303 = vrot.slane %v1221, 7
  %v1304 = vrot.slane %v1222, 7
  %v1305 = vrot.slane %v1223, 7
  %v1306 = vrot.slane %v1224, 7
  %v1307 = vrot.slane %v1225, 7
  %v1308 = vrot.slane %v1226, 7
  %v1309 = vrot.slane %v1227, 7
  %v1310 = vrot.slane %v1228, 7
  %v1311 = vrot.slane %v1229, 7
  %v1312 = vrot.slane %v1230, 7
  %v1313 = vrot.slane %v1231, 7
  %v1314 = vrot.slane %v1232, 7
  %v1315 = vrot.slane %v1233, 7
  %v1316 = vrot.slane %v1234, 7
  %v1317 = vrot.slane %v1235, 7
  %v1318 = vrot.slane %v1236, 7
  %1319 = vrot.lane.b32.xlu0 %v1278, 104
  %v1320 = vpop.permute.xlu0 %1319
  %1321 = vrot.lane.b32.xlu0 %v1279, 104
  %v1322 = vpop.permute.xlu0 %1321
  %1323 = vrot.lane.b32.xlu0 %v1280, 104
  %v1324 = vpop.permute.xlu0 %1323
  %1325 = vrot.lane.b32.xlu0 %v1281, 104
  %v1326 = vpop.permute.xlu0 %1325
  %1327 = vrot.lane.b32.xlu0 %v1282, 104
  %v1328 = vpop.permute.xlu0 %1327
  %1329 = vrot.lane.b32.xlu0 %v1283, 104
  %v1330 = vpop.permute.xlu0 %1329
  %1331 = vrot.lane.b32.xlu0 %v1284, 104
  %v1332 = vpop.permute.xlu0 %1331
  %1333 = vrot.lane.b32.xlu0 %v1285, 104
  %v1334 = vpop.permute.xlu0 %1333
  %1335 = vrot.lane.b32.xlu0 %v1286, 104
  %v1336 = vpop.permute.xlu0 %1335
  %1337 = vrot.lane.b32.xlu0 %v1287, 104
  %v1338 = vpop.permute.xlu0 %1337
  %1339 = vrot.lane.b32.xlu0 %v1288, 104
  %v1340 = vpop.permute.xlu0 %1339
  %1341 = vrot.lane.b32.xlu0 %v1289, 104
  %v1342 = vpop.permute.xlu0 %1341
  %1343 = vrot.lane.b32.xlu0 %v1290, 104
  %v1344 = vpop.permute.xlu0 %1343
  %1345 = vrot.lane.b32.xlu0 %v1291, 104
  %v1346 = vpop.permute.xlu0 %1345
  %1347 = vrot.lane.b32.xlu0 %v1292, 104
  %v1348 = vpop.permute.xlu0 %1347
  %1349 = vrot.lane.b32.xlu0 %v1293, 104
  %v1350 = vpop.permute.xlu0 %1349
  %1351 = vrot.lane.b32.xlu0 %v1294, 104
  %v1352 = vpop.permute.xlu0 %1351
  %1353 = vrot.lane.b32.xlu0 %v1295, 104
  %v1354 = vpop.permute.xlu0 %1353
  %1355 = vrot.lane.b32.xlu0 %v1296, 104
  %v1356 = vpop.permute.xlu0 %1355
  %1357 = vrot.lane.b32.xlu0 %v1297, 104
  %v1358 = vpop.permute.xlu0 %1357
  %1359 = vrot.lane.b32.xlu0 %v1298, 104
  %v1360 = vpop.permute.xlu0 %1359
  %1361 = vrot.lane.b32.xlu0 %v1299, 104
  %v1362 = vpop.permute.xlu0 %1361
  %1363 = vrot.lane.b32.xlu0 %v1300, 104
  %v1364 = vpop.permute.xlu0 %1363
  %1365 = vrot.lane.b32.xlu0 %v1301, 104
  %v1366 = vpop.permute.xlu0 %1365
  %1367 = vrot.lane.b32.xlu0 %v1302, 104
  %v1368 = vpop.permute.xlu0 %1367
  %1369 = vrot.lane.b32.xlu0 %v1303, 104
  %v1370 = vpop.permute.xlu0 %1369
  %1371 = vrot.lane.b32.xlu0 %v1304, 104
  %v1372 = vpop.permute.xlu0 %1371
  %1373 = vrot.lane.b32.xlu0 %v1305, 104
  %v1374 = vpop.permute.xlu0 %1373
  %1375 = vrot.lane.b32.xlu0 %v1306, 104
  %v1376 = vpop.permute.xlu0 %1375
  %1377 = vrot.lane.b32.xlu0 %v1307, 104
  %v1378 = vpop.permute.xlu0 %1377
  %1379 = vrot.lane.b32.xlu0 %v1308, 104
  %v1380 = vpop.permute.xlu0 %1379
  %1381 = vrot.lane.b32.xlu0 %v1309, 104
  %v1382 = vpop.permute.xlu0 %1381
  %1383 = vrot.lane.b32.xlu0 %v1310, 104
  %v1384 = vpop.permute.xlu0 %1383
  %1385 = vrot.lane.b32.xlu0 %v1311, 104
  %v1386 = vpop.permute.xlu0 %1385
  %1387 = vrot.lane.b32.xlu0 %v1312, 104
  %v1388 = vpop.permute.xlu0 %1387
  %1389 = vrot.lane.b32.xlu0 %v1313, 104
  %v1390 = vpop.permute.xlu0 %1389
  %1391 = vrot.lane.b32.xlu0 %v1314, 104
  %v1392 = vpop.permute.xlu0 %1391
  %1393 = vrot.lane.b32.xlu0 %v1315, 104
  %v1394 = vpop.permute.xlu0 %1393
  %1395 = vrot.lane.b32.xlu0 %v1316, 104
  %v1396 = vpop.permute.xlu0 %1395
  %1397 = vrot.lane.b32.xlu0 %v1317, 104
  %v1398 = vpop.permute.xlu0 %1397
  %1399 = vrot.lane.b32.xlu0 %v1318, 104
  %v1400 = vpop.permute.xlu0 %1399
  %vm1401 = vcmask 850944
  %v1402 = vsel %vm1401, %v1320, %v1322
  %v1403 = vsel %vm1401, %v1322, %v1324
  %v1404 = vsel %vm1401, %v1324, %v1326
  %v1405 = vsel %vm1401, %v1326, %v1328
  %v1406 = vsel %vm1401, %v1328, %v1330
  %v1407 = vsel %vm1401, %v1330, %v1332
  %v1408 = vsel %vm1401, %v1332, %v1334
  %v1409 = vsel %vm1401, %v1334, %v1336
  %v1410 = vsel %vm1401, %v1336, %v1338
  %v1411 = vsel %vm1401, %v1338, %v1340
  %v1412 = vsel %vm1401, %v1340, %v1342
  %v1413 = vsel %vm1401, %v1342, %v1344
  %v1414 = vsel %vm1401, %v1344, %v1346
  %v1415 = vsel %vm1401, %v1346, %v1348
  %v1416 = vsel %vm1401, %v1348, %v1350
  %v1417 = vsel %vm1401, %v1350, %v1352
  %v1418 = vsel %vm1401, %v1352, %v1354
  %v1419 = vsel %vm1401, %v1354, %v1356
  %v1420 = vsel %vm1401, %v1356, %v1358
  %v1421 = vsel %vm1401, %v1358, %v1360
  %v1422 = vsel %vm1401, %v1360, %v1362
  %v1423 = vsel %vm1401, %v1362, %v1364
  %v1424 = vsel %vm1401, %v1364, %v1366
  %v1425 = vsel %vm1401, %v1366, %v1368
  %v1426 = vsel %vm1401, %v1368, %v1370
  %v1427 = vsel %vm1401, %v1370, %v1372
  %v1428 = vsel %vm1401, %v1372, %v1374
  %v1429 = vsel %vm1401, %v1374, %v1376
  %v1430 = vsel %vm1401, %v1376, %v1378
  %v1431 = vsel %vm1401, %v1378, %v1380
  %v1432 = vsel %vm1401, %v1380, %v1382
  %v1433 = vsel %vm1401, %v1382, %v1384
  %v1434 = vsel %vm1401, %v1384, %v1386
  %v1435 = vsel %vm1401, %v1386, %v1388
  %v1436 = vsel %vm1401, %v1388, %v1390
  %v1437 = vsel %vm1401, %v1390, %v1392
  %v1438 = vsel %vm1401, %v1392, %v1394
  %v1439 = vsel %vm1401, %v1394, %v1396
  %v1440 = vsel %vm1401, %v1396, %v1398
  %v1441 = vsel %vm1401, %v1398, %v1400
  %1482 = vst [vmem:[#allocation2 + $0x148] sm:$0xe] %v1402
  %1483 = vst [vmem:[#allocation2 + $0x150] sm:$0xe] %v1403
  %1484 = vst [vmem:[#allocation2 + $0x158] sm:$0xe] %v1404
  %1485 = vst [vmem:[#allocation2 + $0x160] sm:$0xe] %v1405
  %1486 = vst [vmem:[#allocation2 + $0x168] sm:$0xe] %v1406
  %1487 = vst [vmem:[#allocation2 + $0x170] sm:$0xe] %v1407
  %1488 = vst [vmem:[#allocation2 + $0x178] sm:$0xe] %v1408
  %1489 = vst [vmem:[#allocation2 + $0x180] sm:$0xe] %v1409
  %1490 = vst [vmem:[#allocation2 + $0x188] sm:$0xe] %v1410
  %1491 = vst [vmem:[#allocation2 + $0x190] sm:$0xe] %v1411
  %1492 = vst [vmem:[#allocation2 + $0x198] sm:$0xe] %v1412
  %1493 = vst [vmem:[#allocation2 + $0x1a0] sm:$0xe] %v1413
  %1494 = vst [vmem:[#allocation2 + $0x1a8] sm:$0xe] %v1414
  %1495 = vst [vmem:[#allocation2 + $0x1b0] sm:$0xe] %v1415
  %1496 = vst [vmem:[#allocation2 + $0x1b8] sm:$0xe] %v1416
  %1497 = vst [vmem:[#allocation2 + $0x1c0] sm:$0xe] %v1417
  %1498 = vst [vmem:[#allocation2 + $0x1c8] sm:$0xe] %v1418
  %1499 = vst [vmem:[#allocation2 + $0x1d0] sm:$0xe] %v1419
  %1500 = vst [vmem:[#allocation2 + $0x1d8] sm:$0xe] %v1420
  %1501 = vst [vmem:[#allocation2 + $0x1e0] sm:$0xe] %v1421
  %1502 = vst [vmem:[#allocation2 + $0x1e8] sm:$0xe] %v1422
  %1503 = vst [vmem:[#allocation2 + $0x1f0] sm:$0xe] %v1423
  %1504 = vst [vmem:[#allocation2 + $0x1f8] sm:$0xe] %v1424
  %1505 = vst [vmem:[#allocation2 + $0x200] sm:$0xe] %v1425
  %1506 = vst [vmem:[#allocation2 + $0x208] sm:$0xe] %v1426
  %1507 = vst [vmem:[#allocation2 + $0x210] sm:$0xe] %v1427
  %1508 = vst [vmem:[#allocation2 + $0x218] sm:$0xe] %v1428
  %1509 = vst [vmem:[#allocation2 + $0x220] sm:$0xe] %v1429
  %1510 = vst [vmem:[#allocation2 + $0x228] sm:$0xe] %v1430
  %1511 = vst [vmem:[#allocation2 + $0x230] sm:$0xe] %v1431
  %1512 = vst [vmem:[#allocation2 + $0x238] sm:$0xe] %v1432
  %1513 = vst [vmem:[#allocation2 + $0x240] sm:$0xe] %v1433
  %1514 = vst [vmem:[#allocation2 + $0x248] sm:$0xe] %v1434
  %1515 = vst [vmem:[#allocation2 + $0x250] sm:$0xe] %v1435
  %1516 = vst [vmem:[#allocation2 + $0x258] sm:$0xe] %v1436
  %1517 = vst [vmem:[#allocation2 + $0x260] sm:$0xe] %v1437
  %1518 = vst [vmem:[#allocation2 + $0x268] sm:$0xe] %v1438
  %1519 = vst [vmem:[#allocation2 + $0x270] sm:$0xe] %v1439
  %1520 = vst [vmem:[#allocation2 + $0x278] sm:$0xe] %v1440
  %1521 = vst [vmem:[#allocation2 + $0x280] sm:$0xe] %v1441
  %v1522 = vld [vmem:[#allocation2] sm:$0x7]
  %v1523 = vld [vmem:[#allocation2 + $0x8] sm:$0x7]
  %v1524 = vld [vmem:[#allocation2 + $0x10] sm:$0x7]
  %v1525 = vld [vmem:[#allocation2 + $0x18] sm:$0x7]
  %v1526 = vld [vmem:[#allocation2 + $0x20] sm:$0x7]
  %v1527 = vld [vmem:[#allocation2 + $0x28] sm:$0x7]
  %v1528 = vld [vmem:[#allocation2 + $0x30] sm:$0x7]
  %v1529 = vld [vmem:[#allocation2 + $0x38] sm:$0x7]
  %v1530 = vld [vmem:[#allocation2 + $0x40] sm:$0x7]
  %v1531 = vld [vmem:[#allocation2 + $0x48] sm:$0x7]
  %v1532 = vld [vmem:[#allocation2 + $0x50] sm:$0x7]
  %v1533 = vld [vmem:[#allocation2 + $0x58] sm:$0x7]
  %v1534 = vld [vmem:[#allocation2 + $0x60] sm:$0x7]
  %v1535 = vld [vmem:[#allocation2 + $0x68] sm:$0x7]
  %v1536 = vld [vmem:[#allocation2 + $0x70] sm:$0x7]
  %v1537 = vld [vmem:[#allocation2 + $0x78] sm:$0x7]
  %v1538 = vld [vmem:[#allocation2 + $0x80] sm:$0x7]
  %v1539 = vld [vmem:[#allocation2 + $0x88] sm:$0x7]
  %v1540 = vld [vmem:[#allocation2 + $0x90] sm:$0x7]
  %v1541 = vld [vmem:[#allocation2 + $0x98] sm:$0x7]
  %v1542 = vld [vmem:[#allocation2 + $0xa0] sm:$0x7]
  %v1543 = vld [vmem:[#allocation2 + $0xa8] sm:$0x7]
  %v1544 = vld [vmem:[#allocation2 + $0xb0] sm:$0x7]
  %v1545 = vld [vmem:[#allocation2 + $0xb8] sm:$0x7]
  %v1546 = vld [vmem:[#allocation2 + $0xc0] sm:$0x7]
  %v1547 = vld [vmem:[#allocation2 + $0xc8] sm:$0x7]
  %v1548 = vld [vmem:[#allocation2 + $0xd0] sm:$0x7]
  %v1549 = vld [vmem:[#allocation2 + $0xd8] sm:$0x7]
  %v1550 = vld [vmem:[#allocation2 + $0xe0] sm:$0x7]
  %v1551 = vld [vmem:[#allocation2 + $0xe8] sm:$0x7]
  %v1552 = vld [vmem:[#allocation2 + $0xf0] sm:$0x7]
  %v1553 = vld [vmem:[#allocation2 + $0xf8] sm:$0x7]
  %v1554 = vld [vmem:[#allocation2 + $0x100] sm:$0x7]
  %v1555 = vld [vmem:[#allocation2 + $0x108] sm:$0x7]
  %v1556 = vld [vmem:[#allocation2 + $0x110] sm:$0x7]
  %v1557 = vld [vmem:[#allocation2 + $0x118] sm:$0x7]
  %v1558 = vld [vmem:[#allocation2 + $0x120] sm:$0x7]
  %v1559 = vld [vmem:[#allocation2 + $0x128] sm:$0x7]
  %v1560 = vld [vmem:[#allocation2 + $0x130] sm:$0x7]
  %v1561 = vld [vmem:[#allocation2 + $0x138] sm:$0x7]
  %v1562 = vld [vmem:[#allocation2 + $0x140] sm:$0x7]
  %v1604 = vrot.slane %v1522, 4
  %v1605 = vrot.slane %v1523, 4
  %v1606 = vrot.slane %v1524, 4
  %v1607 = vrot.slane %v1525, 4
  %v1608 = vrot.slane %v1526, 4
  %v1609 = vrot.slane %v1527, 4
  %v1610 = vrot.slane %v1528, 4
  %v1611 = vrot.slane %v1529, 4
  %v1612 = vrot.slane %v1530, 4
  %v1613 = vrot.slane %v1531, 4
  %v1614 = vrot.slane %v1532, 4
  %v1615 = vrot.slane %v1533, 4
  %v1616 = vrot.slane %v1534, 4
  %v1617 = vrot.slane %v1535, 4
  %v1618 = vrot.slane %v1536, 4
  %v1619 = vrot.slane %v1537, 4
  %v1620 = vrot.slane %v1538, 4
  %v1621 = vrot.slane %v1539, 4
  %v1622 = vrot.slane %v1540, 4
  %v1623 = vrot.slane %v1541, 4
  %v1624 = vrot.slane %v1542, 4
  %v1625 = vrot.slane %v1543, 4
  %v1626 = vrot.slane %v1544, 4
  %v1627 = vrot.slane %v1545, 4
  %v1628 = vrot.slane %v1546, 4
  %v1629 = vrot.slane %v1547, 4
  %v1630 = vrot.slane %v1548, 4
  %v1631 = vrot.slane %v1549, 4
  %v1632 = vrot.slane %v1550, 4
  %v1633 = vrot.slane %v1551, 4
  %v1634 = vrot.slane %v1552, 4
  %v1635 = vrot.slane %v1553, 4
  %v1636 = vrot.slane %v1554, 4
  %v1637 = vrot.slane %v1555, 4
  %v1638 = vrot.slane %v1556, 4
  %v1639 = vrot.slane %v1557, 4
  %v1640 = vrot.slane %v1558, 4
  %v1641 = vrot.slane %v1559, 4
  %v1642 = vrot.slane %v1560, 4
  %v1643 = vrot.slane %v1561, 4
  %v1644 = vrot.slane %v1562, 4
  %1645 = vrot.lane.b32.xlu0 %v1604, 103
  %v1646 = vpop.permute.xlu0 %1645
  %1647 = vrot.lane.b32.xlu0 %v1605, 103
  %v1648 = vpop.permute.xlu0 %1647
  %1649 = vrot.lane.b32.xlu0 %v1606, 103
  %v1650 = vpop.permute.xlu0 %1649
  %1651 = vrot.lane.b32.xlu0 %v1607, 103
  %v1652 = vpop.permute.xlu0 %1651
  %1653 = vrot.lane.b32.xlu0 %v1608, 103
  %v1654 = vpop.permute.xlu0 %1653
  %1655 = vrot.lane.b32.xlu0 %v1609, 103
  %v1656 = vpop.permute.xlu0 %1655
  %1657 = vrot.lane.b32.xlu0 %v1610, 103
  %v1658 = vpop.permute.xlu0 %1657
  %1659 = vrot.lane.b32.xlu0 %v1611, 103
  %v1660 = vpop.permute.xlu0 %1659
  %1661 = vrot.lane.b32.xlu0 %v1612, 103
  %v1662 = vpop.permute.xlu0 %1661
  %1663 = vrot.lane.b32.xlu0 %v1613, 103
  %v1664 = vpop.permute.xlu0 %1663
  %1665 = vrot.lane.b32.xlu0 %v1614, 103
  %v1666 = vpop.permute.xlu0 %1665
  %1667 = vrot.lane.b32.xlu0 %v1615, 103
  %v1668 = vpop.permute.xlu0 %1667
  %1669 = vrot.lane.b32.xlu0 %v1616, 103
  %v1670 = vpop.permute.xlu0 %1669
  %1671 = vrot.lane.b32.xlu0 %v1617, 103
  %v1672 = vpop.permute.xlu0 %1671
  %1673 = vrot.lane.b32.xlu0 %v1618, 103
  %v1674 = vpop.permute.xlu0 %1673
  %1675 = vrot.lane.b32.xlu0 %v1619, 103
  %v1676 = vpop.permute.xlu0 %1675
  %1677 = vrot.lane.b32.xlu0 %v1620, 103
  %v1678 = vpop.permute.xlu0 %1677
  %1679 = vrot.lane.b32.xlu0 %v1621, 103
  %v1680 = vpop.permute.xlu0 %1679
  %1681 = vrot.lane.b32.xlu0 %v1622, 103
  %v1682 = vpop.permute.xlu0 %1681
  %1683 = vrot.lane.b32.xlu0 %v1623, 103
  %v1684 = vpop.permute.xlu0 %1683
  %1685 = vrot.lane.b32.xlu0 %v1624, 103
  %v1686 = vpop.permute.xlu0 %1685
  %1687 = vrot.lane.b32.xlu0 %v1625, 103
  %v1688 = vpop.permute.xlu0 %1687
  %1689 = vrot.lane.b32.xlu0 %v1626, 103
  %v1690 = vpop.permute.xlu0 %1689
  %1691 = vrot.lane.b32.xlu0 %v1627, 103
  %v1692 = vpop.permute.xlu0 %1691
  %1693 = vrot.lane.b32.xlu0 %v1628, 103
  %v1694 = vpop.permute.xlu0 %1693
  %1695 = vrot.lane.b32.xlu0 %v1629, 103
  %v1696 = vpop.permute.xlu0 %1695
  %1697 = vrot.lane.b32.xlu0 %v1630, 103
  %v1698 = vpop.permute.xlu0 %1697
  %1699 = vrot.lane.b32.xlu0 %v1631, 103
  %v1700 = vpop.permute.xlu0 %1699
  %1701 = vrot.lane.b32.xlu0 %v1632, 103
  %v1702 = vpop.permute.xlu0 %1701
  %1703 = vrot.lane.b32.xlu0 %v1633, 103
  %v1704 = vpop.permute.xlu0 %1703
  %1705 = vrot.lane.b32.xlu0 %v1634, 103
  %v1706 = vpop.permute.xlu0 %1705
  %1707 = vrot.lane.b32.xlu0 %v1635, 103
  %v1708 = vpop.permute.xlu0 %1707
  %1709 = vrot.lane.b32.xlu0 %v1636, 103
  %v1710 = vpop.permute.xlu0 %1709
  %1711 = vrot.lane.b32.xlu0 %v1637, 103
  %v1712 = vpop.permute.xlu0 %1711
  %1713 = vrot.lane.b32.xlu0 %v1638, 103
  %v1714 = vpop.permute.xlu0 %1713
  %1715 = vrot.lane.b32.xlu0 %v1639, 103
  %v1716 = vpop.permute.xlu0 %1715
  %1717 = vrot.lane.b32.xlu0 %v1640, 103
  %v1718 = vpop.permute.xlu0 %1717
  %1719 = vrot.lane.b32.xlu0 %v1641, 103
  %v1720 = vpop.permute.xlu0 %1719
  %1721 = vrot.lane.b32.xlu0 %v1642, 103
  %v1722 = vpop.permute.xlu0 %1721
  %1723 = vrot.lane.b32.xlu0 %v1643, 103
  %v1724 = vpop.permute.xlu0 %1723
  %1725 = vrot.lane.b32.xlu0 %v1644, 103
  %v1726 = vpop.permute.xlu0 %1725
  %vm1727 = vcmask 842752
  %v1728 = vsel %vm1727, %v1646, %v1648
  %v1729 = vsel %vm1727, %v1648, %v1650
  %v1730 = vsel %vm1727, %v1650, %v1652
  %v1731 = vsel %vm1727, %v1652, %v1654
  %v1732 = vsel %vm1727, %v1654, %v1656
  %v1733 = vsel %vm1727, %v1656, %v1658
  %v1734 = vsel %vm1727, %v1658, %v1660
  %v1735 = vsel %vm1727, %v1660, %v1662
  %v1736 = vsel %vm1727, %v1662, %v1664
  %v1737 = vsel %vm1727, %v1664, %v1666
  %v1738 = vsel %vm1727, %v1666, %v1668
  %v1739 = vsel %vm1727, %v1668, %v1670
  %v1740 = vsel %vm1727, %v1670, %v1672
  %v1741 = vsel %vm1727, %v1672, %v1674
  %v1742 = vsel %vm1727, %v1674, %v1676
  %v1743 = vsel %vm1727, %v1676, %v1678
  %v1744 = vsel %vm1727, %v1678, %v1680
  %v1745 = vsel %vm1727, %v1680, %v1682
  %v1746 = vsel %vm1727, %v1682, %v1684
  %v1747 = vsel %vm1727, %v1684, %v1686
  %v1748 = vsel %vm1727, %v1686, %v1688
  %v1749 = vsel %vm1727, %v1688, %v1690
  %v1750 = vsel %vm1727, %v1690, %v1692
  %v1751 = vsel %vm1727, %v1692, %v1694
  %v1752 = vsel %vm1727, %v1694, %v1696
  %v1753 = vsel %vm1727, %v1696, %v1698
  %v1754 = vsel %vm1727, %v1698, %v1700
  %v1755 = vsel %vm1727, %v1700, %v1702
  %v1756 = vsel %vm1727, %v1702, %v1704
  %v1757 = vsel %vm1727, %v1704, %v1706
  %v1758 = vsel %vm1727, %v1706, %v1708
  %v1759 = vsel %vm1727, %v1708, %v1710
  %v1760 = vsel %vm1727, %v1710, %v1712
  %v1761 = vsel %vm1727, %v1712, %v1714
  %v1762 = vsel %vm1727, %v1714, %v1716
  %v1763 = vsel %vm1727, %v1716, %v1718
  %v1764 = vsel %vm1727, %v1718, %v1720
  %v1765 = vsel %vm1727, %v1720, %v1722
  %v1766 = vsel %vm1727, %v1722, %v1724
  %v1767 = vsel %vm1727, %v1724, %v1726
  %1808 = vst [vmem:[#allocation2 + $0x148] sm:$0x70] %v1728
  %1809 = vst [vmem:[#allocation2 + $0x150] sm:$0x70] %v1729
  %1810 = vst [vmem:[#allocation2 + $0x158] sm:$0x70] %v1730
  %1811 = vst [vmem:[#allocation2 + $0x160] sm:$0x70] %v1731
  %1812 = vst [vmem:[#allocation2 + $0x168] sm:$0x70] %v1732
  %1813 = vst [vmem:[#allocation2 + $0x170] sm:$0x70] %v1733
  %1814 = vst [vmem:[#allocation2 + $0x178] sm:$0x70] %v1734
  %1815 = vst [vmem:[#allocation2 + $0x180] sm:$0x70] %v1735
  %1816 = vst [vmem:[#allocation2 + $0x188] sm:$0x70] %v1736
  %1817 = vst [vmem:[#allocation2 + $0x190] sm:$0x70] %v1737
  %1818 = vst [vmem:[#allocation2 + $0x198] sm:$0x70] %v1738
  %1819 = vst [vmem:[#allocation2 + $0x1a0] sm:$0x70] %v1739
  %1820 = vst [vmem:[#allocation2 + $0x1a8] sm:$0x70] %v1740
  %1821 = vst [vmem:[#allocation2 + $0x1b0] sm:$0x70] %v1741
  %1822 = vst [vmem:[#allocation2 + $0x1b8] sm:$0x70] %v1742
  %1823 = vst [vmem:[#allocation2 + $0x1c0] sm:$0x70] %v1743
  %1824 = vst [vmem:[#allocation2 + $0x1c8] sm:$0x70] %v1744
  %1825 = vst [vmem:[#allocation2 + $0x1d0] sm:$0x70] %v1745
  %1826 = vst [vmem:[#allocation2 + $0x1d8] sm:$0x70] %v1746
  %1827 = vst [vmem:[#allocation2 + $0x1e0] sm:$0x70] %v1747
  %1828 = vst [vmem:[#allocation2 + $0x1e8] sm:$0x70] %v1748
  %1829 = vst [vmem:[#allocation2 + $0x1f0] sm:$0x70] %v1749
  %1830 = vst [vmem:[#allocation2 + $0x1f8] sm:$0x70] %v1750
  %1831 = vst [vmem:[#allocation2 + $0x200] sm:$0x70] %v1751
  %1832 = vst [vmem:[#allocation2 + $0x208] sm:$0x70] %v1752
  %1833 = vst [vmem:[#allocation2 + $0x210] sm:$0x70] %v1753
  %1834 = vst [vmem:[#allocation2 + $0x218] sm:$0x70] %v1754
  %1835 = vst [vmem:[#allocation2 + $0x220] sm:$0x70] %v1755
  %1836 = vst [vmem:[#allocation2 + $0x228] sm:$0x70] %v1756
  %1837 = vst [vmem:[#allocation2 + $0x230] sm:$0x70] %v1757
  %1838 = vst [vmem:[#allocation2 + $0x238] sm:$0x70] %v1758
  %1839 = vst [vmem:[#allocation2 + $0x240] sm:$0x70] %v1759
  %1840 = vst [vmem:[#allocation2 + $0x248] sm:$0x70] %v1760
  %1841 = vst [vmem:[#allocation2 + $0x250] sm:$0x70] %v1761
  %1842 = vst [vmem:[#allocation2 + $0x258] sm:$0x70] %v1762
  %1843 = vst [vmem:[#allocation2 + $0x260] sm:$0x70] %v1763
  %1844 = vst [vmem:[#allocation2 + $0x268] sm:$0x70] %v1764
  %1845 = vst [vmem:[#allocation2 + $0x270] sm:$0x70] %v1765
  %1846 = vst [vmem:[#allocation2 + $0x278] sm:$0x70] %v1766
  %1847 = vst [vmem:[#allocation2 + $0x280] sm:$0x70] %v1767
  %v1848 = vld [vmem:[#allocation2] sm:$0x7]
  %v1849 = vld [vmem:[#allocation2 + $0x8] sm:$0x7]
  %v1850 = vld [vmem:[#allocation2 + $0x10] sm:$0x7]
  %v1851 = vld [vmem:[#allocation2 + $0x18] sm:$0x7]
  %v1852 = vld [vmem:[#allocation2 + $0x20] sm:$0x7]
  %v1853 = vld [vmem:[#allocation2 + $0x28] sm:$0x7]
  %v1854 = vld [vmem:[#allocation2 + $0x30] sm:$0x7]
  %v1855 = vld [vmem:[#allocation2 + $0x38] sm:$0x7]
  %v1856 = vld [vmem:[#allocation2 + $0x40] sm:$0x7]
  %v1857 = vld [vmem:[#allocation2 + $0x48] sm:$0x7]
  %v1858 = vld [vmem:[#allocation2 + $0x50] sm:$0x7]
  %v1859 = vld [vmem:[#allocation2 + $0x58] sm:$0x7]
  %v1860 = vld [vmem:[#allocation2 + $0x60] sm:$0x7]
  %v1861 = vld [vmem:[#allocation2 + $0x68] sm:$0x7]
  %v1862 = vld [vmem:[#allocation2 + $0x70] sm:$0x7]
  %v1863 = vld [vmem:[#allocation2 + $0x78] sm:$0x7]
  %v1864 = vld [vmem:[#allocation2 + $0x80] sm:$0x7]
  %v1865 = vld [vmem:[#allocation2 + $0x88] sm:$0x7]
  %v1866 = vld [vmem:[#allocation2 + $0x90] sm:$0x7]
  %v1867 = vld [vmem:[#allocation2 + $0x98] sm:$0x7]
  %v1868 = vld [vmem:[#allocation2 + $0xa0] sm:$0x7]
  %v1869 = vld [vmem:[#allocation2 + $0xa8] sm:$0x7]
  %v1870 = vld [vmem:[#allocation2 + $0xb0] sm:$0x7]
  %v1871 = vld [vmem:[#allocation2 + $0xb8] sm:$0x7]
  %v1872 = vld [vmem:[#allocation2 + $0xc0] sm:$0x7]
  %v1873 = vld [vmem:[#allocation2 + $0xc8] sm:$0x7]
  %v1874 = vld [vmem:[#allocation2 + $0xd0] sm:$0x7]
  %v1875 = vld [vmem:[#allocation2 + $0xd8] sm:$0x7]
  %v1876 = vld [vmem:[#allocation2 + $0xe0] sm:$0x7]
  %v1877 = vld [vmem:[#allocation2 + $0xe8] sm:$0x7]
  %v1878 = vld [vmem:[#allocation2 + $0xf0] sm:$0x7]
  %v1879 = vld [vmem:[#allocation2 + $0xf8] sm:$0x7]
  %v1880 = vld [vmem:[#allocation2 + $0x100] sm:$0x7]
  %v1881 = vld [vmem:[#allocation2 + $0x108] sm:$0x7]
  %v1882 = vld [vmem:[#allocation2 + $0x110] sm:$0x7]
  %v1883 = vld [vmem:[#allocation2 + $0x118] sm:$0x7]
  %v1884 = vld [vmem:[#allocation2 + $0x120] sm:$0x7]
  %v1885 = vld [vmem:[#allocation2 + $0x128] sm:$0x7]
  %v1886 = vld [vmem:[#allocation2 + $0x130] sm:$0x7]
  %v1887 = vld [vmem:[#allocation2 + $0x138] sm:$0x7]
  %v1888 = vld [vmem:[#allocation2 + $0x140] sm:$0x7]
  %v1930 = vrot.slane %v1848, 1
  %v1931 = vrot.slane %v1849, 1
  %v1932 = vrot.slane %v1850, 1
  %v1933 = vrot.slane %v1851, 1
  %v1934 = vrot.slane %v1852, 1
  %v1935 = vrot.slane %v1853, 1
  %v1936 = vrot.slane %v1854, 1
  %v1937 = vrot.slane %v1855, 1
  %v1938 = vrot.slane %v1856, 1
  %v1939 = vrot.slane %v1857, 1
  %v1940 = vrot.slane %v1858, 1
  %v1941 = vrot.slane %v1859, 1
  %v1942 = vrot.slane %v1860, 1
  %v1943 = vrot.slane %v1861, 1
  %v1944 = vrot.slane %v1862, 1
  %v1945 = vrot.slane %v1863, 1
  %v1946 = vrot.slane %v1864, 1
  %v1947 = vrot.slane %v1865, 1
  %v1948 = vrot.slane %v1866, 1
  %v1949 = vrot.slane %v1867, 1
  %v1950 = vrot.slane %v1868, 1
  %v1951 = vrot.slane %v1869, 1
  %v1952 = vrot.slane %v1870, 1
  %v1953 = vrot.slane %v1871, 1
  %v1954 = vrot.slane %v1872, 1
  %v1955 = vrot.slane %v1873, 1
  %v1956 = vrot.slane %v1874, 1
  %v1957 = vrot.slane %v1875, 1
  %v1958 = vrot.slane %v1876, 1
  %v1959 = vrot.slane %v1877, 1
  %v1960 = vrot.slane %v1878, 1
  %v1961 = vrot.slane %v1879, 1
  %v1962 = vrot.slane %v1880, 1
  %v1963 = vrot.slane %v1881, 1
  %v1964 = vrot.slane %v1882, 1
  %v1965 = vrot.slane %v1883, 1
  %v1966 = vrot.slane %v1884, 1
  %v1967 = vrot.slane %v1885, 1
  %v1968 = vrot.slane %v1886, 1
  %v1969 = vrot.slane %v1887, 1
  %v1970 = vrot.slane %v1888, 1
  %1971 = vrot.lane.b32.xlu0 %v1930, 102
  %v1972 = vpop.permute.xlu0 %1971
  %1973 = vrot.lane.b32.xlu0 %v1931, 102
  %v1974 = vpop.permute.xlu0 %1973
  %1975 = vrot.lane.b32.xlu0 %v1932, 102
  %v1976 = vpop.permute.xlu0 %1975
  %1977 = vrot.lane.b32.xlu0 %v1933, 102
  %v1978 = vpop.permute.xlu0 %1977
  %1979 = vrot.lane.b32.xlu0 %v1934, 102
  %v1980 = vpop.permute.xlu0 %1979
  %1981 = vrot.lane.b32.xlu0 %v1935, 102
  %v1982 = vpop.permute.xlu0 %1981
  %1983 = vrot.lane.b32.xlu0 %v1936, 102
  %v1984 = vpop.permute.xlu0 %1983
  %1985 = vrot.lane.b32.xlu0 %v1937, 102
  %v1986 = vpop.permute.xlu0 %1985
  %1987 = vrot.lane.b32.xlu0 %v1938, 102
  %v1988 = vpop.permute.xlu0 %1987
  %1989 = vrot.lane.b32.xlu0 %v1939, 102
  %v1990 = vpop.permute.xlu0 %1989
  %1991 = vrot.lane.b32.xlu0 %v1940, 102
  %v1992 = vpop.permute.xlu0 %1991
  %1993 = vrot.lane.b32.xlu0 %v1941, 102
  %v1994 = vpop.permute.xlu0 %1993
  %1995 = vrot.lane.b32.xlu0 %v1942, 102
  %v1996 = vpop.permute.xlu0 %1995
  %1997 = vrot.lane.b32.xlu0 %v1943, 102
  %v1998 = vpop.permute.xlu0 %1997
  %1999 = vrot.lane.b32.xlu0 %v1944, 102
  %v2000 = vpop.permute.xlu0 %1999
  %2001 = vrot.lane.b32.xlu0 %v1945, 102
  %v2002 = vpop.permute.xlu0 %2001
  %2003 = vrot.lane.b32.xlu0 %v1946, 102
  %v2004 = vpop.permute.xlu0 %2003
  %2005 = vrot.lane.b32.xlu0 %v1947, 102
  %v2006 = vpop.permute.xlu0 %2005
  %2007 = vrot.lane.b32.xlu0 %v1948, 102
  %v2008 = vpop.permute.xlu0 %2007
  %2009 = vrot.lane.b32.xlu0 %v1949, 102
  %v2010 = vpop.permute.xlu0 %2009
  %2011 = vrot.lane.b32.xlu0 %v1950, 102
  %v2012 = vpop.permute.xlu0 %2011
  %2013 = vrot.lane.b32.xlu0 %v1951, 102
  %v2014 = vpop.permute.xlu0 %2013
  %2015 = vrot.lane.b32.xlu0 %v1952, 102
  %v2016 = vpop.permute.xlu0 %2015
  %2017 = vrot.lane.b32.xlu0 %v1953, 102
  %v2018 = vpop.permute.xlu0 %2017
  %2019 = vrot.lane.b32.xlu0 %v1954, 102
  %v2020 = vpop.permute.xlu0 %2019
  %2021 = vrot.lane.b32.xlu0 %v1955, 102
  %v2022 = vpop.permute.xlu0 %2021
  %2023 = vrot.lane.b32.xlu0 %v1956, 102
  %v2024 = vpop.permute.xlu0 %2023
  %2025 = vrot.lane.b32.xlu0 %v1957, 102
  %v2026 = vpop.permute.xlu0 %2025
  %2027 = vrot.lane.b32.xlu0 %v1958, 102
  %v2028 = vpop.permute.xlu0 %2027
  %2029 = vrot.lane.b32.xlu0 %v1959, 102
  %v2030 = vpop.permute.xlu0 %2029
  %2031 = vrot.lane.b32.xlu0 %v1960, 102
  %v2032 = vpop.permute.xlu0 %2031
  %2033 = vrot.lane.b32.xlu0 %v1961, 102
  %v2034 = vpop.permute.xlu0 %2033
  %2035 = vrot.lane.b32.xlu0 %v1962, 102
  %v2036 = vpop.permute.xlu0 %2035
  %2037 = vrot.lane.b32.xlu0 %v1963, 102
  %v2038 = vpop.permute.xlu0 %2037
  %2039 = vrot.lane.b32.xlu0 %v1964, 102
  %v2040 = vpop.permute.xlu0 %2039
  %2041 = vrot.lane.b32.xlu0 %v1965, 102
  %v2042 = vpop.permute.xlu0 %2041
  %2043 = vrot.lane.b32.xlu0 %v1966, 102
  %v2044 = vpop.permute.xlu0 %2043
  %2045 = vrot.lane.b32.xlu0 %v1967, 102
  %v2046 = vpop.permute.xlu0 %2045
  %2047 = vrot.lane.b32.xlu0 %v1968, 102
  %v2048 = vpop.permute.xlu0 %2047
  %2049 = vrot.lane.b32.xlu0 %v1969, 102
  %v2050 = vpop.permute.xlu0 %2049
  %2051 = vrot.lane.b32.xlu0 %v1970, 102
  %v2052 = vpop.permute.xlu0 %2051
  %vm2053 = vcmask 834560
  %v2054 = vsel %vm2053, %v1972, %v1974
  %v2055 = vsel %vm2053, %v1974, %v1976
  %v2056 = vsel %vm2053, %v1976, %v1978
  %v2057 = vsel %vm2053, %v1978, %v1980
  %v2058 = vsel %vm2053, %v1980, %v1982
  %v2059 = vsel %vm2053, %v1982, %v1984
  %v2060 = vsel %vm2053, %v1984, %v1986
  %v2061 = vsel %vm2053, %v1986, %v1988
  %v2062 = vsel %vm2053, %v1988, %v1990
  %v2063 = vsel %vm2053, %v1990, %v1992
  %v2064 = vsel %vm2053, %v1992, %v1994
  %v2065 = vsel %vm2053, %v1994, %v1996
  %v2066 = vsel %vm2053, %v1996, %v1998
  %v2067 = vsel %vm2053, %v1998, %v2000
  %v2068 = vsel %vm2053, %v2000, %v2002
  %v2069 = vsel %vm2053, %v2002, %v2004
  %v2070 = vsel %vm2053, %v2004, %v2006
  %v2071 = vsel %vm2053, %v2006, %v2008
  %v2072 = vsel %vm2053, %v2008, %v2010
  %v2073 = vsel %vm2053, %v2010, %v2012
  %v2074 = vsel %vm2053, %v2012, %v2014
  %v2075 = vsel %vm2053, %v2014, %v2016
  %v2076 = vsel %vm2053, %v2016, %v2018
  %v2077 = vsel %vm2053, %v2018, %v2020
  %v2078 = vsel %vm2053, %v2020, %v2022
  %v2079 = vsel %vm2053, %v2022, %v2024
  %v2080 = vsel %vm2053, %v2024, %v2026
  %v2081 = vsel %vm2053, %v2026, %v2028
  %v2082 = vsel %vm2053, %v2028, %v2030
  %v2083 = vsel %vm2053, %v2030, %v2032
  %v2084 = vsel %vm2053, %v2032, %v2034
  %v2085 = vsel %vm2053, %v2034, %v2036
  %v2086 = vsel %vm2053, %v2036, %v2038
  %v2087 = vsel %vm2053, %v2038, %v2040
  %v2088 = vsel %vm2053, %v2040, %v2042
  %v2089 = vsel %vm2053, %v2042, %v2044
  %v2090 = vsel %vm2053, %v2044, %v2046
  %v2091 = vsel %vm2053, %v2046, %v2048
  %v2092 = vsel %vm2053, %v2048, %v2050
  %v2093 = vsel %vm2053, %v2050, %v2052
  %2134 = vst [vmem:[#allocation2 + $0x148] sm:$0x80] %v2054
  %2135 = vst [vmem:[#allocation2 + $0x150] sm:$0x80] %v2055
  %2136 = vst [vmem:[#allocation2 + $0x158] sm:$0x80] %v2056
  %2137 = vst [vmem:[#allocation2 + $0x160] sm:$0x80] %v2057
  %2138 = vst [vmem:[#allocation2 + $0x168] sm:$0x80] %v2058
  %2139 = vst [vmem:[#allocation2 + $0x170] sm:$0x80] %v2059
  %2140 = vst [vmem:[#allocation2 + $0x178] sm:$0x80] %v2060
  %2141 = vst [vmem:[#allocation2 + $0x180] sm:$0x80] %v2061
  %2142 = vst [vmem:[#allocation2 + $0x188] sm:$0x80] %v2062
  %2143 = vst [vmem:[#allocation2 + $0x190] sm:$0x80] %v2063
  %2144 = vst [vmem:[#allocation2 + $0x198] sm:$0x80] %v2064
  %2145 = vst [vmem:[#allocation2 + $0x1a0] sm:$0x80] %v2065
  %2146 = vst [vmem:[#allocation2 + $0x1a8] sm:$0x80] %v2066
  %2147 = vst [vmem:[#allocation2 + $0x1b0] sm:$0x80] %v2067
  %2148 = vst [vmem:[#allocation2 + $0x1b8] sm:$0x80] %v2068
  %2149 = vst [vmem:[#allocation2 + $0x1c0] sm:$0x80] %v2069
  %2150 = vst [vmem:[#allocation2 + $0x1c8] sm:$0x80] %v2070
  %2151 = vst [vmem:[#allocation2 + $0x1d0] sm:$0x80] %v2071
  %2152 = vst [vmem:[#allocation2 + $0x1d8] sm:$0x80] %v2072
  %2153 = vst [vmem:[#allocation2 + $0x1e0] sm:$0x80] %v2073
  %2154 = vst [vmem:[#allocation2 + $0x1e8] sm:$0x80] %v2074
  %2155 = vst [vmem:[#allocation2 + $0x1f0] sm:$0x80] %v2075
  %2156 = vst [vmem:[#allocation2 + $0x1f8] sm:$0x80] %v2076
  %2157 = vst [vmem:[#allocation2 + $0x200] sm:$0x80] %v2077
  %2158 = vst [vmem:[#allocation2 + $0x208] sm:$0x80] %v2078
  %2159 = vst [vmem:[#allocation2 + $0x210] sm:$0x80] %v2079
  %2160 = vst [vmem:[#allocation2 + $0x218] sm:$0x80] %v2080
  %2161 = vst [vmem:[#allocation2 + $0x220] sm:$0x80] %v2081
  %2162 = vst [vmem:[#allocation2 + $0x228] sm:$0x80] %v2082
  %2163 = vst [vmem:[#allocation2 + $0x230] sm:$0x80] %v2083
  %2164 = vst [vmem:[#allocation2 + $0x238] sm:$0x80] %v2084
  %2165 = vst [vmem:[#allocation2 + $0x240] sm:$0x80] %v2085
  %2166 = vst [vmem:[#allocation2 + $0x248] sm:$0x80] %v2086
  %2167 = vst [vmem:[#allocation2 + $0x250] sm:$0x80] %v2087
  %2168 = vst [vmem:[#allocation2 + $0x258] sm:$0x80] %v2088
  %2169 = vst [vmem:[#allocation2 + $0x260] sm:$0x80] %v2089
  %2170 = vst [vmem:[#allocation2 + $0x268] sm:$0x80] %v2090
  %2171 = vst [vmem:[#allocation2 + $0x270] sm:$0x80] %v2091
  %2172 = vst [vmem:[#allocation2 + $0x278] sm:$0x80] %v2092
  %2173 = vst [vmem:[#allocation2 + $0x280] sm:$0x80] %v2093
  %2174 = vst [vmem:[#allocation2 + $0x290] sm:$0x3] %v2054
  %2175 = vst [vmem:[#allocation2 + $0x298] sm:$0x3] %v2055
  %2176 = vst [vmem:[#allocation2 + $0x2a0] sm:$0x3] %v2056
  %2177 = vst [vmem:[#allocation2 + $0x2a8] sm:$0x3] %v2057
  %2178 = vst [vmem:[#allocation2 + $0x2b0] sm:$0x3] %v2058
  %2179 = vst [vmem:[#allocation2 + $0x2b8] sm:$0x3] %v2059
  %2180 = vst [vmem:[#allocation2 + $0x2c0] sm:$0x3] %v2060
  %2181 = vst [vmem:[#allocation2 + $0x2c8] sm:$0x3] %v2061
  %2182 = vst [vmem:[#allocation2 + $0x2d0] sm:$0x3] %v2062
  %2183 = vst [vmem:[#allocation2 + $0x2d8] sm:$0x3] %v2063
  %2184 = vst [vmem:[#allocation2 + $0x2e0] sm:$0x3] %v2064
  %2185 = vst [vmem:[#allocation2 + $0x2e8] sm:$0x3] %v2065
  %2186 = vst [vmem:[#allocation2 + $0x2f0] sm:$0x3] %v2066
  %2187 = vst [vmem:[#allocation2 + $0x2f8] sm:$0x3] %v2067
  %2188 = vst [vmem:[#allocation2 + $0x300] sm:$0x3] %v2068
  %2189 = vst [vmem:[#allocation2 + $0x308] sm:$0x3] %v2069
  %2190 = vst [vmem:[#allocation2 + $0x310] sm:$0x3] %v2070
  %2191 = vst [vmem:[#allocation2 + $0x318] sm:$0x3] %v2071
  %2192 = vst [vmem:[#allocation2 + $0x320] sm:$0x3] %v2072
  %2193 = vst [vmem:[#allocation2 + $0x328] sm:$0x3] %v2073
  %2194 = vst [vmem:[#allocation2 + $0x330] sm:$0x3] %v2074
  %2195 = vst [vmem:[#allocation2 + $0x338] sm:$0x3] %v2075
  %2196 = vst [vmem:[#allocation2 + $0x340] sm:$0x3] %v2076
  %2197 = vst [vmem:[#allocation2 + $0x348] sm:$0x3] %v2077
  %2198 = vst [vmem:[#allocation2 + $0x350] sm:$0x3] %v2078
  %2199 = vst [vmem:[#allocation2 + $0x358] sm:$0x3] %v2079
  %2200 = vst [vmem:[#allocation2 + $0x360] sm:$0x3] %v2080
  %2201 = vst [vmem:[#allocation2 + $0x368] sm:$0x3] %v2081
  %2202 = vst [vmem:[#allocation2 + $0x370] sm:$0x3] %v2082
  %2203 = vst [vmem:[#allocation2 + $0x378] sm:$0x3] %v2083
  %2204 = vst [vmem:[#allocation2 + $0x380] sm:$0x3] %v2084
  %2205 = vst [vmem:[#allocation2 + $0x388] sm:$0x3] %v2085
  %2206 = vst [vmem:[#allocation2 + $0x390] sm:$0x3] %v2086
  %2207 = vst [vmem:[#allocation2 + $0x398] sm:$0x3] %v2087
  %2208 = vst [vmem:[#allocation2 + $0x3a0] sm:$0x3] %v2088
  %2209 = vst [vmem:[#allocation2 + $0x3a8] sm:$0x3] %v2089
  %2210 = vst [vmem:[#allocation2 + $0x3b0] sm:$0x3] %v2090
  %2211 = vst [vmem:[#allocation2 + $0x3b8] sm:$0x3] %v2091
  %2212 = vst [vmem:[#allocation2 + $0x3c0] sm:$0x3] %v2092
  %2213 = vst [vmem:[#allocation2 + $0x3c8] sm:$0x3] %v2093
  %v2214 = vld [vmem:[#allocation2] sm:$0x7]
  %v2215 = vld [vmem:[#allocation2 + $0x8] sm:$0x7]
  %v2216 = vld [vmem:[#allocation2 + $0x10] sm:$0x7]
  %v2217 = vld [vmem:[#allocation2 + $0x18] sm:$0x7]
  %v2218 = vld [vmem:[#allocation2 + $0x20] sm:$0x7]
  %v2219 = vld [vmem:[#allocation2 + $0x28] sm:$0x7]
  %v2220 = vld [vmem:[#allocation2 + $0x30] sm:$0x7]
  %v2221 = vld [vmem:[#allocation2 + $0x38] sm:$0x7]
  %v2222 = vld [vmem:[#allocation2 + $0x40] sm:$0x7]
  %v2223 = vld [vmem:[#allocation2 + $0x48] sm:$0x7]
  %v2224 = vld [vmem:[#allocation2 + $0x50] sm:$0x7]
  %v2225 = vld [vmem:[#allocation2 + $0x58] sm:$0x7]
  %v2226 = vld [vmem:[#allocation2 + $0x60] sm:$0x7]
  %v2227 = vld [vmem:[#allocation2 + $0x68] sm:$0x7]
  %v2228 = vld [vmem:[#allocation2 + $0x70] sm:$0x7]
  %v2229 = vld [vmem:[#allocation2 + $0x78] sm:$0x7]
  %v2230 = vld [vmem:[#allocation2 + $0x80] sm:$0x7]
  %v2231 = vld [vmem:[#allocation2 + $0x88] sm:$0x7]
  %v2232 = vld [vmem:[#allocation2 + $0x90] sm:$0x7]
  %v2233 = vld [vmem:[#allocation2 + $0x98] sm:$0x7]
  %v2234 = vld [vmem:[#allocation2 + $0xa0] sm:$0x7]
  %v2235 = vld [vmem:[#allocation2 + $0xa8] sm:$0x7]
  %v2236 = vld [vmem:[#allocation2 + $0xb0] sm:$0x7]
  %v2237 = vld [vmem:[#allocation2 + $0xb8] sm:$0x7]
  %v2238 = vld [vmem:[#allocation2 + $0xc0] sm:$0x7]
  %v2239 = vld [vmem:[#allocation2 + $0xc8] sm:$0x7]
  %v2240 = vld [vmem:[#allocation2 + $0xd0] sm:$0x7]
  %v2241 = vld [vmem:[#allocation2 + $0xd8] sm:$0x7]
  %v2242 = vld [vmem:[#allocation2 + $0xe0] sm:$0x7]
  %v2243 = vld [vmem:[#allocation2 + $0xe8] sm:$0x7]
  %v2244 = vld [vmem:[#allocation2 + $0xf0] sm:$0x7]
  %v2245 = vld [vmem:[#allocation2 + $0xf8] sm:$0x7]
  %v2246 = vld [vmem:[#allocation2 + $0x100] sm:$0x7]
  %v2247 = vld [vmem:[#allocation2 + $0x108] sm:$0x7]
  %v2248 = vld [vmem:[#allocation2 + $0x110] sm:$0x7]
  %v2249 = vld [vmem:[#allocation2 + $0x118] sm:$0x7]
  %v2250 = vld [vmem:[#allocation2 + $0x120] sm:$0x7]
  %v2251 = vld [vmem:[#allocation2 + $0x128] sm:$0x7]
  %v2252 = vld [vmem:[#allocation2 + $0x130] sm:$0x7]
  %v2253 = vld [vmem:[#allocation2 + $0x138] sm:$0x7]
  %v2254 = vld [vmem:[#allocation2 + $0x140] sm:$0x7]
  %v2296 = vrot.slane %v2214, 6
  %v2297 = vrot.slane %v2215, 6
  %v2298 = vrot.slane %v2216, 6
  %v2299 = vrot.slane %v2217, 6
  %v2300 = vrot.slane %v2218, 6
  %v2301 = vrot.slane %v2219, 6
  %v2302 = vrot.slane %v2220, 6
  %v2303 = vrot.slane %v2221, 6
  %v2304 = vrot.slane %v2222, 6
  %v2305 = vrot.slane %v2223, 6
  %v2306 = vrot.slane %v2224, 6
  %v2307 = vrot.slane %v2225, 6
  %v2308 = vrot.slane %v2226, 6
  %v2309 = vrot.slane %v2227, 6
  %v2310 = vrot.slane %v2228, 6
  %v2311 = vrot.slane %v2229, 6
  %v2312 = vrot.slane %v2230, 6
  %v2313 = vrot.slane %v2231, 6
  %v2314 = vrot.slane %v2232, 6
  %v2315 = vrot.slane %v2233, 6
  %v2316 = vrot.slane %v2234, 6
  %v2317 = vrot.slane %v2235, 6
  %v2318 = vrot.slane %v2236, 6
  %v2319 = vrot.slane %v2237, 6
  %v2320 = vrot.slane %v2238, 6
  %v2321 = vrot.slane %v2239, 6
  %v2322 = vrot.slane %v2240, 6
  %v2323 = vrot.slane %v2241, 6
  %v2324 = vrot.slane %v2242, 6
  %v2325 = vrot.slane %v2243, 6
  %v2326 = vrot.slane %v2244, 6
  %v2327 = vrot.slane %v2245, 6
  %v2328 = vrot.slane %v2246, 6
  %v2329 = vrot.slane %v2247, 6
  %v2330 = vrot.slane %v2248, 6
  %v2331 = vrot.slane %v2249, 6
  %v2332 = vrot.slane %v2250, 6
  %v2333 = vrot.slane %v2251, 6
  %v2334 = vrot.slane %v2252, 6
  %v2335 = vrot.slane %v2253, 6
  %v2336 = vrot.slane %v2254, 6
  %2337 = vrot.lane.b32.xlu0 %v2296, 80
  %v2338 = vpop.permute.xlu0 %2337
  %2339 = vrot.lane.b32.xlu0 %v2297, 80
  %v2340 = vpop.permute.xlu0 %2339
  %2341 = vrot.lane.b32.xlu0 %v2298, 80
  %v2342 = vpop.permute.xlu0 %2341
  %2343 = vrot.lane.b32.xlu0 %v2299, 80
  %v2344 = vpop.permute.xlu0 %2343
  %2345 = vrot.lane.b32.xlu0 %v2300, 80
  %v2346 = vpop.permute.xlu0 %2345
  %2347 = vrot.lane.b32.xlu0 %v2301, 80
  %v2348 = vpop.permute.xlu0 %2347
  %2349 = vrot.lane.b32.xlu0 %v2302, 80
  %v2350 = vpop.permute.xlu0 %2349
  %2351 = vrot.lane.b32.xlu0 %v2303, 80
  %v2352 = vpop.permute.xlu0 %2351
  %2353 = vrot.lane.b32.xlu0 %v2304, 80
  %v2354 = vpop.permute.xlu0 %2353
  %2355 = vrot.lane.b32.xlu0 %v2305, 80
  %v2356 = vpop.permute.xlu0 %2355
  %2357 = vrot.lane.b32.xlu0 %v2306, 80
  %v2358 = vpop.permute.xlu0 %2357
  %2359 = vrot.lane.b32.xlu0 %v2307, 80
  %v2360 = vpop.permute.xlu0 %2359
  %2361 = vrot.lane.b32.xlu0 %v2308, 80
  %v2362 = vpop.permute.xlu0 %2361
  %2363 = vrot.lane.b32.xlu0 %v2309, 80
  %v2364 = vpop.permute.xlu0 %2363
  %2365 = vrot.lane.b32.xlu0 %v2310, 80
  %v2366 = vpop.permute.xlu0 %2365
  %2367 = vrot.lane.b32.xlu0 %v2311, 80
  %v2368 = vpop.permute.xlu0 %2367
  %2369 = vrot.lane.b32.xlu0 %v2312, 80
  %v2370 = vpop.permute.xlu0 %2369
  %2371 = vrot.lane.b32.xlu0 %v2313, 80
  %v2372 = vpop.permute.xlu0 %2371
  %2373 = vrot.lane.b32.xlu0 %v2314, 80
  %v2374 = vpop.permute.xlu0 %2373
  %2375 = vrot.lane.b32.xlu0 %v2315, 80
  %v2376 = vpop.permute.xlu0 %2375
  %2377 = vrot.lane.b32.xlu0 %v2316, 80
  %v2378 = vpop.permute.xlu0 %2377
  %2379 = vrot.lane.b32.xlu0 %v2317, 80
  %v2380 = vpop.permute.xlu0 %2379
  %2381 = vrot.lane.b32.xlu0 %v2318, 80
  %v2382 = vpop.permute.xlu0 %2381
  %2383 = vrot.lane.b32.xlu0 %v2319, 80
  %v2384 = vpop.permute.xlu0 %2383
  %2385 = vrot.lane.b32.xlu0 %v2320, 80
  %v2386 = vpop.permute.xlu0 %2385
  %2387 = vrot.lane.b32.xlu0 %v2321, 80
  %v2388 = vpop.permute.xlu0 %2387
  %2389 = vrot.lane.b32.xlu0 %v2322, 80
  %v2390 = vpop.permute.xlu0 %2389
  %2391 = vrot.lane.b32.xlu0 %v2323, 80
  %v2392 = vpop.permute.xlu0 %2391
  %2393 = vrot.lane.b32.xlu0 %v2324, 80
  %v2394 = vpop.permute.xlu0 %2393
  %2395 = vrot.lane.b32.xlu0 %v2325, 80
  %v2396 = vpop.permute.xlu0 %2395
  %2397 = vrot.lane.b32.xlu0 %v2326, 80
  %v2398 = vpop.permute.xlu0 %2397
  %2399 = vrot.lane.b32.xlu0 %v2327, 80
  %v2400 = vpop.permute.xlu0 %2399
  %2401 = vrot.lane.b32.xlu0 %v2328, 80
  %v2402 = vpop.permute.xlu0 %2401
  %2403 = vrot.lane.b32.xlu0 %v2329, 80
  %v2404 = vpop.permute.xlu0 %2403
  %2405 = vrot.lane.b32.xlu0 %v2330, 80
  %v2406 = vpop.permute.xlu0 %2405
  %2407 = vrot.lane.b32.xlu0 %v2331, 80
  %v2408 = vpop.permute.xlu0 %2407
  %2409 = vrot.lane.b32.xlu0 %v2332, 80
  %v2410 = vpop.permute.xlu0 %2409
  %2411 = vrot.lane.b32.xlu0 %v2333, 80
  %v2412 = vpop.permute.xlu0 %2411
  %2413 = vrot.lane.b32.xlu0 %v2334, 80
  %v2414 = vpop.permute.xlu0 %2413
  %2415 = vrot.lane.b32.xlu0 %v2335, 80
  %v2416 = vpop.permute.xlu0 %2415
  %2417 = vrot.lane.b32.xlu0 %v2336, 80
  %v2418 = vpop.permute.xlu0 %2417
  %vm2419 = vcmask 654336
  %v2420 = vsel %vm2419, %v2338, %v2340
  %v2421 = vsel %vm2419, %v2340, %v2342
  %v2422 = vsel %vm2419, %v2342, %v2344
  %v2423 = vsel %vm2419, %v2344, %v2346
  %v2424 = vsel %vm2419, %v2346, %v2348
  %v2425 = vsel %vm2419, %v2348, %v2350
  %v2426 = vsel %vm2419, %v2350, %v2352
  %v2427 = vsel %vm2419, %v2352, %v2354
  %v2428 = vsel %vm2419, %v2354, %v2356
  %v2429 = vsel %vm2419, %v2356, %v2358
  %v2430 = vsel %vm2419, %v2358, %v2360
  %v2431 = vsel %vm2419, %v2360, %v2362
  %v2432 = vsel %vm2419, %v2362, %v2364
  %v2433 = vsel %vm2419, %v2364, %v2366
  %v2434 = vsel %vm2419, %v2366, %v2368
  %v2435 = vsel %vm2419, %v2368, %v2370
  %v2436 = vsel %vm2419, %v2370, %v2372
  %v2437 = vsel %vm2419, %v2372, %v2374
  %v2438 = vsel %vm2419, %v2374, %v2376
  %v2439 = vsel %vm2419, %v2376, %v2378
  %v2440 = vsel %vm2419, %v2378, %v2380
  %v2441 = vsel %vm2419, %v2380, %v2382
  %v2442 = vsel %vm2419, %v2382, %v2384
  %v2443 = vsel %vm2419, %v2384, %v2386
  %v2444 = vsel %vm2419, %v2386, %v2388
  %v2445 = vsel %vm2419, %v2388, %v2390
  %v2446 = vsel %vm2419, %v2390, %v2392
  %v2447 = vsel %vm2419, %v2392, %v2394
  %v2448 = vsel %vm2419, %v2394, %v2396
  %v2449 = vsel %vm2419, %v2396, %v2398
  %v2450 = vsel %vm2419, %v2398, %v2400
  %v2451 = vsel %vm2419, %v2400, %v2402
  %v2452 = vsel %vm2419, %v2402, %v2404
  %v2453 = vsel %vm2419, %v2404, %v2406
  %v2454 = vsel %vm2419, %v2406, %v2408
  %v2455 = vsel %vm2419, %v2408, %v2410
  %v2456 = vsel %vm2419, %v2410, %v2412
  %v2457 = vsel %vm2419, %v2412, %v2414
  %v2458 = vsel %vm2419, %v2414, %v2416
  %v2459 = vsel %vm2419, %v2416, %v2418
  %2500 = vst [vmem:[#allocation2 + $0x290] sm:$0x1c] %v2420
  %2501 = vst [vmem:[#allocation2 + $0x298] sm:$0x1c] %v2421
  %2502 = vst [vmem:[#allocation2 + $0x2a0] sm:$0x1c] %v2422
  %2503 = vst [vmem:[#allocation2 + $0x2a8] sm:$0x1c] %v2423
  %2504 = vst [vmem:[#allocation2 + $0x2b0] sm:$0x1c] %v2424
  %2505 = vst [vmem:[#allocation2 + $0x2b8] sm:$0x1c] %v2425
  %2506 = vst [vmem:[#allocation2 + $0x2c0] sm:$0x1c] %v2426
  %2507 = vst [vmem:[#allocation2 + $0x2c8] sm:$0x1c] %v2427
  %2508 = vst [vmem:[#allocation2 + $0x2d0] sm:$0x1c] %v2428
  %2509 = vst [vmem:[#allocation2 + $0x2d8] sm:$0x1c] %v2429
  %2510 = vst [vmem:[#allocation2 + $0x2e0] sm:$0x1c] %v2430
  %2511 = vst [vmem:[#allocation2 + $0x2e8] sm:$0x1c] %v2431
  %2512 = vst [vmem:[#allocation2 + $0x2f0] sm:$0x1c] %v2432
  %2513 = vst [vmem:[#allocation2 + $0x2f8] sm:$0x1c] %v2433
  %2514 = vst [vmem:[#allocation2 + $0x300] sm:$0x1c] %v2434
  %2515 = vst [vmem:[#allocation2 + $0x308] sm:$0x1c] %v2435
  %2516 = vst [vmem:[#allocation2 + $0x310] sm:$0x1c] %v2436
  %2517 = vst [vmem:[#allocation2 + $0x318] sm:$0x1c] %v2437
  %2518 = vst [vmem:[#allocation2 + $0x320] sm:$0x1c] %v2438
  %2519 = vst [vmem:[#allocation2 + $0x328] sm:$0x1c] %v2439
  %2520 = vst [vmem:[#allocation2 + $0x330] sm:$0x1c] %v2440
  %2521 = vst [vmem:[#allocation2 + $0x338] sm:$0x1c] %v2441
  %2522 = vst [vmem:[#allocation2 + $0x340] sm:$0x1c] %v2442
  %2523 = vst [vmem:[#allocation2 + $0x348] sm:$0x1c] %v2443
  %2524 = vst [vmem:[#allocation2 + $0x350] sm:$0x1c] %v2444
  %2525 = vst [vmem:[#allocation2 + $0x358] sm:$0x1c] %v2445
  %2526 = vst [vmem:[#allocation2 + $0x360] sm:$0x1c] %v2446
  %2527 = vst [vmem:[#allocation2 + $0x368] sm:$0x1c] %v2447
  %2528 = vst [vmem:[#allocation2 + $0x370] sm:$0x1c] %v2448
  %2529 = vst [vmem:[#allocation2 + $0x378] sm:$0x1c] %v2449
  %2530 = vst [vmem:[#allocation2 + $0x380] sm:$0x1c] %v2450
  %2531 = vst [vmem:[#allocation2 + $0x388] sm:$0x1c] %v2451
  %2532 = vst [vmem:[#allocation2 + $0x390] sm:$0x1c] %v2452
  %2533 = vst [vmem:[#allocation2 + $0x398] sm:$0x1c] %v2453
  %2534 = vst [vmem:[#allocation2 + $0x3a0] sm:$0x1c] %v2454
  %2535 = vst [vmem:[#allocation2 + $0x3a8] sm:$0x1c] %v2455
  %2536 = vst [vmem:[#allocation2 + $0x3b0] sm:$0x1c] %v2456
  %2537 = vst [vmem:[#allocation2 + $0x3b8] sm:$0x1c] %v2457
  %2538 = vst [vmem:[#allocation2 + $0x3c0] sm:$0x1c] %v2458
  %2539 = vst [vmem:[#allocation2 + $0x3c8] sm:$0x1c] %v2459
  %v2540 = vld [vmem:[#allocation2] sm:$0x7]
  %v2541 = vld [vmem:[#allocation2 + $0x8] sm:$0x7]
  %v2542 = vld [vmem:[#allocation2 + $0x10] sm:$0x7]
  %v2543 = vld [vmem:[#allocation2 + $0x18] sm:$0x7]
  %v2544 = vld [vmem:[#allocation2 + $0x20] sm:$0x7]
  %v2545 = vld [vmem:[#allocation2 + $0x28] sm:$0x7]
  %v2546 = vld [vmem:[#allocation2 + $0x30] sm:$0x7]
  %v2547 = vld [vmem:[#allocation2 + $0x38] sm:$0x7]
  %v2548 = vld [vmem:[#allocation2 + $0x40] sm:$0x7]
  %v2549 = vld [vmem:[#allocation2 + $0x48] sm:$0x7]
  %v2550 = vld [vmem:[#allocation2 + $0x50] sm:$0x7]
  %v2551 = vld [vmem:[#allocation2 + $0x58] sm:$0x7]
  %v2552 = vld [vmem:[#allocation2 + $0x60] sm:$0x7]
  %v2553 = vld [vmem:[#allocation2 + $0x68] sm:$0x7]
  %v2554 = vld [vmem:[#allocation2 + $0x70] sm:$0x7]
  %v2555 = vld [vmem:[#allocation2 + $0x78] sm:$0x7]
  %v2556 = vld [vmem:[#allocation2 + $0x80] sm:$0x7]
  %v2557 = vld [vmem:[#allocation2 + $0x88] sm:$0x7]
  %v2558 = vld [vmem:[#allocation2 + $0x90] sm:$0x7]
  %v2559 = vld [vmem:[#allocation2 + $0x98] sm:$0x7]
  %v2560 = vld [vmem:[#allocation2 + $0xa0] sm:$0x7]
  %v2561 = vld [vmem:[#allocation2 + $0xa8] sm:$0x7]
  %v2562 = vld [vmem:[#allocation2 + $0xb0] sm:$0x7]
  %v2563 = vld [vmem:[#allocation2 + $0xb8] sm:$0x7]
  %v2564 = vld [vmem:[#allocation2 + $0xc0] sm:$0x7]
  %v2565 = vld [vmem:[#allocation2 + $0xc8] sm:$0x7]
  %v2566 = vld [vmem:[#allocation2 + $0xd0] sm:$0x7]
  %v2567 = vld [vmem:[#allocation2 + $0xd8] sm:$0x7]
  %v2568 = vld [vmem:[#allocation2 + $0xe0] sm:$0x7]
  %v2569 = vld [vmem:[#allocation2 + $0xe8] sm:$0x7]
  %v2570 = vld [vmem:[#allocation2 + $0xf0] sm:$0x7]
  %v2571 = vld [vmem:[#allocation2 + $0xf8] sm:$0x7]
  %v2572 = vld [vmem:[#allocation2 + $0x100] sm:$0x7]
  %v2573 = vld [vmem:[#allocation2 + $0x108] sm:$0x7]
  %v2574 = vld [vmem:[#allocation2 + $0x110] sm:$0x7]
  %v2575 = vld [vmem:[#allocation2 + $0x118] sm:$0x7]
  %v2576 = vld [vmem:[#allocation2 + $0x120] sm:$0x7]
  %v2577 = vld [vmem:[#allocation2 + $0x128] sm:$0x7]
  %v2578 = vld [vmem:[#allocation2 + $0x130] sm:$0x7]
  %v2579 = vld [vmem:[#allocation2 + $0x138] sm:$0x7]
  %v2580 = vld [vmem:[#allocation2 + $0x140] sm:$0x7]
  %v2622 = vrot.slane %v2540, 3
  %v2623 = vrot.slane %v2541, 3
  %v2624 = vrot.slane %v2542, 3
  %v2625 = vrot.slane %v2543, 3
  %v2626 = vrot.slane %v2544, 3
  %v2627 = vrot.slane %v2545, 3
  %v2628 = vrot.slane %v2546, 3
  %v2629 = vrot.slane %v2547, 3
  %v2630 = vrot.slane %v2548, 3
  %v2631 = vrot.slane %v2549, 3
  %v2632 = vrot.slane %v2550, 3
  %v2633 = vrot.slane %v2551, 3
  %v2634 = vrot.slane %v2552, 3
  %v2635 = vrot.slane %v2553, 3
  %v2636 = vrot.slane %v2554, 3
  %v2637 = vrot.slane %v2555, 3
  %v2638 = vrot.slane %v2556, 3
  %v2639 = vrot.slane %v2557, 3
  %v2640 = vrot.slane %v2558, 3
  %v2641 = vrot.slane %v2559, 3
  %v2642 = vrot.slane %v2560, 3
  %v2643 = vrot.slane %v2561, 3
  %v2644 = vrot.slane %v2562, 3
  %v2645 = vrot.slane %v2563, 3
  %v2646 = vrot.slane %v2564, 3
  %v2647 = vrot.slane %v2565, 3
  %v2648 = vrot.slane %v2566, 3
  %v2649 = vrot.slane %v2567, 3
  %v2650 = vrot.slane %v2568, 3
  %v2651 = vrot.slane %v2569, 3
  %v2652 = vrot.slane %v2570, 3
  %v2653 = vrot.slane %v2571, 3
  %v2654 = vrot.slane %v2572, 3
  %v2655 = vrot.slane %v2573, 3
  %v2656 = vrot.slane %v2574, 3
  %v2657 = vrot.slane %v2575, 3
  %v2658 = vrot.slane %v2576, 3
  %v2659 = vrot.slane %v2577, 3
  %v2660 = vrot.slane %v2578, 3
  %v2661 = vrot.slane %v2579, 3
  %v2662 = vrot.slane %v2580, 3
  %2663 = vrot.lane.b32.xlu0 %v2622, 79
  %v2664 = vpop.permute.xlu0 %2663
  %2665 = vrot.lane.b32.xlu0 %v2623, 79
  %v2666 = vpop.permute.xlu0 %2665
  %2667 = vrot.lane.b32.xlu0 %v2624, 79
  %v2668 = vpop.permute.xlu0 %2667
  %2669 = vrot.lane.b32.xlu0 %v2625, 79
  %v2670 = vpop.permute.xlu0 %2669
  %2671 = vrot.lane.b32.xlu0 %v2626, 79
  %v2672 = vpop.permute.xlu0 %2671
  %2673 = vrot.lane.b32.xlu0 %v2627, 79
  %v2674 = vpop.permute.xlu0 %2673
  %2675 = vrot.lane.b32.xlu0 %v2628, 79
  %v2676 = vpop.permute.xlu0 %2675
  %2677 = vrot.lane.b32.xlu0 %v2629, 79
  %v2678 = vpop.permute.xlu0 %2677
  %2679 = vrot.lane.b32.xlu0 %v2630, 79
  %v2680 = vpop.permute.xlu0 %2679
  %2681 = vrot.lane.b32.xlu0 %v2631, 79
  %v2682 = vpop.permute.xlu0 %2681
  %2683 = vrot.lane.b32.xlu0 %v2632, 79
  %v2684 = vpop.permute.xlu0 %2683
  %2685 = vrot.lane.b32.xlu0 %v2633, 79
  %v2686 = vpop.permute.xlu0 %2685
  %2687 = vrot.lane.b32.xlu0 %v2634, 79
  %v2688 = vpop.permute.xlu0 %2687
  %2689 = vrot.lane.b32.xlu0 %v2635, 79
  %v2690 = vpop.permute.xlu0 %2689
  %2691 = vrot.lane.b32.xlu0 %v2636, 79
  %v2692 = vpop.permute.xlu0 %2691
  %2693 = vrot.lane.b32.xlu0 %v2637, 79
  %v2694 = vpop.permute.xlu0 %2693
  %2695 = vrot.lane.b32.xlu0 %v2638, 79
  %v2696 = vpop.permute.xlu0 %2695
  %2697 = vrot.lane.b32.xlu0 %v2639, 79
  %v2698 = vpop.permute.xlu0 %2697
  %2699 = vrot.lane.b32.xlu0 %v2640, 79
  %v2700 = vpop.permute.xlu0 %2699
  %2701 = vrot.lane.b32.xlu0 %v2641, 79
  %v2702 = vpop.permute.xlu0 %2701
  %2703 = vrot.lane.b32.xlu0 %v2642, 79
  %v2704 = vpop.permute.xlu0 %2703
  %2705 = vrot.lane.b32.xlu0 %v2643, 79
  %v2706 = vpop.permute.xlu0 %2705
  %2707 = vrot.lane.b32.xlu0 %v2644, 79
  %v2708 = vpop.permute.xlu0 %2707
  %2709 = vrot.lane.b32.xlu0 %v2645, 79
  %v2710 = vpop.permute.xlu0 %2709
  %2711 = vrot.lane.b32.xlu0 %v2646, 79
  %v2712 = vpop.permute.xlu0 %2711
  %2713 = vrot.lane.b32.xlu0 %v2647, 79
  %v2714 = vpop.permute.xlu0 %2713
  %2715 = vrot.lane.b32.xlu0 %v2648, 79
  %v2716 = vpop.permute.xlu0 %2715
  %2717 = vrot.lane.b32.xlu0 %v2649, 79
  %v2718 = vpop.permute.xlu0 %2717
  %2719 = vrot.lane.b32.xlu0 %v2650, 79
  %v2720 = vpop.permute.xlu0 %2719
  %2721 = vrot.lane.b32.xlu0 %v2651, 79
  %v2722 = vpop.permute.xlu0 %2721
  %2723 = vrot.lane.b32.xlu0 %v2652, 79
  %v2724 = vpop.permute.xlu0 %2723
  %2725 = vrot.lane.b32.xlu0 %v2653, 79
  %v2726 = vpop.permute.xlu0 %2725
  %2727 = vrot.lane.b32.xlu0 %v2654, 79
  %v2728 = vpop.permute.xlu0 %2727
  %2729 = vrot.lane.b32.xlu0 %v2655, 79
  %v2730 = vpop.permute.xlu0 %2729
  %2731 = vrot.lane.b32.xlu0 %v2656, 79
  %v2732 = vpop.permute.xlu0 %2731
  %2733 = vrot.lane.b32.xlu0 %v2657, 79
  %v2734 = vpop.permute.xlu0 %2733
  %2735 = vrot.lane.b32.xlu0 %v2658, 79
  %v2736 = vpop.permute.xlu0 %2735
  %2737 = vrot.lane.b32.xlu0 %v2659, 79
  %v2738 = vpop.permute.xlu0 %2737
  %2739 = vrot.lane.b32.xlu0 %v2660, 79
  %v2740 = vpop.permute.xlu0 %2739
  %2741 = vrot.lane.b32.xlu0 %v2661, 79
  %v2742 = vpop.permute.xlu0 %2741
  %2743 = vrot.lane.b32.xlu0 %v2662, 79
  %v2744 = vpop.permute.xlu0 %2743
  %vm2745 = vcmask 646144
  %v2746 = vsel %vm2745, %v2664, %v2666
  %v2747 = vsel %vm2745, %v2666, %v2668
  %v2748 = vsel %vm2745, %v2668, %v2670
  %v2749 = vsel %vm2745, %v2670, %v2672
  %v2750 = vsel %vm2745, %v2672, %v2674
  %v2751 = vsel %vm2745, %v2674, %v2676
  %v2752 = vsel %vm2745, %v2676, %v2678
  %v2753 = vsel %vm2745, %v2678, %v2680
  %v2754 = vsel %vm2745, %v2680, %v2682
  %v2755 = vsel %vm2745, %v2682, %v2684
  %v2756 = vsel %vm2745, %v2684, %v2686
  %v2757 = vsel %vm2745, %v2686, %v2688
  %v2758 = vsel %vm2745, %v2688, %v2690
  %v2759 = vsel %vm2745, %v2690, %v2692
  %v2760 = vsel %vm2745, %v2692, %v2694
  %v2761 = vsel %vm2745, %v2694, %v2696
  %v2762 = vsel %vm2745, %v2696, %v2698
  %v2763 = vsel %vm2745, %v2698, %v2700
  %v2764 = vsel %vm2745, %v2700, %v2702
  %v2765 = vsel %vm2745, %v2702, %v2704
  %v2766 = vsel %vm2745, %v2704, %v2706
  %v2767 = vsel %vm2745, %v2706, %v2708
  %v2768 = vsel %vm2745, %v2708, %v2710
  %v2769 = vsel %vm2745, %v2710, %v2712
  %v2770 = vsel %vm2745, %v2712, %v2714
  %v2771 = vsel %vm2745, %v2714, %v2716
  %v2772 = vsel %vm2745, %v2716, %v2718
  %v2773 = vsel %vm2745, %v2718, %v2720
  %v2774 = vsel %vm2745, %v2720, %v2722
  %v2775 = vsel %vm2745, %v2722, %v2724
  %v2776 = vsel %vm2745, %v2724, %v2726
  %v2777 = vsel %vm2745, %v2726, %v2728
  %v2778 = vsel %vm2745, %v2728, %v2730
  %v2779 = vsel %vm2745, %v2730, %v2732
  %v2780 = vsel %vm2745, %v2732, %v2734
  %v2781 = vsel %vm2745, %v2734, %v2736
  %v2782 = vsel %vm2745, %v2736, %v2738
  %v2783 = vsel %vm2745, %v2738, %v2740
  %v2784 = vsel %vm2745, %v2740, %v2742
  %v2785 = vsel %vm2745, %v2742, %v2744
  %2826 = vst [vmem:[#allocation2 + $0x290] sm:$0xe0] %v2746
  %2827 = vst [vmem:[#allocation2 + $0x298] sm:$0xe0] %v2747
  %2828 = vst [vmem:[#allocation2 + $0x2a0] sm:$0xe0] %v2748
  %2829 = vst [vmem:[#allocation2 + $0x2a8] sm:$0xe0] %v2749
  %2830 = vst [vmem:[#allocation2 + $0x2b0] sm:$0xe0] %v2750
  %2831 = vst [vmem:[#allocation2 + $0x2b8] sm:$0xe0] %v2751
  %2832 = vst [vmem:[#allocation2 + $0x2c0] sm:$0xe0] %v2752
  %2833 = vst [vmem:[#allocation2 + $0x2c8] sm:$0xe0] %v2753
  %2834 = vst [vmem:[#allocation2 + $0x2d0] sm:$0xe0] %v2754
  %2835 = vst [vmem:[#allocation2 + $0x2d8] sm:$0xe0] %v2755
  %2836 = vst [vmem:[#allocation2 + $0x2e0] sm:$0xe0] %v2756
  %2837 = vst [vmem:[#allocation2 + $0x2e8] sm:$0xe0] %v2757
  %2838 = vst [vmem:[#allocation2 + $0x2f0] sm:$0xe0] %v2758
  %2839 = vst [vmem:[#allocation2 + $0x2f8] sm:$0xe0] %v2759
  %2840 = vst [vmem:[#allocation2 + $0x300] sm:$0xe0] %v2760
  %2841 = vst [vmem:[#allocation2 + $0x308] sm:$0xe0] %v2761
  %2842 = vst [vmem:[#allocation2 + $0x310] sm:$0xe0] %v2762
  %2843 = vst [vmem:[#allocation2 + $0x318] sm:$0xe0] %v2763
  %2844 = vst [vmem:[#allocation2 + $0x320] sm:$0xe0] %v2764
  %2845 = vst [vmem:[#allocation2 + $0x328] sm:$0xe0] %v2765
  %2846 = vst [vmem:[#allocation2 + $0x330] sm:$0xe0] %v2766
  %2847 = vst [vmem:[#allocation2 + $0x338] sm:$0xe0] %v2767
  %2848 = vst [vmem:[#allocation2 + $0x340] sm:$0xe0] %v2768
  %2849 = vst [vmem:[#allocation2 + $0x348] sm:$0xe0] %v2769
  %2850 = vst [vmem:[#allocation2 + $0x350] sm:$0xe0] %v2770
  %2851 = vst [vmem:[#allocation2 + $0x358] sm:$0xe0] %v2771
  %2852 = vst [vmem:[#allocation2 + $0x360] sm:$0xe0] %v2772
  %2853 = vst [vmem:[#allocation2 + $0x368] sm:$0xe0] %v2773
  %2854 = vst [vmem:[#allocation2 + $0x370] sm:$0xe0] %v2774
  %2855 = vst [vmem:[#allocation2 + $0x378] sm:$0xe0] %v2775
  %2856 = vst [vmem:[#allocation2 + $0x380] sm:$0xe0] %v2776
  %2857 = vst [vmem:[#allocation2 + $0x388] sm:$0xe0] %v2777
  %2858 = vst [vmem:[#allocation2 + $0x390] sm:$0xe0] %v2778
  %2859 = vst [vmem:[#allocation2 + $0x398] sm:$0xe0] %v2779
  %2860 = vst [vmem:[#allocation2 + $0x3a0] sm:$0xe0] %v2780
  %2861 = vst [vmem:[#allocation2 + $0x3a8] sm:$0xe0] %v2781
  %2862 = vst [vmem:[#allocation2 + $0x3b0] sm:$0xe0] %v2782
  %2863 = vst [vmem:[#allocation2 + $0x3b8] sm:$0xe0] %v2783
  %2864 = vst [vmem:[#allocation2 + $0x3c0] sm:$0xe0] %v2784
  %2865 = vst [vmem:[#allocation2 + $0x3c8] sm:$0xe0] %v2785
  %v2866 = vld [vmem:[#allocation2] sm:$0x7]
  %v2867 = vld [vmem:[#allocation2 + $0x8] sm:$0x7]
  %v2868 = vld [vmem:[#allocation2 + $0x10] sm:$0x7]
  %v2869 = vld [vmem:[#allocation2 + $0x18] sm:$0x7]
  %v2870 = vld [vmem:[#allocation2 + $0x20] sm:$0x7]
  %v2871 = vld [vmem:[#allocation2 + $0x28] sm:$0x7]
  %v2872 = vld [vmem:[#allocation2 + $0x30] sm:$0x7]
  %v2873 = vld [vmem:[#allocation2 + $0x38] sm:$0x7]
  %v2874 = vld [vmem:[#allocation2 + $0x40] sm:$0x7]
  %v2875 = vld [vmem:[#allocation2 + $0x48] sm:$0x7]
  %v2876 = vld [vmem:[#allocation2 + $0x50] sm:$0x7]
  %v2877 = vld [vmem:[#allocation2 + $0x58] sm:$0x7]
  %v2878 = vld [vmem:[#allocation2 + $0x60] sm:$0x7]
  %v2879 = vld [vmem:[#allocation2 + $0x68] sm:$0x7]
  %v2880 = vld [vmem:[#allocation2 + $0x70] sm:$0x7]
  %v2881 = vld [vmem:[#allocation2 + $0x78] sm:$0x7]
  %v2882 = vld [vmem:[#allocation2 + $0x80] sm:$0x7]
  %v2883 = vld [vmem:[#allocation2 + $0x88] sm:$0x7]
  %v2884 = vld [vmem:[#allocation2 + $0x90] sm:$0x7]
  %v2885 = vld [vmem:[#allocation2 + $0x98] sm:$0x7]
  %v2886 = vld [vmem:[#allocation2 + $0xa0] sm:$0x7]
  %v2887 = vld [vmem:[#allocation2 + $0xa8] sm:$0x7]
  %v2888 = vld [vmem:[#allocation2 + $0xb0] sm:$0x7]
  %v2889 = vld [vmem:[#allocation2 + $0xb8] sm:$0x7]
  %v2890 = vld [vmem:[#allocation2 + $0xc0] sm:$0x7]
  %v2891 = vld [vmem:[#allocation2 + $0xc8] sm:$0x7]
  %v2892 = vld [vmem:[#allocation2 + $0xd0] sm:$0x7]
  %v2893 = vld [vmem:[#allocation2 + $0xd8] sm:$0x7]
  %v2894 = vld [vmem:[#allocation2 + $0xe0] sm:$0x7]
  %v2895 = vld [vmem:[#allocation2 + $0xe8] sm:$0x7]
  %v2896 = vld [vmem:[#allocation2 + $0xf0] sm:$0x7]
  %v2897 = vld [vmem:[#allocation2 + $0xf8] sm:$0x7]
  %v2898 = vld [vmem:[#allocation2 + $0x100] sm:$0x7]
  %v2899 = vld [vmem:[#allocation2 + $0x108] sm:$0x7]
  %v2900 = vld [vmem:[#allocation2 + $0x110] sm:$0x7]
  %v2901 = vld [vmem:[#allocation2 + $0x118] sm:$0x7]
  %v2902 = vld [vmem:[#allocation2 + $0x120] sm:$0x7]
  %v2903 = vld [vmem:[#allocation2 + $0x128] sm:$0x7]
  %v2904 = vld [vmem:[#allocation2 + $0x130] sm:$0x7]
  %v2905 = vld [vmem:[#allocation2 + $0x138] sm:$0x7]
  %v2906 = vld [vmem:[#allocation2 + $0x140] sm:$0x7]
  %2948 = vrot.lane.b32.xlu0 %v2866, 78
  %v2949 = vpop.permute.xlu0 %2948
  %2950 = vrot.lane.b32.xlu0 %v2867, 78
  %v2951 = vpop.permute.xlu0 %2950
  %2952 = vrot.lane.b32.xlu0 %v2868, 78
  %v2953 = vpop.permute.xlu0 %2952
  %2954 = vrot.lane.b32.xlu0 %v2869, 78
  %v2955 = vpop.permute.xlu0 %2954
  %2956 = vrot.lane.b32.xlu0 %v2870, 78
  %v2957 = vpop.permute.xlu0 %2956
  %2958 = vrot.lane.b32.xlu0 %v2871, 78
  %v2959 = vpop.permute.xlu0 %2958
  %2960 = vrot.lane.b32.xlu0 %v2872, 78
  %v2961 = vpop.permute.xlu0 %2960
  %2962 = vrot.lane.b32.xlu0 %v2873, 78
  %v2963 = vpop.permute.xlu0 %2962
  %2964 = vrot.lane.b32.xlu0 %v2874, 78
  %v2965 = vpop.permute.xlu0 %2964
  %2966 = vrot.lane.b32.xlu0 %v2875, 78
  %v2967 = vpop.permute.xlu0 %2966
  %2968 = vrot.lane.b32.xlu0 %v2876, 78
  %v2969 = vpop.permute.xlu0 %2968
  %2970 = vrot.lane.b32.xlu0 %v2877, 78
  %v2971 = vpop.permute.xlu0 %2970
  %2972 = vrot.lane.b32.xlu0 %v2878, 78
  %v2973 = vpop.permute.xlu0 %2972
  %2974 = vrot.lane.b32.xlu0 %v2879, 78
  %v2975 = vpop.permute.xlu0 %2974
  %2976 = vrot.lane.b32.xlu0 %v2880, 78
  %v2977 = vpop.permute.xlu0 %2976
  %2978 = vrot.lane.b32.xlu0 %v2881, 78
  %v2979 = vpop.permute.xlu0 %2978
  %2980 = vrot.lane.b32.xlu0 %v2882, 78
  %v2981 = vpop.permute.xlu0 %2980
  %2982 = vrot.lane.b32.xlu0 %v2883, 78
  %v2983 = vpop.permute.xlu0 %2982
  %2984 = vrot.lane.b32.xlu0 %v2884, 78
  %v2985 = vpop.permute.xlu0 %2984
  %2986 = vrot.lane.b32.xlu0 %v2885, 78
  %v2987 = vpop.permute.xlu0 %2986
  %2988 = vrot.lane.b32.xlu0 %v2886, 78
  %v2989 = vpop.permute.xlu0 %2988
  %2990 = vrot.lane.b32.xlu0 %v2887, 78
  %v2991 = vpop.permute.xlu0 %2990
  %2992 = vrot.lane.b32.xlu0 %v2888, 78
  %v2993 = vpop.permute.xlu0 %2992
  %2994 = vrot.lane.b32.xlu0 %v2889, 78
  %v2995 = vpop.permute.xlu0 %2994
  %2996 = vrot.lane.b32.xlu0 %v2890, 78
  %v2997 = vpop.permute.xlu0 %2996
  %2998 = vrot.lane.b32.xlu0 %v2891, 78
  %v2999 = vpop.permute.xlu0 %2998
  %3000 = vrot.lane.b32.xlu0 %v2892, 78
  %v3001 = vpop.permute.xlu0 %3000
  %3002 = vrot.lane.b32.xlu0 %v2893, 78
  %v3003 = vpop.permute.xlu0 %3002
  %3004 = vrot.lane.b32.xlu0 %v2894, 78
  %v3005 = vpop.permute.xlu0 %3004
  %3006 = vrot.lane.b32.xlu0 %v2895, 78
  %v3007 = vpop.permute.xlu0 %3006
  %3008 = vrot.lane.b32.xlu0 %v2896, 78
  %v3009 = vpop.permute.xlu0 %3008
  %3010 = vrot.lane.b32.xlu0 %v2897, 78
  %v3011 = vpop.permute.xlu0 %3010
  %3012 = vrot.lane.b32.xlu0 %v2898, 78
  %v3013 = vpop.permute.xlu0 %3012
  %3014 = vrot.lane.b32.xlu0 %v2899, 78
  %v3015 = vpop.permute.xlu0 %3014
  %3016 = vrot.lane.b32.xlu0 %v2900, 78
  %v3017 = vpop.permute.xlu0 %3016
  %3018 = vrot.lane.b32.xlu0 %v2901, 78
  %v3019 = vpop.permute.xlu0 %3018
  %3020 = vrot.lane.b32.xlu0 %v2902, 78
  %v3021 = vpop.permute.xlu0 %3020
  %3022 = vrot.lane.b32.xlu0 %v2903, 78
  %v3023 = vpop.permute.xlu0 %3022
  %3024 = vrot.lane.b32.xlu0 %v2904, 78
  %v3025 = vpop.permute.xlu0 %3024
  %3026 = vrot.lane.b32.xlu0 %v2905, 78
  %v3027 = vpop.permute.xlu0 %3026
  %3028 = vrot.lane.b32.xlu0 %v2906, 78
  %v3029 = vpop.permute.xlu0 %3028
  %vm3030 = vcmask 637952
  %v3031 = vsel %vm3030, %v2949, %v2951
  %v3032 = vsel %vm3030, %v2951, %v2953
  %v3033 = vsel %vm3030, %v2953, %v2955
  %v3034 = vsel %vm3030, %v2955, %v2957
  %v3035 = vsel %vm3030, %v2957, %v2959
  %v3036 = vsel %vm3030, %v2959, %v2961
  %v3037 = vsel %vm3030, %v2961, %v2963
  %v3038 = vsel %vm3030, %v2963, %v2965
  %v3039 = vsel %vm3030, %v2965, %v2967
  %v3040 = vsel %vm3030, %v2967, %v2969
  %v3041 = vsel %vm3030, %v2969, %v2971
  %v3042 = vsel %vm3030, %v2971, %v2973
  %v3043 = vsel %vm3030, %v2973, %v2975
  %v3044 = vsel %vm3030, %v2975, %v2977
  %v3045 = vsel %vm3030, %v2977, %v2979
  %v3046 = vsel %vm3030, %v2979, %v2981
  %v3047 = vsel %vm3030, %v2981, %v2983
  %v3048 = vsel %vm3030, %v2983, %v2985
  %v3049 = vsel %vm3030, %v2985, %v2987
  %v3050 = vsel %vm3030, %v2987, %v2989
  %v3051 = vsel %vm3030, %v2989, %v2991
  %v3052 = vsel %vm3030, %v2991, %v2993
  %v3053 = vsel %vm3030, %v2993, %v2995
  %v3054 = vsel %vm3030, %v2995, %v2997
  %v3055 = vsel %vm3030, %v2997, %v2999
  %v3056 = vsel %vm3030, %v2999, %v3001
  %v3057 = vsel %vm3030, %v3001, %v3003
  %v3058 = vsel %vm3030, %v3003, %v3005
  %v3059 = vsel %vm3030, %v3005, %v3007
  %v3060 = vsel %vm3030, %v3007, %v3009
  %v3061 = vsel %vm3030, %v3009, %v3011
  %v3062 = vsel %vm3030, %v3011, %v3013
  %v3063 = vsel %vm3030, %v3013, %v3015
  %v3064 = vsel %vm3030, %v3015, %v3017
  %v3065 = vsel %vm3030, %v3017, %v3019
  %v3066 = vsel %vm3030, %v3019, %v3021
  %v3067 = vsel %vm3030, %v3021, %v3023
  %v3068 = vsel %vm3030, %v3023, %v3025
  %v3069 = vsel %vm3030, %v3025, %v3027
  %v3070 = vsel %vm3030, %v3027, %v3029
  %3111 = vst [vmem:[#allocation2 + $0x3d8] sm:$0x7] %v3031
  %3112 = vst [vmem:[#allocation2 + $0x3e0] sm:$0x7] %v3032
  %3113 = vst [vmem:[#allocation2 + $0x3e8] sm:$0x7] %v3033
  %3114 = vst [vmem:[#allocation2 + $0x3f0] sm:$0x7] %v3034
  %3115 = vst [vmem:[#allocation2 + $0x3f8] sm:$0x7] %v3035
  %3116 = vst [vmem:[#allocation2 + $0x400] sm:$0x7] %v3036
  %3117 = vst [vmem:[#allocation2 + $0x408] sm:$0x7] %v3037
  %3118 = vst [vmem:[#allocation2 + $0x410] sm:$0x7] %v3038
  %3119 = vst [vmem:[#allocation2 + $0x418] sm:$0x7] %v3039
  %3120 = vst [vmem:[#allocation2 + $0x420] sm:$0x7] %v3040
  %3121 = vst [vmem:[#allocation2 + $0x428] sm:$0x7] %v3041
  %3122 = vst [vmem:[#allocation2 + $0x430] sm:$0x7] %v3042
  %3123 = vst [vmem:[#allocation2 + $0x438] sm:$0x7] %v3043
  %3124 = vst [vmem:[#allocation2 + $0x440] sm:$0x7] %v3044
  %3125 = vst [vmem:[#allocation2 + $0x448] sm:$0x7] %v3045
  %3126 = vst [vmem:[#allocation2 + $0x450] sm:$0x7] %v3046
  %3127 = vst [vmem:[#allocation2 + $0x458] sm:$0x7] %v3047
  %3128 = vst [vmem:[#allocation2 + $0x460] sm:$0x7] %v3048
  %3129 = vst [vmem:[#allocation2 + $0x468] sm:$0x7] %v3049
  %3130 = vst [vmem:[#allocation2 + $0x470] sm:$0x7] %v3050
  %3131 = vst [vmem:[#allocation2 + $0x478] sm:$0x7] %v3051
  %3132 = vst [vmem:[#allocation2 + $0x480] sm:$0x7] %v3052
  %3133 = vst [vmem:[#allocation2 + $0x488] sm:$0x7] %v3053
  %3134 = vst [vmem:[#allocation2 + $0x490] sm:$0x7] %v3054
  %3135 = vst [vmem:[#allocation2 + $0x498] sm:$0x7] %v3055
  %3136 = vst [vmem:[#allocation2 + $0x4a0] sm:$0x7] %v3056
  %3137 = vst [vmem:[#allocation2 + $0x4a8] sm:$0x7] %v3057
  %3138 = vst [vmem:[#allocation2 + $0x4b0] sm:$0x7] %v3058
  %3139 = vst [vmem:[#allocation2 + $0x4b8] sm:$0x7] %v3059
  %3140 = vst [vmem:[#allocation2 + $0x4c0] sm:$0x7] %v3060
  %3141 = vst [vmem:[#allocation2 + $0x4c8] sm:$0x7] %v3061
  %3142 = vst [vmem:[#allocation2 + $0x4d0] sm:$0x7] %v3062
  %3143 = vst [vmem:[#allocation2 + $0x4d8] sm:$0x7] %v3063
  %3144 = vst [vmem:[#allocation2 + $0x4e0] sm:$0x7] %v3064
  %3145 = vst [vmem:[#allocation2 + $0x4e8] sm:$0x7] %v3065
  %3146 = vst [vmem:[#allocation2 + $0x4f0] sm:$0x7] %v3066
  %3147 = vst [vmem:[#allocation2 + $0x4f8] sm:$0x7] %v3067
  %3148 = vst [vmem:[#allocation2 + $0x500] sm:$0x7] %v3068
  %3149 = vst [vmem:[#allocation2 + $0x508] sm:$0x7] %v3069
  %3150 = vst [vmem:[#allocation2 + $0x510] sm:$0x7] %v3070
  %v3151 = vld [vmem:[%s2] sm:$0xf]
  %v3152 = vld [vmem:[%s2 + $0x4] sm:$0xf]
  %v3153 = vld [vmem:[%s2 + $0x8] sm:$0xf]
  %v3154 = vld [vmem:[%s2 + $0xc] sm:$0xf]
  %v3155 = vld [vmem:[#allocation2] sm:$0xff]
  %v3156 = vld [vmem:[#allocation2 + $0x8] sm:$0xff]
  %v3157 = vld [vmem:[#allocation2 + $0x10] sm:$0xff]
  %v3158 = vld [vmem:[#allocation2 + $0x18] sm:$0xff]
  %v3159 = vld [vmem:[#allocation2 + $0x20] sm:$0xff]
  %v3160 = vld [vmem:[#allocation2 + $0x148] sm:$0xff]
  %v3161 = vld [vmem:[#allocation2 + $0x150] sm:$0xff]
  %v3162 = vld [vmem:[#allocation2 + $0x158] sm:$0xff]
  %v3163 = vld [vmem:[#allocation2 + $0x160] sm:$0xff]
  %v3164 = vld [vmem:[#allocation2 + $0x168] sm:$0xff]
  %v3165 = vld [vmem:[#allocation2 + $0x290] sm:$0xff]
  %v3166 = vld [vmem:[#allocation2 + $0x298] sm:$0xff]
  %v3167 = vld [vmem:[#allocation2 + $0x2a0] sm:$0xff]
  %v3168 = vld [vmem:[#allocation2 + $0x2a8] sm:$0xff]
  %v3169 = vld [vmem:[#allocation2 + $0x2b0] sm:$0xff]
  %v3170 = vld [vmem:[#allocation2 + $0x3d8] sm:$0xff]
  %v3171 = vld [vmem:[#allocation2 + $0x3e0] sm:$0xff]
  %v3172 = vld [vmem:[#allocation2 + $0x3e8] sm:$0xff]
  %v3173 = vld [vmem:[#allocation2 + $0x3f0] sm:$0xff]
  %v3174 = vld [vmem:[#allocation2 + $0x3f8] sm:$0xff]
  %v3175 = vpack.c.bf16 %v3160, %v3155
  %v3176 = vpack.c.bf16 %v3161, %v3156
  %v3177 = vpack.c.bf16 %v3162, %v3157
  %v3178 = vpack.c.bf16 %v3163, %v3158
  %v3179 = vpack.c.bf16 %v3164, %v3159
  %v3180 = vpack.c.bf16 %v3170, %v3165
  %v3181 = vpack.c.bf16 %v3171, %v3166
  %v3182 = vpack.c.bf16 %v3172, %v3167
  %v3183 = vpack.c.bf16 %v3173, %v3168
  %v3184 = vpack.c.bf16 %v3174, %v3169
  %v3189 = vunpack.c.l.b16 %v3151
  %v3190 = vunpack.c.l.b16 %v3152
  %v3191 = vunpack.c.l.b16 %v3153
  %v3192 = vunpack.c.l.b16 %v3154
  %v3193 = vpack.c.b16 %v3190, %v3189
  %v3194 = vpack.c.b16 %v3192, %v3191
  %vm3195 = vcmask 261120
  %v3197 = vsel %vm3195, %v3193, 0
  %v3200 = vsel %vm3195, %v3194, 0
  %3202 = vmatpush.bf16.msra.mxu0 0
  %3203 = vmatpush.bf16.msra.mxu0 0
  %3204 = vmatpush.bf16.msra.mxu0 0
  %3205 = vmatpush.bf16.msra.mxu0 0
  %3206 = vmatpush.bf16.msra.mxu0 0
  %3207 = vmatpush.bf16.msra.mxu0 0
  %3208 = vmatpush.bf16.msra.mxu0 %v3180
  %3209 = vmatpush.bf16.msra.mxu0 %v3175
  %3210 = vmatmul.bf16.gmra.mxu0 %v3197
  %v3211 = vpop.f32.mrf.mxu0
  %v3212 = vadd.f32 0.0, %v3211
  %v3213 = vpop.f32.mrf.mxu0
  %v3214 = vadd.f32 0.0, %v3213
  %3215 = vmatmul.bf16.gmra.mxu0 %v3200
  %v3216 = vpop.f32.mrf.mxu0
  %v3217 = vadd.f32 0.0, %v3216
  %v3218 = vpop.f32.mrf.mxu0
  %v3219 = vadd.f32 0.0, %v3218
  %3220 = vdwg.mxu0
  %3221 = vmatpush.bf16.msra.mxu0 0
  %3222 = vmatpush.bf16.msra.mxu0 0
  %3223 = vmatpush.bf16.msra.mxu0 0
  %3224 = vmatpush.bf16.msra.mxu0 0
  %3225 = vmatpush.bf16.msra.mxu0 0
  %3226 = vmatpush.bf16.msra.mxu0 0
  %3227 = vmatpush.bf16.msra.mxu0 %v3181
  %3228 = vmatpush.bf16.msra.mxu0 %v3176
  %3229 = vmatmul.bf16.gmra.mxu0 %v3197
  %v3230 = vpop.f32.mrf.mxu0
  %v3231 = vadd.f32 0.0, %v3230
  %v3232 = vpop.f32.mrf.mxu0
  %v3233 = vadd.f32 0.0, %v3232
  %3234 = vmatmul.bf16.gmra.mxu0 %v3200
  %v3235 = vpop.f32.mrf.mxu0
  %v3236 = vadd.f32 0.0, %v3235
  %v3237 = vpop.f32.mrf.mxu0
  %v3238 = vadd.f32 0.0, %v3237
  %3239 = vdwg.mxu0
  %3240 = vmatpush.bf16.msra.mxu0 0
  %3241 = vmatpush.bf16.msra.mxu0 0
  %3242 = vmatpush.bf16.msra.mxu0 0
  %3243 = vmatpush.bf16.msra.mxu0 0
  %3244 = vmatpush.bf16.msra.mxu0 0
  %3245 = vmatpush.bf16.msra.mxu0 0
  %3246 = vmatpush.bf16.msra.mxu0 %v3182
  %3247 = vmatpush.bf16.msra.mxu0 %v3177
  %3248 = vmatmul.bf16.gmra.mxu0 %v3197
  %v3249 = vpop.f32.mrf.mxu0
  %v3250 = vadd.f32 0.0, %v3249
  %v3251 = vpop.f32.mrf.mxu0
  %v3252 = vadd.f32 0.0, %v3251
  %3253 = vmatmul.bf16.gmra.mxu0 %v3200
  %v3254 = vpop.f32.mrf.mxu0
  %v3255 = vadd.f32 0.0, %v3254
  %v3256 = vpop.f32.mrf.mxu0
  %v3257 = vadd.f32 0.0, %v3256
  %3258 = vdwg.mxu0
  %3259 = vmatpush.bf16.msra.mxu0 0
  %3260 = vmatpush.bf16.msra.mxu0 0
  %3261 = vmatpush.bf16.msra.mxu0 0
  %3262 = vmatpush.bf16.msra.mxu0 0
  %3263 = vmatpush.bf16.msra.mxu0 0
  %3264 = vmatpush.bf16.msra.mxu0 0
  %3265 = vmatpush.bf16.msra.mxu0 %v3183
  %3266 = vmatpush.bf16.msra.mxu0 %v3178
  %3267 = vmatmul.bf16.gmra.mxu0 %v3197
  %v3268 = vpop.f32.mrf.mxu0
  %v3269 = vadd.f32 0.0, %v3268
  %v3270 = vpop.f32.mrf.mxu0
  %v3271 = vadd.f32 0.0, %v3270
  %3272 = vmatmul.bf16.gmra.mxu0 %v3200
  %v3273 = vpop.f32.mrf.mxu0
  %v3274 = vadd.f32 0.0, %v3273
  %v3275 = vpop.f32.mrf.mxu0
  %v3276 = vadd.f32 0.0, %v3275
  %3277 = vdwg.mxu0
  %3278 = vmatpush.bf16.msra.mxu0 0
  %3279 = vmatpush.bf16.msra.mxu0 0
  %3280 = vmatpush.bf16.msra.mxu0 0
  %3281 = vmatpush.bf16.msra.mxu0 0
  %3282 = vmatpush.bf16.msra.mxu0 0
  %3283 = vmatpush.bf16.msra.mxu0 0
  %3284 = vmatpush.bf16.msra.mxu0 %v3184
  %3285 = vmatpush.bf16.msra.mxu0 %v3179
  %3286 = vmatmul.bf16.gmra.mxu0 %v3197
  %v3287 = vpop.f32.mrf.mxu0
  %v3288 = vadd.f32 0.0, %v3287
  %v3289 = vpop.f32.mrf.mxu0
  %v3290 = vadd.f32 0.0, %v3289
  %3291 = vmatmul.bf16.gmra.mxu0 %v3200
  %v3292 = vpop.f32.mrf.mxu0
  %v3293 = vadd.f32 0.0, %v3292
  %v3294 = vpop.f32.mrf.mxu0
  %v3295 = vadd.f32 0.0, %v3294
  %3296 = vdwg.mxu0
  %v3297 = vmax.f32 %v3212, 0.0
  %v3298 = vmax.f32 %v3231, 0.0
  %v3299 = vmax.f32 %v3250, 0.0
  %v3300 = vmax.f32 %v3269, 0.0
  %v3301 = vmax.f32 %v3288, 0.0
  %v3302 = vmax.f32 %v3214, 0.0
  %v3303 = vmax.f32 %v3233, 0.0
  %v3304 = vmax.f32 %v3252, 0.0
  %v3305 = vmax.f32 %v3271, 0.0
  %v3306 = vmax.f32 %v3290, 0.0
  %v3307 = vmax.f32 %v3217, 0.0
  %v3308 = vmax.f32 %v3236, 0.0
  %v3309 = vmax.f32 %v3255, 0.0
  %v3310 = vmax.f32 %v3274, 0.0
  %v3311 = vmax.f32 %v3293, 0.0
  %v3312 = vmax.f32 %v3219, 0.0
  %v3313 = vmax.f32 %v3238, 0.0
  %v3314 = vmax.f32 %v3257, 0.0
  %v3315 = vmax.f32 %v3276, 0.0
  %v3316 = vmax.f32 %v3295, 0.0
  %v3318 = vperm.slane %v86, 0
  %v3319 = vperm.slane %v86, 1
  %v3320 = vperm.slane %v86, 2
  %v3321 = vperm.slane %v86, 3
  %v3322 = vperm.slane %v86, 4
  %v3328 = vmul.f32 %v3297, %v3318
  %v3329 = vmul.f32 %v3298, %v3319
  %v3330 = vmul.f32 %v3299, %v3320
  %v3331 = vmul.f32 %v3300, %v3321
  %v3332 = vmul.f32 %v3301, %v3322
  %v3333 = vmul.f32 %v3302, %v3318
  %v3334 = vmul.f32 %v3303, %v3319
  %v3335 = vmul.f32 %v3304, %v3320
  %v3336 = vmul.f32 %v3305, %v3321
  %v3337 = vmul.f32 %v3306, %v3322
  %v3338 = vmul.f32 %v3307, %v3318
  %v3339 = vmul.f32 %v3308, %v3319
  %v3340 = vmul.f32 %v3309, %v3320
  %v3341 = vmul.f32 %v3310, %v3321
  %v3342 = vmul.f32 %v3311, %v3322
  %v3343 = vmul.f32 %v3312, %v3318
  %v3344 = vmul.f32 %v3313, %v3319
  %v3345 = vmul.f32 %v3314, %v3320
  %v3346 = vmul.f32 %v3315, %v3321
  %v3347 = vmul.f32 %v3316, %v3322
  %v3348 = vadd.f32 %v3328, %v3329
  %v3349 = vadd.f32 %v3348, %v3330
  %v3350 = vadd.f32 %v3349, %v3331
  %v3351 = vadd.f32 %v3350, %v3332
  %3352 = vadd.xlane.f32.xlu0 %v3351
  %v3353 = vpop.xlane.xlu0 %3352
  %v3354 = vadd.f32 %v3333, %v3334
  %v3355 = vadd.f32 %v3354, %v3335
  %v3356 = vadd.f32 %v3355, %v3336
  %v3357 = vadd.f32 %v3356, %v3337
  %3358 = vadd.xlane.f32.xlu0 %v3357
  %v3359 = vpop.xlane.xlu0 %3358
  %v3360 = vadd.f32 %v3338, %v3339
  %v3361 = vadd.f32 %v3360, %v3340
  %v3362 = vadd.f32 %v3361, %v3341
  %v3363 = vadd.f32 %v3362, %v3342
  %3364 = vadd.xlane.f32.xlu0 %v3363
  %v3365 = vpop.xlane.xlu0 %3364
  %v3366 = vadd.f32 %v3343, %v3344
  %v3367 = vadd.f32 %v3366, %v3345
  %v3368 = vadd.f32 %v3367, %v3346
  %v3369 = vadd.f32 %v3368, %v3347
  %3370 = vadd.xlane.f32.xlu0 %v3369
  %v3371 = vpop.xlane.xlu0 %3370
  %v3372 = vld [vmem:[#allocation2 + $0x28] sm:$0xff]
  %v3373 = vld [vmem:[#allocation2 + $0x30] sm:$0xff]
  %v3374 = vld [vmem:[#allocation2 + $0x38] sm:$0xff]
  %v3375 = vld [vmem:[#allocation2 + $0x40] sm:$0xff]
  %v3376 = vld [vmem:[#allocation2 + $0x48] sm:$0xff]
  %v3377 = vld [vmem:[#allocation2 + $0x170] sm:$0xff]
  %v3378 = vld [vmem:[#allocation2 + $0x178] sm:$0xff]
  %v3379 = vld [vmem:[#allocation2 + $0x180] sm:$0xff]
  %v3380 = vld [vmem:[#allocation2 + $0x188] sm:$0xff]
  %v3381 = vld [vmem:[#allocation2 + $0x190] sm:$0xff]
  %v3382 = vld [vmem:[#allocation2 + $0x2b8] sm:$0xff]
  %v3383 = vld [vmem:[#allocation2 + $0x2c0] sm:$0xff]
  %v3384 = vld [vmem:[#allocation2 + $0x2c8] sm:$0xff]
  %v3385 = vld [vmem:[#allocation2 + $0x2d0] sm:$0xff]
  %v3386 = vld [vmem:[#allocation2 + $0x2d8] sm:$0xff]
  %v3387 = vld [vmem:[#allocation2 + $0x400] sm:$0xff]
  %v3388 = vld [vmem:[#allocation2 + $0x408] sm:$0xff]
  %v3389 = vld [vmem:[#allocation2 + $0x410] sm:$0xff]
  %v3390 = vld [vmem:[#allocation2 + $0x418] sm:$0xff]
  %v3391 = vld [vmem:[#allocation2 + $0x420] sm:$0xff]
  %v3392 = vpack.c.bf16 %v3377, %v3372
  %v3393 = vpack.c.bf16 %v3378, %v3373
  %v3394 = vpack.c.bf16 %v3379, %v3374
  %v3395 = vpack.c.bf16 %v3380, %v3375
  %v3396 = vpack.c.bf16 %v3381, %v3376
  %v3397 = vpack.c.bf16 %v3387, %v3382
  %v3398 = vpack.c.bf16 %v3388, %v3383
  %v3399 = vpack.c.bf16 %v3389, %v3384
  %v3400 = vpack.c.bf16 %v3390, %v3385
  %v3401 = vpack.c.bf16 %v3391, %v3386
  %3402 = vmatpush.bf16.msra.mxu0 0
  %3403 = vmatpush.bf16.msra.mxu0 0
  %3404 = vmatpush.bf16.msra.mxu0 0
  %3405 = vmatpush.bf16.msra.mxu0 0
  %3406 = vmatpush.bf16.msra.mxu0 0
  %3407 = vmatpush.bf16.msra.mxu0 0
  %3408 = vmatpush.bf16.msra.mxu0 %v3397
  %3409 = vmatpush.bf16.msra.mxu0 %v3392
  %3410 = vmatmul.bf16.gmra.mxu0 %v3197
  %v3411 = vpop.f32.mrf.mxu0
  %v3412 = vadd.f32 0.0, %v3411
  %v3413 = vpop.f32.mrf.mxu0
  %v3414 = vadd.f32 0.0, %v3413
  %3415 = vmatmul.bf16.gmra.mxu0 %v3200
  %v3416 = vpop.f32.mrf.mxu0
  %v3417 = vadd.f32 0.0, %v3416
  %v3418 = vpop.f32.mrf.mxu0
  %v3419 = vadd.f32 0.0, %v3418
  %3420 = vdwg.mxu0
  %3421 = vmatpush.bf16.msra.mxu0 0
  %3422 = vmatpush.bf16.msra.mxu0 0
  %3423 = vmatpush.bf16.msra.mxu0 0
  %3424 = vmatpush.bf16.msra.mxu0 0
  %3425 = vmatpush.bf16.msra.mxu0 0
  %3426 = vmatpush.bf16.msra.mxu0 0
  %3427 = vmatpush.bf16.msra.mxu0 %v3398
  %3428 = vmatpush.bf16.msra.mxu0 %v3393
  %3429 = vmatmul.bf16.gmra.mxu0 %v3197
  %v3430 = vpop.f32.mrf.mxu0
  %v3431 = vadd.f32 0.0, %v3430
  %v3432 = vpop.f32.mrf.mxu0
  %v3433 = vadd.f32 0.0, %v3432
  %3434 = vmatmul.bf16.gmra.mxu0 %v3200
  %v3435 = vpop.f32.mrf.mxu0
  %v3436 = vadd.f32 0.0, %v3435
  %v3437 = vpop.f32.mrf.mxu0
  %v3438 = vadd.f32 0.0, %v3437
  %3439 = vdwg.mxu0
  %3440 = vmatpush.bf16.msra.mxu0 0
  %3441 = vmatpush.bf16.msra.mxu0 0
  %3442 = vmatpush.bf16.msra.mxu0 0
  %3443 = vmatpush.bf16.msra.mxu0 0
  %3444 = vmatpush.bf16.msra.mxu0 0
  %3445 = vmatpush.bf16.msra.mxu0 0
  %3446 = vmatpush.bf16.msra.mxu0 %v3399
  %3447 = vmatpush.bf16.msra.mxu0 %v3394
  %3448 = vmatmul.bf16.gmra.mxu0 %v3197
  %v3449 = vpop.f32.mrf.mxu0
  %v3450 = vadd.f32 0.0, %v3449
  %v3451 = vpop.f32.mrf.mxu0
  %v3452 = vadd.f32 0.0, %v3451
  %3453 = vmatmul.bf16.gmra.mxu0 %v3200
  %v3454 = vpop.f32.mrf.mxu0
  %v3455 = vadd.f32 0.0, %v3454
  %v3456 = vpop.f32.mrf.mxu0
  %v3457 = vadd.f32 0.0, %v3456
  %3458 = vdwg.mxu0
  %3459 = vmatpush.bf16.msra.mxu0 0
  %3460 = vmatpush.bf16.msra.mxu0 0
  %3461 = vmatpush.bf16.msra.mxu0 0
  %3462 = vmatpush.bf16.msra.mxu0 0
  %3463 = vmatpush.bf16.msra.mxu0 0
  %3464 = vmatpush.bf16.msra.mxu0 0
  %3465 = vmatpush.bf16.msra.mxu0 %v3400
  %3466 = vmatpush.bf16.msra.mxu0 %v3395
  %3467 = vmatmul.bf16.gmra.mxu0 %v3197
  %v3468 = vpop.f32.mrf.mxu0
  %v3469 = vadd.f32 0.0, %v3468
  %v3470 = vpop.f32.mrf.mxu0
  %v3471 = vadd.f32 0.0, %v3470
  %3472 = vmatmul.bf16.gmra.mxu0 %v3200
  %v3473 = vpop.f32.mrf.mxu0
  %v3474 = vadd.f32 0.0, %v3473
  %v3475 = vpop.f32.mrf.mxu0
  %v3476 = vadd.f32 0.0, %v3475
  %3477 = vdwg.mxu0
  %3478 = vmatpush.bf16.msra.mxu0 0
  %3479 = vmatpush.bf16.msra.mxu0 0
  %3480 = vmatpush.bf16.msra.mxu0 0
  %3481 = vmatpush.bf16.msra.mxu0 0
  %3482 = vmatpush.bf16.msra.mxu0 0
  %3483 = vmatpush.bf16.msra.mxu0 0
  %3484 = vmatpush.bf16.msra.mxu0 %v3401
  %3485 = vmatpush.bf16.msra.mxu0 %v3396
  %3486 = vmatmul.bf16.gmra.mxu0 %v3197
  %v3487 = vpop.f32.mrf.mxu0
  %v3488 = vadd.f32 0.0, %v3487
  %v3489 = vpop.f32.mrf.mxu0
  %v3490 = vadd.f32 0.0, %v3489
  %3491 = vmatmul.bf16.gmra.mxu0 %v3200
  %v3492 = vpop.f32.mrf.mxu0
  %v3493 = vadd.f32 0.0, %v3492
  %v3494 = vpop.f32.mrf.mxu0
  %v3495 = vadd.f32 0.0, %v3494
  %3496 = vdwg.mxu0
  %v3497 = vmax.f32 %v3412, 0.0
  %v3498 = vmax.f32 %v3431, 0.0
  %v3499 = vmax.f32 %v3450, 0.0
  %v3500 = vmax.f32 %v3469, 0.0
  %v3501 = vmax.f32 %v3488, 0.0
  %v3502 = vmax.f32 %v3414, 0.0
  %v3503 = vmax.f32 %v3433, 0.0
  %v3504 = vmax.f32 %v3452, 0.0
  %v3505 = vmax.f32 %v3471, 0.0
  %v3506 = vmax.f32 %v3490, 0.0
  %v3507 = vmax.f32 %v3417, 0.0
  %v3508 = vmax.f32 %v3436, 0.0
  %v3509 = vmax.f32 %v3455, 0.0
  %v3510 = vmax.f32 %v3474, 0.0
  %v3511 = vmax.f32 %v3493, 0.0
  %v3512 = vmax.f32 %v3419, 0.0
  %v3513 = vmax.f32 %v3438, 0.0
  %v3514 = vmax.f32 %v3457, 0.0
  %v3515 = vmax.f32 %v3476, 0.0
  %v3516 = vmax.f32 %v3495, 0.0
  %v3517 = vmul.f32 %v3497, %v3318
  %v3518 = vmul.f32 %v3498, %v3319
  %v3519 = vmul.f32 %v3499, %v3320
  %v3520 = vmul.f32 %v3500, %v3321
  %v3521 = vmul.f32 %v3501, %v3322
  %v3522 = vmul.f32 %v3502, %v3318
  %v3523 = vmul.f32 %v3503, %v3319
  %v3524 = vmul.f32 %v3504, %v3320
  %v3525 = vmul.f32 %v3505, %v3321
  %v3526 = vmul.f32 %v3506, %v3322
  %v3527 = vmul.f32 %v3507, %v3318
  %v3528 = vmul.f32 %v3508, %v3319
  %v3529 = vmul.f32 %v3509, %v3320
  %v3530 = vmul.f32 %v3510, %v3321
  %v3531 = vmul.f32 %v3511, %v3322
  %v3532 = vmul.f32 %v3512, %v3318
  %v3533 = vmul.f32 %v3513, %v3319
  %v3534 = vmul.f32 %v3514, %v3320
  %v3535 = vmul.f32 %v3515, %v3321
  %v3536 = vmul.f32 %v3516, %v3322
  %v3537 = vadd.f32 %v3517, %v3518
  %v3538 = vadd.f32 %v3537, %v3519
  %v3539 = vadd.f32 %v3538, %v3520
  %v3540 = vadd.f32 %v3539, %v3521
  %3541 = vadd.xlane.f32.xlu0 %v3540
  %v3542 = vpop.xlane.xlu0 %3541
  %v3543 = vadd.f32 %v3522, %v3523
  %v3544 = vadd.f32 %v3543, %v3524
  %v3545 = vadd.f32 %v3544, %v3525
  %v3546 = vadd.f32 %v3545, %v3526
  %3547 = vadd.xlane.f32.xlu0 %v3546
  %v3548 = vpop.xlane.xlu0 %3547
  %v3549 = vadd.f32 %v3527, %v3528
  %v3550 = vadd.f32 %v3549, %v3529
  %v3551 = vadd.f32 %v3550, %v3530
  %v3552 = vadd.f32 %v3551, %v3531
  %3553 = vadd.xlane.f32.xlu0 %v3552
  %v3554 = vpop.xlane.xlu0 %3553
  %v3555 = vadd.f32 %v3532, %v3533
  %v3556 = vadd.f32 %v3555, %v3534
  %v3557 = vadd.f32 %v3556, %v3535
  %v3558 = vadd.f32 %v3557, %v3536
  %3559 = vadd.xlane.f32.xlu0 %v3558
  %v3560 = vpop.xlane.xlu0 %3559
  %v3561 = vld [vmem:[#allocation2 + $0x50] sm:$0xff]
  %v3562 = vld [vmem:[#allocation2 + $0x58] sm:$0xff]
  %v3563 = vld [vmem:[#allocation2 + $0x60] sm:$0xff]
  %v3564 = vld [vmem:[#allocation2 + $0x68] sm:$0xff]
  %v3565 = vld [vmem:[#allocation2 + $0x70] sm:$0xff]
  %v3566 = vld [vmem:[#allocation2 + $0x198] sm:$0xff]
  %v3567 = vld [vmem:[#allocation2 + $0x1a0] sm:$0xff]
  %v3568 = vld [vmem:[#allocation2 + $0x1a8] sm:$0xff]
  %v3569 = vld [vmem:[#allocation2 + $0x1b0] sm:$0xff]
  %v3570 = vld [vmem:[#allocation2 + $0x1b8] sm:$0xff]
  %v3571 = vld [vmem:[#allocation2 + $0x2e0] sm:$0xff]
  %v3572 = vld [vmem:[#allocation2 + $0x2e8] sm:$0xff]
  %v3573 = vld [vmem:[#allocation2 + $0x2f0] sm:$0xff]
  %v3574 = vld [vmem:[#allocation2 + $0x2f8] sm:$0xff]
  %v3575 = vld [vmem:[#allocation2 + $0x300] sm:$0xff]
  %v3576 = vld [vmem:[#allocation2 + $0x428] sm:$0xff]
  %v3577 = vld [vmem:[#allocation2 + $0x430] sm:$0xff]
  %v3578 = vld [vmem:[#allocation2 + $0x438] sm:$0xff]
  %v3579 = vld [vmem:[#allocation2 + $0x440] sm:$0xff]
  %v3580 = vld [vmem:[#allocation2 + $0x448] sm:$0xff]
  %v3581 = vpack.c.bf16 %v3566, %v3561
  %v3582 = vpack.c.bf16 %v3567, %v3562
  %v3583 = vpack.c.bf16 %v3568, %v3563
  %v3584 = vpack.c.bf16 %v3569, %v3564
  %v3585 = vpack.c.bf16 %v3570, %v3565
  %v3586 = vpack.c.bf16 %v3576, %v3571
  %v3587 = vpack.c.bf16 %v3577, %v3572
  %v3588 = vpack.c.bf16 %v3578, %v3573
  %v3589 = vpack.c.bf16 %v3579, %v3574
  %v3590 = vpack.c.bf16 %v3580, %v3575
  %3591 = vmatpush.bf16.msra.mxu0 0
  %3592 = vmatpush.bf16.msra.mxu0 0
  %3593 = vmatpush.bf16.msra.mxu0 0
  %3594 = vmatpush.bf16.msra.mxu0 0
  %3595 = vmatpush.bf16.msra.mxu0 0
  %3596 = vmatpush.bf16.msra.mxu0 0
  %3597 = vmatpush.bf16.msra.mxu0 %v3586
  %3598 = vmatpush.bf16.msra.mxu0 %v3581
  %3599 = vmatmul.bf16.gmra.mxu0 %v3197
  %v3600 = vpop.f32.mrf.mxu0
  %v3601 = vadd.f32 0.0, %v3600
  %v3602 = vpop.f32.mrf.mxu0
  %v3603 = vadd.f32 0.0, %v3602
  %3604 = vmatmul.bf16.gmra.mxu0 %v3200
  %v3605 = vpop.f32.mrf.mxu0
  %v3606 = vadd.f32 0.0, %v3605
  %v3607 = vpop.f32.mrf.mxu0
  %v3608 = vadd.f32 0.0, %v3607
  %3609 = vdwg.mxu0
  %3610 = vmatpush.bf16.msra.mxu0 0
  %3611 = vmatpush.bf16.msra.mxu0 0
  %3612 = vmatpush.bf16.msra.mxu0 0
  %3613 = vmatpush.bf16.msra.mxu0 0
  %3614 = vmatpush.bf16.msra.mxu0 0
  %3615 = vmatpush.bf16.msra.mxu0 0
  %3616 = vmatpush.bf16.msra.mxu0 %v3587
  %3617 = vmatpush.bf16.msra.mxu0 %v3582
  %3618 = vmatmul.bf16.gmra.mxu0 %v3197
  %v3619 = vpop.f32.mrf.mxu0
  %v3620 = vadd.f32 0.0, %v3619
  %v3621 = vpop.f32.mrf.mxu0
  %v3622 = vadd.f32 0.0, %v3621
  %3623 = vmatmul.bf16.gmra.mxu0 %v3200
  %v3624 = vpop.f32.mrf.mxu0
  %v3625 = vadd.f32 0.0, %v3624
  %v3626 = vpop.f32.mrf.mxu0
  %v3627 = vadd.f32 0.0, %v3626
  %3628 = vdwg.mxu0
  %3629 = vmatpush.bf16.msra.mxu0 0
  %3630 = vmatpush.bf16.msra.mxu0 0
  %3631 = vmatpush.bf16.msra.mxu0 0
  %3632 = vmatpush.bf16.msra.mxu0 0
  %3633 = vmatpush.bf16.msra.mxu0 0
  %3634 = vmatpush.bf16.msra.mxu0 0
  %3635 = vmatpush.bf16.msra.mxu0 %v3588
  %3636 = vmatpush.bf16.msra.mxu0 %v3583
  %3637 = vmatmul.bf16.gmra.mxu0 %v3197
  %v3638 = vpop.f32.mrf.mxu0
  %v3639 = vadd.f32 0.0, %v3638
  %v3640 = vpop.f32.mrf.mxu0
  %v3641 = vadd.f32 0.0, %v3640
  %3642 = vmatmul.bf16.gmra.mxu0 %v3200
  %v3643 = vpop.f32.mrf.mxu0
  %v3644 = vadd.f32 0.0, %v3643
  %v3645 = vpop.f32.mrf.mxu0
  %v3646 = vadd.f32 0.0, %v3645
  %3647 = vdwg.mxu0
  %3648 = vmatpush.bf16.msra.mxu0 0
  %3649 = vmatpush.bf16.msra.mxu0 0
  %3650 = vmatpush.bf16.msra.mxu0 0
  %3651 = vmatpush.bf16.msra.mxu0 0
  %3652 = vmatpush.bf16.msra.mxu0 0
  %3653 = vmatpush.bf16.msra.mxu0 0
  %3654 = vmatpush.bf16.msra.mxu0 %v3589
  %3655 = vmatpush.bf16.msra.mxu0 %v3584
  %3656 = vmatmul.bf16.gmra.mxu0 %v3197
  %v3657 = vpop.f32.mrf.mxu0
  %v3658 = vadd.f32 0.0, %v3657
  %v3659 = vpop.f32.mrf.mxu0
  %v3660 = vadd.f32 0.0, %v3659
  %3661 = vmatmul.bf16.gmra.mxu0 %v3200
  %v3662 = vpop.f32.mrf.mxu0
  %v3663 = vadd.f32 0.0, %v3662
  %v3664 = vpop.f32.mrf.mxu0
  %v3665 = vadd.f32 0.0, %v3664
  %3666 = vdwg.mxu0
  %3667 = vmatpush.bf16.msra.mxu0 0
  %3668 = vmatpush.bf16.msra.mxu0 0
  %3669 = vmatpush.bf16.msra.mxu0 0
  %3670 = vmatpush.bf16.msra.mxu0 0
  %3671 = vmatpush.bf16.msra.mxu0 0
  %3672 = vmatpush.bf16.msra.mxu0 0
  %3673 = vmatpush.bf16.msra.mxu0 %v3590
  %3674 = vmatpush.bf16.msra.mxu0 %v3585
  %3675 = vmatmul.bf16.gmra.mxu0 %v3197
  %v3676 = vpop.f32.mrf.mxu0
  %v3677 = vadd.f32 0.0, %v3676
  %v3678 = vpop.f32.mrf.mxu0
  %v3679 = vadd.f32 0.0, %v3678
  %3680 = vmatmul.bf16.gmra.mxu0 %v3200
  %v3681 = vpop.f32.mrf.mxu0
  %v3682 = vadd.f32 0.0, %v3681
  %v3683 = vpop.f32.mrf.mxu0
  %v3684 = vadd.f32 0.0, %v3683
  %3685 = vdwg.mxu0
  %v3686 = vmax.f32 %v3601, 0.0
  %v3687 = vmax.f32 %v3620, 0.0
  %v3688 = vmax.f32 %v3639, 0.0
  %v3689 = vmax.f32 %v3658, 0.0
  %v3690 = vmax.f32 %v3677, 0.0
  %v3691 = vmax.f32 %v3603, 0.0
  %v3692 = vmax.f32 %v3622, 0.0
  %v3693 = vmax.f32 %v3641, 0.0
  %v3694 = vmax.f32 %v3660, 0.0
  %v3695 = vmax.f32 %v3679, 0.0
  %v3696 = vmax.f32 %v3606, 0.0
  %v3697 = vmax.f32 %v3625, 0.0
  %v3698 = vmax.f32 %v3644, 0.0
  %v3699 = vmax.f32 %v3663, 0.0
  %v3700 = vmax.f32 %v3682, 0.0
  %v3701 = vmax.f32 %v3608, 0.0
  %v3702 = vmax.f32 %v3627, 0.0
  %v3703 = vmax.f32 %v3646, 0.0
  %v3704 = vmax.f32 %v3665, 0.0
  %v3705 = vmax.f32 %v3684, 0.0
  %v3706 = vmul.f32 %v3686, %v3318
  %v3707 = vmul.f32 %v3687, %v3319
  %v3708 = vmul.f32 %v3688, %v3320
  %v3709 = vmul.f32 %v3689, %v3321
  %v3710 = vmul.f32 %v3690, %v3322
  %v3711 = vmul.f32 %v3691, %v3318
  %v3712 = vmul.f32 %v3692, %v3319
  %v3713 = vmul.f32 %v3693, %v3320
  %v3714 = vmul.f32 %v3694, %v3321
  %v3715 = vmul.f32 %v3695, %v3322
  %v3716 = vmul.f32 %v3696, %v3318
  %v3717 = vmul.f32 %v3697, %v3319
  %v3718 = vmul.f32 %v3698, %v3320
  %v3719 = vmul.f32 %v3699, %v3321
  %v3720 = vmul.f32 %v3700, %v3322
  %v3721 = vmul.f32 %v3701, %v3318
  %v3722 = vmul.f32 %v3702, %v3319
  %v3723 = vmul.f32 %v3703, %v3320
  %v3724 = vmul.f32 %v3704, %v3321
  %v3725 = vmul.f32 %v3705, %v3322
  %v3726 = vadd.f32 %v3706, %v3707
  %v3727 = vadd.f32 %v3726, %v3708
  %v3728 = vadd.f32 %v3727, %v3709
  %v3729 = vadd.f32 %v3728, %v3710
  %3730 = vadd.xlane.f32.xlu0 %v3729
  %v3731 = vpop.xlane.xlu0 %3730
  %v3732 = vadd.f32 %v3711, %v3712
  %v3733 = vadd.f32 %v3732, %v3713
  %v3734 = vadd.f32 %v3733, %v3714
  %v3735 = vadd.f32 %v3734, %v3715
  %3736 = vadd.xlane.f32.xlu0 %v3735
  %v3737 = vpop.xlane.xlu0 %3736
  %v3738 = vadd.f32 %v3716, %v3717
  %v3739 = vadd.f32 %v3738, %v3718
  %v3740 = vadd.f32 %v3739, %v3719
  %v3741 = vadd.f32 %v3740, %v3720
  %3742 = vadd.xlane.f32.xlu0 %v3741
  %v3743 = vpop.xlane.xlu0 %3742
  %v3744 = vadd.f32 %v3721, %v3722
  %v3745 = vadd.f32 %v3744, %v3723
  %v3746 = vadd.f32 %v3745, %v3724
  %v3747 = vadd.f32 %v3746, %v3725
  %3748 = vadd.xlane.f32.xlu0 %v3747
  %v3749 = vpop.xlane.xlu0 %3748
  %v3750 = vld [vmem:[#allocation2 + $0x78] sm:$0xff]
  %v3751 = vld [vmem:[#allocation2 + $0x80] sm:$0xff]
  %v3752 = vld [vmem:[#allocation2 + $0x88] sm:$0xff]
  %v3753 = vld [vmem:[#allocation2 + $0x90] sm:$0xff]
  %v3754 = vld [vmem:[#allocation2 + $0x98] sm:$0xff]
  %v3755 = vld [vmem:[#allocation2 + $0x1c0] sm:$0xff]
  %v3756 = vld [vmem:[#allocation2 + $0x1c8] sm:$0xff]
  %v3757 = vld [vmem:[#allocation2 + $0x1d0] sm:$0xff]
  %v3758 = vld [vmem:[#allocation2 + $0x1d8] sm:$0xff]
  %v3759 = vld [vmem:[#allocation2 + $0x1e0] sm:$0xff]
  %v3760 = vld [vmem:[#allocation2 + $0x308] sm:$0xff]
  %v3761 = vld [vmem:[#allocation2 + $0x310] sm:$0xff]
  %v3762 = vld [vmem:[#allocation2 + $0x318] sm:$0xff]
  %v3763 = vld [vmem:[#allocation2 + $0x320] sm:$0xff]
  %v3764 = vld [vmem:[#allocation2 + $0x328] sm:$0xff]
  %v3765 = vld [vmem:[#allocation2 + $0x450] sm:$0xff]
  %v3766 = vld [vmem:[#allocation2 + $0x458] sm:$0xff]
  %v3767 = vld [vmem:[#allocation2 + $0x460] sm:$0xff]
  %v3768 = vld [vmem:[#allocation2 + $0x468] sm:$0xff]
  %v3769 = vld [vmem:[#allocation2 + $0x470] sm:$0xff]
  %v3770 = vpack.c.bf16 %v3755, %v3750
  %v3771 = vpack.c.bf16 %v3756, %v3751
  %v3772 = vpack.c.bf16 %v3757, %v3752
  %v3773 = vpack.c.bf16 %v3758, %v3753
  %v3774 = vpack.c.bf16 %v3759, %v3754
  %v3775 = vpack.c.bf16 %v3765, %v3760
  %v3776 = vpack.c.bf16 %v3766, %v3761
  %v3777 = vpack.c.bf16 %v3767, %v3762
  %v3778 = vpack.c.bf16 %v3768, %v3763
  %v3779 = vpack.c.bf16 %v3769, %v3764
  %3780 = vmatpush.bf16.msra.mxu0 0
  %3781 = vmatpush.bf16.msra.mxu0 0
  %3782 = vmatpush.bf16.msra.mxu0 0
  %3783 = vmatpush.bf16.msra.mxu0 0
  %3784 = vmatpush.bf16.msra.mxu0 0
  %3785 = vmatpush.bf16.msra.mxu0 0
  %3786 = vmatpush.bf16.msra.mxu0 %v3775
  %3787 = vmatpush.bf16.msra.mxu0 %v3770
  %3788 = vmatmul.bf16.gmra.mxu0 %v3197
  %v3789 = vpop.f32.mrf.mxu0
  %v3790 = vadd.f32 0.0, %v3789
  %v3791 = vpop.f32.mrf.mxu0
  %v3792 = vadd.f32 0.0, %v3791
  %3793 = vmatmul.bf16.gmra.mxu0 %v3200
  %v3794 = vpop.f32.mrf.mxu0
  %v3795 = vadd.f32 0.0, %v3794
  %v3796 = vpop.f32.mrf.mxu0
  %v3797 = vadd.f32 0.0, %v3796
  %3798 = vdwg.mxu0
  %3799 = vmatpush.bf16.msra.mxu0 0
  %3800 = vmatpush.bf16.msra.mxu0 0
  %3801 = vmatpush.bf16.msra.mxu0 0
  %3802 = vmatpush.bf16.msra.mxu0 0
  %3803 = vmatpush.bf16.msra.mxu0 0
  %3804 = vmatpush.bf16.msra.mxu0 0
  %3805 = vmatpush.bf16.msra.mxu0 %v3776
  %3806 = vmatpush.bf16.msra.mxu0 %v3771
  %3807 = vmatmul.bf16.gmra.mxu0 %v3197
  %v3808 = vpop.f32.mrf.mxu0
  %v3809 = vadd.f32 0.0, %v3808
  %v3810 = vpop.f32.mrf.mxu0
  %v3811 = vadd.f32 0.0, %v3810
  %3812 = vmatmul.bf16.gmra.mxu0 %v3200
  %v3813 = vpop.f32.mrf.mxu0
  %v3814 = vadd.f32 0.0, %v3813
  %v3815 = vpop.f32.mrf.mxu0
  %v3816 = vadd.f32 0.0, %v3815
  %3817 = vdwg.mxu0
  %3818 = vmatpush.bf16.msra.mxu0 0
  %3819 = vmatpush.bf16.msra.mxu0 0
  %3820 = vmatpush.bf16.msra.mxu0 0
  %3821 = vmatpush.bf16.msra.mxu0 0
  %3822 = vmatpush.bf16.msra.mxu0 0
  %3823 = vmatpush.bf16.msra.mxu0 0
  %3824 = vmatpush.bf16.msra.mxu0 %v3777
  %3825 = vmatpush.bf16.msra.mxu0 %v3772
  %3826 = vmatmul.bf16.gmra.mxu0 %v3197
  %v3827 = vpop.f32.mrf.mxu0
  %v3828 = vadd.f32 0.0, %v3827
  %v3829 = vpop.f32.mrf.mxu0
  %v3830 = vadd.f32 0.0, %v3829
  %3831 = vmatmul.bf16.gmra.mxu0 %v3200
  %v3832 = vpop.f32.mrf.mxu0
  %v3833 = vadd.f32 0.0, %v3832
  %v3834 = vpop.f32.mrf.mxu0
  %v3835 = vadd.f32 0.0, %v3834
  %3836 = vdwg.mxu0
  %3837 = vmatpush.bf16.msra.mxu0 0
  %3838 = vmatpush.bf16.msra.mxu0 0
  %3839 = vmatpush.bf16.msra.mxu0 0
  %3840 = vmatpush.bf16.msra.mxu0 0
  %3841 = vmatpush.bf16.msra.mxu0 0
  %3842 = vmatpush.bf16.msra.mxu0 0
  %3843 = vmatpush.bf16.msra.mxu0 %v3778
  %3844 = vmatpush.bf16.msra.mxu0 %v3773
  %3845 = vmatmul.bf16.gmra.mxu0 %v3197
  %v3846 = vpop.f32.mrf.mxu0
  %v3847 = vadd.f32 0.0, %v3846
  %v3848 = vpop.f32.mrf.mxu0
  %v3849 = vadd.f32 0.0, %v3848
  %3850 = vmatmul.bf16.gmra.mxu0 %v3200
  %v3851 = vpop.f32.mrf.mxu0
  %v3852 = vadd.f32 0.0, %v3851
  %v3853 = vpop.f32.mrf.mxu0
  %v3854 = vadd.f32 0.0, %v3853
  %3855 = vdwg.mxu0
  %3856 = vmatpush.bf16.msra.mxu0 0
  %3857 = vmatpush.bf16.msra.mxu0 0
  %3858 = vmatpush.bf16.msra.mxu0 0
  %3859 = vmatpush.bf16.msra.mxu0 0
  %3860 = vmatpush.bf16.msra.mxu0 0
  %3861 = vmatpush.bf16.msra.mxu0 0
  %3862 = vmatpush.bf16.msra.mxu0 %v3779
  %3863 = vmatpush.bf16.msra.mxu0 %v3774
  %3864 = vmatmul.bf16.gmra.mxu0 %v3197
  %v3865 = vpop.f32.mrf.mxu0
  %v3866 = vadd.f32 0.0, %v3865
  %v3867 = vpop.f32.mrf.mxu0
  %v3868 = vadd.f32 0.0, %v3867
  %3869 = vmatmul.bf16.gmra.mxu0 %v3200
  %v3870 = vpop.f32.mrf.mxu0
  %v3871 = vadd.f32 0.0, %v3870
  %v3872 = vpop.f32.mrf.mxu0
  %v3873 = vadd.f32 0.0, %v3872
  %3874 = vdwg.mxu0
  %v3875 = vmax.f32 %v3790, 0.0
  %v3876 = vmax.f32 %v3809, 0.0
  %v3877 = vmax.f32 %v3828, 0.0
  %v3878 = vmax.f32 %v3847, 0.0
  %v3879 = vmax.f32 %v3866, 0.0
  %v3880 = vmax.f32 %v3792, 0.0
  %v3881 = vmax.f32 %v3811, 0.0
  %v3882 = vmax.f32 %v3830, 0.0
  %v3883 = vmax.f32 %v3849, 0.0
  %v3884 = vmax.f32 %v3868, 0.0
  %v3885 = vmax.f32 %v3795, 0.0
  %v3886 = vmax.f32 %v3814, 0.0
  %v3887 = vmax.f32 %v3833, 0.0
  %v3888 = vmax.f32 %v3852, 0.0
  %v3889 = vmax.f32 %v3871, 0.0
  %v3890 = vmax.f32 %v3797, 0.0
  %v3891 = vmax.f32 %v3816, 0.0
  %v3892 = vmax.f32 %v3835, 0.0
  %v3893 = vmax.f32 %v3854, 0.0
  %v3894 = vmax.f32 %v3873, 0.0
  %v3895 = vmul.f32 %v3875, %v3318
  %v3896 = vmul.f32 %v3876, %v3319
  %v3897 = vmul.f32 %v3877, %v3320
  %v3898 = vmul.f32 %v3878, %v3321
  %v3899 = vmul.f32 %v3879, %v3322
  %v3900 = vmul.f32 %v3880, %v3318
  %v3901 = vmul.f32 %v3881, %v3319
  %v3902 = vmul.f32 %v3882, %v3320
  %v3903 = vmul.f32 %v3883, %v3321
  %v3904 = vmul.f32 %v3884, %v3322
  %v3905 = vmul.f32 %v3885, %v3318
  %v3906 = vmul.f32 %v3886, %v3319
  %v3907 = vmul.f32 %v3887, %v3320
  %v3908 = vmul.f32 %v3888, %v3321
  %v3909 = vmul.f32 %v3889, %v3322
  %v3910 = vmul.f32 %v3890, %v3318
  %v3911 = vmul.f32 %v3891, %v3319
  %v3912 = vmul.f32 %v3892, %v3320
  %v3913 = vmul.f32 %v3893, %v3321
  %v3914 = vmul.f32 %v3894, %v3322
  %v3915 = vadd.f32 %v3895, %v3896
  %v3916 = vadd.f32 %v3915, %v3897
  %v3917 = vadd.f32 %v3916, %v3898
  %v3918 = vadd.f32 %v3917, %v3899
  %3919 = vadd.xlane.f32.xlu0 %v3918
  %v3920 = vpop.xlane.xlu0 %3919
  %v3921 = vadd.f32 %v3900, %v3901
  %v3922 = vadd.f32 %v3921, %v3902
  %v3923 = vadd.f32 %v3922, %v3903
  %v3924 = vadd.f32 %v3923, %v3904
  %3925 = vadd.xlane.f32.xlu0 %v3924
  %v3926 = vpop.xlane.xlu0 %3925
  %v3927 = vadd.f32 %v3905, %v3906
  %v3928 = vadd.f32 %v3927, %v3907
  %v3929 = vadd.f32 %v3928, %v3908
  %v3930 = vadd.f32 %v3929, %v3909
  %3931 = vadd.xlane.f32.xlu0 %v3930
  %v3932 = vpop.xlane.xlu0 %3931
  %v3933 = vadd.f32 %v3910, %v3911
  %v3934 = vadd.f32 %v3933, %v3912
  %v3935 = vadd.f32 %v3934, %v3913
  %v3936 = vadd.f32 %v3935, %v3914
  %3937 = vadd.xlane.f32.xlu0 %v3936
  %v3938 = vpop.xlane.xlu0 %3937
  %v3939 = vld [vmem:[#allocation2 + $0xa0] sm:$0xff]
  %v3940 = vld [vmem:[#allocation2 + $0xa8] sm:$0xff]
  %v3941 = vld [vmem:[#allocation2 + $0xb0] sm:$0xff]
  %v3942 = vld [vmem:[#allocation2 + $0xb8] sm:$0xff]
  %v3943 = vld [vmem:[#allocation2 + $0xc0] sm:$0xff]
  %v3944 = vld [vmem:[#allocation2 + $0x1e8] sm:$0xff]
  %v3945 = vld [vmem:[#allocation2 + $0x1f0] sm:$0xff]
  %v3946 = vld [vmem:[#allocation2 + $0x1f8] sm:$0xff]
  %v3947 = vld [vmem:[#allocation2 + $0x200] sm:$0xff]
  %v3948 = vld [vmem:[#allocation2 + $0x208] sm:$0xff]
  %v3949 = vld [vmem:[#allocation2 + $0x330] sm:$0xff]
  %v3950 = vld [vmem:[#allocation2 + $0x338] sm:$0xff]
  %v3951 = vld [vmem:[#allocation2 + $0x340] sm:$0xff]
  %v3952 = vld [vmem:[#allocation2 + $0x348] sm:$0xff]
  %v3953 = vld [vmem:[#allocation2 + $0x350] sm:$0xff]
  %v3954 = vld [vmem:[#allocation2 + $0x478] sm:$0xff]
  %v3955 = vld [vmem:[#allocation2 + $0x480] sm:$0xff]
  %v3956 = vld [vmem:[#allocation2 + $0x488] sm:$0xff]
  %v3957 = vld [vmem:[#allocation2 + $0x490] sm:$0xff]
  %v3958 = vld [vmem:[#allocation2 + $0x498] sm:$0xff]
  %v3959 = vpack.c.bf16 %v3944, %v3939
  %v3960 = vpack.c.bf16 %v3945, %v3940
  %v3961 = vpack.c.bf16 %v3946, %v3941
  %v3962 = vpack.c.bf16 %v3947, %v3942
  %v3963 = vpack.c.bf16 %v3948, %v3943
  %v3964 = vpack.c.bf16 %v3954, %v3949
  %v3965 = vpack.c.bf16 %v3955, %v3950
  %v3966 = vpack.c.bf16 %v3956, %v3951
  %v3967 = vpack.c.bf16 %v3957, %v3952
  %v3968 = vpack.c.bf16 %v3958, %v3953
  %3969 = vmatpush.bf16.msra.mxu0 0
  %3970 = vmatpush.bf16.msra.mxu0 0
  %3971 = vmatpush.bf16.msra.mxu0 0
  %3972 = vmatpush.bf16.msra.mxu0 0
  %3973 = vmatpush.bf16.msra.mxu0 0
  %3974 = vmatpush.bf16.msra.mxu0 0
  %3975 = vmatpush.bf16.msra.mxu0 %v3964
  %3976 = vmatpush.bf16.msra.mxu0 %v3959
  %3977 = vmatmul.bf16.gmra.mxu0 %v3197
  %v3978 = vpop.f32.mrf.mxu0
  %v3979 = vadd.f32 0.0, %v3978
  %v3980 = vpop.f32.mrf.mxu0
  %v3981 = vadd.f32 0.0, %v3980
  %3982 = vmatmul.bf16.gmra.mxu0 %v3200
  %v3983 = vpop.f32.mrf.mxu0
  %v3984 = vadd.f32 0.0, %v3983
  %v3985 = vpop.f32.mrf.mxu0
  %v3986 = vadd.f32 0.0, %v3985
  %3987 = vdwg.mxu0
  %3988 = vmatpush.bf16.msra.mxu0 0
  %3989 = vmatpush.bf16.msra.mxu0 0
  %3990 = vmatpush.bf16.msra.mxu0 0
  %3991 = vmatpush.bf16.msra.mxu0 0
  %3992 = vmatpush.bf16.msra.mxu0 0
  %3993 = vmatpush.bf16.msra.mxu0 0
  %3994 = vmatpush.bf16.msra.mxu0 %v3965
  %3995 = vmatpush.bf16.msra.mxu0 %v3960
  %3996 = vmatmul.bf16.gmra.mxu0 %v3197
  %v3997 = vpop.f32.mrf.mxu0
  %v3998 = vadd.f32 0.0, %v3997
  %v3999 = vpop.f32.mrf.mxu0
  %v4000 = vadd.f32 0.0, %v3999
  %4001 = vmatmul.bf16.gmra.mxu0 %v3200
  %v4002 = vpop.f32.mrf.mxu0
  %v4003 = vadd.f32 0.0, %v4002
  %v4004 = vpop.f32.mrf.mxu0
  %v4005 = vadd.f32 0.0, %v4004
  %4006 = vdwg.mxu0
  %4007 = vmatpush.bf16.msra.mxu0 0
  %4008 = vmatpush.bf16.msra.mxu0 0
  %4009 = vmatpush.bf16.msra.mxu0 0
  %4010 = vmatpush.bf16.msra.mxu0 0
  %4011 = vmatpush.bf16.msra.mxu0 0
  %4012 = vmatpush.bf16.msra.mxu0 0
  %4013 = vmatpush.bf16.msra.mxu0 %v3966
  %4014 = vmatpush.bf16.msra.mxu0 %v3961
  %4015 = vmatmul.bf16.gmra.mxu0 %v3197
  %v4016 = vpop.f32.mrf.mxu0
  %v4017 = vadd.f32 0.0, %v4016
  %v4018 = vpop.f32.mrf.mxu0
  %v4019 = vadd.f32 0.0, %v4018
  %4020 = vmatmul.bf16.gmra.mxu0 %v3200
  %v4021 = vpop.f32.mrf.mxu0
  %v4022 = vadd.f32 0.0, %v4021
  %v4023 = vpop.f32.mrf.mxu0
  %v4024 = vadd.f32 0.0, %v4023
  %4025 = vdwg.mxu0
  %4026 = vmatpush.bf16.msra.mxu0 0
  %4027 = vmatpush.bf16.msra.mxu0 0
  %4028 = vmatpush.bf16.msra.mxu0 0
  %4029 = vmatpush.bf16.msra.mxu0 0
  %4030 = vmatpush.bf16.msra.mxu0 0
  %4031 = vmatpush.bf16.msra.mxu0 0
  %4032 = vmatpush.bf16.msra.mxu0 %v3967
  %4033 = vmatpush.bf16.msra.mxu0 %v3962
  %4034 = vmatmul.bf16.gmra.mxu0 %v3197
  %v4035 = vpop.f32.mrf.mxu0
  %v4036 = vadd.f32 0.0, %v4035
  %v4037 = vpop.f32.mrf.mxu0
  %v4038 = vadd.f32 0.0, %v4037
  %4039 = vmatmul.bf16.gmra.mxu0 %v3200
  %v4040 = vpop.f32.mrf.mxu0
  %v4041 = vadd.f32 0.0, %v4040
  %v4042 = vpop.f32.mrf.mxu0
  %v4043 = vadd.f32 0.0, %v4042
  %4044 = vdwg.mxu0
  %4045 = vmatpush.bf16.msra.mxu0 0
  %4046 = vmatpush.bf16.msra.mxu0 0
  %4047 = vmatpush.bf16.msra.mxu0 0
  %4048 = vmatpush.bf16.msra.mxu0 0
  %4049 = vmatpush.bf16.msra.mxu0 0
  %4050 = vmatpush.bf16.msra.mxu0 0
  %4051 = vmatpush.bf16.msra.mxu0 %v3968
  %4052 = vmatpush.bf16.msra.mxu0 %v3963
  %4053 = vmatmul.bf16.gmra.mxu0 %v3197
  %v4054 = vpop.f32.mrf.mxu0
  %v4055 = vadd.f32 0.0, %v4054
  %v4056 = vpop.f32.mrf.mxu0
  %v4057 = vadd.f32 0.0, %v4056
  %4058 = vmatmul.bf16.gmra.mxu0 %v3200
  %v4059 = vpop.f32.mrf.mxu0
  %v4060 = vadd.f32 0.0, %v4059
  %v4061 = vpop.f32.mrf.mxu0
  %v4062 = vadd.f32 0.0, %v4061
  %4063 = vdwg.mxu0
  %v4064 = vmax.f32 %v3979, 0.0
  %v4065 = vmax.f32 %v3998, 0.0
  %v4066 = vmax.f32 %v4017, 0.0
  %v4067 = vmax.f32 %v4036, 0.0
  %v4068 = vmax.f32 %v4055, 0.0
  %v4069 = vmax.f32 %v3981, 0.0
  %v4070 = vmax.f32 %v4000, 0.0
  %v4071 = vmax.f32 %v4019, 0.0
  %v4072 = vmax.f32 %v4038, 0.0
  %v4073 = vmax.f32 %v4057, 0.0
  %v4074 = vmax.f32 %v3984, 0.0
  %v4075 = vmax.f32 %v4003, 0.0
  %v4076 = vmax.f32 %v4022, 0.0
  %v4077 = vmax.f32 %v4041, 0.0
  %v4078 = vmax.f32 %v4060, 0.0
  %v4079 = vmax.f32 %v3986, 0.0
  %v4080 = vmax.f32 %v4005, 0.0
  %v4081 = vmax.f32 %v4024, 0.0
  %v4082 = vmax.f32 %v4043, 0.0
  %v4083 = vmax.f32 %v4062, 0.0
  %v4084 = vmul.f32 %v4064, %v3318
  %v4085 = vmul.f32 %v4065, %v3319
  %v4086 = vmul.f32 %v4066, %v3320
  %v4087 = vmul.f32 %v4067, %v3321
  %v4088 = vmul.f32 %v4068, %v3322
  %v4089 = vmul.f32 %v4069, %v3318
  %v4090 = vmul.f32 %v4070, %v3319
  %v4091 = vmul.f32 %v4071, %v3320
  %v4092 = vmul.f32 %v4072, %v3321
  %v4093 = vmul.f32 %v4073, %v3322
  %v4094 = vmul.f32 %v4074, %v3318
  %v4095 = vmul.f32 %v4075, %v3319
  %v4096 = vmul.f32 %v4076, %v3320
  %v4097 = vmul.f32 %v4077, %v3321
  %v4098 = vmul.f32 %v4078, %v3322
  %v4099 = vmul.f32 %v4079, %v3318
  %v4100 = vmul.f32 %v4080, %v3319
  %v4101 = vmul.f32 %v4081, %v3320
  %v4102 = vmul.f32 %v4082, %v3321
  %v4103 = vmul.f32 %v4083, %v3322
  %v4104 = vadd.f32 %v4084, %v4085
  %v4105 = vadd.f32 %v4104, %v4086
  %v4106 = vadd.f32 %v4105, %v4087
  %v4107 = vadd.f32 %v4106, %v4088
  %4108 = vadd.xlane.f32.xlu0 %v4107
  %v4109 = vpop.xlane.xlu0 %4108
  %v4110 = vadd.f32 %v4089, %v4090
  %v4111 = vadd.f32 %v4110, %v4091
  %v4112 = vadd.f32 %v4111, %v4092
  %v4113 = vadd.f32 %v4112, %v4093
  %4114 = vadd.xlane.f32.xlu0 %v4113
  %v4115 = vpop.xlane.xlu0 %4114
  %v4116 = vadd.f32 %v4094, %v4095
  %v4117 = vadd.f32 %v4116, %v4096
  %v4118 = vadd.f32 %v4117, %v4097
  %v4119 = vadd.f32 %v4118, %v4098
  %4120 = vadd.xlane.f32.xlu0 %v4119
  %v4121 = vpop.xlane.xlu0 %4120
  %v4122 = vadd.f32 %v4099, %v4100
  %v4123 = vadd.f32 %v4122, %v4101
  %v4124 = vadd.f32 %v4123, %v4102
  %v4125 = vadd.f32 %v4124, %v4103
  %4126 = vadd.xlane.f32.xlu0 %v4125
  %v4127 = vpop.xlane.xlu0 %4126
  %v4128 = vld [vmem:[#allocation2 + $0xc8] sm:$0xff]
  %v4129 = vld [vmem:[#allocation2 + $0xd0] sm:$0xff]
  %v4130 = vld [vmem:[#allocation2 + $0xd8] sm:$0xff]
  %v4131 = vld [vmem:[#allocation2 + $0xe0] sm:$0xff]
  %v4132 = vld [vmem:[#allocation2 + $0xe8] sm:$0xff]
  %v4133 = vld [vmem:[#allocation2 + $0x210] sm:$0xff]
  %v4134 = vld [vmem:[#allocation2 + $0x218] sm:$0xff]
  %v4135 = vld [vmem:[#allocation2 + $0x220] sm:$0xff]
  %v4136 = vld [vmem:[#allocation2 + $0x228] sm:$0xff]
  %v4137 = vld [vmem:[#allocation2 + $0x230] sm:$0xff]
  %v4138 = vld [vmem:[#allocation2 + $0x358] sm:$0xff]
  %v4139 = vld [vmem:[#allocation2 + $0x360] sm:$0xff]
  %v4140 = vld [vmem:[#allocation2 + $0x368] sm:$0xff]
  %v4141 = vld [vmem:[#allocation2 + $0x370] sm:$0xff]
  %v4142 = vld [vmem:[#allocation2 + $0x378] sm:$0xff]
  %v4143 = vld [vmem:[#allocation2 + $0x4a0] sm:$0xff]
  %v4144 = vld [vmem:[#allocation2 + $0x4a8] sm:$0xff]
  %v4145 = vld [vmem:[#allocation2 + $0x4b0] sm:$0xff]
  %v4146 = vld [vmem:[#allocation2 + $0x4b8] sm:$0xff]
  %v4147 = vld [vmem:[#allocation2 + $0x4c0] sm:$0xff]
  %v4148 = vpack.c.bf16 %v4133, %v4128
  %v4149 = vpack.c.bf16 %v4134, %v4129
  %v4150 = vpack.c.bf16 %v4135, %v4130
  %v4151 = vpack.c.bf16 %v4136, %v4131
  %v4152 = vpack.c.bf16 %v4137, %v4132
  %v4153 = vpack.c.bf16 %v4143, %v4138
  %v4154 = vpack.c.bf16 %v4144, %v4139
  %v4155 = vpack.c.bf16 %v4145, %v4140
  %v4156 = vpack.c.bf16 %v4146, %v4141
  %v4157 = vpack.c.bf16 %v4147, %v4142
  %4158 = vmatpush.bf16.msra.mxu0 0
  %4159 = vmatpush.bf16.msra.mxu0 0
  %4160 = vmatpush.bf16.msra.mxu0 0
  %4161 = vmatpush.bf16.msra.mxu0 0
  %4162 = vmatpush.bf16.msra.mxu0 0
  %4163 = vmatpush.bf16.msra.mxu0 0
  %4164 = vmatpush.bf16.msra.mxu0 %v4153
  %4165 = vmatpush.bf16.msra.mxu0 %v4148
  %4166 = vmatmul.bf16.gmra.mxu0 %v3197
  %v4167 = vpop.f32.mrf.mxu0
  %v4168 = vadd.f32 0.0, %v4167
  %v4169 = vpop.f32.mrf.mxu0
  %v4170 = vadd.f32 0.0, %v4169
  %4171 = vmatmul.bf16.gmra.mxu0 %v3200
  %v4172 = vpop.f32.mrf.mxu0
  %v4173 = vadd.f32 0.0, %v4172
  %v4174 = vpop.f32.mrf.mxu0
  %v4175 = vadd.f32 0.0, %v4174
  %4176 = vdwg.mxu0
  %4177 = vmatpush.bf16.msra.mxu0 0
  %4178 = vmatpush.bf16.msra.mxu0 0
  %4179 = vmatpush.bf16.msra.mxu0 0
  %4180 = vmatpush.bf16.msra.mxu0 0
  %4181 = vmatpush.bf16.msra.mxu0 0
  %4182 = vmatpush.bf16.msra.mxu0 0
  %4183 = vmatpush.bf16.msra.mxu0 %v4154
  %4184 = vmatpush.bf16.msra.mxu0 %v4149
  %4185 = vmatmul.bf16.gmra.mxu0 %v3197
  %v4186 = vpop.f32.mrf.mxu0
  %v4187 = vadd.f32 0.0, %v4186
  %v4188 = vpop.f32.mrf.mxu0
  %v4189 = vadd.f32 0.0, %v4188
  %4190 = vmatmul.bf16.gmra.mxu0 %v3200
  %v4191 = vpop.f32.mrf.mxu0
  %v4192 = vadd.f32 0.0, %v4191
  %v4193 = vpop.f32.mrf.mxu0
  %v4194 = vadd.f32 0.0, %v4193
  %4195 = vdwg.mxu0
  %4196 = vmatpush.bf16.msra.mxu0 0
  %4197 = vmatpush.bf16.msra.mxu0 0
  %4198 = vmatpush.bf16.msra.mxu0 0
  %4199 = vmatpush.bf16.msra.mxu0 0
  %4200 = vmatpush.bf16.msra.mxu0 0
  %4201 = vmatpush.bf16.msra.mxu0 0
  %4202 = vmatpush.bf16.msra.mxu0 %v4155
  %4203 = vmatpush.bf16.msra.mxu0 %v4150
  %4204 = vmatmul.bf16.gmra.mxu0 %v3197
  %v4205 = vpop.f32.mrf.mxu0
  %v4206 = vadd.f32 0.0, %v4205
  %v4207 = vpop.f32.mrf.mxu0
  %v4208 = vadd.f32 0.0, %v4207
  %4209 = vmatmul.bf16.gmra.mxu0 %v3200
  %v4210 = vpop.f32.mrf.mxu0
  %v4211 = vadd.f32 0.0, %v4210
  %v4212 = vpop.f32.mrf.mxu0
  %v4213 = vadd.f32 0.0, %v4212
  %4214 = vdwg.mxu0
  %4215 = vmatpush.bf16.msra.mxu0 0
  %4216 = vmatpush.bf16.msra.mxu0 0
  %4217 = vmatpush.bf16.msra.mxu0 0
  %4218 = vmatpush.bf16.msra.mxu0 0
  %4219 = vmatpush.bf16.msra.mxu0 0
  %4220 = vmatpush.bf16.msra.mxu0 0
  %4221 = vmatpush.bf16.msra.mxu0 %v4156
  %4222 = vmatpush.bf16.msra.mxu0 %v4151
  %4223 = vmatmul.bf16.gmra.mxu0 %v3197
  %v4224 = vpop.f32.mrf.mxu0
  %v4225 = vadd.f32 0.0, %v4224
  %v4226 = vpop.f32.mrf.mxu0
  %v4227 = vadd.f32 0.0, %v4226
  %4228 = vmatmul.bf16.gmra.mxu0 %v3200
  %v4229 = vpop.f32.mrf.mxu0
  %v4230 = vadd.f32 0.0, %v4229
  %v4231 = vpop.f32.mrf.mxu0
  %v4232 = vadd.f32 0.0, %v4231
  %4233 = vdwg.mxu0
  %4234 = vmatpush.bf16.msra.mxu0 0
  %4235 = vmatpush.bf16.msra.mxu0 0
  %4236 = vmatpush.bf16.msra.mxu0 0
  %4237 = vmatpush.bf16.msra.mxu0 0
  %4238 = vmatpush.bf16.msra.mxu0 0
  %4239 = vmatpush.bf16.msra.mxu0 0
  %4240 = vmatpush.bf16.msra.mxu0 %v4157
  %4241 = vmatpush.bf16.msra.mxu0 %v4152
  %4242 = vmatmul.bf16.gmra.mxu0 %v3197
  %v4243 = vpop.f32.mrf.mxu0
  %v4244 = vadd.f32 0.0, %v4243
  %v4245 = vpop.f32.mrf.mxu0
  %v4246 = vadd.f32 0.0, %v4245
  %4247 = vmatmul.bf16.gmra.mxu0 %v3200
  %v4248 = vpop.f32.mrf.mxu0
  %v4249 = vadd.f32 0.0, %v4248
  %v4250 = vpop.f32.mrf.mxu0
  %v4251 = vadd.f32 0.0, %v4250
  %4252 = vdwg.mxu0
  %v4253 = vmax.f32 %v4168, 0.0
  %v4254 = vmax.f32 %v4187, 0.0
  %v4255 = vmax.f32 %v4206, 0.0
  %v4256 = vmax.f32 %v4225, 0.0
  %v4257 = vmax.f32 %v4244, 0.0
  %v4258 = vmax.f32 %v4170, 0.0
  %v4259 = vmax.f32 %v4189, 0.0
  %v4260 = vmax.f32 %v4208, 0.0
  %v4261 = vmax.f32 %v4227, 0.0
  %v4262 = vmax.f32 %v4246, 0.0
  %v4263 = vmax.f32 %v4173, 0.0
  %v4264 = vmax.f32 %v4192, 0.0
  %v4265 = vmax.f32 %v4211, 0.0
  %v4266 = vmax.f32 %v4230, 0.0
  %v4267 = vmax.f32 %v4249, 0.0
  %v4268 = vmax.f32 %v4175, 0.0
  %v4269 = vmax.f32 %v4194, 0.0
  %v4270 = vmax.f32 %v4213, 0.0
  %v4271 = vmax.f32 %v4232, 0.0
  %v4272 = vmax.f32 %v4251, 0.0
  %v4273 = vmul.f32 %v4253, %v3318
  %v4274 = vmul.f32 %v4254, %v3319
  %v4275 = vmul.f32 %v4255, %v3320
  %v4276 = vmul.f32 %v4256, %v3321
  %v4277 = vmul.f32 %v4257, %v3322
  %v4278 = vmul.f32 %v4258, %v3318
  %v4279 = vmul.f32 %v4259, %v3319
  %v4280 = vmul.f32 %v4260, %v3320
  %v4281 = vmul.f32 %v4261, %v3321
  %v4282 = vmul.f32 %v4262, %v3322
  %v4283 = vmul.f32 %v4263, %v3318
  %v4284 = vmul.f32 %v4264, %v3319
  %v4285 = vmul.f32 %v4265, %v3320
  %v4286 = vmul.f32 %v4266, %v3321
  %v4287 = vmul.f32 %v4267, %v3322
  %v4288 = vmul.f32 %v4268, %v3318
  %v4289 = vmul.f32 %v4269, %v3319
  %v4290 = vmul.f32 %v4270, %v3320
  %v4291 = vmul.f32 %v4271, %v3321
  %v4292 = vmul.f32 %v4272, %v3322
  %v4293 = vadd.f32 %v4273, %v4274
  %v4294 = vadd.f32 %v4293, %v4275
  %v4295 = vadd.f32 %v4294, %v4276
  %v4296 = vadd.f32 %v4295, %v4277
  %4297 = vadd.xlane.f32.xlu0 %v4296
  %v4298 = vpop.xlane.xlu0 %4297
  %v4299 = vadd.f32 %v4278, %v4279
  %v4300 = vadd.f32 %v4299, %v4280
  %v4301 = vadd.f32 %v4300, %v4281
  %v4302 = vadd.f32 %v4301, %v4282
  %4303 = vadd.xlane.f32.xlu0 %v4302
  %v4304 = vpop.xlane.xlu0 %4303
  %v4305 = vadd.f32 %v4283, %v4284
  %v4306 = vadd.f32 %v4305, %v4285
  %v4307 = vadd.f32 %v4306, %v4286
  %v4308 = vadd.f32 %v4307, %v4287
  %4309 = vadd.xlane.f32.xlu0 %v4308
  %v4310 = vpop.xlane.xlu0 %4309
  %v4311 = vadd.f32 %v4288, %v4289
  %v4312 = vadd.f32 %v4311, %v4290
  %v4313 = vadd.f32 %v4312, %v4291
  %v4314 = vadd.f32 %v4313, %v4292
  %4315 = vadd.xlane.f32.xlu0 %v4314
  %v4316 = vpop.xlane.xlu0 %4315
  %v4317 = vld [vmem:[#allocation2 + $0xf0] sm:$0xff]
  %v4318 = vld [vmem:[#allocation2 + $0xf8] sm:$0xff]
  %v4319 = vld [vmem:[#allocation2 + $0x100] sm:$0xff]
  %v4320 = vld [vmem:[#allocation2 + $0x108] sm:$0xff]
  %v4321 = vld [vmem:[#allocation2 + $0x110] sm:$0xff]
  %v4322 = vld [vmem:[#allocation2 + $0x238] sm:$0xff]
  %v4323 = vld [vmem:[#allocation2 + $0x240] sm:$0xff]
  %v4324 = vld [vmem:[#allocation2 + $0x248] sm:$0xff]
  %v4325 = vld [vmem:[#allocation2 + $0x250] sm:$0xff]
  %v4326 = vld [vmem:[#allocation2 + $0x258] sm:$0xff]
  %v4327 = vld [vmem:[#allocation2 + $0x380] sm:$0xff]
  %v4328 = vld [vmem:[#allocation2 + $0x388] sm:$0xff]
  %v4329 = vld [vmem:[#allocation2 + $0x390] sm:$0xff]
  %v4330 = vld [vmem:[#allocation2 + $0x398] sm:$0xff]
  %v4331 = vld [vmem:[#allocation2 + $0x3a0] sm:$0xff]
  %v4332 = vld [vmem:[#allocation2 + $0x4c8] sm:$0xff]
  %v4333 = vld [vmem:[#allocation2 + $0x4d0] sm:$0xff]
  %v4334 = vld [vmem:[#allocation2 + $0x4d8] sm:$0xff]
  %v4335 = vld [vmem:[#allocation2 + $0x4e0] sm:$0xff]
  %v4336 = vld [vmem:[#allocation2 + $0x4e8] sm:$0xff]
  %v4337 = vpack.c.bf16 %v4322, %v4317
  %v4338 = vpack.c.bf16 %v4323, %v4318
  %v4339 = vpack.c.bf16 %v4324, %v4319
  %v4340 = vpack.c.bf16 %v4325, %v4320
  %v4341 = vpack.c.bf16 %v4326, %v4321
  %v4342 = vpack.c.bf16 %v4332, %v4327
  %v4343 = vpack.c.bf16 %v4333, %v4328
  %v4344 = vpack.c.bf16 %v4334, %v4329
  %v4345 = vpack.c.bf16 %v4335, %v4330
  %v4346 = vpack.c.bf16 %v4336, %v4331
  %4347 = vmatpush.bf16.msra.mxu0 0
  %4348 = vmatpush.bf16.msra.mxu0 0
  %4349 = vmatpush.bf16.msra.mxu0 0
  %4350 = vmatpush.bf16.msra.mxu0 0
  %4351 = vmatpush.bf16.msra.mxu0 0
  %4352 = vmatpush.bf16.msra.mxu0 0
  %4353 = vmatpush.bf16.msra.mxu0 %v4342
  %4354 = vmatpush.bf16.msra.mxu0 %v4337
  %4355 = vmatmul.bf16.gmra.mxu0 %v3197
  %v4356 = vpop.f32.mrf.mxu0
  %v4357 = vadd.f32 0.0, %v4356
  %v4358 = vpop.f32.mrf.mxu0
  %v4359 = vadd.f32 0.0, %v4358
  %4360 = vmatmul.bf16.gmra.mxu0 %v3200
  %v4361 = vpop.f32.mrf.mxu0
  %v4362 = vadd.f32 0.0, %v4361
  %v4363 = vpop.f32.mrf.mxu0
  %v4364 = vadd.f32 0.0, %v4363
  %4365 = vdwg.mxu0
  %4366 = vmatpush.bf16.msra.mxu0 0
  %4367 = vmatpush.bf16.msra.mxu0 0
  %4368 = vmatpush.bf16.msra.mxu0 0
  %4369 = vmatpush.bf16.msra.mxu0 0
  %4370 = vmatpush.bf16.msra.mxu0 0
  %4371 = vmatpush.bf16.msra.mxu0 0
  %4372 = vmatpush.bf16.msra.mxu0 %v4343
  %4373 = vmatpush.bf16.msra.mxu0 %v4338
  %4374 = vmatmul.bf16.gmra.mxu0 %v3197
  %v4375 = vpop.f32.mrf.mxu0
  %v4376 = vadd.f32 0.0, %v4375
  %v4377 = vpop.f32.mrf.mxu0
  %v4378 = vadd.f32 0.0, %v4377
  %4379 = vmatmul.bf16.gmra.mxu0 %v3200
  %v4380 = vpop.f32.mrf.mxu0
  %v4381 = vadd.f32 0.0, %v4380
  %v4382 = vpop.f32.mrf.mxu0
  %v4383 = vadd.f32 0.0, %v4382
  %4384 = vdwg.mxu0
  %4385 = vmatpush.bf16.msra.mxu0 0
  %4386 = vmatpush.bf16.msra.mxu0 0
  %4387 = vmatpush.bf16.msra.mxu0 0
  %4388 = vmatpush.bf16.msra.mxu0 0
  %4389 = vmatpush.bf16.msra.mxu0 0
  %4390 = vmatpush.bf16.msra.mxu0 0
  %4391 = vmatpush.bf16.msra.mxu0 %v4344
  %4392 = vmatpush.bf16.msra.mxu0 %v4339
  %4393 = vmatmul.bf16.gmra.mxu0 %v3197
  %v4394 = vpop.f32.mrf.mxu0
  %v4395 = vadd.f32 0.0, %v4394
  %v4396 = vpop.f32.mrf.mxu0
  %v4397 = vadd.f32 0.0, %v4396
  %4398 = vmatmul.bf16.gmra.mxu0 %v3200
  %v4399 = vpop.f32.mrf.mxu0
  %v4400 = vadd.f32 0.0, %v4399
  %v4401 = vpop.f32.mrf.mxu0
  %v4402 = vadd.f32 0.0, %v4401
  %4403 = vdwg.mxu0
  %4404 = vmatpush.bf16.msra.mxu0 0
  %4405 = vmatpush.bf16.msra.mxu0 0
  %4406 = vmatpush.bf16.msra.mxu0 0
  %4407 = vmatpush.bf16.msra.mxu0 0
  %4408 = vmatpush.bf16.msra.mxu0 0
  %4409 = vmatpush.bf16.msra.mxu0 0
  %4410 = vmatpush.bf16.msra.mxu0 %v4345
  %4411 = vmatpush.bf16.msra.mxu0 %v4340
  %4412 = vmatmul.bf16.gmra.mxu0 %v3197
  %v4413 = vpop.f32.mrf.mxu0
  %v4414 = vadd.f32 0.0, %v4413
  %v4415 = vpop.f32.mrf.mxu0
  %v4416 = vadd.f32 0.0, %v4415
  %4417 = vmatmul.bf16.gmra.mxu0 %v3200
  %v4418 = vpop.f32.mrf.mxu0
  %v4419 = vadd.f32 0.0, %v4418
  %v4420 = vpop.f32.mrf.mxu0
  %v4421 = vadd.f32 0.0, %v4420
  %4422 = vdwg.mxu0
  %4423 = vmatpush.bf16.msra.mxu0 0
  %4424 = vmatpush.bf16.msra.mxu0 0
  %4425 = vmatpush.bf16.msra.mxu0 0
  %4426 = vmatpush.bf16.msra.mxu0 0
  %4427 = vmatpush.bf16.msra.mxu0 0
  %4428 = vmatpush.bf16.msra.mxu0 0
  %4429 = vmatpush.bf16.msra.mxu0 %v4346
  %4430 = vmatpush.bf16.msra.mxu0 %v4341
  %4431 = vmatmul.bf16.gmra.mxu0 %v3197
  %v4432 = vpop.f32.mrf.mxu0
  %v4433 = vadd.f32 0.0, %v4432
  %v4434 = vpop.f32.mrf.mxu0
  %v4435 = vadd.f32 0.0, %v4434
  %4436 = vmatmul.bf16.gmra.mxu0 %v3200
  %v4437 = vpop.f32.mrf.mxu0
  %v4438 = vadd.f32 0.0, %v4437
  %v4439 = vpop.f32.mrf.mxu0
  %v4440 = vadd.f32 0.0, %v4439
  %4441 = vdwg.mxu0
  %v4442 = vmax.f32 %v4357, 0.0
  %v4443 = vmax.f32 %v4376, 0.0
  %v4444 = vmax.f32 %v4395, 0.0
  %v4445 = vmax.f32 %v4414, 0.0
  %v4446 = vmax.f32 %v4433, 0.0
  %v4447 = vmax.f32 %v4359, 0.0
  %v4448 = vmax.f32 %v4378, 0.0
  %v4449 = vmax.f32 %v4397, 0.0
  %v4450 = vmax.f32 %v4416, 0.0
  %v4451 = vmax.f32 %v4435, 0.0
  %v4452 = vmax.f32 %v4362, 0.0
  %v4453 = vmax.f32 %v4381, 0.0
  %v4454 = vmax.f32 %v4400, 0.0
  %v4455 = vmax.f32 %v4419, 0.0
  %v4456 = vmax.f32 %v4438, 0.0
  %v4457 = vmax.f32 %v4364, 0.0
  %v4458 = vmax.f32 %v4383, 0.0
  %v4459 = vmax.f32 %v4402, 0.0
  %v4460 = vmax.f32 %v4421, 0.0
  %v4461 = vmax.f32 %v4440, 0.0
  %v4462 = vmul.f32 %v4442, %v3318
  %v4463 = vmul.f32 %v4443, %v3319
  %v4464 = vmul.f32 %v4444, %v3320
  %v4465 = vmul.f32 %v4445, %v3321
  %v4466 = vmul.f32 %v4446, %v3322
  %v4467 = vmul.f32 %v4447, %v3318
  %v4468 = vmul.f32 %v4448, %v3319
  %v4469 = vmul.f32 %v4449, %v3320
  %v4470 = vmul.f32 %v4450, %v3321
  %v4471 = vmul.f32 %v4451, %v3322
  %v4472 = vmul.f32 %v4452, %v3318
  %v4473 = vmul.f32 %v4453, %v3319
  %v4474 = vmul.f32 %v4454, %v3320
  %v4475 = vmul.f32 %v4455, %v3321
  %v4476 = vmul.f32 %v4456, %v3322
  %v4477 = vmul.f32 %v4457, %v3318
  %v4478 = vmul.f32 %v4458, %v3319
  %v4479 = vmul.f32 %v4459, %v3320
  %v4480 = vmul.f32 %v4460, %v3321
  %v4481 = vmul.f32 %v4461, %v3322
  %v4482 = vadd.f32 %v4462, %v4463
  %v4483 = vadd.f32 %v4482, %v4464
  %v4484 = vadd.f32 %v4483, %v4465
  %v4485 = vadd.f32 %v4484, %v4466
  %4486 = vadd.xlane.f32.xlu0 %v4485
  %v4487 = vpop.xlane.xlu0 %4486
  %v4488 = vadd.f32 %v4467, %v4468
  %v4489 = vadd.f32 %v4488, %v4469
  %v4490 = vadd.f32 %v4489, %v4470
  %v4491 = vadd.f32 %v4490, %v4471
  %4492 = vadd.xlane.f32.xlu0 %v4491
  %v4493 = vpop.xlane.xlu0 %4492
  %v4494 = vadd.f32 %v4472, %v4473
  %v4495 = vadd.f32 %v4494, %v4474
  %v4496 = vadd.f32 %v4495, %v4475
  %v4497 = vadd.f32 %v4496, %v4476
  %4498 = vadd.xlane.f32.xlu0 %v4497
  %v4499 = vpop.xlane.xlu0 %4498
  %v4500 = vadd.f32 %v4477, %v4478
  %v4501 = vadd.f32 %v4500, %v4479
  %v4502 = vadd.f32 %v4501, %v4480
  %v4503 = vadd.f32 %v4502, %v4481
  %4504 = vadd.xlane.f32.xlu0 %v4503
  %v4505 = vpop.xlane.xlu0 %4504
  %v4506 = vld [vmem:[#allocation2 + $0x118] sm:$0xff]
  %v4507 = vld [vmem:[#allocation2 + $0x120] sm:$0xff]
  %v4508 = vld [vmem:[#allocation2 + $0x128] sm:$0xff]
  %v4509 = vld [vmem:[#allocation2 + $0x130] sm:$0xff]
  %v4510 = vld [vmem:[#allocation2 + $0x138] sm:$0xff]
  %v4511 = vld [vmem:[#allocation2 + $0x260] sm:$0xff]
  %v4512 = vld [vmem:[#allocation2 + $0x268] sm:$0xff]
  %v4513 = vld [vmem:[#allocation2 + $0x270] sm:$0xff]
  %v4514 = vld [vmem:[#allocation2 + $0x278] sm:$0xff]
  %v4515 = vld [vmem:[#allocation2 + $0x280] sm:$0xff]
  %v4516 = vld [vmem:[#allocation2 + $0x3a8] sm:$0xff]
  %v4517 = vld [vmem:[#allocation2 + $0x3b0] sm:$0xff]
  %v4518 = vld [vmem:[#allocation2 + $0x3b8] sm:$0xff]
  %v4519 = vld [vmem:[#allocation2 + $0x3c0] sm:$0xff]
  %v4520 = vld [vmem:[#allocation2 + $0x3c8] sm:$0xff]
  %v4521 = vld [vmem:[#allocation2 + $0x4f0] sm:$0xff]
  %v4522 = vld [vmem:[#allocation2 + $0x4f8] sm:$0xff]
  %v4523 = vld [vmem:[#allocation2 + $0x500] sm:$0xff]
  %v4524 = vld [vmem:[#allocation2 + $0x508] sm:$0xff]
  %v4525 = vld [vmem:[#allocation2 + $0x510] sm:$0xff]
  %v4526 = vpack.c.bf16 %v4511, %v4506
  %v4527 = vpack.c.bf16 %v4512, %v4507
  %v4528 = vpack.c.bf16 %v4513, %v4508
  %v4529 = vpack.c.bf16 %v4514, %v4509
  %v4530 = vpack.c.bf16 %v4515, %v4510
  %v4531 = vpack.c.bf16 %v4521, %v4516
  %v4532 = vpack.c.bf16 %v4522, %v4517
  %v4533 = vpack.c.bf16 %v4523, %v4518
  %v4534 = vpack.c.bf16 %v4524, %v4519
  %v4535 = vpack.c.bf16 %v4525, %v4520
  %4536 = vmatpush.bf16.msra.mxu0 0
  %4537 = vmatpush.bf16.msra.mxu0 0
  %4538 = vmatpush.bf16.msra.mxu0 0
  %4539 = vmatpush.bf16.msra.mxu0 0
  %4540 = vmatpush.bf16.msra.mxu0 0
  %4541 = vmatpush.bf16.msra.mxu0 0
  %4542 = vmatpush.bf16.msra.mxu0 %v4531
  %4543 = vmatpush.bf16.msra.mxu0 %v4526
  %4544 = vmatmul.bf16.gmra.mxu0 %v3197
  %v4545 = vpop.f32.mrf.mxu0
  %v4546 = vadd.f32 0.0, %v4545
  %v4547 = vpop.f32.mrf.mxu0
  %v4548 = vadd.f32 0.0, %v4547
  %4549 = vmatmul.bf16.gmra.mxu0 %v3200
  %v4550 = vpop.f32.mrf.mxu0
  %v4551 = vadd.f32 0.0, %v4550
  %v4552 = vpop.f32.mrf.mxu0
  %v4553 = vadd.f32 0.0, %v4552
  %4554 = vdwg.mxu0
  %4555 = vmatpush.bf16.msra.mxu0 0
  %4556 = vmatpush.bf16.msra.mxu0 0
  %4557 = vmatpush.bf16.msra.mxu0 0
  %4558 = vmatpush.bf16.msra.mxu0 0
  %4559 = vmatpush.bf16.msra.mxu0 0
  %4560 = vmatpush.bf16.msra.mxu0 0
  %4561 = vmatpush.bf16.msra.mxu0 %v4532
  %4562 = vmatpush.bf16.msra.mxu0 %v4527
  %4563 = vmatmul.bf16.gmra.mxu0 %v3197
  %v4564 = vpop.f32.mrf.mxu0
  %v4565 = vadd.f32 0.0, %v4564
  %v4566 = vpop.f32.mrf.mxu0
  %v4567 = vadd.f32 0.0, %v4566
  %4568 = vmatmul.bf16.gmra.mxu0 %v3200
  %v4569 = vpop.f32.mrf.mxu0
  %v4570 = vadd.f32 0.0, %v4569
  %v4571 = vpop.f32.mrf.mxu0
  %v4572 = vadd.f32 0.0, %v4571
  %4573 = vdwg.mxu0
  %4574 = vmatpush.bf16.msra.mxu0 0
  %4575 = vmatpush.bf16.msra.mxu0 0
  %4576 = vmatpush.bf16.msra.mxu0 0
  %4577 = vmatpush.bf16.msra.mxu0 0
  %4578 = vmatpush.bf16.msra.mxu0 0
  %4579 = vmatpush.bf16.msra.mxu0 0
  %4580 = vmatpush.bf16.msra.mxu0 %v4533
  %4581 = vmatpush.bf16.msra.mxu0 %v4528
  %4582 = vmatmul.bf16.gmra.mxu0 %v3197
  %v4583 = vpop.f32.mrf.mxu0
  %v4584 = vadd.f32 0.0, %v4583
  %v4585 = vpop.f32.mrf.mxu0
  %v4586 = vadd.f32 0.0, %v4585
  %4587 = vmatmul.bf16.gmra.mxu0 %v3200
  %v4588 = vpop.f32.mrf.mxu0
  %v4589 = vadd.f32 0.0, %v4588
  %v4590 = vpop.f32.mrf.mxu0
  %v4591 = vadd.f32 0.0, %v4590
  %4592 = vdwg.mxu0
  %4593 = vmatpush.bf16.msra.mxu0 0
  %4594 = vmatpush.bf16.msra.mxu0 0
  %4595 = vmatpush.bf16.msra.mxu0 0
  %4596 = vmatpush.bf16.msra.mxu0 0
  %4597 = vmatpush.bf16.msra.mxu0 0
  %4598 = vmatpush.bf16.msra.mxu0 0
  %4599 = vmatpush.bf16.msra.mxu0 %v4534
  %4600 = vmatpush.bf16.msra.mxu0 %v4529
  %4601 = vmatmul.bf16.gmra.mxu0 %v3197
  %v4602 = vpop.f32.mrf.mxu0
  %v4603 = vadd.f32 0.0, %v4602
  %v4604 = vpop.f32.mrf.mxu0
  %v4605 = vadd.f32 0.0, %v4604
  %4606 = vmatmul.bf16.gmra.mxu0 %v3200
  %v4607 = vpop.f32.mrf.mxu0
  %v4608 = vadd.f32 0.0, %v4607
  %v4609 = vpop.f32.mrf.mxu0
  %v4610 = vadd.f32 0.0, %v4609
  %4611 = vdwg.mxu0
  %4612 = vmatpush.bf16.msra.mxu0 0
  %4613 = vmatpush.bf16.msra.mxu0 0
  %4614 = vmatpush.bf16.msra.mxu0 0
  %4615 = vmatpush.bf16.msra.mxu0 0
  %4616 = vmatpush.bf16.msra.mxu0 0
  %4617 = vmatpush.bf16.msra.mxu0 0
  %4618 = vmatpush.bf16.msra.mxu0 %v4535
  %4619 = vmatpush.bf16.msra.mxu0 %v4530
  %4620 = vmatmul.bf16.gmra.mxu0 %v3197
  %v4621 = vpop.f32.mrf.mxu0
  %v4622 = vadd.f32 0.0, %v4621
  %v4623 = vpop.f32.mrf.mxu0
  %v4624 = vadd.f32 0.0, %v4623
  %4625 = vmatmul.bf16.gmra.mxu0 %v3200
  %v4626 = vpop.f32.mrf.mxu0
  %v4627 = vadd.f32 0.0, %v4626
  %v4628 = vpop.f32.mrf.mxu0
  %v4629 = vadd.f32 0.0, %v4628
  %4630 = vdwg.mxu0
  %v4631 = vmax.f32 %v4546, 0.0
  %v4632 = vmax.f32 %v4565, 0.0
  %v4633 = vmax.f32 %v4584, 0.0
  %v4634 = vmax.f32 %v4603, 0.0
  %v4635 = vmax.f32 %v4622, 0.0
  %v4636 = vmax.f32 %v4548, 0.0
  %v4637 = vmax.f32 %v4567, 0.0
  %v4638 = vmax.f32 %v4586, 0.0
  %v4639 = vmax.f32 %v4605, 0.0
  %v4640 = vmax.f32 %v4624, 0.0
  %v4641 = vmax.f32 %v4551, 0.0
  %v4642 = vmax.f32 %v4570, 0.0
  %v4643 = vmax.f32 %v4589, 0.0
  %v4644 = vmax.f32 %v4608, 0.0
  %v4645 = vmax.f32 %v4627, 0.0
  %v4646 = vmax.f32 %v4553, 0.0
  %v4647 = vmax.f32 %v4572, 0.0
  %v4648 = vmax.f32 %v4591, 0.0
  %v4649 = vmax.f32 %v4610, 0.0
  %v4650 = vmax.f32 %v4629, 0.0
  %v4651 = vmul.f32 %v4631, %v3318
  %v4652 = vmul.f32 %v4632, %v3319
  %v4653 = vmul.f32 %v4633, %v3320
  %v4654 = vmul.f32 %v4634, %v3321
  %v4655 = vmul.f32 %v4635, %v3322
  %v4656 = vmul.f32 %v4636, %v3318
  %v4657 = vmul.f32 %v4637, %v3319
  %v4658 = vmul.f32 %v4638, %v3320
  %v4659 = vmul.f32 %v4639, %v3321
  %v4660 = vmul.f32 %v4640, %v3322
  %v4661 = vmul.f32 %v4641, %v3318
  %v4662 = vmul.f32 %v4642, %v3319
  %v4663 = vmul.f32 %v4643, %v3320
  %v4664 = vmul.f32 %v4644, %v3321
  %v4665 = vmul.f32 %v4645, %v3322
  %v4666 = vmul.f32 %v4646, %v3318
  %v4667 = vmul.f32 %v4647, %v3319
  %v4668 = vmul.f32 %v4648, %v3320
  %v4669 = vmul.f32 %v4649, %v3321
  %v4670 = vmul.f32 %v4650, %v3322
  %v4671 = vadd.f32 %v4651, %v4652
  %v4672 = vadd.f32 %v4671, %v4653
  %v4673 = vadd.f32 %v4672, %v4654
  %v4674 = vadd.f32 %v4673, %v4655
  %4675 = vadd.xlane.f32.xlu0 %v4674
  %v4676 = vpop.xlane.xlu0 %4675
  %v4677 = vadd.f32 %v4656, %v4657
  %v4678 = vadd.f32 %v4677, %v4658
  %v4679 = vadd.f32 %v4678, %v4659
  %v4680 = vadd.f32 %v4679, %v4660
  %4681 = vadd.xlane.f32.xlu0 %v4680
  %v4682 = vpop.xlane.xlu0 %4681
  %v4683 = vadd.f32 %v4661, %v4662
  %v4684 = vadd.f32 %v4683, %v4663
  %v4685 = vadd.f32 %v4684, %v4664
  %v4686 = vadd.f32 %v4685, %v4665
  %4687 = vadd.xlane.f32.xlu0 %v4686
  %v4688 = vpop.xlane.xlu0 %4687
  %v4689 = vadd.f32 %v4666, %v4667
  %v4690 = vadd.f32 %v4689, %v4668
  %v4691 = vadd.f32 %v4690, %v4669
  %v4692 = vadd.f32 %v4691, %v4670
  %4693 = vadd.xlane.f32.xlu0 %v4692
  %v4694 = vpop.xlane.xlu0 %4693
  %vm4695 = vcmask 7168
  %v4696 = vsel %vm4695, %v3353, %v3542
  %v4697 = vsel %vm4695, %v3359, %v3548
  %v4698 = vsel %vm4695, %v3365, %v3554
  %v4699 = vsel %vm4695, %v3371, %v3560
  %vm4700 = vcmask 15360
  %v4701 = vsel %vm4700, %v4696, %v3731
  %v4702 = vsel %vm4700, %v4697, %v3737
  %v4703 = vsel %vm4700, %v4698, %v3743
  %v4704 = vsel %vm4700, %v4699, %v3749
  %vm4705 = vcmask 23552
  %v4706 = vsel %vm4705, %v4701, %v3920
  %v4707 = vsel %vm4705, %v4702, %v3926
  %v4708 = vsel %vm4705, %v4703, %v3932
  %v4709 = vsel %vm4705, %v4704, %v3938
  %vm4710 = vcmask 31744
  %v4711 = vsel %vm4710, %v4706, %v4109
  %v4712 = vsel %vm4710, %v4707, %v4115
  %v4713 = vsel %vm4710, %v4708, %v4121
  %v4714 = vsel %vm4710, %v4709, %v4127
  %vm4715 = vcmask 39936
  %v4716 = vsel %vm4715, %v4711, %v4298
  %v4717 = vsel %vm4715, %v4712, %v4304
  %v4718 = vsel %vm4715, %v4713, %v4310
  %v4719 = vsel %vm4715, %v4714, %v4316
  %vm4720 = vcmask 48128
  %v4721 = vsel %vm4720, %v4716, %v4487
  %v4722 = vsel %vm4720, %v4717, %v4493
  %v4723 = vsel %vm4720, %v4718, %v4499
  %v4724 = vsel %vm4720, %v4719, %v4505
  %vm4725 = vcmask 56320
  %v4726 = vsel %vm4725, %v4721, %v4676
  %v4727 = vsel %vm4725, %v4722, %v4682
  %v4728 = vsel %vm4725, %v4723, %v4688
  %v4729 = vsel %vm4725, %v4724, %v4694
  %s4730 = scalar_lea.vmem %s1, 4
  %v4731 = vld [vmem:[%s4730] sm:$0x7]
  %s4732 = scalar_lea.vmem %s0, 80
  %v4733 = vld [vmem:[%s4732] ss:$2 sm:$0x1f]
  %s4734 = scalar_lea.vmem %s4732, 1
  %v4735 = vld [vmem:[%s4734] ss:$2 sm:$0x1f]
  %4737 = vset.pattern.permute.xlu0 0
  %4738 = vperm.xlu0 %4737, %v4731
  %v4739 = vpop.permute.xlu0 %4738
  %v4742 = vperm.slane %v4733, 0
  %v4743 = vperm.slane %v4733, 1
  %v4744 = vperm.slane %v4733, 2
  %v4745 = vperm.slane %v4733, 3
  %v4746 = vperm.slane %v4733, 4
  %v4752 = vmul.f32 %v4739, %v4742
  %v4753 = vmul.f32 %v4739, %v4743
  %v4754 = vmul.f32 %v4739, %v4744
  %v4755 = vmul.f32 %v4739, %v4745
  %v4756 = vmul.f32 %v4739, %v4746
  %4757 = vset.pattern.permute.xlu0 1
  %4758 = vperm.xlu0 %4757, %v4731
  %v4759 = vpop.permute.xlu0 %4758
  %v4762 = vperm.slane %v4735, 0
  %v4763 = vperm.slane %v4735, 1
  %v4764 = vperm.slane %v4735, 2
  %v4765 = vperm.slane %v4735, 3
  %v4766 = vperm.slane %v4735, 4
  %v4772 = vmul.f32 %v4759, %v4762
  %v4773 = vmul.f32 %v4759, %v4763
  %v4774 = vmul.f32 %v4759, %v4764
  %v4775 = vmul.f32 %v4759, %v4765
  %v4776 = vmul.f32 %v4759, %v4766
  %v4777 = vadd.f32 %v4752, %v4772
  %v4778 = vadd.f32 %v4753, %v4773
  %v4779 = vadd.f32 %v4754, %v4774
  %v4780 = vadd.f32 %v4755, %v4775
  %v4781 = vadd.f32 %v4756, %v4776
  %v4782 = vmax.f32 %v4777, 0.0
  %v4783 = vmax.f32 %v4778, 0.0
  %v4784 = vmax.f32 %v4779, 0.0
  %v4785 = vmax.f32 %v4780, 0.0
  %v4786 = vmax.f32 %v4781, 0.0
  %4787 = vst [vmem:[#allocation2] sm:$0x7] %v4782
  %4788 = vst [vmem:[#allocation2 + $0x8] sm:$0x7] %v4783
  %4789 = vst [vmem:[#allocation2 + $0x10] sm:$0x7] %v4784
  %4790 = vst [vmem:[#allocation2 + $0x18] sm:$0x7] %v4785
  %4791 = vst [vmem:[#allocation2 + $0x20] sm:$0x7] %v4786
  %s4792 = scalar_lea.vmem %s4732, 10
  %v4793 = vld [vmem:[%s4792] ss:$2 sm:$0x1f]
  %s4794 = scalar_lea.vmem %s4732, 11
  %v4795 = vld [vmem:[%s4794] ss:$2 sm:$0x1f]
  %v4797 = vperm.slane %v4793, 0
  %v4798 = vperm.slane %v4793, 1
  %v4799 = vperm.slane %v4793, 2
  %v4800 = vperm.slane %v4793, 3
  %v4801 = vperm.slane %v4793, 4
  %v4807 = vmul.f32 %v4739, %v4797
  %v4808 = vmul.f32 %v4739, %v4798
  %v4809 = vmul.f32 %v4739, %v4799
  %v4810 = vmul.f32 %v4739, %v4800
  %v4811 = vmul.f32 %v4739, %v4801
  %v4813 = vperm.slane %v4795, 0
  %v4814 = vperm.slane %v4795, 1
  %v4815 = vperm.slane %v4795, 2
  %v4816 = vperm.slane %v4795, 3
  %v4817 = vperm.slane %v4795, 4
  %v4823 = vmul.f32 %v4759, %v4813
  %v4824 = vmul.f32 %v4759, %v4814
  %v4825 = vmul.f32 %v4759, %v4815
  %v4826 = vmul.f32 %v4759, %v4816
  %v4827 = vmul.f32 %v4759, %v4817
  %v4828 = vadd.f32 %v4807, %v4823
  %v4829 = vadd.f32 %v4808, %v4824
  %v4830 = vadd.f32 %v4809, %v4825
  %v4831 = vadd.f32 %v4810, %v4826
  %v4832 = vadd.f32 %v4811, %v4827
  %v4833 = vmax.f32 %v4828, 0.0
  %v4834 = vmax.f32 %v4829, 0.0
  %v4835 = vmax.f32 %v4830, 0.0
  %v4836 = vmax.f32 %v4831, 0.0
  %v4837 = vmax.f32 %v4832, 0.0
  %4838 = vst [vmem:[#allocation2 + $0x28] sm:$0x7] %v4833
  %4839 = vst [vmem:[#allocation2 + $0x30] sm:$0x7] %v4834
  %4840 = vst [vmem:[#allocation2 + $0x38] sm:$0x7] %v4835
  %4841 = vst [vmem:[#allocation2 + $0x40] sm:$0x7] %v4836
  %4842 = vst [vmem:[#allocation2 + $0x48] sm:$0x7] %v4837
  %s4843 = scalar_lea.vmem %s4732, 20
  %v4844 = vld [vmem:[%s4843] ss:$2 sm:$0x1f]
  %s4845 = scalar_lea.vmem %s4732, 21
  %v4846 = vld [vmem:[%s4845] ss:$2 sm:$0x1f]
  %v4848 = vperm.slane %v4844, 0
  %v4849 = vperm.slane %v4844, 1
  %v4850 = vperm.slane %v4844, 2
  %v4851 = vperm.slane %v4844, 3
  %v4852 = vperm.slane %v4844, 4
  %v4858 = vmul.f32 %v4739, %v4848
  %v4859 = vmul.f32 %v4739, %v4849
  %v4860 = vmul.f32 %v4739, %v4850
  %v4861 = vmul.f32 %v4739, %v4851
  %v4862 = vmul.f32 %v4739, %v4852
  %v4864 = vperm.slane %v4846, 0
  %v4865 = vperm.slane %v4846, 1
  %v4866 = vperm.slane %v4846, 2
  %v4867 = vperm.slane %v4846, 3
  %v4868 = vperm.slane %v4846, 4
  %v4874 = vmul.f32 %v4759, %v4864
  %v4875 = vmul.f32 %v4759, %v4865
  %v4876 = vmul.f32 %v4759, %v4866
  %v4877 = vmul.f32 %v4759, %v4867
  %v4878 = vmul.f32 %v4759, %v4868
  %v4879 = vadd.f32 %v4858, %v4874
  %v4880 = vadd.f32 %v4859, %v4875
  %v4881 = vadd.f32 %v4860, %v4876
  %v4882 = vadd.f32 %v4861, %v4877
  %v4883 = vadd.f32 %v4862, %v4878
  %v4884 = vmax.f32 %v4879, 0.0
  %v4885 = vmax.f32 %v4880, 0.0
  %v4886 = vmax.f32 %v4881, 0.0
  %v4887 = vmax.f32 %v4882, 0.0
  %v4888 = vmax.f32 %v4883, 0.0
  %4889 = vst [vmem:[#allocation2 + $0x50] sm:$0x7] %v4884
  %4890 = vst [vmem:[#allocation2 + $0x58] sm:$0x7] %v4885
  %4891 = vst [vmem:[#allocation2 + $0x60] sm:$0x7] %v4886
  %4892 = vst [vmem:[#allocation2 + $0x68] sm:$0x7] %v4887
  %4893 = vst [vmem:[#allocation2 + $0x70] sm:$0x7] %v4888
  %s4894 = scalar_lea.vmem %s4732, 30
  %v4895 = vld [vmem:[%s4894] ss:$2 sm:$0x1f]
  %s4896 = scalar_lea.vmem %s4732, 31
  %v4897 = vld [vmem:[%s4896] ss:$2 sm:$0x1f]
  %v4899 = vperm.slane %v4895, 0
  %v4900 = vperm.slane %v4895, 1
  %v4901 = vperm.slane %v4895, 2
  %v4902 = vperm.slane %v4895, 3
  %v4903 = vperm.slane %v4895, 4
  %v4909 = vmul.f32 %v4739, %v4899
  %v4910 = vmul.f32 %v4739, %v4900
  %v4911 = vmul.f32 %v4739, %v4901
  %v4912 = vmul.f32 %v4739, %v4902
  %v4913 = vmul.f32 %v4739, %v4903
  %v4915 = vperm.slane %v4897, 0
  %v4916 = vperm.slane %v4897, 1
  %v4917 = vperm.slane %v4897, 2
  %v4918 = vperm.slane %v4897, 3
  %v4919 = vperm.slane %v4897, 4
  %v4925 = vmul.f32 %v4759, %v4915
  %v4926 = vmul.f32 %v4759, %v4916
  %v4927 = vmul.f32 %v4759, %v4917
  %v4928 = vmul.f32 %v4759, %v4918
  %v4929 = vmul.f32 %v4759, %v4919
  %v4930 = vadd.f32 %v4909, %v4925
  %v4931 = vadd.f32 %v4910, %v4926
  %v4932 = vadd.f32 %v4911, %v4927
  %v4933 = vadd.f32 %v4912, %v4928
  %v4934 = vadd.f32 %v4913, %v4929
  %v4935 = vmax.f32 %v4930, 0.0
  %v4936 = vmax.f32 %v4931, 0.0
  %v4937 = vmax.f32 %v4932, 0.0
  %v4938 = vmax.f32 %v4933, 0.0
  %v4939 = vmax.f32 %v4934, 0.0
  %4940 = vst [vmem:[#allocation2 + $0x78] sm:$0x7] %v4935
  %4941 = vst [vmem:[#allocation2 + $0x80] sm:$0x7] %v4936
  %4942 = vst [vmem:[#allocation2 + $0x88] sm:$0x7] %v4937
  %4943 = vst [vmem:[#allocation2 + $0x90] sm:$0x7] %v4938
  %4944 = vst [vmem:[#allocation2 + $0x98] sm:$0x7] %v4939
  %s4945 = scalar_lea.vmem %s4732, 40
  %v4946 = vld [vmem:[%s4945] ss:$2 sm:$0x1f]
  %s4947 = scalar_lea.vmem %s4732, 41
  %v4948 = vld [vmem:[%s4947] ss:$2 sm:$0x1f]
  %v4950 = vperm.slane %v4946, 0
  %v4951 = vperm.slane %v4946, 1
  %v4952 = vperm.slane %v4946, 2
  %v4953 = vperm.slane %v4946, 3
  %v4954 = vperm.slane %v4946, 4
  %v4960 = vmul.f32 %v4739, %v4950
  %v4961 = vmul.f32 %v4739, %v4951
  %v4962 = vmul.f32 %v4739, %v4952
  %v4963 = vmul.f32 %v4739, %v4953
  %v4964 = vmul.f32 %v4739, %v4954
  %v4966 = vperm.slane %v4948, 0
  %v4967 = vperm.slane %v4948, 1
  %v4968 = vperm.slane %v4948, 2
  %v4969 = vperm.slane %v4948, 3
  %v4970 = vperm.slane %v4948, 4
  %v4976 = vmul.f32 %v4759, %v4966
  %v4977 = vmul.f32 %v4759, %v4967
  %v4978 = vmul.f32 %v4759, %v4968
  %v4979 = vmul.f32 %v4759, %v4969
  %v4980 = vmul.f32 %v4759, %v4970
  %v4981 = vadd.f32 %v4960, %v4976
  %v4982 = vadd.f32 %v4961, %v4977
  %v4983 = vadd.f32 %v4962, %v4978
  %v4984 = vadd.f32 %v4963, %v4979
  %v4985 = vadd.f32 %v4964, %v4980
  %v4986 = vmax.f32 %v4981, 0.0
  %v4987 = vmax.f32 %v4982, 0.0
  %v4988 = vmax.f32 %v4983, 0.0
  %v4989 = vmax.f32 %v4984, 0.0
  %v4990 = vmax.f32 %v4985, 0.0
  %4991 = vst [vmem:[#allocation2 + $0xa0] sm:$0x7] %v4986
  %4992 = vst [vmem:[#allocation2 + $0xa8] sm:$0x7] %v4987
  %4993 = vst [vmem:[#allocation2 + $0xb0] sm:$0x7] %v4988
  %4994 = vst [vmem:[#allocation2 + $0xb8] sm:$0x7] %v4989
  %4995 = vst [vmem:[#allocation2 + $0xc0] sm:$0x7] %v4990
  %s4996 = scalar_lea.vmem %s4732, 50
  %v4997 = vld [vmem:[%s4996] ss:$2 sm:$0x1f]
  %s4998 = scalar_lea.vmem %s4732, 51
  %v4999 = vld [vmem:[%s4998] ss:$2 sm:$0x1f]
  %v5001 = vperm.slane %v4997, 0
  %v5002 = vperm.slane %v4997, 1
  %v5003 = vperm.slane %v4997, 2
  %v5004 = vperm.slane %v4997, 3
  %v5005 = vperm.slane %v4997, 4
  %v5011 = vmul.f32 %v4739, %v5001
  %v5012 = vmul.f32 %v4739, %v5002
  %v5013 = vmul.f32 %v4739, %v5003
  %v5014 = vmul.f32 %v4739, %v5004
  %v5015 = vmul.f32 %v4739, %v5005
  %v5017 = vperm.slane %v4999, 0
  %v5018 = vperm.slane %v4999, 1
  %v5019 = vperm.slane %v4999, 2
  %v5020 = vperm.slane %v4999, 3
  %v5021 = vperm.slane %v4999, 4
  %v5027 = vmul.f32 %v4759, %v5017
  %v5028 = vmul.f32 %v4759, %v5018
  %v5029 = vmul.f32 %v4759, %v5019
  %v5030 = vmul.f32 %v4759, %v5020
  %v5031 = vmul.f32 %v4759, %v5021
  %v5032 = vadd.f32 %v5011, %v5027
  %v5033 = vadd.f32 %v5012, %v5028
  %v5034 = vadd.f32 %v5013, %v5029
  %v5035 = vadd.f32 %v5014, %v5030
  %v5036 = vadd.f32 %v5015, %v5031
  %v5037 = vmax.f32 %v5032, 0.0
  %v5038 = vmax.f32 %v5033, 0.0
  %v5039 = vmax.f32 %v5034, 0.0
  %v5040 = vmax.f32 %v5035, 0.0
  %v5041 = vmax.f32 %v5036, 0.0
  %5042 = vst [vmem:[#allocation2 + $0xc8] sm:$0x7] %v5037
  %5043 = vst [vmem:[#allocation2 + $0xd0] sm:$0x7] %v5038
  %5044 = vst [vmem:[#allocation2 + $0xd8] sm:$0x7] %v5039
  %5045 = vst [vmem:[#allocation2 + $0xe0] sm:$0x7] %v5040
  %5046 = vst [vmem:[#allocation2 + $0xe8] sm:$0x7] %v5041
  %s5047 = scalar_lea.vmem %s4732, 60
  %v5048 = vld [vmem:[%s5047] ss:$2 sm:$0x1f]
  %s5049 = scalar_lea.vmem %s4732, 61
  %v5050 = vld [vmem:[%s5049] ss:$2 sm:$0x1f]
  %v5052 = vperm.slane %v5048, 0
  %v5053 = vperm.slane %v5048, 1
  %v5054 = vperm.slane %v5048, 2
  %v5055 = vperm.slane %v5048, 3
  %v5056 = vperm.slane %v5048, 4
  %v5062 = vmul.f32 %v4739, %v5052
  %v5063 = vmul.f32 %v4739, %v5053
  %v5064 = vmul.f32 %v4739, %v5054
  %v5065 = vmul.f32 %v4739, %v5055
  %v5066 = vmul.f32 %v4739, %v5056
  %v5068 = vperm.slane %v5050, 0
  %v5069 = vperm.slane %v5050, 1
  %v5070 = vperm.slane %v5050, 2
  %v5071 = vperm.slane %v5050, 3
  %v5072 = vperm.slane %v5050, 4
  %v5078 = vmul.f32 %v4759, %v5068
  %v5079 = vmul.f32 %v4759, %v5069
  %v5080 = vmul.f32 %v4759, %v5070
  %v5081 = vmul.f32 %v4759, %v5071
  %v5082 = vmul.f32 %v4759, %v5072
  %v5083 = vadd.f32 %v5062, %v5078
  %v5084 = vadd.f32 %v5063, %v5079
  %v5085 = vadd.f32 %v5064, %v5080
  %v5086 = vadd.f32 %v5065, %v5081
  %v5087 = vadd.f32 %v5066, %v5082
  %v5088 = vmax.f32 %v5083, 0.0
  %v5089 = vmax.f32 %v5084, 0.0
  %v5090 = vmax.f32 %v5085, 0.0
  %v5091 = vmax.f32 %v5086, 0.0
  %v5092 = vmax.f32 %v5087, 0.0
  %5093 = vst [vmem:[#allocation2 + $0xf0] sm:$0x7] %v5088
  %5094 = vst [vmem:[#allocation2 + $0xf8] sm:$0x7] %v5089
  %5095 = vst [vmem:[#allocation2 + $0x100] sm:$0x7] %v5090
  %5096 = vst [vmem:[#allocation2 + $0x108] sm:$0x7] %v5091
  %5097 = vst [vmem:[#allocation2 + $0x110] sm:$0x7] %v5092
  %s5098 = scalar_lea.vmem %s4732, 70
  %v5099 = vld [vmem:[%s5098] ss:$2 sm:$0x1f]
  %s5100 = scalar_lea.vmem %s4732, 71
  %v5101 = vld [vmem:[%s5100] ss:$2 sm:$0x1f]
  %v5103 = vperm.slane %v5099, 0
  %v5104 = vperm.slane %v5099, 1
  %v5105 = vperm.slane %v5099, 2
  %v5106 = vperm.slane %v5099, 3
  %v5107 = vperm.slane %v5099, 4
  %v5113 = vmul.f32 %v4739, %v5103
  %v5114 = vmul.f32 %v4739, %v5104
  %v5115 = vmul.f32 %v4739, %v5105
  %v5116 = vmul.f32 %v4739, %v5106
  %v5117 = vmul.f32 %v4739, %v5107
  %v5119 = vperm.slane %v5101, 0
  %v5120 = vperm.slane %v5101, 1
  %v5121 = vperm.slane %v5101, 2
  %v5122 = vperm.slane %v5101, 3
  %v5123 = vperm.slane %v5101, 4
  %v5129 = vmul.f32 %v4759, %v5119
  %v5130 = vmul.f32 %v4759, %v5120
  %v5131 = vmul.f32 %v4759, %v5121
  %v5132 = vmul.f32 %v4759, %v5122
  %v5133 = vmul.f32 %v4759, %v5123
  %v5134 = vadd.f32 %v5113, %v5129
  %v5135 = vadd.f32 %v5114, %v5130
  %v5136 = vadd.f32 %v5115, %v5131
  %v5137 = vadd.f32 %v5116, %v5132
  %v5138 = vadd.f32 %v5117, %v5133
  %v5139 = vmax.f32 %v5134, 0.0
  %v5140 = vmax.f32 %v5135, 0.0
  %v5141 = vmax.f32 %v5136, 0.0
  %v5142 = vmax.f32 %v5137, 0.0
  %v5143 = vmax.f32 %v5138, 0.0
  %5144 = vst [vmem:[#allocation2 + $0x118] sm:$0x7] %v5139
  %5145 = vst [vmem:[#allocation2 + $0x120] sm:$0x7] %v5140
  %5146 = vst [vmem:[#allocation2 + $0x128] sm:$0x7] %v5141
  %5147 = vst [vmem:[#allocation2 + $0x130] sm:$0x7] %v5142
  %5148 = vst [vmem:[#allocation2 + $0x138] sm:$0x7] %v5143
  %v5149 = vld [vmem:[#allocation2] sm:$0x7]
  %v5150 = vld [vmem:[#allocation2 + $0x8] sm:$0x7]
  %v5151 = vld [vmem:[#allocation2 + $0x10] sm:$0x7]
  %v5152 = vld [vmem:[#allocation2 + $0x18] sm:$0x7]
  %v5153 = vld [vmem:[#allocation2 + $0x20] sm:$0x7]
  %v5154 = vld [vmem:[#allocation2 + $0x28] sm:$0x7]
  %v5155 = vld [vmem:[#allocation2 + $0x30] sm:$0x7]
  %v5156 = vld [vmem:[#allocation2 + $0x38] sm:$0x7]
  %v5157 = vld [vmem:[#allocation2 + $0x40] sm:$0x7]
  %v5158 = vld [vmem:[#allocation2 + $0x48] sm:$0x7]
  %v5159 = vld [vmem:[#allocation2 + $0x50] sm:$0x7]
  %v5160 = vld [vmem:[#allocation2 + $0x58] sm:$0x7]
  %v5161 = vld [vmem:[#allocation2 + $0x60] sm:$0x7]
  %v5162 = vld [vmem:[#allocation2 + $0x68] sm:$0x7]
  %v5163 = vld [vmem:[#allocation2 + $0x70] sm:$0x7]
  %v5164 = vld [vmem:[#allocation2 + $0x78] sm:$0x7]
  %v5165 = vld [vmem:[#allocation2 + $0x80] sm:$0x7]
  %v5166 = vld [vmem:[#allocation2 + $0x88] sm:$0x7]
  %v5167 = vld [vmem:[#allocation2 + $0x90] sm:$0x7]
  %v5168 = vld [vmem:[#allocation2 + $0x98] sm:$0x7]
  %v5169 = vld [vmem:[#allocation2 + $0xa0] sm:$0x7]
  %v5170 = vld [vmem:[#allocation2 + $0xa8] sm:$0x7]
  %v5171 = vld [vmem:[#allocation2 + $0xb0] sm:$0x7]
  %v5172 = vld [vmem:[#allocation2 + $0xb8] sm:$0x7]
  %v5173 = vld [vmem:[#allocation2 + $0xc0] sm:$0x7]
  %v5174 = vld [vmem:[#allocation2 + $0xc8] sm:$0x7]
  %v5175 = vld [vmem:[#allocation2 + $0xd0] sm:$0x7]
  %v5176 = vld [vmem:[#allocation2 + $0xd8] sm:$0x7]
  %v5177 = vld [vmem:[#allocation2 + $0xe0] sm:$0x7]
  %v5178 = vld [vmem:[#allocation2 + $0xe8] sm:$0x7]
  %v5179 = vld [vmem:[#allocation2 + $0xf0] sm:$0x7]
  %v5180 = vld [vmem:[#allocation2 + $0xf8] sm:$0x7]
  %v5181 = vld [vmem:[#allocation2 + $0x100] sm:$0x7]
  %v5182 = vld [vmem:[#allocation2 + $0x108] sm:$0x7]
  %v5183 = vld [vmem:[#allocation2 + $0x110] sm:$0x7]
  %v5184 = vld [vmem:[#allocation2 + $0x118] sm:$0x7]
  %v5185 = vld [vmem:[#allocation2 + $0x120] sm:$0x7]
  %v5186 = vld [vmem:[#allocation2 + $0x128] sm:$0x7]
  %v5187 = vld [vmem:[#allocation2 + $0x130] sm:$0x7]
  %v5188 = vld [vmem:[#allocation2 + $0x138] sm:$0x7]
  %v5189 = vld [vmem:[#allocation2 + $0x140] sm:$0x7]
  %v5231 = vrot.slane %v5149, 5
  %v5232 = vrot.slane %v5150, 5
  %v5233 = vrot.slane %v5151, 5
  %v5234 = vrot.slane %v5152, 5
  %v5235 = vrot.slane %v5153, 5
  %v5236 = vrot.slane %v5154, 5
  %v5237 = vrot.slane %v5155, 5
  %v5238 = vrot.slane %v5156, 5
  %v5239 = vrot.slane %v5157, 5
  %v5240 = vrot.slane %v5158, 5
  %v5241 = vrot.slane %v5159, 5
  %v5242 = vrot.slane %v5160, 5
  %v5243 = vrot.slane %v5161, 5
  %v5244 = vrot.slane %v5162, 5
  %v5245 = vrot.slane %v5163, 5
  %v5246 = vrot.slane %v5164, 5
  %v5247 = vrot.slane %v5165, 5
  %v5248 = vrot.slane %v5166, 5
  %v5249 = vrot.slane %v5167, 5
  %v5250 = vrot.slane %v5168, 5
  %v5251 = vrot.slane %v5169, 5
  %v5252 = vrot.slane %v5170, 5
  %v5253 = vrot.slane %v5171, 5
  %v5254 = vrot.slane %v5172, 5
  %v5255 = vrot.slane %v5173, 5
  %v5256 = vrot.slane %v5174, 5
  %v5257 = vrot.slane %v5175, 5
  %v5258 = vrot.slane %v5176, 5
  %v5259 = vrot.slane %v5177, 5
  %v5260 = vrot.slane %v5178, 5
  %v5261 = vrot.slane %v5179, 5
  %v5262 = vrot.slane %v5180, 5
  %v5263 = vrot.slane %v5181, 5
  %v5264 = vrot.slane %v5182, 5
  %v5265 = vrot.slane %v5183, 5
  %v5266 = vrot.slane %v5184, 5
  %v5267 = vrot.slane %v5185, 5
  %v5268 = vrot.slane %v5186, 5
  %v5269 = vrot.slane %v5187, 5
  %v5270 = vrot.slane %v5188, 5
  %v5271 = vrot.slane %v5189, 5
  %5272 = vrot.lane.b32.xlu0 %v5231, 127
  %v5273 = vpop.permute.xlu0 %5272
  %5274 = vrot.lane.b32.xlu0 %v5232, 127
  %v5275 = vpop.permute.xlu0 %5274
  %5276 = vrot.lane.b32.xlu0 %v5233, 127
  %v5277 = vpop.permute.xlu0 %5276
  %5278 = vrot.lane.b32.xlu0 %v5234, 127
  %v5279 = vpop.permute.xlu0 %5278
  %5280 = vrot.lane.b32.xlu0 %v5235, 127
  %v5281 = vpop.permute.xlu0 %5280
  %5282 = vrot.lane.b32.xlu0 %v5236, 127
  %v5283 = vpop.permute.xlu0 %5282
  %5284 = vrot.lane.b32.xlu0 %v5237, 127
  %v5285 = vpop.permute.xlu0 %5284
  %5286 = vrot.lane.b32.xlu0 %v5238, 127
  %v5287 = vpop.permute.xlu0 %5286
  %5288 = vrot.lane.b32.xlu0 %v5239, 127
  %v5289 = vpop.permute.xlu0 %5288
  %5290 = vrot.lane.b32.xlu0 %v5240, 127
  %v5291 = vpop.permute.xlu0 %5290
  %5292 = vrot.lane.b32.xlu0 %v5241, 127
  %v5293 = vpop.permute.xlu0 %5292
  %5294 = vrot.lane.b32.xlu0 %v5242, 127
  %v5295 = vpop.permute.xlu0 %5294
  %5296 = vrot.lane.b32.xlu0 %v5243, 127
  %v5297 = vpop.permute.xlu0 %5296
  %5298 = vrot.lane.b32.xlu0 %v5244, 127
  %v5299 = vpop.permute.xlu0 %5298
  %5300 = vrot.lane.b32.xlu0 %v5245, 127
  %v5301 = vpop.permute.xlu0 %5300
  %5302 = vrot.lane.b32.xlu0 %v5246, 127
  %v5303 = vpop.permute.xlu0 %5302
  %5304 = vrot.lane.b32.xlu0 %v5247, 127
  %v5305 = vpop.permute.xlu0 %5304
  %5306 = vrot.lane.b32.xlu0 %v5248, 127
  %v5307 = vpop.permute.xlu0 %5306
  %5308 = vrot.lane.b32.xlu0 %v5249, 127
  %v5309 = vpop.permute.xlu0 %5308
  %5310 = vrot.lane.b32.xlu0 %v5250, 127
  %v5311 = vpop.permute.xlu0 %5310
  %5312 = vrot.lane.b32.xlu0 %v5251, 127
  %v5313 = vpop.permute.xlu0 %5312
  %5314 = vrot.lane.b32.xlu0 %v5252, 127
  %v5315 = vpop.permute.xlu0 %5314
  %5316 = vrot.lane.b32.xlu0 %v5253, 127
  %v5317 = vpop.permute.xlu0 %5316
  %5318 = vrot.lane.b32.xlu0 %v5254, 127
  %v5319 = vpop.permute.xlu0 %5318
  %5320 = vrot.lane.b32.xlu0 %v5255, 127
  %v5321 = vpop.permute.xlu0 %5320
  %5322 = vrot.lane.b32.xlu0 %v5256, 127
  %v5323 = vpop.permute.xlu0 %5322
  %5324 = vrot.lane.b32.xlu0 %v5257, 127
  %v5325 = vpop.permute.xlu0 %5324
  %5326 = vrot.lane.b32.xlu0 %v5258, 127
  %v5327 = vpop.permute.xlu0 %5326
  %5328 = vrot.lane.b32.xlu0 %v5259, 127
  %v5329 = vpop.permute.xlu0 %5328
  %5330 = vrot.lane.b32.xlu0 %v5260, 127
  %v5331 = vpop.permute.xlu0 %5330
  %5332 = vrot.lane.b32.xlu0 %v5261, 127
  %v5333 = vpop.permute.xlu0 %5332
  %5334 = vrot.lane.b32.xlu0 %v5262, 127
  %v5335 = vpop.permute.xlu0 %5334
  %5336 = vrot.lane.b32.xlu0 %v5263, 127
  %v5337 = vpop.permute.xlu0 %5336
  %5338 = vrot.lane.b32.xlu0 %v5264, 127
  %v5339 = vpop.permute.xlu0 %5338
  %5340 = vrot.lane.b32.xlu0 %v5265, 127
  %v5341 = vpop.permute.xlu0 %5340
  %5342 = vrot.lane.b32.xlu0 %v5266, 127
  %v5343 = vpop.permute.xlu0 %5342
  %5344 = vrot.lane.b32.xlu0 %v5267, 127
  %v5345 = vpop.permute.xlu0 %5344
  %5346 = vrot.lane.b32.xlu0 %v5268, 127
  %v5347 = vpop.permute.xlu0 %5346
  %5348 = vrot.lane.b32.xlu0 %v5269, 127
  %v5349 = vpop.permute.xlu0 %5348
  %5350 = vrot.lane.b32.xlu0 %v5270, 127
  %v5351 = vpop.permute.xlu0 %5350
  %5352 = vrot.lane.b32.xlu0 %v5271, 127
  %v5353 = vpop.permute.xlu0 %5352
  %v5354 = vsel %vm709, %v5273, %v5275
  %v5355 = vsel %vm709, %v5275, %v5277
  %v5356 = vsel %vm709, %v5277, %v5279
  %v5357 = vsel %vm709, %v5279, %v5281
  %v5358 = vsel %vm709, %v5281, %v5283
  %v5359 = vsel %vm709, %v5283, %v5285
  %v5360 = vsel %vm709, %v5285, %v5287
  %v5361 = vsel %vm709, %v5287, %v5289
  %v5362 = vsel %vm709, %v5289, %v5291
  %v5363 = vsel %vm709, %v5291, %v5293
  %v5364 = vsel %vm709, %v5293, %v5295
  %v5365 = vsel %vm709, %v5295, %v5297
  %v5366 = vsel %vm709, %v5297, %v5299
  %v5367 = vsel %vm709, %v5299, %v5301
  %v5368 = vsel %vm709, %v5301, %v5303
  %v5369 = vsel %vm709, %v5303, %v5305
  %v5370 = vsel %vm709, %v5305, %v5307
  %v5371 = vsel %vm709, %v5307, %v5309
  %v5372 = vsel %vm709, %v5309, %v5311
  %v5373 = vsel %vm709, %v5311, %v5313
  %v5374 = vsel %vm709, %v5313, %v5315
  %v5375 = vsel %vm709, %v5315, %v5317
  %v5376 = vsel %vm709, %v5317, %v5319
  %v5377 = vsel %vm709, %v5319, %v5321
  %v5378 = vsel %vm709, %v5321, %v5323
  %v5379 = vsel %vm709, %v5323, %v5325
  %v5380 = vsel %vm709, %v5325, %v5327
  %v5381 = vsel %vm709, %v5327, %v5329
  %v5382 = vsel %vm709, %v5329, %v5331
  %v5383 = vsel %vm709, %v5331, %v5333
  %v5384 = vsel %vm709, %v5333, %v5335
  %v5385 = vsel %vm709, %v5335, %v5337
  %v5386 = vsel %vm709, %v5337, %v5339
  %v5387 = vsel %vm709, %v5339, %v5341
  %v5388 = vsel %vm709, %v5341, %v5343
  %v5389 = vsel %vm709, %v5343, %v5345
  %v5390 = vsel %vm709, %v5345, %v5347
  %v5391 = vsel %vm709, %v5347, %v5349
  %v5392 = vsel %vm709, %v5349, %v5351
  %v5393 = vsel %vm709, %v5351, %v5353
  %5434 = vst [vmem:[#allocation2] sm:$0x38] %v5354
  %5435 = vst [vmem:[#allocation2 + $0x8] sm:$0x38] %v5355
  %5436 = vst [vmem:[#allocation2 + $0x10] sm:$0x38] %v5356
  %5437 = vst [vmem:[#allocation2 + $0x18] sm:$0x38] %v5357
  %5438 = vst [vmem:[#allocation2 + $0x20] sm:$0x38] %v5358
  %5439 = vst [vmem:[#allocation2 + $0x28] sm:$0x38] %v5359
  %5440 = vst [vmem:[#allocation2 + $0x30] sm:$0x38] %v5360
  %5441 = vst [vmem:[#allocation2 + $0x38] sm:$0x38] %v5361
  %5442 = vst [vmem:[#allocation2 + $0x40] sm:$0x38] %v5362
  %5443 = vst [vmem:[#allocation2 + $0x48] sm:$0x38] %v5363
  %5444 = vst [vmem:[#allocation2 + $0x50] sm:$0x38] %v5364
  %5445 = vst [vmem:[#allocation2 + $0x58] sm:$0x38] %v5365
  %5446 = vst [vmem:[#allocation2 + $0x60] sm:$0x38] %v5366
  %5447 = vst [vmem:[#allocation2 + $0x68] sm:$0x38] %v5367
  %5448 = vst [vmem:[#allocation2 + $0x70] sm:$0x38] %v5368
  %5449 = vst [vmem:[#allocation2 + $0x78] sm:$0x38] %v5369
  %5450 = vst [vmem:[#allocation2 + $0x80] sm:$0x38] %v5370
  %5451 = vst [vmem:[#allocation2 + $0x88] sm:$0x38] %v5371
  %5452 = vst [vmem:[#allocation2 + $0x90] sm:$0x38] %v5372
  %5453 = vst [vmem:[#allocation2 + $0x98] sm:$0x38] %v5373
  %5454 = vst [vmem:[#allocation2 + $0xa0] sm:$0x38] %v5374
  %5455 = vst [vmem:[#allocation2 + $0xa8] sm:$0x38] %v5375
  %5456 = vst [vmem:[#allocation2 + $0xb0] sm:$0x38] %v5376
  %5457 = vst [vmem:[#allocation2 + $0xb8] sm:$0x38] %v5377
  %5458 = vst [vmem:[#allocation2 + $0xc0] sm:$0x38] %v5378
  %5459 = vst [vmem:[#allocation2 + $0xc8] sm:$0x38] %v5379
  %5460 = vst [vmem:[#allocation2 + $0xd0] sm:$0x38] %v5380
  %5461 = vst [vmem:[#allocation2 + $0xd8] sm:$0x38] %v5381
  %5462 = vst [vmem:[#allocation2 + $0xe0] sm:$0x38] %v5382
  %5463 = vst [vmem:[#allocation2 + $0xe8] sm:$0x38] %v5383
  %5464 = vst [vmem:[#allocation2 + $0xf0] sm:$0x38] %v5384
  %5465 = vst [vmem:[#allocation2 + $0xf8] sm:$0x38] %v5385
  %5466 = vst [vmem:[#allocation2 + $0x100] sm:$0x38] %v5386
  %5467 = vst [vmem:[#allocation2 + $0x108] sm:$0x38] %v5387
  %5468 = vst [vmem:[#allocation2 + $0x110] sm:$0x38] %v5388
  %5469 = vst [vmem:[#allocation2 + $0x118] sm:$0x38] %v5389
  %5470 = vst [vmem:[#allocation2 + $0x120] sm:$0x38] %v5390
  %5471 = vst [vmem:[#allocation2 + $0x128] sm:$0x38] %v5391
  %5472 = vst [vmem:[#allocation2 + $0x130] sm:$0x38] %v5392
  %5473 = vst [vmem:[#allocation2 + $0x138] sm:$0x38] %v5393
  %v5474 = vld [vmem:[#allocation2] sm:$0x7]
  %v5475 = vld [vmem:[#allocation2 + $0x8] sm:$0x7]
  %v5476 = vld [vmem:[#allocation2 + $0x10] sm:$0x7]
  %v5477 = vld [vmem:[#allocation2 + $0x18] sm:$0x7]
  %v5478 = vld [vmem:[#allocation2 + $0x20] sm:$0x7]
  %v5479 = vld [vmem:[#allocation2 + $0x28] sm:$0x7]
  %v5480 = vld [vmem:[#allocation2 + $0x30] sm:$0x7]
  %v5481 = vld [vmem:[#allocation2 + $0x38] sm:$0x7]
  %v5482 = vld [vmem:[#allocation2 + $0x40] sm:$0x7]
  %v5483 = vld [vmem:[#allocation2 + $0x48] sm:$0x7]
  %v5484 = vld [vmem:[#allocation2 + $0x50] sm:$0x7]
  %v5485 = vld [vmem:[#allocation2 + $0x58] sm:$0x7]
  %v5486 = vld [vmem:[#allocation2 + $0x60] sm:$0x7]
  %v5487 = vld [vmem:[#allocation2 + $0x68] sm:$0x7]
  %v5488 = vld [vmem:[#allocation2 + $0x70] sm:$0x7]
  %v5489 = vld [vmem:[#allocation2 + $0x78] sm:$0x7]
  %v5490 = vld [vmem:[#allocation2 + $0x80] sm:$0x7]
  %v5491 = vld [vmem:[#allocation2 + $0x88] sm:$0x7]
  %v5492 = vld [vmem:[#allocation2 + $0x90] sm:$0x7]
  %v5493 = vld [vmem:[#allocation2 + $0x98] sm:$0x7]
  %v5494 = vld [vmem:[#allocation2 + $0xa0] sm:$0x7]
  %v5495 = vld [vmem:[#allocation2 + $0xa8] sm:$0x7]
  %v5496 = vld [vmem:[#allocation2 + $0xb0] sm:$0x7]
  %v5497 = vld [vmem:[#allocation2 + $0xb8] sm:$0x7]
  %v5498 = vld [vmem:[#allocation2 + $0xc0] sm:$0x7]
  %v5499 = vld [vmem:[#allocation2 + $0xc8] sm:$0x7]
  %v5500 = vld [vmem:[#allocation2 + $0xd0] sm:$0x7]
  %v5501 = vld [vmem:[#allocation2 + $0xd8] sm:$0x7]
  %v5502 = vld [vmem:[#allocation2 + $0xe0] sm:$0x7]
  %v5503 = vld [vmem:[#allocation2 + $0xe8] sm:$0x7]
  %v5504 = vld [vmem:[#allocation2 + $0xf0] sm:$0x7]
  %v5505 = vld [vmem:[#allocation2 + $0xf8] sm:$0x7]
  %v5506 = vld [vmem:[#allocation2 + $0x100] sm:$0x7]
  %v5507 = vld [vmem:[#allocation2 + $0x108] sm:$0x7]
  %v5508 = vld [vmem:[#allocation2 + $0x110] sm:$0x7]
  %v5509 = vld [vmem:[#allocation2 + $0x118] sm:$0x7]
  %v5510 = vld [vmem:[#allocation2 + $0x120] sm:$0x7]
  %v5511 = vld [vmem:[#allocation2 + $0x128] sm:$0x7]
  %v5512 = vld [vmem:[#allocation2 + $0x130] sm:$0x7]
  %v5513 = vld [vmem:[#allocation2 + $0x138] sm:$0x7]
  %v5514 = vld [vmem:[#allocation2 + $0x140] sm:$0x7]
  %v5556 = vrot.slane %v5474, 2
  %v5557 = vrot.slane %v5475, 2
  %v5558 = vrot.slane %v5476, 2
  %v5559 = vrot.slane %v5477, 2
  %v5560 = vrot.slane %v5478, 2
  %v5561 = vrot.slane %v5479, 2
  %v5562 = vrot.slane %v5480, 2
  %v5563 = vrot.slane %v5481, 2
  %v5564 = vrot.slane %v5482, 2
  %v5565 = vrot.slane %v5483, 2
  %v5566 = vrot.slane %v5484, 2
  %v5567 = vrot.slane %v5485, 2
  %v5568 = vrot.slane %v5486, 2
  %v5569 = vrot.slane %v5487, 2
  %v5570 = vrot.slane %v5488, 2
  %v5571 = vrot.slane %v5489, 2
  %v5572 = vrot.slane %v5490, 2
  %v5573 = vrot.slane %v5491, 2
  %v5574 = vrot.slane %v5492, 2
  %v5575 = vrot.slane %v5493, 2
  %v5576 = vrot.slane %v5494, 2
  %v5577 = vrot.slane %v5495, 2
  %v5578 = vrot.slane %v5496, 2
  %v5579 = vrot.slane %v5497, 2
  %v5580 = vrot.slane %v5498, 2
  %v5581 = vrot.slane %v5499, 2
  %v5582 = vrot.slane %v5500, 2
  %v5583 = vrot.slane %v5501, 2
  %v5584 = vrot.slane %v5502, 2
  %v5585 = vrot.slane %v5503, 2
  %v5586 = vrot.slane %v5504, 2
  %v5587 = vrot.slane %v5505, 2
  %v5588 = vrot.slane %v5506, 2
  %v5589 = vrot.slane %v5507, 2
  %v5590 = vrot.slane %v5508, 2
  %v5591 = vrot.slane %v5509, 2
  %v5592 = vrot.slane %v5510, 2
  %v5593 = vrot.slane %v5511, 2
  %v5594 = vrot.slane %v5512, 2
  %v5595 = vrot.slane %v5513, 2
  %v5596 = vrot.slane %v5514, 2
  %5597 = vrot.lane.b32.xlu0 %v5556, 126
  %v5598 = vpop.permute.xlu0 %5597
  %5599 = vrot.lane.b32.xlu0 %v5557, 126
  %v5600 = vpop.permute.xlu0 %5599
  %5601 = vrot.lane.b32.xlu0 %v5558, 126
  %v5602 = vpop.permute.xlu0 %5601
  %5603 = vrot.lane.b32.xlu0 %v5559, 126
  %v5604 = vpop.permute.xlu0 %5603
  %5605 = vrot.lane.b32.xlu0 %v5560, 126
  %v5606 = vpop.permute.xlu0 %5605
  %5607 = vrot.lane.b32.xlu0 %v5561, 126
  %v5608 = vpop.permute.xlu0 %5607
  %5609 = vrot.lane.b32.xlu0 %v5562, 126
  %v5610 = vpop.permute.xlu0 %5609
  %5611 = vrot.lane.b32.xlu0 %v5563, 126
  %v5612 = vpop.permute.xlu0 %5611
  %5613 = vrot.lane.b32.xlu0 %v5564, 126
  %v5614 = vpop.permute.xlu0 %5613
  %5615 = vrot.lane.b32.xlu0 %v5565, 126
  %v5616 = vpop.permute.xlu0 %5615
  %5617 = vrot.lane.b32.xlu0 %v5566, 126
  %v5618 = vpop.permute.xlu0 %5617
  %5619 = vrot.lane.b32.xlu0 %v5567, 126
  %v5620 = vpop.permute.xlu0 %5619
  %5621 = vrot.lane.b32.xlu0 %v5568, 126
  %v5622 = vpop.permute.xlu0 %5621
  %5623 = vrot.lane.b32.xlu0 %v5569, 126
  %v5624 = vpop.permute.xlu0 %5623
  %5625 = vrot.lane.b32.xlu0 %v5570, 126
  %v5626 = vpop.permute.xlu0 %5625
  %5627 = vrot.lane.b32.xlu0 %v5571, 126
  %v5628 = vpop.permute.xlu0 %5627
  %5629 = vrot.lane.b32.xlu0 %v5572, 126
  %v5630 = vpop.permute.xlu0 %5629
  %5631 = vrot.lane.b32.xlu0 %v5573, 126
  %v5632 = vpop.permute.xlu0 %5631
  %5633 = vrot.lane.b32.xlu0 %v5574, 126
  %v5634 = vpop.permute.xlu0 %5633
  %5635 = vrot.lane.b32.xlu0 %v5575, 126
  %v5636 = vpop.permute.xlu0 %5635
  %5637 = vrot.lane.b32.xlu0 %v5576, 126
  %v5638 = vpop.permute.xlu0 %5637
  %5639 = vrot.lane.b32.xlu0 %v5577, 126
  %v5640 = vpop.permute.xlu0 %5639
  %5641 = vrot.lane.b32.xlu0 %v5578, 126
  %v5642 = vpop.permute.xlu0 %5641
  %5643 = vrot.lane.b32.xlu0 %v5579, 126
  %v5644 = vpop.permute.xlu0 %5643
  %5645 = vrot.lane.b32.xlu0 %v5580, 126
  %v5646 = vpop.permute.xlu0 %5645
  %5647 = vrot.lane.b32.xlu0 %v5581, 126
  %v5648 = vpop.permute.xlu0 %5647
  %5649 = vrot.lane.b32.xlu0 %v5582, 126
  %v5650 = vpop.permute.xlu0 %5649
  %5651 = vrot.lane.b32.xlu0 %v5583, 126
  %v5652 = vpop.permute.xlu0 %5651
  %5653 = vrot.lane.b32.xlu0 %v5584, 126
  %v5654 = vpop.permute.xlu0 %5653
  %5655 = vrot.lane.b32.xlu0 %v5585, 126
  %v5656 = vpop.permute.xlu0 %5655
  %5657 = vrot.lane.b32.xlu0 %v5586, 126
  %v5658 = vpop.permute.xlu0 %5657
  %5659 = vrot.lane.b32.xlu0 %v5587, 126
  %v5660 = vpop.permute.xlu0 %5659
  %5661 = vrot.lane.b32.xlu0 %v5588, 126
  %v5662 = vpop.permute.xlu0 %5661
  %5663 = vrot.lane.b32.xlu0 %v5589, 126
  %v5664 = vpop.permute.xlu0 %5663
  %5665 = vrot.lane.b32.xlu0 %v5590, 126
  %v5666 = vpop.permute.xlu0 %5665
  %5667 = vrot.lane.b32.xlu0 %v5591, 126
  %v5668 = vpop.permute.xlu0 %5667
  %5669 = vrot.lane.b32.xlu0 %v5592, 126
  %v5670 = vpop.permute.xlu0 %5669
  %5671 = vrot.lane.b32.xlu0 %v5593, 126
  %v5672 = vpop.permute.xlu0 %5671
  %5673 = vrot.lane.b32.xlu0 %v5594, 126
  %v5674 = vpop.permute.xlu0 %5673
  %5675 = vrot.lane.b32.xlu0 %v5595, 126
  %v5676 = vpop.permute.xlu0 %5675
  %5677 = vrot.lane.b32.xlu0 %v5596, 126
  %v5678 = vpop.permute.xlu0 %5677
  %v5679 = vsel %vm1035, %v5598, %v5600
  %v5680 = vsel %vm1035, %v5600, %v5602
  %v5681 = vsel %vm1035, %v5602, %v5604
  %v5682 = vsel %vm1035, %v5604, %v5606
  %v5683 = vsel %vm1035, %v5606, %v5608
  %v5684 = vsel %vm1035, %v5608, %v5610
  %v5685 = vsel %vm1035, %v5610, %v5612
  %v5686 = vsel %vm1035, %v5612, %v5614
  %v5687 = vsel %vm1035, %v5614, %v5616
  %v5688 = vsel %vm1035, %v5616, %v5618
  %v5689 = vsel %vm1035, %v5618, %v5620
  %v5690 = vsel %vm1035, %v5620, %v5622
  %v5691 = vsel %vm1035, %v5622, %v5624
  %v5692 = vsel %vm1035, %v5624, %v5626
  %v5693 = vsel %vm1035, %v5626, %v5628
  %v5694 = vsel %vm1035, %v5628, %v5630
  %v5695 = vsel %vm1035, %v5630, %v5632
  %v5696 = vsel %vm1035, %v5632, %v5634
  %v5697 = vsel %vm1035, %v5634, %v5636
  %v5698 = vsel %vm1035, %v5636, %v5638
  %v5699 = vsel %vm1035, %v5638, %v5640
  %v5700 = vsel %vm1035, %v5640, %v5642
  %v5701 = vsel %vm1035, %v5642, %v5644
  %v5702 = vsel %vm1035, %v5644, %v5646
  %v5703 = vsel %vm1035, %v5646, %v5648
  %v5704 = vsel %vm1035, %v5648, %v5650
  %v5705 = vsel %vm1035, %v5650, %v5652
  %v5706 = vsel %vm1035, %v5652, %v5654
  %v5707 = vsel %vm1035, %v5654, %v5656
  %v5708 = vsel %vm1035, %v5656, %v5658
  %v5709 = vsel %vm1035, %v5658, %v5660
  %v5710 = vsel %vm1035, %v5660, %v5662
  %v5711 = vsel %vm1035, %v5662, %v5664
  %v5712 = vsel %vm1035, %v5664, %v5666
  %v5713 = vsel %vm1035, %v5666, %v5668
  %v5714 = vsel %vm1035, %v5668, %v5670
  %v5715 = vsel %vm1035, %v5670, %v5672
  %v5716 = vsel %vm1035, %v5672, %v5674
  %v5717 = vsel %vm1035, %v5674, %v5676
  %v5718 = vsel %vm1035, %v5676, %v5678
  %5759 = vst [vmem:[#allocation2] sm:$0xc0] %v5679
  %5760 = vst [vmem:[#allocation2 + $0x8] sm:$0xc0] %v5680
  %5761 = vst [vmem:[#allocation2 + $0x10] sm:$0xc0] %v5681
  %5762 = vst [vmem:[#allocation2 + $0x18] sm:$0xc0] %v5682
  %5763 = vst [vmem:[#allocation2 + $0x20] sm:$0xc0] %v5683
  %5764 = vst [vmem:[#allocation2 + $0x28] sm:$0xc0] %v5684
  %5765 = vst [vmem:[#allocation2 + $0x30] sm:$0xc0] %v5685
  %5766 = vst [vmem:[#allocation2 + $0x38] sm:$0xc0] %v5686
  %5767 = vst [vmem:[#allocation2 + $0x40] sm:$0xc0] %v5687
  %5768 = vst [vmem:[#allocation2 + $0x48] sm:$0xc0] %v5688
  %5769 = vst [vmem:[#allocation2 + $0x50] sm:$0xc0] %v5689
  %5770 = vst [vmem:[#allocation2 + $0x58] sm:$0xc0] %v5690
  %5771 = vst [vmem:[#allocation2 + $0x60] sm:$0xc0] %v5691
  %5772 = vst [vmem:[#allocation2 + $0x68] sm:$0xc0] %v5692
  %5773 = vst [vmem:[#allocation2 + $0x70] sm:$0xc0] %v5693
  %5774 = vst [vmem:[#allocation2 + $0x78] sm:$0xc0] %v5694
  %5775 = vst [vmem:[#allocation2 + $0x80] sm:$0xc0] %v5695
  %5776 = vst [vmem:[#allocation2 + $0x88] sm:$0xc0] %v5696
  %5777 = vst [vmem:[#allocation2 + $0x90] sm:$0xc0] %v5697
  %5778 = vst [vmem:[#allocation2 + $0x98] sm:$0xc0] %v5698
  %5779 = vst [vmem:[#allocation2 + $0xa0] sm:$0xc0] %v5699
  %5780 = vst [vmem:[#allocation2 + $0xa8] sm:$0xc0] %v5700
  %5781 = vst [vmem:[#allocation2 + $0xb0] sm:$0xc0] %v5701
  %5782 = vst [vmem:[#allocation2 + $0xb8] sm:$0xc0] %v5702
  %5783 = vst [vmem:[#allocation2 + $0xc0] sm:$0xc0] %v5703
  %5784 = vst [vmem:[#allocation2 + $0xc8] sm:$0xc0] %v5704
  %5785 = vst [vmem:[#allocation2 + $0xd0] sm:$0xc0] %v5705
  %5786 = vst [vmem:[#allocation2 + $0xd8] sm:$0xc0] %v5706
  %5787 = vst [vmem:[#allocation2 + $0xe0] sm:$0xc0] %v5707
  %5788 = vst [vmem:[#allocation2 + $0xe8] sm:$0xc0] %v5708
  %5789 = vst [vmem:[#allocation2 + $0xf0] sm:$0xc0] %v5709
  %5790 = vst [vmem:[#allocation2 + $0xf8] sm:$0xc0] %v5710
  %5791 = vst [vmem:[#allocation2 + $0x100] sm:$0xc0] %v5711
  %5792 = vst [vmem:[#allocation2 + $0x108] sm:$0xc0] %v5712
  %5793 = vst [vmem:[#allocation2 + $0x110] sm:$0xc0] %v5713
  %5794 = vst [vmem:[#allocation2 + $0x118] sm:$0xc0] %v5714
  %5795 = vst [vmem:[#allocation2 + $0x120] sm:$0xc0] %v5715
  %5796 = vst [vmem:[#allocation2 + $0x128] sm:$0xc0] %v5716
  %5797 = vst [vmem:[#allocation2 + $0x130] sm:$0xc0] %v5717
  %5798 = vst [vmem:[#allocation2 + $0x138] sm:$0xc0] %v5718
  %5799 = vst [vmem:[#allocation2 + $0x148] sm:$0x1] %v5679
  %5800 = vst [vmem:[#allocation2 + $0x150] sm:$0x1] %v5680
  %5801 = vst [vmem:[#allocation2 + $0x158] sm:$0x1] %v5681
  %5802 = vst [vmem:[#allocation2 + $0x160] sm:$0x1] %v5682
  %5803 = vst [vmem:[#allocation2 + $0x168] sm:$0x1] %v5683
  %5804 = vst [vmem:[#allocation2 + $0x170] sm:$0x1] %v5684
  %5805 = vst [vmem:[#allocation2 + $0x178] sm:$0x1] %v5685
  %5806 = vst [vmem:[#allocation2 + $0x180] sm:$0x1] %v5686
  %5807 = vst [vmem:[#allocation2 + $0x188] sm:$0x1] %v5687
  %5808 = vst [vmem:[#allocation2 + $0x190] sm:$0x1] %v5688
  %5809 = vst [vmem:[#allocation2 + $0x198] sm:$0x1] %v5689
  %5810 = vst [vmem:[#allocation2 + $0x1a0] sm:$0x1] %v5690
  %5811 = vst [vmem:[#allocation2 + $0x1a8] sm:$0x1] %v5691
  %5812 = vst [vmem:[#allocation2 + $0x1b0] sm:$0x1] %v5692
  %5813 = vst [vmem:[#allocation2 + $0x1b8] sm:$0x1] %v5693
  %5814 = vst [vmem:[#allocation2 + $0x1c0] sm:$0x1] %v5694
  %5815 = vst [vmem:[#allocation2 + $0x1c8] sm:$0x1] %v5695
  %5816 = vst [vmem:[#allocation2 + $0x1d0] sm:$0x1] %v5696
  %5817 = vst [vmem:[#allocation2 + $0x1d8] sm:$0x1] %v5697
  %5818 = vst [vmem:[#allocation2 + $0x1e0] sm:$0x1] %v5698
  %5819 = vst [vmem:[#allocation2 + $0x1e8] sm:$0x1] %v5699
  %5820 = vst [vmem:[#allocation2 + $0x1f0] sm:$0x1] %v5700
  %5821 = vst [vmem:[#allocation2 + $0x1f8] sm:$0x1] %v5701
  %5822 = vst [vmem:[#allocation2 + $0x200] sm:$0x1] %v5702
  %5823 = vst [vmem:[#allocation2 + $0x208] sm:$0x1] %v5703
  %5824 = vst [vmem:[#allocation2 + $0x210] sm:$0x1] %v5704
  %5825 = vst [vmem:[#allocation2 + $0x218] sm:$0x1] %v5705
  %5826 = vst [vmem:[#allocation2 + $0x220] sm:$0x1] %v5706
  %5827 = vst [vmem:[#allocation2 + $0x228] sm:$0x1] %v5707
  %5828 = vst [vmem:[#allocation2 + $0x230] sm:$0x1] %v5708
  %5829 = vst [vmem:[#allocation2 + $0x238] sm:$0x1] %v5709
  %5830 = vst [vmem:[#allocation2 + $0x240] sm:$0x1] %v5710
  %5831 = vst [vmem:[#allocation2 + $0x248] sm:$0x1] %v5711
  %5832 = vst [vmem:[#allocation2 + $0x250] sm:$0x1] %v5712
  %5833 = vst [vmem:[#allocation2 + $0x258] sm:$0x1] %v5713
  %5834 = vst [vmem:[#allocation2 + $0x260] sm:$0x1] %v5714
  %5835 = vst [vmem:[#allocation2 + $0x268] sm:$0x1] %v5715
  %5836 = vst [vmem:[#allocation2 + $0x270] sm:$0x1] %v5716
  %5837 = vst [vmem:[#allocation2 + $0x278] sm:$0x1] %v5717
  %5838 = vst [vmem:[#allocation2 + $0x280] sm:$0x1] %v5718
  %v5839 = vld [vmem:[#allocation2] sm:$0x7]
  %v5840 = vld [vmem:[#allocation2 + $0x8] sm:$0x7]
  %v5841 = vld [vmem:[#allocation2 + $0x10] sm:$0x7]
  %v5842 = vld [vmem:[#allocation2 + $0x18] sm:$0x7]
  %v5843 = vld [vmem:[#allocation2 + $0x20] sm:$0x7]
  %v5844 = vld [vmem:[#allocation2 + $0x28] sm:$0x7]
  %v5845 = vld [vmem:[#allocation2 + $0x30] sm:$0x7]
  %v5846 = vld [vmem:[#allocation2 + $0x38] sm:$0x7]
  %v5847 = vld [vmem:[#allocation2 + $0x40] sm:$0x7]
  %v5848 = vld [vmem:[#allocation2 + $0x48] sm:$0x7]
  %v5849 = vld [vmem:[#allocation2 + $0x50] sm:$0x7]
  %v5850 = vld [vmem:[#allocation2 + $0x58] sm:$0x7]
  %v5851 = vld [vmem:[#allocation2 + $0x60] sm:$0x7]
  %v5852 = vld [vmem:[#allocation2 + $0x68] sm:$0x7]
  %v5853 = vld [vmem:[#allocation2 + $0x70] sm:$0x7]
  %v5854 = vld [vmem:[#allocation2 + $0x78] sm:$0x7]
  %v5855 = vld [vmem:[#allocation2 + $0x80] sm:$0x7]
  %v5856 = vld [vmem:[#allocation2 + $0x88] sm:$0x7]
  %v5857 = vld [vmem:[#allocation2 + $0x90] sm:$0x7]
  %v5858 = vld [vmem:[#allocation2 + $0x98] sm:$0x7]
  %v5859 = vld [vmem:[#allocation2 + $0xa0] sm:$0x7]
  %v5860 = vld [vmem:[#allocation2 + $0xa8] sm:$0x7]
  %v5861 = vld [vmem:[#allocation2 + $0xb0] sm:$0x7]
  %v5862 = vld [vmem:[#allocation2 + $0xb8] sm:$0x7]
  %v5863 = vld [vmem:[#allocation2 + $0xc0] sm:$0x7]
  %v5864 = vld [vmem:[#allocation2 + $0xc8] sm:$0x7]
  %v5865 = vld [vmem:[#allocation2 + $0xd0] sm:$0x7]
  %v5866 = vld [vmem:[#allocation2 + $0xd8] sm:$0x7]
  %v5867 = vld [vmem:[#allocation2 + $0xe0] sm:$0x7]
  %v5868 = vld [vmem:[#allocation2 + $0xe8] sm:$0x7]
  %v5869 = vld [vmem:[#allocation2 + $0xf0] sm:$0x7]
  %v5870 = vld [vmem:[#allocation2 + $0xf8] sm:$0x7]
  %v5871 = vld [vmem:[#allocation2 + $0x100] sm:$0x7]
  %v5872 = vld [vmem:[#allocation2 + $0x108] sm:$0x7]
  %v5873 = vld [vmem:[#allocation2 + $0x110] sm:$0x7]
  %v5874 = vld [vmem:[#allocation2 + $0x118] sm:$0x7]
  %v5875 = vld [vmem:[#allocation2 + $0x120] sm:$0x7]
  %v5876 = vld [vmem:[#allocation2 + $0x128] sm:$0x7]
  %v5877 = vld [vmem:[#allocation2 + $0x130] sm:$0x7]
  %v5878 = vld [vmem:[#allocation2 + $0x138] sm:$0x7]
  %v5879 = vld [vmem:[#allocation2 + $0x140] sm:$0x7]
  %v5921 = vrot.slane %v5839, 7
  %v5922 = vrot.slane %v5840, 7
  %v5923 = vrot.slane %v5841, 7
  %v5924 = vrot.slane %v5842, 7
  %v5925 = vrot.slane %v5843, 7
  %v5926 = vrot.slane %v5844, 7
  %v5927 = vrot.slane %v5845, 7
  %v5928 = vrot.slane %v5846, 7
  %v5929 = vrot.slane %v5847, 7
  %v5930 = vrot.slane %v5848, 7
  %v5931 = vrot.slane %v5849, 7
  %v5932 = vrot.slane %v5850, 7
  %v5933 = vrot.slane %v5851, 7
  %v5934 = vrot.slane %v5852, 7
  %v5935 = vrot.slane %v5853, 7
  %v5936 = vrot.slane %v5854, 7
  %v5937 = vrot.slane %v5855, 7
  %v5938 = vrot.slane %v5856, 7
  %v5939 = vrot.slane %v5857, 7
  %v5940 = vrot.slane %v5858, 7
  %v5941 = vrot.slane %v5859, 7
  %v5942 = vrot.slane %v5860, 7
  %v5943 = vrot.slane %v5861, 7
  %v5944 = vrot.slane %v5862, 7
  %v5945 = vrot.slane %v5863, 7
  %v5946 = vrot.slane %v5864, 7
  %v5947 = vrot.slane %v5865, 7
  %v5948 = vrot.slane %v5866, 7
  %v5949 = vrot.slane %v5867, 7
  %v5950 = vrot.slane %v5868, 7
  %v5951 = vrot.slane %v5869, 7
  %v5952 = vrot.slane %v5870, 7
  %v5953 = vrot.slane %v5871, 7
  %v5954 = vrot.slane %v5872, 7
  %v5955 = vrot.slane %v5873, 7
  %v5956 = vrot.slane %v5874, 7
  %v5957 = vrot.slane %v5875, 7
  %v5958 = vrot.slane %v5876, 7
  %v5959 = vrot.slane %v5877, 7
  %v5960 = vrot.slane %v5878, 7
  %v5961 = vrot.slane %v5879, 7
  %5962 = vrot.lane.b32.xlu0 %v5921, 104
  %v5963 = vpop.permute.xlu0 %5962
  %5964 = vrot.lane.b32.xlu0 %v5922, 104
  %v5965 = vpop.permute.xlu0 %5964
  %5966 = vrot.lane.b32.xlu0 %v5923, 104
  %v5967 = vpop.permute.xlu0 %5966
  %5968 = vrot.lane.b32.xlu0 %v5924, 104
  %v5969 = vpop.permute.xlu0 %5968
  %5970 = vrot.lane.b32.xlu0 %v5925, 104
  %v5971 = vpop.permute.xlu0 %5970
  %5972 = vrot.lane.b32.xlu0 %v5926, 104
  %v5973 = vpop.permute.xlu0 %5972
  %5974 = vrot.lane.b32.xlu0 %v5927, 104
  %v5975 = vpop.permute.xlu0 %5974
  %5976 = vrot.lane.b32.xlu0 %v5928, 104
  %v5977 = vpop.permute.xlu0 %5976
  %5978 = vrot.lane.b32.xlu0 %v5929, 104
  %v5979 = vpop.permute.xlu0 %5978
  %5980 = vrot.lane.b32.xlu0 %v5930, 104
  %v5981 = vpop.permute.xlu0 %5980
  %5982 = vrot.lane.b32.xlu0 %v5931, 104
  %v5983 = vpop.permute.xlu0 %5982
  %5984 = vrot.lane.b32.xlu0 %v5932, 104
  %v5985 = vpop.permute.xlu0 %5984
  %5986 = vrot.lane.b32.xlu0 %v5933, 104
  %v5987 = vpop.permute.xlu0 %5986
  %5988 = vrot.lane.b32.xlu0 %v5934, 104
  %v5989 = vpop.permute.xlu0 %5988
  %5990 = vrot.lane.b32.xlu0 %v5935, 104
  %v5991 = vpop.permute.xlu0 %5990
  %5992 = vrot.lane.b32.xlu0 %v5936, 104
  %v5993 = vpop.permute.xlu0 %5992
  %5994 = vrot.lane.b32.xlu0 %v5937, 104
  %v5995 = vpop.permute.xlu0 %5994
  %5996 = vrot.lane.b32.xlu0 %v5938, 104
  %v5997 = vpop.permute.xlu0 %5996
  %5998 = vrot.lane.b32.xlu0 %v5939, 104
  %v5999 = vpop.permute.xlu0 %5998
  %6000 = vrot.lane.b32.xlu0 %v5940, 104
  %v6001 = vpop.permute.xlu0 %6000
  %6002 = vrot.lane.b32.xlu0 %v5941, 104
  %v6003 = vpop.permute.xlu0 %6002
  %6004 = vrot.lane.b32.xlu0 %v5942, 104
  %v6005 = vpop.permute.xlu0 %6004
  %6006 = vrot.lane.b32.xlu0 %v5943, 104
  %v6007 = vpop.permute.xlu0 %6006
  %6008 = vrot.lane.b32.xlu0 %v5944, 104
  %v6009 = vpop.permute.xlu0 %6008
  %6010 = vrot.lane.b32.xlu0 %v5945, 104
  %v6011 = vpop.permute.xlu0 %6010
  %6012 = vrot.lane.b32.xlu0 %v5946, 104
  %v6013 = vpop.permute.xlu0 %6012
  %6014 = vrot.lane.b32.xlu0 %v5947, 104
  %v6015 = vpop.permute.xlu0 %6014
  %6016 = vrot.lane.b32.xlu0 %v5948, 104
  %v6017 = vpop.permute.xlu0 %6016
  %6018 = vrot.lane.b32.xlu0 %v5949, 104
  %v6019 = vpop.permute.xlu0 %6018
  %6020 = vrot.lane.b32.xlu0 %v5950, 104
  %v6021 = vpop.permute.xlu0 %6020
  %6022 = vrot.lane.b32.xlu0 %v5951, 104
  %v6023 = vpop.permute.xlu0 %6022
  %6024 = vrot.lane.b32.xlu0 %v5952, 104
  %v6025 = vpop.permute.xlu0 %6024
  %6026 = vrot.lane.b32.xlu0 %v5953, 104
  %v6027 = vpop.permute.xlu0 %6026
  %6028 = vrot.lane.b32.xlu0 %v5954, 104
  %v6029 = vpop.permute.xlu0 %6028
  %6030 = vrot.lane.b32.xlu0 %v5955, 104
  %v6031 = vpop.permute.xlu0 %6030
  %6032 = vrot.lane.b32.xlu0 %v5956, 104
  %v6033 = vpop.permute.xlu0 %6032
  %6034 = vrot.lane.b32.xlu0 %v5957, 104
  %v6035 = vpop.permute.xlu0 %6034
  %6036 = vrot.lane.b32.xlu0 %v5958, 104
  %v6037 = vpop.permute.xlu0 %6036
  %6038 = vrot.lane.b32.xlu0 %v5959, 104
  %v6039 = vpop.permute.xlu0 %6038
  %6040 = vrot.lane.b32.xlu0 %v5960, 104
  %v6041 = vpop.permute.xlu0 %6040
  %6042 = vrot.lane.b32.xlu0 %v5961, 104
  %v6043 = vpop.permute.xlu0 %6042
  %v6044 = vsel %vm1401, %v5963, %v5965
  %v6045 = vsel %vm1401, %v5965, %v5967
  %v6046 = vsel %vm1401, %v5967, %v5969
  %v6047 = vsel %vm1401, %v5969, %v5971
  %v6048 = vsel %vm1401, %v5971, %v5973
  %v6049 = vsel %vm1401, %v5973, %v5975
  %v6050 = vsel %vm1401, %v5975, %v5977
  %v6051 = vsel %vm1401, %v5977, %v5979
  %v6052 = vsel %vm1401, %v5979, %v5981
  %v6053 = vsel %vm1401, %v5981, %v5983
  %v6054 = vsel %vm1401, %v5983, %v5985
  %v6055 = vsel %vm1401, %v5985, %v5987
  %v6056 = vsel %vm1401, %v5987, %v5989
  %v6057 = vsel %vm1401, %v5989, %v5991
  %v6058 = vsel %vm1401, %v5991, %v5993
  %v6059 = vsel %vm1401, %v5993, %v5995
  %v6060 = vsel %vm1401, %v5995, %v5997
  %v6061 = vsel %vm1401, %v5997, %v5999
  %v6062 = vsel %vm1401, %v5999, %v6001
  %v6063 = vsel %vm1401, %v6001, %v6003
  %v6064 = vsel %vm1401, %v6003, %v6005
  %v6065 = vsel %vm1401, %v6005, %v6007
  %v6066 = vsel %vm1401, %v6007, %v6009
  %v6067 = vsel %vm1401, %v6009, %v6011
  %v6068 = vsel %vm1401, %v6011, %v6013
  %v6069 = vsel %vm1401, %v6013, %v6015
  %v6070 = vsel %vm1401, %v6015, %v6017
  %v6071 = vsel %vm1401, %v6017, %v6019
  %v6072 = vsel %vm1401, %v6019, %v6021
  %v6073 = vsel %vm1401, %v6021, %v6023
  %v6074 = vsel %vm1401, %v6023, %v6025
  %v6075 = vsel %vm1401, %v6025, %v6027
  %v6076 = vsel %vm1401, %v6027, %v6029
  %v6077 = vsel %vm1401, %v6029, %v6031
  %v6078 = vsel %vm1401, %v6031, %v6033
  %v6079 = vsel %vm1401, %v6033, %v6035
  %v6080 = vsel %vm1401, %v6035, %v6037
  %v6081 = vsel %vm1401, %v6037, %v6039
  %v6082 = vsel %vm1401, %v6039, %v6041
  %v6083 = vsel %vm1401, %v6041, %v6043
  %6124 = vst [vmem:[#allocation2 + $0x148] sm:$0xe] %v6044
  %6125 = vst [vmem:[#allocation2 + $0x150] sm:$0xe] %v6045
  %6126 = vst [vmem:[#allocation2 + $0x158] sm:$0xe] %v6046
  %6127 = vst [vmem:[#allocation2 + $0x160] sm:$0xe] %v6047
  %6128 = vst [vmem:[#allocation2 + $0x168] sm:$0xe] %v6048
  %6129 = vst [vmem:[#allocation2 + $0x170] sm:$0xe] %v6049
  %6130 = vst [vmem:[#allocation2 + $0x178] sm:$0xe] %v6050
  %6131 = vst [vmem:[#allocation2 + $0x180] sm:$0xe] %v6051
  %6132 = vst [vmem:[#allocation2 + $0x188] sm:$0xe] %v6052
  %6133 = vst [vmem:[#allocation2 + $0x190] sm:$0xe] %v6053
  %6134 = vst [vmem:[#allocation2 + $0x198] sm:$0xe] %v6054
  %6135 = vst [vmem:[#allocation2 + $0x1a0] sm:$0xe] %v6055
  %6136 = vst [vmem:[#allocation2 + $0x1a8] sm:$0xe] %v6056
  %6137 = vst [vmem:[#allocation2 + $0x1b0] sm:$0xe] %v6057
  %6138 = vst [vmem:[#allocation2 + $0x1b8] sm:$0xe] %v6058
  %6139 = vst [vmem:[#allocation2 + $0x1c0] sm:$0xe] %v6059
  %6140 = vst [vmem:[#allocation2 + $0x1c8] sm:$0xe] %v6060
  %6141 = vst [vmem:[#allocation2 + $0x1d0] sm:$0xe] %v6061
  %6142 = vst [vmem:[#allocation2 + $0x1d8] sm:$0xe] %v6062
  %6143 = vst [vmem:[#allocation2 + $0x1e0] sm:$0xe] %v6063
  %6144 = vst [vmem:[#allocation2 + $0x1e8] sm:$0xe] %v6064
  %6145 = vst [vmem:[#allocation2 + $0x1f0] sm:$0xe] %v6065
  %6146 = vst [vmem:[#allocation2 + $0x1f8] sm:$0xe] %v6066
  %6147 = vst [vmem:[#allocation2 + $0x200] sm:$0xe] %v6067
  %6148 = vst [vmem:[#allocation2 + $0x208] sm:$0xe] %v6068
  %6149 = vst [vmem:[#allocation2 + $0x210] sm:$0xe] %v6069
  %6150 = vst [vmem:[#allocation2 + $0x218] sm:$0xe] %v6070
  %6151 = vst [vmem:[#allocation2 + $0x220] sm:$0xe] %v6071
  %6152 = vst [vmem:[#allocation2 + $0x228] sm:$0xe] %v6072
  %6153 = vst [vmem:[#allocation2 + $0x230] sm:$0xe] %v6073
  %6154 = vst [vmem:[#allocation2 + $0x238] sm:$0xe] %v6074
  %6155 = vst [vmem:[#allocation2 + $0x240] sm:$0xe] %v6075
  %6156 = vst [vmem:[#allocation2 + $0x248] sm:$0xe] %v6076
  %6157 = vst [vmem:[#allocation2 + $0x250] sm:$0xe] %v6077
  %6158 = vst [vmem:[#allocation2 + $0x258] sm:$0xe] %v6078
  %6159 = vst [vmem:[#allocation2 + $0x260] sm:$0xe] %v6079
  %6160 = vst [vmem:[#allocation2 + $0x268] sm:$0xe] %v6080
  %6161 = vst [vmem:[#allocation2 + $0x270] sm:$0xe] %v6081
  %6162 = vst [vmem:[#allocation2 + $0x278] sm:$0xe] %v6082
  %6163 = vst [vmem:[#allocation2 + $0x280] sm:$0xe] %v6083
  %v6164 = vld [vmem:[#allocation2] sm:$0x7]
  %v6165 = vld [vmem:[#allocation2 + $0x8] sm:$0x7]
  %v6166 = vld [vmem:[#allocation2 + $0x10] sm:$0x7]
  %v6167 = vld [vmem:[#allocation2 + $0x18] sm:$0x7]
  %v6168 = vld [vmem:[#allocation2 + $0x20] sm:$0x7]
  %v6169 = vld [vmem:[#allocation2 + $0x28] sm:$0x7]
  %v6170 = vld [vmem:[#allocation2 + $0x30] sm:$0x7]
  %v6171 = vld [vmem:[#allocation2 + $0x38] sm:$0x7]
  %v6172 = vld [vmem:[#allocation2 + $0x40] sm:$0x7]
  %v6173 = vld [vmem:[#allocation2 + $0x48] sm:$0x7]
  %v6174 = vld [vmem:[#allocation2 + $0x50] sm:$0x7]
  %v6175 = vld [vmem:[#allocation2 + $0x58] sm:$0x7]
  %v6176 = vld [vmem:[#allocation2 + $0x60] sm:$0x7]
  %v6177 = vld [vmem:[#allocation2 + $0x68] sm:$0x7]
  %v6178 = vld [vmem:[#allocation2 + $0x70] sm:$0x7]
  %v6179 = vld [vmem:[#allocation2 + $0x78] sm:$0x7]
  %v6180 = vld [vmem:[#allocation2 + $0x80] sm:$0x7]
  %v6181 = vld [vmem:[#allocation2 + $0x88] sm:$0x7]
  %v6182 = vld [vmem:[#allocation2 + $0x90] sm:$0x7]
  %v6183 = vld [vmem:[#allocation2 + $0x98] sm:$0x7]
  %v6184 = vld [vmem:[#allocation2 + $0xa0] sm:$0x7]
  %v6185 = vld [vmem:[#allocation2 + $0xa8] sm:$0x7]
  %v6186 = vld [vmem:[#allocation2 + $0xb0] sm:$0x7]
  %v6187 = vld [vmem:[#allocation2 + $0xb8] sm:$0x7]
  %v6188 = vld [vmem:[#allocation2 + $0xc0] sm:$0x7]
  %v6189 = vld [vmem:[#allocation2 + $0xc8] sm:$0x7]
  %v6190 = vld [vmem:[#allocation2 + $0xd0] sm:$0x7]
  %v6191 = vld [vmem:[#allocation2 + $0xd8] sm:$0x7]
  %v6192 = vld [vmem:[#allocation2 + $0xe0] sm:$0x7]
  %v6193 = vld [vmem:[#allocation2 + $0xe8] sm:$0x7]
  %v6194 = vld [vmem:[#allocation2 + $0xf0] sm:$0x7]
  %v6195 = vld [vmem:[#allocation2 + $0xf8] sm:$0x7]
  %v6196 = vld [vmem:[#allocation2 + $0x100] sm:$0x7]
  %v6197 = vld [vmem:[#allocation2 + $0x108] sm:$0x7]
  %v6198 = vld [vmem:[#allocation2 + $0x110] sm:$0x7]
  %v6199 = vld [vmem:[#allocation2 + $0x118] sm:$0x7]
  %v6200 = vld [vmem:[#allocation2 + $0x120] sm:$0x7]
  %v6201 = vld [vmem:[#allocation2 + $0x128] sm:$0x7]
  %v6202 = vld [vmem:[#allocation2 + $0x130] sm:$0x7]
  %v6203 = vld [vmem:[#allocation2 + $0x138] sm:$0x7]
  %v6204 = vld [vmem:[#allocation2 + $0x140] sm:$0x7]
  %v6246 = vrot.slane %v6164, 4
  %v6247 = vrot.slane %v6165, 4
  %v6248 = vrot.slane %v6166, 4
  %v6249 = vrot.slane %v6167, 4
  %v6250 = vrot.slane %v6168, 4
  %v6251 = vrot.slane %v6169, 4
  %v6252 = vrot.slane %v6170, 4
  %v6253 = vrot.slane %v6171, 4
  %v6254 = vrot.slane %v6172, 4
  %v6255 = vrot.slane %v6173, 4
  %v6256 = vrot.slane %v6174, 4
  %v6257 = vrot.slane %v6175, 4
  %v6258 = vrot.slane %v6176, 4
  %v6259 = vrot.slane %v6177, 4
  %v6260 = vrot.slane %v6178, 4
  %v6261 = vrot.slane %v6179, 4
  %v6262 = vrot.slane %v6180, 4
  %v6263 = vrot.slane %v6181, 4
  %v6264 = vrot.slane %v6182, 4
  %v6265 = vrot.slane %v6183, 4
  %v6266 = vrot.slane %v6184, 4
  %v6267 = vrot.slane %v6185, 4
  %v6268 = vrot.slane %v6186, 4
  %v6269 = vrot.slane %v6187, 4
  %v6270 = vrot.slane %v6188, 4
  %v6271 = vrot.slane %v6189, 4
  %v6272 = vrot.slane %v6190, 4
  %v6273 = vrot.slane %v6191, 4
  %v6274 = vrot.slane %v6192, 4
  %v6275 = vrot.slane %v6193, 4
  %v6276 = vrot.slane %v6194, 4
  %v6277 = vrot.slane %v6195, 4
  %v6278 = vrot.slane %v6196, 4
  %v6279 = vrot.slane %v6197, 4
  %v6280 = vrot.slane %v6198, 4
  %v6281 = vrot.slane %v6199, 4
  %v6282 = vrot.slane %v6200, 4
  %v6283 = vrot.slane %v6201, 4
  %v6284 = vrot.slane %v6202, 4
  %v6285 = vrot.slane %v6203, 4
  %v6286 = vrot.slane %v6204, 4
  %6287 = vrot.lane.b32.xlu0 %v6246, 103
  %v6288 = vpop.permute.xlu0 %6287
  %6289 = vrot.lane.b32.xlu0 %v6247, 103
  %v6290 = vpop.permute.xlu0 %6289
  %6291 = vrot.lane.b32.xlu0 %v6248, 103
  %v6292 = vpop.permute.xlu0 %6291
  %6293 = vrot.lane.b32.xlu0 %v6249, 103
  %v6294 = vpop.permute.xlu0 %6293
  %6295 = vrot.lane.b32.xlu0 %v6250, 103
  %v6296 = vpop.permute.xlu0 %6295
  %6297 = vrot.lane.b32.xlu0 %v6251, 103
  %v6298 = vpop.permute.xlu0 %6297
  %6299 = vrot.lane.b32.xlu0 %v6252, 103
  %v6300 = vpop.permute.xlu0 %6299
  %6301 = vrot.lane.b32.xlu0 %v6253, 103
  %v6302 = vpop.permute.xlu0 %6301
  %6303 = vrot.lane.b32.xlu0 %v6254, 103
  %v6304 = vpop.permute.xlu0 %6303
  %6305 = vrot.lane.b32.xlu0 %v6255, 103
  %v6306 = vpop.permute.xlu0 %6305
  %6307 = vrot.lane.b32.xlu0 %v6256, 103
  %v6308 = vpop.permute.xlu0 %6307
  %6309 = vrot.lane.b32.xlu0 %v6257, 103
  %v6310 = vpop.permute.xlu0 %6309
  %6311 = vrot.lane.b32.xlu0 %v6258, 103
  %v6312 = vpop.permute.xlu0 %6311
  %6313 = vrot.lane.b32.xlu0 %v6259, 103
  %v6314 = vpop.permute.xlu0 %6313
  %6315 = vrot.lane.b32.xlu0 %v6260, 103
  %v6316 = vpop.permute.xlu0 %6315
  %6317 = vrot.lane.b32.xlu0 %v6261, 103
  %v6318 = vpop.permute.xlu0 %6317
  %6319 = vrot.lane.b32.xlu0 %v6262, 103
  %v6320 = vpop.permute.xlu0 %6319
  %6321 = vrot.lane.b32.xlu0 %v6263, 103
  %v6322 = vpop.permute.xlu0 %6321
  %6323 = vrot.lane.b32.xlu0 %v6264, 103
  %v6324 = vpop.permute.xlu0 %6323
  %6325 = vrot.lane.b32.xlu0 %v6265, 103
  %v6326 = vpop.permute.xlu0 %6325
  %6327 = vrot.lane.b32.xlu0 %v6266, 103
  %v6328 = vpop.permute.xlu0 %6327
  %6329 = vrot.lane.b32.xlu0 %v6267, 103
  %v6330 = vpop.permute.xlu0 %6329
  %6331 = vrot.lane.b32.xlu0 %v6268, 103
  %v6332 = vpop.permute.xlu0 %6331
  %6333 = vrot.lane.b32.xlu0 %v6269, 103
  %v6334 = vpop.permute.xlu0 %6333
  %6335 = vrot.lane.b32.xlu0 %v6270, 103
  %v6336 = vpop.permute.xlu0 %6335
  %6337 = vrot.lane.b32.xlu0 %v6271, 103
  %v6338 = vpop.permute.xlu0 %6337
  %6339 = vrot.lane.b32.xlu0 %v6272, 103
  %v6340 = vpop.permute.xlu0 %6339
  %6341 = vrot.lane.b32.xlu0 %v6273, 103
  %v6342 = vpop.permute.xlu0 %6341
  %6343 = vrot.lane.b32.xlu0 %v6274, 103
  %v6344 = vpop.permute.xlu0 %6343
  %6345 = vrot.lane.b32.xlu0 %v6275, 103
  %v6346 = vpop.permute.xlu0 %6345
  %6347 = vrot.lane.b32.xlu0 %v6276, 103
  %v6348 = vpop.permute.xlu0 %6347
  %6349 = vrot.lane.b32.xlu0 %v6277, 103
  %v6350 = vpop.permute.xlu0 %6349
  %6351 = vrot.lane.b32.xlu0 %v6278, 103
  %v6352 = vpop.permute.xlu0 %6351
  %6353 = vrot.lane.b32.xlu0 %v6279, 103
  %v6354 = vpop.permute.xlu0 %6353
  %6355 = vrot.lane.b32.xlu0 %v6280, 103
  %v6356 = vpop.permute.xlu0 %6355
  %6357 = vrot.lane.b32.xlu0 %v6281, 103
  %v6358 = vpop.permute.xlu0 %6357
  %6359 = vrot.lane.b32.xlu0 %v6282, 103
  %v6360 = vpop.permute.xlu0 %6359
  %6361 = vrot.lane.b32.xlu0 %v6283, 103
  %v6362 = vpop.permute.xlu0 %6361
  %6363 = vrot.lane.b32.xlu0 %v6284, 103
  %v6364 = vpop.permute.xlu0 %6363
  %6365 = vrot.lane.b32.xlu0 %v6285, 103
  %v6366 = vpop.permute.xlu0 %6365
  %6367 = vrot.lane.b32.xlu0 %v6286, 103
  %v6368 = vpop.permute.xlu0 %6367
  %v6369 = vsel %vm1727, %v6288, %v6290
  %v6370 = vsel %vm1727, %v6290, %v6292
  %v6371 = vsel %vm1727, %v6292, %v6294
  %v6372 = vsel %vm1727, %v6294, %v6296
  %v6373 = vsel %vm1727, %v6296, %v6298
  %v6374 = vsel %vm1727, %v6298, %v6300
  %v6375 = vsel %vm1727, %v6300, %v6302
  %v6376 = vsel %vm1727, %v6302, %v6304
  %v6377 = vsel %vm1727, %v6304, %v6306
  %v6378 = vsel %vm1727, %v6306, %v6308
  %v6379 = vsel %vm1727, %v6308, %v6310
  %v6380 = vsel %vm1727, %v6310, %v6312
  %v6381 = vsel %vm1727, %v6312, %v6314
  %v6382 = vsel %vm1727, %v6314, %v6316
  %v6383 = vsel %vm1727, %v6316, %v6318
  %v6384 = vsel %vm1727, %v6318, %v6320
  %v6385 = vsel %vm1727, %v6320, %v6322
  %v6386 = vsel %vm1727, %v6322, %v6324
  %v6387 = vsel %vm1727, %v6324, %v6326
  %v6388 = vsel %vm1727, %v6326, %v6328
  %v6389 = vsel %vm1727, %v6328, %v6330
  %v6390 = vsel %vm1727, %v6330, %v6332
  %v6391 = vsel %vm1727, %v6332, %v6334
  %v6392 = vsel %vm1727, %v6334, %v6336
  %v6393 = vsel %vm1727, %v6336, %v6338
  %v6394 = vsel %vm1727, %v6338, %v6340
  %v6395 = vsel %vm1727, %v6340, %v6342
  %v6396 = vsel %vm1727, %v6342, %v6344
  %v6397 = vsel %vm1727, %v6344, %v6346
  %v6398 = vsel %vm1727, %v6346, %v6348
  %v6399 = vsel %vm1727, %v6348, %v6350
  %v6400 = vsel %vm1727, %v6350, %v6352
  %v6401 = vsel %vm1727, %v6352, %v6354
  %v6402 = vsel %vm1727, %v6354, %v6356
  %v6403 = vsel %vm1727, %v6356, %v6358
  %v6404 = vsel %vm1727, %v6358, %v6360
  %v6405 = vsel %vm1727, %v6360, %v6362
  %v6406 = vsel %vm1727, %v6362, %v6364
  %v6407 = vsel %vm1727, %v6364, %v6366
  %v6408 = vsel %vm1727, %v6366, %v6368
  %6449 = vst [vmem:[#allocation2 + $0x148] sm:$0x70] %v6369
  %6450 = vst [vmem:[#allocation2 + $0x150] sm:$0x70] %v6370
  %6451 = vst [vmem:[#allocation2 + $0x158] sm:$0x70] %v6371
  %6452 = vst [vmem:[#allocation2 + $0x160] sm:$0x70] %v6372
  %6453 = vst [vmem:[#allocation2 + $0x168] sm:$0x70] %v6373
  %6454 = vst [vmem:[#allocation2 + $0x170] sm:$0x70] %v6374
  %6455 = vst [vmem:[#allocation2 + $0x178] sm:$0x70] %v6375
  %6456 = vst [vmem:[#allocation2 + $0x180] sm:$0x70] %v6376
  %6457 = vst [vmem:[#allocation2 + $0x188] sm:$0x70] %v6377
  %6458 = vst [vmem:[#allocation2 + $0x190] sm:$0x70] %v6378
  %6459 = vst [vmem:[#allocation2 + $0x198] sm:$0x70] %v6379
  %6460 = vst [vmem:[#allocation2 + $0x1a0] sm:$0x70] %v6380
  %6461 = vst [vmem:[#allocation2 + $0x1a8] sm:$0x70] %v6381
  %6462 = vst [vmem:[#allocation2 + $0x1b0] sm:$0x70] %v6382
  %6463 = vst [vmem:[#allocation2 + $0x1b8] sm:$0x70] %v6383
  %6464 = vst [vmem:[#allocation2 + $0x1c0] sm:$0x70] %v6384
  %6465 = vst [vmem:[#allocation2 + $0x1c8] sm:$0x70] %v6385
  %6466 = vst [vmem:[#allocation2 + $0x1d0] sm:$0x70] %v6386
  %6467 = vst [vmem:[#allocation2 + $0x1d8] sm:$0x70] %v6387
  %6468 = vst [vmem:[#allocation2 + $0x1e0] sm:$0x70] %v6388
  %6469 = vst [vmem:[#allocation2 + $0x1e8] sm:$0x70] %v6389
  %6470 = vst [vmem:[#allocation2 + $0x1f0] sm:$0x70] %v6390
  %6471 = vst [vmem:[#allocation2 + $0x1f8] sm:$0x70] %v6391
  %6472 = vst [vmem:[#allocation2 + $0x200] sm:$0x70] %v6392
  %6473 = vst [vmem:[#allocation2 + $0x208] sm:$0x70] %v6393
  %6474 = vst [vmem:[#allocation2 + $0x210] sm:$0x70] %v6394
  %6475 = vst [vmem:[#allocation2 + $0x218] sm:$0x70] %v6395
  %6476 = vst [vmem:[#allocation2 + $0x220] sm:$0x70] %v6396
  %6477 = vst [vmem:[#allocation2 + $0x228] sm:$0x70] %v6397
  %6478 = vst [vmem:[#allocation2 + $0x230] sm:$0x70] %v6398
  %6479 = vst [vmem:[#allocation2 + $0x238] sm:$0x70] %v6399
  %6480 = vst [vmem:[#allocation2 + $0x240] sm:$0x70] %v6400
  %6481 = vst [vmem:[#allocation2 + $0x248] sm:$0x70] %v6401
  %6482 = vst [vmem:[#allocation2 + $0x250] sm:$0x70] %v6402
  %6483 = vst [vmem:[#allocation2 + $0x258] sm:$0x70] %v6403
  %6484 = vst [vmem:[#allocation2 + $0x260] sm:$0x70] %v6404
  %6485 = vst [vmem:[#allocation2 + $0x268] sm:$0x70] %v6405
  %6486 = vst [vmem:[#allocation2 + $0x270] sm:$0x70] %v6406
  %6487 = vst [vmem:[#allocation2 + $0x278] sm:$0x70] %v6407
  %6488 = vst [vmem:[#allocation2 + $0x280] sm:$0x70] %v6408
  %v6489 = vld [vmem:[#allocation2] sm:$0x7]
  %v6490 = vld [vmem:[#allocation2 + $0x8] sm:$0x7]
  %v6491 = vld [vmem:[#allocation2 + $0x10] sm:$0x7]
  %v6492 = vld [vmem:[#allocation2 + $0x18] sm:$0x7]
  %v6493 = vld [vmem:[#allocation2 + $0x20] sm:$0x7]
  %v6494 = vld [vmem:[#allocation2 + $0x28] sm:$0x7]
  %v6495 = vld [vmem:[#allocation2 + $0x30] sm:$0x7]
  %v6496 = vld [vmem:[#allocation2 + $0x38] sm:$0x7]
  %v6497 = vld [vmem:[#allocation2 + $0x40] sm:$0x7]
  %v6498 = vld [vmem:[#allocation2 + $0x48] sm:$0x7]
  %v6499 = vld [vmem:[#allocation2 + $0x50] sm:$0x7]
  %v6500 = vld [vmem:[#allocation2 + $0x58] sm:$0x7]
  %v6501 = vld [vmem:[#allocation2 + $0x60] sm:$0x7]
  %v6502 = vld [vmem:[#allocation2 + $0x68] sm:$0x7]
  %v6503 = vld [vmem:[#allocation2 + $0x70] sm:$0x7]
  %v6504 = vld [vmem:[#allocation2 + $0x78] sm:$0x7]
  %v6505 = vld [vmem:[#allocation2 + $0x80] sm:$0x7]
  %v6506 = vld [vmem:[#allocation2 + $0x88] sm:$0x7]
  %v6507 = vld [vmem:[#allocation2 + $0x90] sm:$0x7]
  %v6508 = vld [vmem:[#allocation2 + $0x98] sm:$0x7]
  %v6509 = vld [vmem:[#allocation2 + $0xa0] sm:$0x7]
  %v6510 = vld [vmem:[#allocation2 + $0xa8] sm:$0x7]
  %v6511 = vld [vmem:[#allocation2 + $0xb0] sm:$0x7]
  %v6512 = vld [vmem:[#allocation2 + $0xb8] sm:$0x7]
  %v6513 = vld [vmem:[#allocation2 + $0xc0] sm:$0x7]
  %v6514 = vld [vmem:[#allocation2 + $0xc8] sm:$0x7]
  %v6515 = vld [vmem:[#allocation2 + $0xd0] sm:$0x7]
  %v6516 = vld [vmem:[#allocation2 + $0xd8] sm:$0x7]
  %v6517 = vld [vmem:[#allocation2 + $0xe0] sm:$0x7]
  %v6518 = vld [vmem:[#allocation2 + $0xe8] sm:$0x7]
  %v6519 = vld [vmem:[#allocation2 + $0xf0] sm:$0x7]
  %v6520 = vld [vmem:[#allocation2 + $0xf8] sm:$0x7]
  %v6521 = vld [vmem:[#allocation2 + $0x100] sm:$0x7]
  %v6522 = vld [vmem:[#allocation2 + $0x108] sm:$0x7]
  %v6523 = vld [vmem:[#allocation2 + $0x110] sm:$0x7]
  %v6524 = vld [vmem:[#allocation2 + $0x118] sm:$0x7]
  %v6525 = vld [vmem:[#allocation2 + $0x120] sm:$0x7]
  %v6526 = vld [vmem:[#allocation2 + $0x128] sm:$0x7]
  %v6527 = vld [vmem:[#allocation2 + $0x130] sm:$0x7]
  %v6528 = vld [vmem:[#allocation2 + $0x138] sm:$0x7]
  %v6529 = vld [vmem:[#allocation2 + $0x140] sm:$0x7]
  %v6571 = vrot.slane %v6489, 1
  %v6572 = vrot.slane %v6490, 1
  %v6573 = vrot.slane %v6491, 1
  %v6574 = vrot.slane %v6492, 1
  %v6575 = vrot.slane %v6493, 1
  %v6576 = vrot.slane %v6494, 1
  %v6577 = vrot.slane %v6495, 1
  %v6578 = vrot.slane %v6496, 1
  %v6579 = vrot.slane %v6497, 1
  %v6580 = vrot.slane %v6498, 1
  %v6581 = vrot.slane %v6499, 1
  %v6582 = vrot.slane %v6500, 1
  %v6583 = vrot.slane %v6501, 1
  %v6584 = vrot.slane %v6502, 1
  %v6585 = vrot.slane %v6503, 1
  %v6586 = vrot.slane %v6504, 1
  %v6587 = vrot.slane %v6505, 1
  %v6588 = vrot.slane %v6506, 1
  %v6589 = vrot.slane %v6507, 1
  %v6590 = vrot.slane %v6508, 1
  %v6591 = vrot.slane %v6509, 1
  %v6592 = vrot.slane %v6510, 1
  %v6593 = vrot.slane %v6511, 1
  %v6594 = vrot.slane %v6512, 1
  %v6595 = vrot.slane %v6513, 1
  %v6596 = vrot.slane %v6514, 1
  %v6597 = vrot.slane %v6515, 1
  %v6598 = vrot.slane %v6516, 1
  %v6599 = vrot.slane %v6517, 1
  %v6600 = vrot.slane %v6518, 1
  %v6601 = vrot.slane %v6519, 1
  %v6602 = vrot.slane %v6520, 1
  %v6603 = vrot.slane %v6521, 1
  %v6604 = vrot.slane %v6522, 1
  %v6605 = vrot.slane %v6523, 1
  %v6606 = vrot.slane %v6524, 1
  %v6607 = vrot.slane %v6525, 1
  %v6608 = vrot.slane %v6526, 1
  %v6609 = vrot.slane %v6527, 1
  %v6610 = vrot.slane %v6528, 1
  %v6611 = vrot.slane %v6529, 1
  %6612 = vrot.lane.b32.xlu0 %v6571, 102
  %v6613 = vpop.permute.xlu0 %6612
  %6614 = vrot.lane.b32.xlu0 %v6572, 102
  %v6615 = vpop.permute.xlu0 %6614
  %6616 = vrot.lane.b32.xlu0 %v6573, 102
  %v6617 = vpop.permute.xlu0 %6616
  %6618 = vrot.lane.b32.xlu0 %v6574, 102
  %v6619 = vpop.permute.xlu0 %6618
  %6620 = vrot.lane.b32.xlu0 %v6575, 102
  %v6621 = vpop.permute.xlu0 %6620
  %6622 = vrot.lane.b32.xlu0 %v6576, 102
  %v6623 = vpop.permute.xlu0 %6622
  %6624 = vrot.lane.b32.xlu0 %v6577, 102
  %v6625 = vpop.permute.xlu0 %6624
  %6626 = vrot.lane.b32.xlu0 %v6578, 102
  %v6627 = vpop.permute.xlu0 %6626
  %6628 = vrot.lane.b32.xlu0 %v6579, 102
  %v6629 = vpop.permute.xlu0 %6628
  %6630 = vrot.lane.b32.xlu0 %v6580, 102
  %v6631 = vpop.permute.xlu0 %6630
  %6632 = vrot.lane.b32.xlu0 %v6581, 102
  %v6633 = vpop.permute.xlu0 %6632
  %6634 = vrot.lane.b32.xlu0 %v6582, 102
  %v6635 = vpop.permute.xlu0 %6634
  %6636 = vrot.lane.b32.xlu0 %v6583, 102
  %v6637 = vpop.permute.xlu0 %6636
  %6638 = vrot.lane.b32.xlu0 %v6584, 102
  %v6639 = vpop.permute.xlu0 %6638
  %6640 = vrot.lane.b32.xlu0 %v6585, 102
  %v6641 = vpop.permute.xlu0 %6640
  %6642 = vrot.lane.b32.xlu0 %v6586, 102
  %v6643 = vpop.permute.xlu0 %6642
  %6644 = vrot.lane.b32.xlu0 %v6587, 102
  %v6645 = vpop.permute.xlu0 %6644
  %6646 = vrot.lane.b32.xlu0 %v6588, 102
  %v6647 = vpop.permute.xlu0 %6646
  %6648 = vrot.lane.b32.xlu0 %v6589, 102
  %v6649 = vpop.permute.xlu0 %6648
  %6650 = vrot.lane.b32.xlu0 %v6590, 102
  %v6651 = vpop.permute.xlu0 %6650
  %6652 = vrot.lane.b32.xlu0 %v6591, 102
  %v6653 = vpop.permute.xlu0 %6652
  %6654 = vrot.lane.b32.xlu0 %v6592, 102
  %v6655 = vpop.permute.xlu0 %6654
  %6656 = vrot.lane.b32.xlu0 %v6593, 102
  %v6657 = vpop.permute.xlu0 %6656
  %6658 = vrot.lane.b32.xlu0 %v6594, 102
  %v6659 = vpop.permute.xlu0 %6658
  %6660 = vrot.lane.b32.xlu0 %v6595, 102
  %v6661 = vpop.permute.xlu0 %6660
  %6662 = vrot.lane.b32.xlu0 %v6596, 102
  %v6663 = vpop.permute.xlu0 %6662
  %6664 = vrot.lane.b32.xlu0 %v6597, 102
  %v6665 = vpop.permute.xlu0 %6664
  %6666 = vrot.lane.b32.xlu0 %v6598, 102
  %v6667 = vpop.permute.xlu0 %6666
  %6668 = vrot.lane.b32.xlu0 %v6599, 102
  %v6669 = vpop.permute.xlu0 %6668
  %6670 = vrot.lane.b32.xlu0 %v6600, 102
  %v6671 = vpop.permute.xlu0 %6670
  %6672 = vrot.lane.b32.xlu0 %v6601, 102
  %v6673 = vpop.permute.xlu0 %6672
  %6674 = vrot.lane.b32.xlu0 %v6602, 102
  %v6675 = vpop.permute.xlu0 %6674
  %6676 = vrot.lane.b32.xlu0 %v6603, 102
  %v6677 = vpop.permute.xlu0 %6676
  %6678 = vrot.lane.b32.xlu0 %v6604, 102
  %v6679 = vpop.permute.xlu0 %6678
  %6680 = vrot.lane.b32.xlu0 %v6605, 102
  %v6681 = vpop.permute.xlu0 %6680
  %6682 = vrot.lane.b32.xlu0 %v6606, 102
  %v6683 = vpop.permute.xlu0 %6682
  %6684 = vrot.lane.b32.xlu0 %v6607, 102
  %v6685 = vpop.permute.xlu0 %6684
  %6686 = vrot.lane.b32.xlu0 %v6608, 102
  %v6687 = vpop.permute.xlu0 %6686
  %6688 = vrot.lane.b32.xlu0 %v6609, 102
  %v6689 = vpop.permute.xlu0 %6688
  %6690 = vrot.lane.b32.xlu0 %v6610, 102
  %v6691 = vpop.permute.xlu0 %6690
  %6692 = vrot.lane.b32.xlu0 %v6611, 102
  %v6693 = vpop.permute.xlu0 %6692
  %v6694 = vsel %vm2053, %v6613, %v6615
  %v6695 = vsel %vm2053, %v6615, %v6617
  %v6696 = vsel %vm2053, %v6617, %v6619
  %v6697 = vsel %vm2053, %v6619, %v6621
  %v6698 = vsel %vm2053, %v6621, %v6623
  %v6699 = vsel %vm2053, %v6623, %v6625
  %v6700 = vsel %vm2053, %v6625, %v6627
  %v6701 = vsel %vm2053, %v6627, %v6629
  %v6702 = vsel %vm2053, %v6629, %v6631
  %v6703 = vsel %vm2053, %v6631, %v6633
  %v6704 = vsel %vm2053, %v6633, %v6635
  %v6705 = vsel %vm2053, %v6635, %v6637
  %v6706 = vsel %vm2053, %v6637, %v6639
  %v6707 = vsel %vm2053, %v6639, %v6641
  %v6708 = vsel %vm2053, %v6641, %v6643
  %v6709 = vsel %vm2053, %v6643, %v6645
  %v6710 = vsel %vm2053, %v6645, %v6647
  %v6711 = vsel %vm2053, %v6647, %v6649
  %v6712 = vsel %vm2053, %v6649, %v6651
  %v6713 = vsel %vm2053, %v6651, %v6653
  %v6714 = vsel %vm2053, %v6653, %v6655
  %v6715 = vsel %vm2053, %v6655, %v6657
  %v6716 = vsel %vm2053, %v6657, %v6659
  %v6717 = vsel %vm2053, %v6659, %v6661
  %v6718 = vsel %vm2053, %v6661, %v6663
  %v6719 = vsel %vm2053, %v6663, %v6665
  %v6720 = vsel %vm2053, %v6665, %v6667
  %v6721 = vsel %vm2053, %v6667, %v6669
  %v6722 = vsel %vm2053, %v6669, %v6671
  %v6723 = vsel %vm2053, %v6671, %v6673
  %v6724 = vsel %vm2053, %v6673, %v6675
  %v6725 = vsel %vm2053, %v6675, %v6677
  %v6726 = vsel %vm2053, %v6677, %v6679
  %v6727 = vsel %vm2053, %v6679, %v6681
  %v6728 = vsel %vm2053, %v6681, %v6683
  %v6729 = vsel %vm2053, %v6683, %v6685
  %v6730 = vsel %vm2053, %v6685, %v6687
  %v6731 = vsel %vm2053, %v6687, %v6689
  %v6732 = vsel %vm2053, %v6689, %v6691
  %v6733 = vsel %vm2053, %v6691, %v6693
  %6774 = vst [vmem:[#allocation2 + $0x148] sm:$0x80] %v6694
  %6775 = vst [vmem:[#allocation2 + $0x150] sm:$0x80] %v6695
  %6776 = vst [vmem:[#allocation2 + $0x158] sm:$0x80] %v6696
  %6777 = vst [vmem:[#allocation2 + $0x160] sm:$0x80] %v6697
  %6778 = vst [vmem:[#allocation2 + $0x168] sm:$0x80] %v6698
  %6779 = vst [vmem:[#allocation2 + $0x170] sm:$0x80] %v6699
  %6780 = vst [vmem:[#allocation2 + $0x178] sm:$0x80] %v6700
  %6781 = vst [vmem:[#allocation2 + $0x180] sm:$0x80] %v6701
  %6782 = vst [vmem:[#allocation2 + $0x188] sm:$0x80] %v6702
  %6783 = vst [vmem:[#allocation2 + $0x190] sm:$0x80] %v6703
  %6784 = vst [vmem:[#allocation2 + $0x198] sm:$0x80] %v6704
  %6785 = vst [vmem:[#allocation2 + $0x1a0] sm:$0x80] %v6705
  %6786 = vst [vmem:[#allocation2 + $0x1a8] sm:$0x80] %v6706
  %6787 = vst [vmem:[#allocation2 + $0x1b0] sm:$0x80] %v6707
  %6788 = vst [vmem:[#allocation2 + $0x1b8] sm:$0x80] %v6708
  %6789 = vst [vmem:[#allocation2 + $0x1c0] sm:$0x80] %v6709
  %6790 = vst [vmem:[#allocation2 + $0x1c8] sm:$0x80] %v6710
  %6791 = vst [vmem:[#allocation2 + $0x1d0] sm:$0x80] %v6711
  %6792 = vst [vmem:[#allocation2 + $0x1d8] sm:$0x80] %v6712
  %6793 = vst [vmem:[#allocation2 + $0x1e0] sm:$0x80] %v6713
  %6794 = vst [vmem:[#allocation2 + $0x1e8] sm:$0x80] %v6714
  %6795 = vst [vmem:[#allocation2 + $0x1f0] sm:$0x80] %v6715
  %6796 = vst [vmem:[#allocation2 + $0x1f8] sm:$0x80] %v6716
  %6797 = vst [vmem:[#allocation2 + $0x200] sm:$0x80] %v6717
  %6798 = vst [vmem:[#allocation2 + $0x208] sm:$0x80] %v6718
  %6799 = vst [vmem:[#allocation2 + $0x210] sm:$0x80] %v6719
  %6800 = vst [vmem:[#allocation2 + $0x218] sm:$0x80] %v6720
  %6801 = vst [vmem:[#allocation2 + $0x220] sm:$0x80] %v6721
  %6802 = vst [vmem:[#allocation2 + $0x228] sm:$0x80] %v6722
  %6803 = vst [vmem:[#allocation2 + $0x230] sm:$0x80] %v6723
  %6804 = vst [vmem:[#allocation2 + $0x238] sm:$0x80] %v6724
  %6805 = vst [vmem:[#allocation2 + $0x240] sm:$0x80] %v6725
  %6806 = vst [vmem:[#allocation2 + $0x248] sm:$0x80] %v6726
  %6807 = vst [vmem:[#allocation2 + $0x250] sm:$0x80] %v6727
  %6808 = vst [vmem:[#allocation2 + $0x258] sm:$0x80] %v6728
  %6809 = vst [vmem:[#allocation2 + $0x260] sm:$0x80] %v6729
  %6810 = vst [vmem:[#allocation2 + $0x268] sm:$0x80] %v6730
  %6811 = vst [vmem:[#allocation2 + $0x270] sm:$0x80] %v6731
  %6812 = vst [vmem:[#allocation2 + $0x278] sm:$0x80] %v6732
  %6813 = vst [vmem:[#allocation2 + $0x280] sm:$0x80] %v6733
  %6814 = vst [vmem:[#allocation2 + $0x290] sm:$0x3] %v6694
  %6815 = vst [vmem:[#allocation2 + $0x298] sm:$0x3] %v6695
  %6816 = vst [vmem:[#allocation2 + $0x2a0] sm:$0x3] %v6696
  %6817 = vst [vmem:[#allocation2 + $0x2a8] sm:$0x3] %v6697
  %6818 = vst [vmem:[#allocation2 + $0x2b0] sm:$0x3] %v6698
  %6819 = vst [vmem:[#allocation2 + $0x2b8] sm:$0x3] %v6699
  %6820 = vst [vmem:[#allocation2 + $0x2c0] sm:$0x3] %v6700
  %6821 = vst [vmem:[#allocation2 + $0x2c8] sm:$0x3] %v6701
  %6822 = vst [vmem:[#allocation2 + $0x2d0] sm:$0x3] %v6702
  %6823 = vst [vmem:[#allocation2 + $0x2d8] sm:$0x3] %v6703
  %6824 = vst [vmem:[#allocation2 + $0x2e0] sm:$0x3] %v6704
  %6825 = vst [vmem:[#allocation2 + $0x2e8] sm:$0x3] %v6705
  %6826 = vst [vmem:[#allocation2 + $0x2f0] sm:$0x3] %v6706
  %6827 = vst [vmem:[#allocation2 + $0x2f8] sm:$0x3] %v6707
  %6828 = vst [vmem:[#allocation2 + $0x300] sm:$0x3] %v6708
  %6829 = vst [vmem:[#allocation2 + $0x308] sm:$0x3] %v6709
  %6830 = vst [vmem:[#allocation2 + $0x310] sm:$0x3] %v6710
  %6831 = vst [vmem:[#allocation2 + $0x318] sm:$0x3] %v6711
  %6832 = vst [vmem:[#allocation2 + $0x320] sm:$0x3] %v6712
  %6833 = vst [vmem:[#allocation2 + $0x328] sm:$0x3] %v6713
  %6834 = vst [vmem:[#allocation2 + $0x330] sm:$0x3] %v6714
  %6835 = vst [vmem:[#allocation2 + $0x338] sm:$0x3] %v6715
  %6836 = vst [vmem:[#allocation2 + $0x340] sm:$0x3] %v6716
  %6837 = vst [vmem:[#allocation2 + $0x348] sm:$0x3] %v6717
  %6838 = vst [vmem:[#allocation2 + $0x350] sm:$0x3] %v6718
  %6839 = vst [vmem:[#allocation2 + $0x358] sm:$0x3] %v6719
  %6840 = vst [vmem:[#allocation2 + $0x360] sm:$0x3] %v6720
  %6841 = vst [vmem:[#allocation2 + $0x368] sm:$0x3] %v6721
  %6842 = vst [vmem:[#allocation2 + $0x370] sm:$0x3] %v6722
  %6843 = vst [vmem:[#allocation2 + $0x378] sm:$0x3] %v6723
  %6844 = vst [vmem:[#allocation2 + $0x380] sm:$0x3] %v6724
  %6845 = vst [vmem:[#allocation2 + $0x388] sm:$0x3] %v6725
  %6846 = vst [vmem:[#allocation2 + $0x390] sm:$0x3] %v6726
  %6847 = vst [vmem:[#allocation2 + $0x398] sm:$0x3] %v6727
  %6848 = vst [vmem:[#allocation2 + $0x3a0] sm:$0x3] %v6728
  %6849 = vst [vmem:[#allocation2 + $0x3a8] sm:$0x3] %v6729
  %6850 = vst [vmem:[#allocation2 + $0x3b0] sm:$0x3] %v6730
  %6851 = vst [vmem:[#allocation2 + $0x3b8] sm:$0x3] %v6731
  %6852 = vst [vmem:[#allocation2 + $0x3c0] sm:$0x3] %v6732
  %6853 = vst [vmem:[#allocation2 + $0x3c8] sm:$0x3] %v6733
  %v6854 = vld [vmem:[#allocation2] sm:$0x7]
  %v6855 = vld [vmem:[#allocation2 + $0x8] sm:$0x7]
  %v6856 = vld [vmem:[#allocation2 + $0x10] sm:$0x7]
  %v6857 = vld [vmem:[#allocation2 + $0x18] sm:$0x7]
  %v6858 = vld [vmem:[#allocation2 + $0x20] sm:$0x7]
  %v6859 = vld [vmem:[#allocation2 + $0x28] sm:$0x7]
  %v6860 = vld [vmem:[#allocation2 + $0x30] sm:$0x7]
  %v6861 = vld [vmem:[#allocation2 + $0x38] sm:$0x7]
  %v6862 = vld [vmem:[#allocation2 + $0x40] sm:$0x7]
  %v6863 = vld [vmem:[#allocation2 + $0x48] sm:$0x7]
  %v6864 = vld [vmem:[#allocation2 + $0x50] sm:$0x7]
  %v6865 = vld [vmem:[#allocation2 + $0x58] sm:$0x7]
  %v6866 = vld [vmem:[#allocation2 + $0x60] sm:$0x7]
  %v6867 = vld [vmem:[#allocation2 + $0x68] sm:$0x7]
  %v6868 = vld [vmem:[#allocation2 + $0x70] sm:$0x7]
  %v6869 = vld [vmem:[#allocation2 + $0x78] sm:$0x7]
  %v6870 = vld [vmem:[#allocation2 + $0x80] sm:$0x7]
  %v6871 = vld [vmem:[#allocation2 + $0x88] sm:$0x7]
  %v6872 = vld [vmem:[#allocation2 + $0x90] sm:$0x7]
  %v6873 = vld [vmem:[#allocation2 + $0x98] sm:$0x7]
  %v6874 = vld [vmem:[#allocation2 + $0xa0] sm:$0x7]
  %v6875 = vld [vmem:[#allocation2 + $0xa8] sm:$0x7]
  %v6876 = vld [vmem:[#allocation2 + $0xb0] sm:$0x7]
  %v6877 = vld [vmem:[#allocation2 + $0xb8] sm:$0x7]
  %v6878 = vld [vmem:[#allocation2 + $0xc0] sm:$0x7]
  %v6879 = vld [vmem:[#allocation2 + $0xc8] sm:$0x7]
  %v6880 = vld [vmem:[#allocation2 + $0xd0] sm:$0x7]
  %v6881 = vld [vmem:[#allocation2 + $0xd8] sm:$0x7]
  %v6882 = vld [vmem:[#allocation2 + $0xe0] sm:$0x7]
  %v6883 = vld [vmem:[#allocation2 + $0xe8] sm:$0x7]
  %v6884 = vld [vmem:[#allocation2 + $0xf0] sm:$0x7]
  %v6885 = vld [vmem:[#allocation2 + $0xf8] sm:$0x7]
  %v6886 = vld [vmem:[#allocation2 + $0x100] sm:$0x7]
  %v6887 = vld [vmem:[#allocation2 + $0x108] sm:$0x7]
  %v6888 = vld [vmem:[#allocation2 + $0x110] sm:$0x7]
  %v6889 = vld [vmem:[#allocation2 + $0x118] sm:$0x7]
  %v6890 = vld [vmem:[#allocation2 + $0x120] sm:$0x7]
  %v6891 = vld [vmem:[#allocation2 + $0x128] sm:$0x7]
  %v6892 = vld [vmem:[#allocation2 + $0x130] sm:$0x7]
  %v6893 = vld [vmem:[#allocation2 + $0x138] sm:$0x7]
  %v6894 = vld [vmem:[#allocation2 + $0x140] sm:$0x7]
  %v6936 = vrot.slane %v6854, 6
  %v6937 = vrot.slane %v6855, 6
  %v6938 = vrot.slane %v6856, 6
  %v6939 = vrot.slane %v6857, 6
  %v6940 = vrot.slane %v6858, 6
  %v6941 = vrot.slane %v6859, 6
  %v6942 = vrot.slane %v6860, 6
  %v6943 = vrot.slane %v6861, 6
  %v6944 = vrot.slane %v6862, 6
  %v6945 = vrot.slane %v6863, 6
  %v6946 = vrot.slane %v6864, 6
  %v6947 = vrot.slane %v6865, 6
  %v6948 = vrot.slane %v6866, 6
  %v6949 = vrot.slane %v6867, 6
  %v6950 = vrot.slane %v6868, 6
  %v6951 = vrot.slane %v6869, 6
  %v6952 = vrot.slane %v6870, 6
  %v6953 = vrot.slane %v6871, 6
  %v6954 = vrot.slane %v6872, 6
  %v6955 = vrot.slane %v6873, 6
  %v6956 = vrot.slane %v6874, 6
  %v6957 = vrot.slane %v6875, 6
  %v6958 = vrot.slane %v6876, 6
  %v6959 = vrot.slane %v6877, 6
  %v6960 = vrot.slane %v6878, 6
  %v6961 = vrot.slane %v6879, 6
  %v6962 = vrot.slane %v6880, 6
  %v6963 = vrot.slane %v6881, 6
  %v6964 = vrot.slane %v6882, 6
  %v6965 = vrot.slane %v6883, 6
  %v6966 = vrot.slane %v6884, 6
  %v6967 = vrot.slane %v6885, 6
  %v6968 = vrot.slane %v6886, 6
  %v6969 = vrot.slane %v6887, 6
  %v6970 = vrot.slane %v6888, 6
  %v6971 = vrot.slane %v6889, 6
  %v6972 = vrot.slane %v6890, 6
  %v6973 = vrot.slane %v6891, 6
  %v6974 = vrot.slane %v6892, 6
  %v6975 = vrot.slane %v6893, 6
  %v6976 = vrot.slane %v6894, 6
  %6977 = vrot.lane.b32.xlu0 %v6936, 80
  %v6978 = vpop.permute.xlu0 %6977
  %6979 = vrot.lane.b32.xlu0 %v6937, 80
  %v6980 = vpop.permute.xlu0 %6979
  %6981 = vrot.lane.b32.xlu0 %v6938, 80
  %v6982 = vpop.permute.xlu0 %6981
  %6983 = vrot.lane.b32.xlu0 %v6939, 80
  %v6984 = vpop.permute.xlu0 %6983
  %6985 = vrot.lane.b32.xlu0 %v6940, 80
  %v6986 = vpop.permute.xlu0 %6985
  %6987 = vrot.lane.b32.xlu0 %v6941, 80
  %v6988 = vpop.permute.xlu0 %6987
  %6989 = vrot.lane.b32.xlu0 %v6942, 80
  %v6990 = vpop.permute.xlu0 %6989
  %6991 = vrot.lane.b32.xlu0 %v6943, 80
  %v6992 = vpop.permute.xlu0 %6991
  %6993 = vrot.lane.b32.xlu0 %v6944, 80
  %v6994 = vpop.permute.xlu0 %6993
  %6995 = vrot.lane.b32.xlu0 %v6945, 80
  %v6996 = vpop.permute.xlu0 %6995
  %6997 = vrot.lane.b32.xlu0 %v6946, 80
  %v6998 = vpop.permute.xlu0 %6997
  %6999 = vrot.lane.b32.xlu0 %v6947, 80
  %v7000 = vpop.permute.xlu0 %6999
  %7001 = vrot.lane.b32.xlu0 %v6948, 80
  %v7002 = vpop.permute.xlu0 %7001
  %7003 = vrot.lane.b32.xlu0 %v6949, 80
  %v7004 = vpop.permute.xlu0 %7003
  %7005 = vrot.lane.b32.xlu0 %v6950, 80
  %v7006 = vpop.permute.xlu0 %7005
  %7007 = vrot.lane.b32.xlu0 %v6951, 80
  %v7008 = vpop.permute.xlu0 %7007
  %7009 = vrot.lane.b32.xlu0 %v6952, 80
  %v7010 = vpop.permute.xlu0 %7009
  %7011 = vrot.lane.b32.xlu0 %v6953, 80
  %v7012 = vpop.permute.xlu0 %7011
  %7013 = vrot.lane.b32.xlu0 %v6954, 80
  %v7014 = vpop.permute.xlu0 %7013
  %7015 = vrot.lane.b32.xlu0 %v6955, 80
  %v7016 = vpop.permute.xlu0 %7015
  %7017 = vrot.lane.b32.xlu0 %v6956, 80
  %v7018 = vpop.permute.xlu0 %7017
  %7019 = vrot.lane.b32.xlu0 %v6957, 80
  %v7020 = vpop.permute.xlu0 %7019
  %7021 = vrot.lane.b32.xlu0 %v6958, 80
  %v7022 = vpop.permute.xlu0 %7021
  %7023 = vrot.lane.b32.xlu0 %v6959, 80
  %v7024 = vpop.permute.xlu0 %7023
  %7025 = vrot.lane.b32.xlu0 %v6960, 80
  %v7026 = vpop.permute.xlu0 %7025
  %7027 = vrot.lane.b32.xlu0 %v6961, 80
  %v7028 = vpop.permute.xlu0 %7027
  %7029 = vrot.lane.b32.xlu0 %v6962, 80
  %v7030 = vpop.permute.xlu0 %7029
  %7031 = vrot.lane.b32.xlu0 %v6963, 80
  %v7032 = vpop.permute.xlu0 %7031
  %7033 = vrot.lane.b32.xlu0 %v6964, 80
  %v7034 = vpop.permute.xlu0 %7033
  %7035 = vrot.lane.b32.xlu0 %v6965, 80
  %v7036 = vpop.permute.xlu0 %7035
  %7037 = vrot.lane.b32.xlu0 %v6966, 80
  %v7038 = vpop.permute.xlu0 %7037
  %7039 = vrot.lane.b32.xlu0 %v6967, 80
  %v7040 = vpop.permute.xlu0 %7039
  %7041 = vrot.lane.b32.xlu0 %v6968, 80
  %v7042 = vpop.permute.xlu0 %7041
  %7043 = vrot.lane.b32.xlu0 %v6969, 80
  %v7044 = vpop.permute.xlu0 %7043
  %7045 = vrot.lane.b32.xlu0 %v6970, 80
  %v7046 = vpop.permute.xlu0 %7045
  %7047 = vrot.lane.b32.xlu0 %v6971, 80
  %v7048 = vpop.permute.xlu0 %7047
  %7049 = vrot.lane.b32.xlu0 %v6972, 80
  %v7050 = vpop.permute.xlu0 %7049
  %7051 = vrot.lane.b32.xlu0 %v6973, 80
  %v7052 = vpop.permute.xlu0 %7051
  %7053 = vrot.lane.b32.xlu0 %v6974, 80
  %v7054 = vpop.permute.xlu0 %7053
  %7055 = vrot.lane.b32.xlu0 %v6975, 80
  %v7056 = vpop.permute.xlu0 %7055
  %7057 = vrot.lane.b32.xlu0 %v6976, 80
  %v7058 = vpop.permute.xlu0 %7057
  %v7059 = vsel %vm2419, %v6978, %v6980
  %v7060 = vsel %vm2419, %v6980, %v6982
  %v7061 = vsel %vm2419, %v6982, %v6984
  %v7062 = vsel %vm2419, %v6984, %v6986
  %v7063 = vsel %vm2419, %v6986, %v6988
  %v7064 = vsel %vm2419, %v6988, %v6990
  %v7065 = vsel %vm2419, %v6990, %v6992
  %v7066 = vsel %vm2419, %v6992, %v6994
  %v7067 = vsel %vm2419, %v6994, %v6996
  %v7068 = vsel %vm2419, %v6996, %v6998
  %v7069 = vsel %vm2419, %v6998, %v7000
  %v7070 = vsel %vm2419, %v7000, %v7002
  %v7071 = vsel %vm2419, %v7002, %v7004
  %v7072 = vsel %vm2419, %v7004, %v7006
  %v7073 = vsel %vm2419, %v7006, %v7008
  %v7074 = vsel %vm2419, %v7008, %v7010
  %v7075 = vsel %vm2419, %v7010, %v7012
  %v7076 = vsel %vm2419, %v7012, %v7014
  %v7077 = vsel %vm2419, %v7014, %v7016
  %v7078 = vsel %vm2419, %v7016, %v7018
  %v7079 = vsel %vm2419, %v7018, %v7020
  %v7080 = vsel %vm2419, %v7020, %v7022
  %v7081 = vsel %vm2419, %v7022, %v7024
  %v7082 = vsel %vm2419, %v7024, %v7026
  %v7083 = vsel %vm2419, %v7026, %v7028
  %v7084 = vsel %vm2419, %v7028, %v7030
  %v7085 = vsel %vm2419, %v7030, %v7032
  %v7086 = vsel %vm2419, %v7032, %v7034
  %v7087 = vsel %vm2419, %v7034, %v7036
  %v7088 = vsel %vm2419, %v7036, %v7038
  %v7089 = vsel %vm2419, %v7038, %v7040
  %v7090 = vsel %vm2419, %v7040, %v7042
  %v7091 = vsel %vm2419, %v7042, %v7044
  %v7092 = vsel %vm2419, %v7044, %v7046
  %v7093 = vsel %vm2419, %v7046, %v7048
  %v7094 = vsel %vm2419, %v7048, %v7050
  %v7095 = vsel %vm2419, %v7050, %v7052
  %v7096 = vsel %vm2419, %v7052, %v7054
  %v7097 = vsel %vm2419, %v7054, %v7056
  %v7098 = vsel %vm2419, %v7056, %v7058
  %7139 = vst [vmem:[#allocation2 + $0x290] sm:$0x1c] %v7059
  %7140 = vst [vmem:[#allocation2 + $0x298] sm:$0x1c] %v7060
  %7141 = vst [vmem:[#allocation2 + $0x2a0] sm:$0x1c] %v7061
  %7142 = vst [vmem:[#allocation2 + $0x2a8] sm:$0x1c] %v7062
  %7143 = vst [vmem:[#allocation2 + $0x2b0] sm:$0x1c] %v7063
  %7144 = vst [vmem:[#allocation2 + $0x2b8] sm:$0x1c] %v7064
  %7145 = vst [vmem:[#allocation2 + $0x2c0] sm:$0x1c] %v7065
  %7146 = vst [vmem:[#allocation2 + $0x2c8] sm:$0x1c] %v7066
  %7147 = vst [vmem:[#allocation2 + $0x2d0] sm:$0x1c] %v7067
  %7148 = vst [vmem:[#allocation2 + $0x2d8] sm:$0x1c] %v7068
  %7149 = vst [vmem:[#allocation2 + $0x2e0] sm:$0x1c] %v7069
  %7150 = vst [vmem:[#allocation2 + $0x2e8] sm:$0x1c] %v7070
  %7151 = vst [vmem:[#allocation2 + $0x2f0] sm:$0x1c] %v7071
  %7152 = vst [vmem:[#allocation2 + $0x2f8] sm:$0x1c] %v7072
  %7153 = vst [vmem:[#allocation2 + $0x300] sm:$0x1c] %v7073
  %7154 = vst [vmem:[#allocation2 + $0x308] sm:$0x1c] %v7074
  %7155 = vst [vmem:[#allocation2 + $0x310] sm:$0x1c] %v7075
  %7156 = vst [vmem:[#allocation2 + $0x318] sm:$0x1c] %v7076
  %7157 = vst [vmem:[#allocation2 + $0x320] sm:$0x1c] %v7077
  %7158 = vst [vmem:[#allocation2 + $0x328] sm:$0x1c] %v7078
  %7159 = vst [vmem:[#allocation2 + $0x330] sm:$0x1c] %v7079
  %7160 = vst [vmem:[#allocation2 + $0x338] sm:$0x1c] %v7080
  %7161 = vst [vmem:[#allocation2 + $0x340] sm:$0x1c] %v7081
  %7162 = vst [vmem:[#allocation2 + $0x348] sm:$0x1c] %v7082
  %7163 = vst [vmem:[#allocation2 + $0x350] sm:$0x1c] %v7083
  %7164 = vst [vmem:[#allocation2 + $0x358] sm:$0x1c] %v7084
  %7165 = vst [vmem:[#allocation2 + $0x360] sm:$0x1c] %v7085
  %7166 = vst [vmem:[#allocation2 + $0x368] sm:$0x1c] %v7086
  %7167 = vst [vmem:[#allocation2 + $0x370] sm:$0x1c] %v7087
  %7168 = vst [vmem:[#allocation2 + $0x378] sm:$0x1c] %v7088
  %7169 = vst [vmem:[#allocation2 + $0x380] sm:$0x1c] %v7089
  %7170 = vst [vmem:[#allocation2 + $0x388] sm:$0x1c] %v7090
  %7171 = vst [vmem:[#allocation2 + $0x390] sm:$0x1c] %v7091
  %7172 = vst [vmem:[#allocation2 + $0x398] sm:$0x1c] %v7092
  %7173 = vst [vmem:[#allocation2 + $0x3a0] sm:$0x1c] %v7093
  %7174 = vst [vmem:[#allocation2 + $0x3a8] sm:$0x1c] %v7094
  %7175 = vst [vmem:[#allocation2 + $0x3b0] sm:$0x1c] %v7095
  %7176 = vst [vmem:[#allocation2 + $0x3b8] sm:$0x1c] %v7096
  %7177 = vst [vmem:[#allocation2 + $0x3c0] sm:$0x1c] %v7097
  %7178 = vst [vmem:[#allocation2 + $0x3c8] sm:$0x1c] %v7098
  %v7179 = vld [vmem:[#allocation2] sm:$0x7]
  %v7180 = vld [vmem:[#allocation2 + $0x8] sm:$0x7]
  %v7181 = vld [vmem:[#allocation2 + $0x10] sm:$0x7]
  %v7182 = vld [vmem:[#allocation2 + $0x18] sm:$0x7]
  %v7183 = vld [vmem:[#allocation2 + $0x20] sm:$0x7]
  %v7184 = vld [vmem:[#allocation2 + $0x28] sm:$0x7]
  %v7185 = vld [vmem:[#allocation2 + $0x30] sm:$0x7]
  %v7186 = vld [vmem:[#allocation2 + $0x38] sm:$0x7]
  %v7187 = vld [vmem:[#allocation2 + $0x40] sm:$0x7]
  %v7188 = vld [vmem:[#allocation2 + $0x48] sm:$0x7]
  %v7189 = vld [vmem:[#allocation2 + $0x50] sm:$0x7]
  %v7190 = vld [vmem:[#allocation2 + $0x58] sm:$0x7]
  %v7191 = vld [vmem:[#allocation2 + $0x60] sm:$0x7]
  %v7192 = vld [vmem:[#allocation2 + $0x68] sm:$0x7]
  %v7193 = vld [vmem:[#allocation2 + $0x70] sm:$0x7]
  %v7194 = vld [vmem:[#allocation2 + $0x78] sm:$0x7]
  %v7195 = vld [vmem:[#allocation2 + $0x80] sm:$0x7]
  %v7196 = vld [vmem:[#allocation2 + $0x88] sm:$0x7]
  %v7197 = vld [vmem:[#allocation2 + $0x90] sm:$0x7]
  %v7198 = vld [vmem:[#allocation2 + $0x98] sm:$0x7]
  %v7199 = vld [vmem:[#allocation2 + $0xa0] sm:$0x7]
  %v7200 = vld [vmem:[#allocation2 + $0xa8] sm:$0x7]
  %v7201 = vld [vmem:[#allocation2 + $0xb0] sm:$0x7]
  %v7202 = vld [vmem:[#allocation2 + $0xb8] sm:$0x7]
  %v7203 = vld [vmem:[#allocation2 + $0xc0] sm:$0x7]
  %v7204 = vld [vmem:[#allocation2 + $0xc8] sm:$0x7]
  %v7205 = vld [vmem:[#allocation2 + $0xd0] sm:$0x7]
  %v7206 = vld [vmem:[#allocation2 + $0xd8] sm:$0x7]
  %v7207 = vld [vmem:[#allocation2 + $0xe0] sm:$0x7]
  %v7208 = vld [vmem:[#allocation2 + $0xe8] sm:$0x7]
  %v7209 = vld [vmem:[#allocation2 + $0xf0] sm:$0x7]
  %v7210 = vld [vmem:[#allocation2 + $0xf8] sm:$0x7]
  %v7211 = vld [vmem:[#allocation2 + $0x100] sm:$0x7]
  %v7212 = vld [vmem:[#allocation2 + $0x108] sm:$0x7]
  %v7213 = vld [vmem:[#allocation2 + $0x110] sm:$0x7]
  %v7214 = vld [vmem:[#allocation2 + $0x118] sm:$0x7]
  %v7215 = vld [vmem:[#allocation2 + $0x120] sm:$0x7]
  %v7216 = vld [vmem:[#allocation2 + $0x128] sm:$0x7]
  %v7217 = vld [vmem:[#allocation2 + $0x130] sm:$0x7]
  %v7218 = vld [vmem:[#allocation2 + $0x138] sm:$0x7]
  %v7219 = vld [vmem:[#allocation2 + $0x140] sm:$0x7]
  %v7261 = vrot.slane %v7179, 3
  %v7262 = vrot.slane %v7180, 3
  %v7263 = vrot.slane %v7181, 3
  %v7264 = vrot.slane %v7182, 3
  %v7265 = vrot.slane %v7183, 3
  %v7266 = vrot.slane %v7184, 3
  %v7267 = vrot.slane %v7185, 3
  %v7268 = vrot.slane %v7186, 3
  %v7269 = vrot.slane %v7187, 3
  %v7270 = vrot.slane %v7188, 3
  %v7271 = vrot.slane %v7189, 3
  %v7272 = vrot.slane %v7190, 3
  %v7273 = vrot.slane %v7191, 3
  %v7274 = vrot.slane %v7192, 3
  %v7275 = vrot.slane %v7193, 3
  %v7276 = vrot.slane %v7194, 3
  %v7277 = vrot.slane %v7195, 3
  %v7278 = vrot.slane %v7196, 3
  %v7279 = vrot.slane %v7197, 3
  %v7280 = vrot.slane %v7198, 3
  %v7281 = vrot.slane %v7199, 3
  %v7282 = vrot.slane %v7200, 3
  %v7283 = vrot.slane %v7201, 3
  %v7284 = vrot.slane %v7202, 3
  %v7285 = vrot.slane %v7203, 3
  %v7286 = vrot.slane %v7204, 3
  %v7287 = vrot.slane %v7205, 3
  %v7288 = vrot.slane %v7206, 3
  %v7289 = vrot.slane %v7207, 3
  %v7290 = vrot.slane %v7208, 3
  %v7291 = vrot.slane %v7209, 3
  %v7292 = vrot.slane %v7210, 3
  %v7293 = vrot.slane %v7211, 3
  %v7294 = vrot.slane %v7212, 3
  %v7295 = vrot.slane %v7213, 3
  %v7296 = vrot.slane %v7214, 3
  %v7297 = vrot.slane %v7215, 3
  %v7298 = vrot.slane %v7216, 3
  %v7299 = vrot.slane %v7217, 3
  %v7300 = vrot.slane %v7218, 3
  %v7301 = vrot.slane %v7219, 3
  %7302 = vrot.lane.b32.xlu0 %v7261, 79
  %v7303 = vpop.permute.xlu0 %7302
  %7304 = vrot.lane.b32.xlu0 %v7262, 79
  %v7305 = vpop.permute.xlu0 %7304
  %7306 = vrot.lane.b32.xlu0 %v7263, 79
  %v7307 = vpop.permute.xlu0 %7306
  %7308 = vrot.lane.b32.xlu0 %v7264, 79
  %v7309 = vpop.permute.xlu0 %7308
  %7310 = vrot.lane.b32.xlu0 %v7265, 79
  %v7311 = vpop.permute.xlu0 %7310
  %7312 = vrot.lane.b32.xlu0 %v7266, 79
  %v7313 = vpop.permute.xlu0 %7312
  %7314 = vrot.lane.b32.xlu0 %v7267, 79
  %v7315 = vpop.permute.xlu0 %7314
  %7316 = vrot.lane.b32.xlu0 %v7268, 79
  %v7317 = vpop.permute.xlu0 %7316
  %7318 = vrot.lane.b32.xlu0 %v7269, 79
  %v7319 = vpop.permute.xlu0 %7318
  %7320 = vrot.lane.b32.xlu0 %v7270, 79
  %v7321 = vpop.permute.xlu0 %7320
  %7322 = vrot.lane.b32.xlu0 %v7271, 79
  %v7323 = vpop.permute.xlu0 %7322
  %7324 = vrot.lane.b32.xlu0 %v7272, 79
  %v7325 = vpop.permute.xlu0 %7324
  %7326 = vrot.lane.b32.xlu0 %v7273, 79
  %v7327 = vpop.permute.xlu0 %7326
  %7328 = vrot.lane.b32.xlu0 %v7274, 79
  %v7329 = vpop.permute.xlu0 %7328
  %7330 = vrot.lane.b32.xlu0 %v7275, 79
  %v7331 = vpop.permute.xlu0 %7330
  %7332 = vrot.lane.b32.xlu0 %v7276, 79
  %v7333 = vpop.permute.xlu0 %7332
  %7334 = vrot.lane.b32.xlu0 %v7277, 79
  %v7335 = vpop.permute.xlu0 %7334
  %7336 = vrot.lane.b32.xlu0 %v7278, 79
  %v7337 = vpop.permute.xlu0 %7336
  %7338 = vrot.lane.b32.xlu0 %v7279, 79
  %v7339 = vpop.permute.xlu0 %7338
  %7340 = vrot.lane.b32.xlu0 %v7280, 79
  %v7341 = vpop.permute.xlu0 %7340
  %7342 = vrot.lane.b32.xlu0 %v7281, 79
  %v7343 = vpop.permute.xlu0 %7342
  %7344 = vrot.lane.b32.xlu0 %v7282, 79
  %v7345 = vpop.permute.xlu0 %7344
  %7346 = vrot.lane.b32.xlu0 %v7283, 79
  %v7347 = vpop.permute.xlu0 %7346
  %7348 = vrot.lane.b32.xlu0 %v7284, 79
  %v7349 = vpop.permute.xlu0 %7348
  %7350 = vrot.lane.b32.xlu0 %v7285, 79
  %v7351 = vpop.permute.xlu0 %7350
  %7352 = vrot.lane.b32.xlu0 %v7286, 79
  %v7353 = vpop.permute.xlu0 %7352
  %7354 = vrot.lane.b32.xlu0 %v7287, 79
  %v7355 = vpop.permute.xlu0 %7354
  %7356 = vrot.lane.b32.xlu0 %v7288, 79
  %v7357 = vpop.permute.xlu0 %7356
  %7358 = vrot.lane.b32.xlu0 %v7289, 79
  %v7359 = vpop.permute.xlu0 %7358
  %7360 = vrot.lane.b32.xlu0 %v7290, 79
  %v7361 = vpop.permute.xlu0 %7360
  %7362 = vrot.lane.b32.xlu0 %v7291, 79
  %v7363 = vpop.permute.xlu0 %7362
  %7364 = vrot.lane.b32.xlu0 %v7292, 79
  %v7365 = vpop.permute.xlu0 %7364
  %7366 = vrot.lane.b32.xlu0 %v7293, 79
  %v7367 = vpop.permute.xlu0 %7366
  %7368 = vrot.lane.b32.xlu0 %v7294, 79
  %v7369 = vpop.permute.xlu0 %7368
  %7370 = vrot.lane.b32.xlu0 %v7295, 79
  %v7371 = vpop.permute.xlu0 %7370
  %7372 = vrot.lane.b32.xlu0 %v7296, 79
  %v7373 = vpop.permute.xlu0 %7372
  %7374 = vrot.lane.b32.xlu0 %v7297, 79
  %v7375 = vpop.permute.xlu0 %7374
  %7376 = vrot.lane.b32.xlu0 %v7298, 79
  %v7377 = vpop.permute.xlu0 %7376
  %7378 = vrot.lane.b32.xlu0 %v7299, 79
  %v7379 = vpop.permute.xlu0 %7378
  %7380 = vrot.lane.b32.xlu0 %v7300, 79
  %v7381 = vpop.permute.xlu0 %7380
  %7382 = vrot.lane.b32.xlu0 %v7301, 79
  %v7383 = vpop.permute.xlu0 %7382
  %v7384 = vsel %vm2745, %v7303, %v7305
  %v7385 = vsel %vm2745, %v7305, %v7307
  %v7386 = vsel %vm2745, %v7307, %v7309
  %v7387 = vsel %vm2745, %v7309, %v7311
  %v7388 = vsel %vm2745, %v7311, %v7313
  %v7389 = vsel %vm2745, %v7313, %v7315
  %v7390 = vsel %vm2745, %v7315, %v7317
  %v7391 = vsel %vm2745, %v7317, %v7319
  %v7392 = vsel %vm2745, %v7319, %v7321
  %v7393 = vsel %vm2745, %v7321, %v7323
  %v7394 = vsel %vm2745, %v7323, %v7325
  %v7395 = vsel %vm2745, %v7325, %v7327
  %v7396 = vsel %vm2745, %v7327, %v7329
  %v7397 = vsel %vm2745, %v7329, %v7331
  %v7398 = vsel %vm2745, %v7331, %v7333
  %v7399 = vsel %vm2745, %v7333, %v7335
  %v7400 = vsel %vm2745, %v7335, %v7337
  %v7401 = vsel %vm2745, %v7337, %v7339
  %v7402 = vsel %vm2745, %v7339, %v7341
  %v7403 = vsel %vm2745, %v7341, %v7343
  %v7404 = vsel %vm2745, %v7343, %v7345
  %v7405 = vsel %vm2745, %v7345, %v7347
  %v7406 = vsel %vm2745, %v7347, %v7349
  %v7407 = vsel %vm2745, %v7349, %v7351
  %v7408 = vsel %vm2745, %v7351, %v7353
  %v7409 = vsel %vm2745, %v7353, %v7355
  %v7410 = vsel %vm2745, %v7355, %v7357
  %v7411 = vsel %vm2745, %v7357, %v7359
  %v7412 = vsel %vm2745, %v7359, %v7361
  %v7413 = vsel %vm2745, %v7361, %v7363
  %v7414 = vsel %vm2745, %v7363, %v7365
  %v7415 = vsel %vm2745, %v7365, %v7367
  %v7416 = vsel %vm2745, %v7367, %v7369
  %v7417 = vsel %vm2745, %v7369, %v7371
  %v7418 = vsel %vm2745, %v7371, %v7373
  %v7419 = vsel %vm2745, %v7373, %v7375
  %v7420 = vsel %vm2745, %v7375, %v7377
  %v7421 = vsel %vm2745, %v7377, %v7379
  %v7422 = vsel %vm2745, %v7379, %v7381
  %v7423 = vsel %vm2745, %v7381, %v7383
  %7464 = vst [vmem:[#allocation2 + $0x290] sm:$0xe0] %v7384
  %7465 = vst [vmem:[#allocation2 + $0x298] sm:$0xe0] %v7385
  %7466 = vst [vmem:[#allocation2 + $0x2a0] sm:$0xe0] %v7386
  %7467 = vst [vmem:[#allocation2 + $0x2a8] sm:$0xe0] %v7387
  %7468 = vst [vmem:[#allocation2 + $0x2b0] sm:$0xe0] %v7388
  %7469 = vst [vmem:[#allocation2 + $0x2b8] sm:$0xe0] %v7389
  %7470 = vst [vmem:[#allocation2 + $0x2c0] sm:$0xe0] %v7390
  %7471 = vst [vmem:[#allocation2 + $0x2c8] sm:$0xe0] %v7391
  %7472 = vst [vmem:[#allocation2 + $0x2d0] sm:$0xe0] %v7392
  %7473 = vst [vmem:[#allocation2 + $0x2d8] sm:$0xe0] %v7393
  %7474 = vst [vmem:[#allocation2 + $0x2e0] sm:$0xe0] %v7394
  %7475 = vst [vmem:[#allocation2 + $0x2e8] sm:$0xe0] %v7395
  %7476 = vst [vmem:[#allocation2 + $0x2f0] sm:$0xe0] %v7396
  %7477 = vst [vmem:[#allocation2 + $0x2f8] sm:$0xe0] %v7397
  %7478 = vst [vmem:[#allocation2 + $0x300] sm:$0xe0] %v7398
  %7479 = vst [vmem:[#allocation2 + $0x308] sm:$0xe0] %v7399
  %7480 = vst [vmem:[#allocation2 + $0x310] sm:$0xe0] %v7400
  %7481 = vst [vmem:[#allocation2 + $0x318] sm:$0xe0] %v7401
  %7482 = vst [vmem:[#allocation2 + $0x320] sm:$0xe0] %v7402
  %7483 = vst [vmem:[#allocation2 + $0x328] sm:$0xe0] %v7403
  %7484 = vst [vmem:[#allocation2 + $0x330] sm:$0xe0] %v7404
  %7485 = vst [vmem:[#allocation2 + $0x338] sm:$0xe0] %v7405
  %7486 = vst [vmem:[#allocation2 + $0x340] sm:$0xe0] %v7406
  %7487 = vst [vmem:[#allocation2 + $0x348] sm:$0xe0] %v7407
  %7488 = vst [vmem:[#allocation2 + $0x350] sm:$0xe0] %v7408
  %7489 = vst [vmem:[#allocation2 + $0x358] sm:$0xe0] %v7409
  %7490 = vst [vmem:[#allocation2 + $0x360] sm:$0xe0] %v7410
  %7491 = vst [vmem:[#allocation2 + $0x368] sm:$0xe0] %v7411
  %7492 = vst [vmem:[#allocation2 + $0x370] sm:$0xe0] %v7412
  %7493 = vst [vmem:[#allocation2 + $0x378] sm:$0xe0] %v7413
  %7494 = vst [vmem:[#allocation2 + $0x380] sm:$0xe0] %v7414
  %7495 = vst [vmem:[#allocation2 + $0x388] sm:$0xe0] %v7415
  %7496 = vst [vmem:[#allocation2 + $0x390] sm:$0xe0] %v7416
  %7497 = vst [vmem:[#allocation2 + $0x398] sm:$0xe0] %v7417
  %7498 = vst [vmem:[#allocation2 + $0x3a0] sm:$0xe0] %v7418
  %7499 = vst [vmem:[#allocation2 + $0x3a8] sm:$0xe0] %v7419
  %7500 = vst [vmem:[#allocation2 + $0x3b0] sm:$0xe0] %v7420
  %7501 = vst [vmem:[#allocation2 + $0x3b8] sm:$0xe0] %v7421
  %7502 = vst [vmem:[#allocation2 + $0x3c0] sm:$0xe0] %v7422
  %7503 = vst [vmem:[#allocation2 + $0x3c8] sm:$0xe0] %v7423
  %v7504 = vld [vmem:[#allocation2] sm:$0x7]
  %v7505 = vld [vmem:[#allocation2 + $0x8] sm:$0x7]
  %v7506 = vld [vmem:[#allocation2 + $0x10] sm:$0x7]
  %v7507 = vld [vmem:[#allocation2 + $0x18] sm:$0x7]
  %v7508 = vld [vmem:[#allocation2 + $0x20] sm:$0x7]
  %v7509 = vld [vmem:[#allocation2 + $0x28] sm:$0x7]
  %v7510 = vld [vmem:[#allocation2 + $0x30] sm:$0x7]
  %v7511 = vld [vmem:[#allocation2 + $0x38] sm:$0x7]
  %v7512 = vld [vmem:[#allocation2 + $0x40] sm:$0x7]
  %v7513 = vld [vmem:[#allocation2 + $0x48] sm:$0x7]
  %v7514 = vld [vmem:[#allocation2 + $0x50] sm:$0x7]
  %v7515 = vld [vmem:[#allocation2 + $0x58] sm:$0x7]
  %v7516 = vld [vmem:[#allocation2 + $0x60] sm:$0x7]
  %v7517 = vld [vmem:[#allocation2 + $0x68] sm:$0x7]
  %v7518 = vld [vmem:[#allocation2 + $0x70] sm:$0x7]
  %v7519 = vld [vmem:[#allocation2 + $0x78] sm:$0x7]
  %v7520 = vld [vmem:[#allocation2 + $0x80] sm:$0x7]
  %v7521 = vld [vmem:[#allocation2 + $0x88] sm:$0x7]
  %v7522 = vld [vmem:[#allocation2 + $0x90] sm:$0x7]
  %v7523 = vld [vmem:[#allocation2 + $0x98] sm:$0x7]
  %v7524 = vld [vmem:[#allocation2 + $0xa0] sm:$0x7]
  %v7525 = vld [vmem:[#allocation2 + $0xa8] sm:$0x7]
  %v7526 = vld [vmem:[#allocation2 + $0xb0] sm:$0x7]
  %v7527 = vld [vmem:[#allocation2 + $0xb8] sm:$0x7]
  %v7528 = vld [vmem:[#allocation2 + $0xc0] sm:$0x7]
  %v7529 = vld [vmem:[#allocation2 + $0xc8] sm:$0x7]
  %v7530 = vld [vmem:[#allocation2 + $0xd0] sm:$0x7]
  %v7531 = vld [vmem:[#allocation2 + $0xd8] sm:$0x7]
  %v7532 = vld [vmem:[#allocation2 + $0xe0] sm:$0x7]
  %v7533 = vld [vmem:[#allocation2 + $0xe8] sm:$0x7]
  %v7534 = vld [vmem:[#allocation2 + $0xf0] sm:$0x7]
  %v7535 = vld [vmem:[#allocation2 + $0xf8] sm:$0x7]
  %v7536 = vld [vmem:[#allocation2 + $0x100] sm:$0x7]
  %v7537 = vld [vmem:[#allocation2 + $0x108] sm:$0x7]
  %v7538 = vld [vmem:[#allocation2 + $0x110] sm:$0x7]
  %v7539 = vld [vmem:[#allocation2 + $0x118] sm:$0x7]
  %v7540 = vld [vmem:[#allocation2 + $0x120] sm:$0x7]
  %v7541 = vld [vmem:[#allocation2 + $0x128] sm:$0x7]
  %v7542 = vld [vmem:[#allocation2 + $0x130] sm:$0x7]
  %v7543 = vld [vmem:[#allocation2 + $0x138] sm:$0x7]
  %v7544 = vld [vmem:[#allocation2 + $0x140] sm:$0x7]
  %7586 = vrot.lane.b32.xlu0 %v7504, 78
  %v7587 = vpop.permute.xlu0 %7586
  %7588 = vrot.lane.b32.xlu0 %v7505, 78
  %v7589 = vpop.permute.xlu0 %7588
  %7590 = vrot.lane.b32.xlu0 %v7506, 78
  %v7591 = vpop.permute.xlu0 %7590
  %7592 = vrot.lane.b32.xlu0 %v7507, 78
  %v7593 = vpop.permute.xlu0 %7592
  %7594 = vrot.lane.b32.xlu0 %v7508, 78
  %v7595 = vpop.permute.xlu0 %7594
  %7596 = vrot.lane.b32.xlu0 %v7509, 78
  %v7597 = vpop.permute.xlu0 %7596
  %7598 = vrot.lane.b32.xlu0 %v7510, 78
  %v7599 = vpop.permute.xlu0 %7598
  %7600 = vrot.lane.b32.xlu0 %v7511, 78
  %v7601 = vpop.permute.xlu0 %7600
  %7602 = vrot.lane.b32.xlu0 %v7512, 78
  %v7603 = vpop.permute.xlu0 %7602
  %7604 = vrot.lane.b32.xlu0 %v7513, 78
  %v7605 = vpop.permute.xlu0 %7604
  %7606 = vrot.lane.b32.xlu0 %v7514, 78
  %v7607 = vpop.permute.xlu0 %7606
  %7608 = vrot.lane.b32.xlu0 %v7515, 78
  %v7609 = vpop.permute.xlu0 %7608
  %7610 = vrot.lane.b32.xlu0 %v7516, 78
  %v7611 = vpop.permute.xlu0 %7610
  %7612 = vrot.lane.b32.xlu0 %v7517, 78
  %v7613 = vpop.permute.xlu0 %7612
  %7614 = vrot.lane.b32.xlu0 %v7518, 78
  %v7615 = vpop.permute.xlu0 %7614
  %7616 = vrot.lane.b32.xlu0 %v7519, 78
  %v7617 = vpop.permute.xlu0 %7616
  %7618 = vrot.lane.b32.xlu0 %v7520, 78
  %v7619 = vpop.permute.xlu0 %7618
  %7620 = vrot.lane.b32.xlu0 %v7521, 78
  %v7621 = vpop.permute.xlu0 %7620
  %7622 = vrot.lane.b32.xlu0 %v7522, 78
  %v7623 = vpop.permute.xlu0 %7622
  %7624 = vrot.lane.b32.xlu0 %v7523, 78
  %v7625 = vpop.permute.xlu0 %7624
  %7626 = vrot.lane.b32.xlu0 %v7524, 78
  %v7627 = vpop.permute.xlu0 %7626
  %7628 = vrot.lane.b32.xlu0 %v7525, 78
  %v7629 = vpop.permute.xlu0 %7628
  %7630 = vrot.lane.b32.xlu0 %v7526, 78
  %v7631 = vpop.permute.xlu0 %7630
  %7632 = vrot.lane.b32.xlu0 %v7527, 78
  %v7633 = vpop.permute.xlu0 %7632
  %7634 = vrot.lane.b32.xlu0 %v7528, 78
  %v7635 = vpop.permute.xlu0 %7634
  %7636 = vrot.lane.b32.xlu0 %v7529, 78
  %v7637 = vpop.permute.xlu0 %7636
  %7638 = vrot.lane.b32.xlu0 %v7530, 78
  %v7639 = vpop.permute.xlu0 %7638
  %7640 = vrot.lane.b32.xlu0 %v7531, 78
  %v7641 = vpop.permute.xlu0 %7640
  %7642 = vrot.lane.b32.xlu0 %v7532, 78
  %v7643 = vpop.permute.xlu0 %7642
  %7644 = vrot.lane.b32.xlu0 %v7533, 78
  %v7645 = vpop.permute.xlu0 %7644
  %7646 = vrot.lane.b32.xlu0 %v7534, 78
  %v7647 = vpop.permute.xlu0 %7646
  %7648 = vrot.lane.b32.xlu0 %v7535, 78
  %v7649 = vpop.permute.xlu0 %7648
  %7650 = vrot.lane.b32.xlu0 %v7536, 78
  %v7651 = vpop.permute.xlu0 %7650
  %7652 = vrot.lane.b32.xlu0 %v7537, 78
  %v7653 = vpop.permute.xlu0 %7652
  %7654 = vrot.lane.b32.xlu0 %v7538, 78
  %v7655 = vpop.permute.xlu0 %7654
  %7656 = vrot.lane.b32.xlu0 %v7539, 78
  %v7657 = vpop.permute.xlu0 %7656
  %7658 = vrot.lane.b32.xlu0 %v7540, 78
  %v7659 = vpop.permute.xlu0 %7658
  %7660 = vrot.lane.b32.xlu0 %v7541, 78
  %v7661 = vpop.permute.xlu0 %7660
  %7662 = vrot.lane.b32.xlu0 %v7542, 78
  %v7663 = vpop.permute.xlu0 %7662
  %7664 = vrot.lane.b32.xlu0 %v7543, 78
  %v7665 = vpop.permute.xlu0 %7664
  %7666 = vrot.lane.b32.xlu0 %v7544, 78
  %v7667 = vpop.permute.xlu0 %7666
  %v7668 = vsel %vm3030, %v7587, %v7589
  %v7669 = vsel %vm3030, %v7589, %v7591
  %v7670 = vsel %vm3030, %v7591, %v7593
  %v7671 = vsel %vm3030, %v7593, %v7595
  %v7672 = vsel %vm3030, %v7595, %v7597
  %v7673 = vsel %vm3030, %v7597, %v7599
  %v7674 = vsel %vm3030, %v7599, %v7601
  %v7675 = vsel %vm3030, %v7601, %v7603
  %v7676 = vsel %vm3030, %v7603, %v7605
  %v7677 = vsel %vm3030, %v7605, %v7607
  %v7678 = vsel %vm3030, %v7607, %v7609
  %v7679 = vsel %vm3030, %v7609, %v7611
  %v7680 = vsel %vm3030, %v7611, %v7613
  %v7681 = vsel %vm3030, %v7613, %v7615
  %v7682 = vsel %vm3030, %v7615, %v7617
  %v7683 = vsel %vm3030, %v7617, %v7619
  %v7684 = vsel %vm3030, %v7619, %v7621
  %v7685 = vsel %vm3030, %v7621, %v7623
  %v7686 = vsel %vm3030, %v7623, %v7625
  %v7687 = vsel %vm3030, %v7625, %v7627
  %v7688 = vsel %vm3030, %v7627, %v7629
  %v7689 = vsel %vm3030, %v7629, %v7631
  %v7690 = vsel %vm3030, %v7631, %v7633
  %v7691 = vsel %vm3030, %v7633, %v7635
  %v7692 = vsel %vm3030, %v7635, %v7637
  %v7693 = vsel %vm3030, %v7637, %v7639
  %v7694 = vsel %vm3030, %v7639, %v7641
  %v7695 = vsel %vm3030, %v7641, %v7643
  %v7696 = vsel %vm3030, %v7643, %v7645
  %v7697 = vsel %vm3030, %v7645, %v7647
  %v7698 = vsel %vm3030, %v7647, %v7649
  %v7699 = vsel %vm3030, %v7649, %v7651
  %v7700 = vsel %vm3030, %v7651, %v7653
  %v7701 = vsel %vm3030, %v7653, %v7655
  %v7702 = vsel %vm3030, %v7655, %v7657
  %v7703 = vsel %vm3030, %v7657, %v7659
  %v7704 = vsel %vm3030, %v7659, %v7661
  %v7705 = vsel %vm3030, %v7661, %v7663
  %v7706 = vsel %vm3030, %v7663, %v7665
  %v7707 = vsel %vm3030, %v7665, %v7667
  %7748 = vst [vmem:[#allocation2 + $0x3d8] sm:$0x7] %v7668
  %7749 = vst [vmem:[#allocation2 + $0x3e0] sm:$0x7] %v7669
  %7750 = vst [vmem:[#allocation2 + $0x3e8] sm:$0x7] %v7670
  %7751 = vst [vmem:[#allocation2 + $0x3f0] sm:$0x7] %v7671
  %7752 = vst [vmem:[#allocation2 + $0x3f8] sm:$0x7] %v7672
  %7753 = vst [vmem:[#allocation2 + $0x400] sm:$0x7] %v7673
  %7754 = vst [vmem:[#allocation2 + $0x408] sm:$0x7] %v7674
  %7755 = vst [vmem:[#allocation2 + $0x410] sm:$0x7] %v7675
  %7756 = vst [vmem:[#allocation2 + $0x418] sm:$0x7] %v7676
  %7757 = vst [vmem:[#allocation2 + $0x420] sm:$0x7] %v7677
  %7758 = vst [vmem:[#allocation2 + $0x428] sm:$0x7] %v7678
  %7759 = vst [vmem:[#allocation2 + $0x430] sm:$0x7] %v7679
  %7760 = vst [vmem:[#allocation2 + $0x438] sm:$0x7] %v7680
  %7761 = vst [vmem:[#allocation2 + $0x440] sm:$0x7] %v7681
  %7762 = vst [vmem:[#allocation2 + $0x448] sm:$0x7] %v7682
  %7763 = vst [vmem:[#allocation2 + $0x450] sm:$0x7] %v7683
  %7764 = vst [vmem:[#allocation2 + $0x458] sm:$0x7] %v7684
  %7765 = vst [vmem:[#allocation2 + $0x460] sm:$0x7] %v7685
  %7766 = vst [vmem:[#allocation2 + $0x468] sm:$0x7] %v7686
  %7767 = vst [vmem:[#allocation2 + $0x470] sm:$0x7] %v7687
  %7768 = vst [vmem:[#allocation2 + $0x478] sm:$0x7] %v7688
  %7769 = vst [vmem:[#allocation2 + $0x480] sm:$0x7] %v7689
  %7770 = vst [vmem:[#allocation2 + $0x488] sm:$0x7] %v7690
  %7771 = vst [vmem:[#allocation2 + $0x490] sm:$0x7] %v7691
  %7772 = vst [vmem:[#allocation2 + $0x498] sm:$0x7] %v7692
  %7773 = vst [vmem:[#allocation2 + $0x4a0] sm:$0x7] %v7693
  %7774 = vst [vmem:[#allocation2 + $0x4a8] sm:$0x7] %v7694
  %7775 = vst [vmem:[#allocation2 + $0x4b0] sm:$0x7] %v7695
  %7776 = vst [vmem:[#allocation2 + $0x4b8] sm:$0x7] %v7696
  %7777 = vst [vmem:[#allocation2 + $0x4c0] sm:$0x7] %v7697
  %7778 = vst [vmem:[#allocation2 + $0x4c8] sm:$0x7] %v7698
  %7779 = vst [vmem:[#allocation2 + $0x4d0] sm:$0x7] %v7699
  %7780 = vst [vmem:[#allocation2 + $0x4d8] sm:$0x7] %v7700
  %7781 = vst [vmem:[#allocation2 + $0x4e0] sm:$0x7] %v7701
  %7782 = vst [vmem:[#allocation2 + $0x4e8] sm:$0x7] %v7702
  %7783 = vst [vmem:[#allocation2 + $0x4f0] sm:$0x7] %v7703
  %7784 = vst [vmem:[#allocation2 + $0x4f8] sm:$0x7] %v7704
  %7785 = vst [vmem:[#allocation2 + $0x500] sm:$0x7] %v7705
  %7786 = vst [vmem:[#allocation2 + $0x508] sm:$0x7] %v7706
  %7787 = vst [vmem:[#allocation2 + $0x510] sm:$0x7] %v7707
  %s7788 = scalar_lea.vmem %s2, 16
  %v7789 = vld [vmem:[%s7788] sm:$0xf]
  %v7790 = vld [vmem:[%s7788 + $0x4] sm:$0xf]
  %v7791 = vld [vmem:[%s7788 + $0x8] sm:$0xf]
  %v7792 = vld [vmem:[%s7788 + $0xc] sm:$0xf]
  %v7793 = vld [vmem:[#allocation2] sm:$0xff]
  %v7794 = vld [vmem:[#allocation2 + $0x8] sm:$0xff]
  %v7795 = vld [vmem:[#allocation2 + $0x10] sm:$0xff]
  %v7796 = vld [vmem:[#allocation2 + $0x18] sm:$0xff]
  %v7797 = vld [vmem:[#allocation2 + $0x20] sm:$0xff]
  %v7798 = vld [vmem:[#allocation2 + $0x148] sm:$0xff]
  %v7799 = vld [vmem:[#allocation2 + $0x150] sm:$0xff]
  %v7800 = vld [vmem:[#allocation2 + $0x158] sm:$0xff]
  %v7801 = vld [vmem:[#allocation2 + $0x160] sm:$0xff]
  %v7802 = vld [vmem:[#allocation2 + $0x168] sm:$0xff]
  %v7803 = vld [vmem:[#allocation2 + $0x290] sm:$0xff]
  %v7804 = vld [vmem:[#allocation2 + $0x298] sm:$0xff]
  %v7805 = vld [vmem:[#allocation2 + $0x2a0] sm:$0xff]
  %v7806 = vld [vmem:[#allocation2 + $0x2a8] sm:$0xff]
  %v7807 = vld [vmem:[#allocation2 + $0x2b0] sm:$0xff]
  %v7808 = vld [vmem:[#allocation2 + $0x3d8] sm:$0xff]
  %v7809 = vld [vmem:[#allocation2 + $0x3e0] sm:$0xff]
  %v7810 = vld [vmem:[#allocation2 + $0x3e8] sm:$0xff]
  %v7811 = vld [vmem:[#allocation2 + $0x3f0] sm:$0xff]
  %v7812 = vld [vmem:[#allocation2 + $0x3f8] sm:$0xff]
  %v7813 = vpack.c.bf16 %v7798, %v7793
  %v7814 = vpack.c.bf16 %v7799, %v7794
  %v7815 = vpack.c.bf16 %v7800, %v7795
  %v7816 = vpack.c.bf16 %v7801, %v7796
  %v7817 = vpack.c.bf16 %v7802, %v7797
  %v7818 = vpack.c.bf16 %v7808, %v7803
  %v7819 = vpack.c.bf16 %v7809, %v7804
  %v7820 = vpack.c.bf16 %v7810, %v7805
  %v7821 = vpack.c.bf16 %v7811, %v7806
  %v7822 = vpack.c.bf16 %v7812, %v7807
  %v7827 = vunpack.c.l.b16 %v7789
  %v7828 = vunpack.c.l.b16 %v7790
  %v7829 = vunpack.c.l.b16 %v7791
  %v7830 = vunpack.c.l.b16 %v7792
  %v7831 = vpack.c.b16 %v7828, %v7827
  %v7832 = vpack.c.b16 %v7830, %v7829
  %v7834 = vsel %vm3195, %v7831, 0
  %v7837 = vsel %vm3195, %v7832, 0
  %7839 = vmatpush.bf16.msra.mxu0 0
  %7840 = vmatpush.bf16.msra.mxu0 0
  %7841 = vmatpush.bf16.msra.mxu0 0
  %7842 = vmatpush.bf16.msra.mxu0 0
  %7843 = vmatpush.bf16.msra.mxu0 0
  %7844 = vmatpush.bf16.msra.mxu0 0
  %7845 = vmatpush.bf16.msra.mxu0 %v7818
  %7846 = vmatpush.bf16.msra.mxu0 %v7813
  %7847 = vmatmul.bf16.gmra.mxu0 %v7834
  %v7848 = vpop.f32.mrf.mxu0
  %v7849 = vadd.f32 0.0, %v7848
  %v7850 = vpop.f32.mrf.mxu0
  %v7851 = vadd.f32 0.0, %v7850
  %7852 = vmatmul.bf16.gmra.mxu0 %v7837
  %v7853 = vpop.f32.mrf.mxu0
  %v7854 = vadd.f32 0.0, %v7853
  %v7855 = vpop.f32.mrf.mxu0
  %v7856 = vadd.f32 0.0, %v7855
  %7857 = vdwg.mxu0
  %7858 = vmatpush.bf16.msra.mxu0 0
  %7859 = vmatpush.bf16.msra.mxu0 0
  %7860 = vmatpush.bf16.msra.mxu0 0
  %7861 = vmatpush.bf16.msra.mxu0 0
  %7862 = vmatpush.bf16.msra.mxu0 0
  %7863 = vmatpush.bf16.msra.mxu0 0
  %7864 = vmatpush.bf16.msra.mxu0 %v7819
  %7865 = vmatpush.bf16.msra.mxu0 %v7814
  %7866 = vmatmul.bf16.gmra.mxu0 %v7834
  %v7867 = vpop.f32.mrf.mxu0
  %v7868 = vadd.f32 0.0, %v7867
  %v7869 = vpop.f32.mrf.mxu0
  %v7870 = vadd.f32 0.0, %v7869
  %7871 = vmatmul.bf16.gmra.mxu0 %v7837
  %v7872 = vpop.f32.mrf.mxu0
  %v7873 = vadd.f32 0.0, %v7872
  %v7874 = vpop.f32.mrf.mxu0
  %v7875 = vadd.f32 0.0, %v7874
  %7876 = vdwg.mxu0
  %7877 = vmatpush.bf16.msra.mxu0 0
  %7878 = vmatpush.bf16.msra.mxu0 0
  %7879 = vmatpush.bf16.msra.mxu0 0
  %7880 = vmatpush.bf16.msra.mxu0 0
  %7881 = vmatpush.bf16.msra.mxu0 0
  %7882 = vmatpush.bf16.msra.mxu0 0
  %7883 = vmatpush.bf16.msra.mxu0 %v7820
  %7884 = vmatpush.bf16.msra.mxu0 %v7815
  %7885 = vmatmul.bf16.gmra.mxu0 %v7834
  %v7886 = vpop.f32.mrf.mxu0
  %v7887 = vadd.f32 0.0, %v7886
  %v7888 = vpop.f32.mrf.mxu0
  %v7889 = vadd.f32 0.0, %v7888
  %7890 = vmatmul.bf16.gmra.mxu0 %v7837
  %v7891 = vpop.f32.mrf.mxu0
  %v7892 = vadd.f32 0.0, %v7891
  %v7893 = vpop.f32.mrf.mxu0
  %v7894 = vadd.f32 0.0, %v7893
  %7895 = vdwg.mxu0
  %7896 = vmatpush.bf16.msra.mxu0 0
  %7897 = vmatpush.bf16.msra.mxu0 0
  %7898 = vmatpush.bf16.msra.mxu0 0
  %7899 = vmatpush.bf16.msra.mxu0 0
  %7900 = vmatpush.bf16.msra.mxu0 0
  %7901 = vmatpush.bf16.msra.mxu0 0
  %7902 = vmatpush.bf16.msra.mxu0 %v7821
  %7903 = vmatpush.bf16.msra.mxu0 %v7816
  %7904 = vmatmul.bf16.gmra.mxu0 %v7834
  %v7905 = vpop.f32.mrf.mxu0
  %v7906 = vadd.f32 0.0, %v7905
  %v7907 = vpop.f32.mrf.mxu0
  %v7908 = vadd.f32 0.0, %v7907
  %7909 = vmatmul.bf16.gmra.mxu0 %v7837
  %v7910 = vpop.f32.mrf.mxu0
  %v7911 = vadd.f32 0.0, %v7910
  %v7912 = vpop.f32.mrf.mxu0
  %v7913 = vadd.f32 0.0, %v7912
  %7914 = vdwg.mxu0
  %7915 = vmatpush.bf16.msra.mxu0 0
  %7916 = vmatpush.bf16.msra.mxu0 0
  %7917 = vmatpush.bf16.msra.mxu0 0
  %7918 = vmatpush.bf16.msra.mxu0 0
  %7919 = vmatpush.bf16.msra.mxu0 0
  %7920 = vmatpush.bf16.msra.mxu0 0
  %7921 = vmatpush.bf16.msra.mxu0 %v7822
  %7922 = vmatpush.bf16.msra.mxu0 %v7817
  %7923 = vmatmul.bf16.gmra.mxu0 %v7834
  %v7924 = vpop.f32.mrf.mxu0
  %v7925 = vadd.f32 0.0, %v7924
  %v7926 = vpop.f32.mrf.mxu0
  %v7927 = vadd.f32 0.0, %v7926
  %7928 = vmatmul.bf16.gmra.mxu0 %v7837
  %v7929 = vpop.f32.mrf.mxu0
  %v7930 = vadd.f32 0.0, %v7929
  %v7931 = vpop.f32.mrf.mxu0
  %v7932 = vadd.f32 0.0, %v7931
  %7933 = vdwg.mxu0
  %v7934 = vmax.f32 %v7849, 0.0
  %v7935 = vmax.f32 %v7868, 0.0
  %v7936 = vmax.f32 %v7887, 0.0
  %v7937 = vmax.f32 %v7906, 0.0
  %v7938 = vmax.f32 %v7925, 0.0
  %v7939 = vmax.f32 %v7851, 0.0
  %v7940 = vmax.f32 %v7870, 0.0
  %v7941 = vmax.f32 %v7889, 0.0
  %v7942 = vmax.f32 %v7908, 0.0
  %v7943 = vmax.f32 %v7927, 0.0
  %v7944 = vmax.f32 %v7854, 0.0
  %v7945 = vmax.f32 %v7873, 0.0
  %v7946 = vmax.f32 %v7892, 0.0
  %v7947 = vmax.f32 %v7911, 0.0
  %v7948 = vmax.f32 %v7930, 0.0
  %v7949 = vmax.f32 %v7856, 0.0
  %v7950 = vmax.f32 %v7875, 0.0
  %v7951 = vmax.f32 %v7894, 0.0
  %v7952 = vmax.f32 %v7913, 0.0
  %v7953 = vmax.f32 %v7932, 0.0
  %v7954 = vmul.f32 %v7934, %v3318
  %v7955 = vmul.f32 %v7935, %v3319
  %v7956 = vmul.f32 %v7936, %v3320
  %v7957 = vmul.f32 %v7937, %v3321
  %v7958 = vmul.f32 %v7938, %v3322
  %v7959 = vmul.f32 %v7939, %v3318
  %v7960 = vmul.f32 %v7940, %v3319
  %v7961 = vmul.f32 %v7941, %v3320
  %v7962 = vmul.f32 %v7942, %v3321
  %v7963 = vmul.f32 %v7943, %v3322
  %v7964 = vmul.f32 %v7944, %v3318
  %v7965 = vmul.f32 %v7945, %v3319
  %v7966 = vmul.f32 %v7946, %v3320
  %v7967 = vmul.f32 %v7947, %v3321
  %v7968 = vmul.f32 %v7948, %v3322
  %v7969 = vmul.f32 %v7949, %v3318
  %v7970 = vmul.f32 %v7950, %v3319
  %v7971 = vmul.f32 %v7951, %v3320
  %v7972 = vmul.f32 %v7952, %v3321
  %v7973 = vmul.f32 %v7953, %v3322
  %v7974 = vadd.f32 %v7954, %v7955
  %v7975 = vadd.f32 %v7974, %v7956
  %v7976 = vadd.f32 %v7975, %v7957
  %v7977 = vadd.f32 %v7976, %v7958
  %7978 = vadd.xlane.f32.xlu0 %v7977
  %v7979 = vpop.xlane.xlu0 %7978
  %v7980 = vadd.f32 %v7959, %v7960
  %v7981 = vadd.f32 %v7980, %v7961
  %v7982 = vadd.f32 %v7981, %v7962
  %v7983 = vadd.f32 %v7982, %v7963
  %7984 = vadd.xlane.f32.xlu0 %v7983
  %v7985 = vpop.xlane.xlu0 %7984
  %v7986 = vadd.f32 %v7964, %v7965
  %v7987 = vadd.f32 %v7986, %v7966
  %v7988 = vadd.f32 %v7987, %v7967
  %v7989 = vadd.f32 %v7988, %v7968
  %7990 = vadd.xlane.f32.xlu0 %v7989
  %v7991 = vpop.xlane.xlu0 %7990
  %v7992 = vadd.f32 %v7969, %v7970
  %v7993 = vadd.f32 %v7992, %v7971
  %v7994 = vadd.f32 %v7993, %v7972
  %v7995 = vadd.f32 %v7994, %v7973
  %7996 = vadd.xlane.f32.xlu0 %v7995
  %v7997 = vpop.xlane.xlu0 %7996
  %v7998 = vld [vmem:[#allocation2 + $0x28] sm:$0xff]
  %v7999 = vld [vmem:[#allocation2 + $0x30] sm:$0xff]
  %v8000 = vld [vmem:[#allocation2 + $0x38] sm:$0xff]
  %v8001 = vld [vmem:[#allocation2 + $0x40] sm:$0xff]
  %v8002 = vld [vmem:[#allocation2 + $0x48] sm:$0xff]
  %v8003 = vld [vmem:[#allocation2 + $0x170] sm:$0xff]
  %v8004 = vld [vmem:[#allocation2 + $0x178] sm:$0xff]
  %v8005 = vld [vmem:[#allocation2 + $0x180] sm:$0xff]
  %v8006 = vld [vmem:[#allocation2 + $0x188] sm:$0xff]
  %v8007 = vld [vmem:[#allocation2 + $0x190] sm:$0xff]
  %v8008 = vld [vmem:[#allocation2 + $0x2b8] sm:$0xff]
  %v8009 = vld [vmem:[#allocation2 + $0x2c0] sm:$0xff]
  %v8010 = vld [vmem:[#allocation2 + $0x2c8] sm:$0xff]
  %v8011 = vld [vmem:[#allocation2 + $0x2d0] sm:$0xff]
  %v8012 = vld [vmem:[#allocation2 + $0x2d8] sm:$0xff]
  %v8013 = vld [vmem:[#allocation2 + $0x400] sm:$0xff]
  %v8014 = vld [vmem:[#allocation2 + $0x408] sm:$0xff]
  %v8015 = vld [vmem:[#allocation2 + $0x410] sm:$0xff]
  %v8016 = vld [vmem:[#allocation2 + $0x418] sm:$0xff]
  %v8017 = vld [vmem:[#allocation2 + $0x420] sm:$0xff]
  %v8018 = vpack.c.bf16 %v8003, %v7998
  %v8019 = vpack.c.bf16 %v8004, %v7999
  %v8020 = vpack.c.bf16 %v8005, %v8000
  %v8021 = vpack.c.bf16 %v8006, %v8001
  %v8022 = vpack.c.bf16 %v8007, %v8002
  %v8023 = vpack.c.bf16 %v8013, %v8008
  %v8024 = vpack.c.bf16 %v8014, %v8009
  %v8025 = vpack.c.bf16 %v8015, %v8010
  %v8026 = vpack.c.bf16 %v8016, %v8011
  %v8027 = vpack.c.bf16 %v8017, %v8012
  %8028 = vmatpush.bf16.msra.mxu0 0
  %8029 = vmatpush.bf16.msra.mxu0 0
  %8030 = vmatpush.bf16.msra.mxu0 0
  %8031 = vmatpush.bf16.msra.mxu0 0
  %8032 = vmatpush.bf16.msra.mxu0 0
  %8033 = vmatpush.bf16.msra.mxu0 0
  %8034 = vmatpush.bf16.msra.mxu0 %v8023
  %8035 = vmatpush.bf16.msra.mxu0 %v8018
  %8036 = vmatmul.bf16.gmra.mxu0 %v7834
  %v8037 = vpop.f32.mrf.mxu0
  %v8038 = vadd.f32 0.0, %v8037
  %v8039 = vpop.f32.mrf.mxu0
  %v8040 = vadd.f32 0.0, %v8039
  %8041 = vmatmul.bf16.gmra.mxu0 %v7837
  %v8042 = vpop.f32.mrf.mxu0
  %v8043 = vadd.f32 0.0, %v8042
  %v8044 = vpop.f32.mrf.mxu0
  %v8045 = vadd.f32 0.0, %v8044
  %8046 = vdwg.mxu0
  %8047 = vmatpush.bf16.msra.mxu0 0
  %8048 = vmatpush.bf16.msra.mxu0 0
  %8049 = vmatpush.bf16.msra.mxu0 0
  %8050 = vmatpush.bf16.msra.mxu0 0
  %8051 = vmatpush.bf16.msra.mxu0 0
  %8052 = vmatpush.bf16.msra.mxu0 0
  %8053 = vmatpush.bf16.msra.mxu0 %v8024
  %8054 = vmatpush.bf16.msra.mxu0 %v8019
  %8055 = vmatmul.bf16.gmra.mxu0 %v7834
  %v8056 = vpop.f32.mrf.mxu0
  %v8057 = vadd.f32 0.0, %v8056
  %v8058 = vpop.f32.mrf.mxu0
  %v8059 = vadd.f32 0.0, %v8058
  %8060 = vmatmul.bf16.gmra.mxu0 %v7837
  %v8061 = vpop.f32.mrf.mxu0
  %v8062 = vadd.f32 0.0, %v8061
  %v8063 = vpop.f32.mrf.mxu0
  %v8064 = vadd.f32 0.0, %v8063
  %8065 = vdwg.mxu0
  %8066 = vmatpush.bf16.msra.mxu0 0
  %8067 = vmatpush.bf16.msra.mxu0 0
  %8068 = vmatpush.bf16.msra.mxu0 0
  %8069 = vmatpush.bf16.msra.mxu0 0
  %8070 = vmatpush.bf16.msra.mxu0 0
  %8071 = vmatpush.bf16.msra.mxu0 0
  %8072 = vmatpush.bf16.msra.mxu0 %v8025
  %8073 = vmatpush.bf16.msra.mxu0 %v8020
  %8074 = vmatmul.bf16.gmra.mxu0 %v7834
  %v8075 = vpop.f32.mrf.mxu0
  %v8076 = vadd.f32 0.0, %v8075
  %v8077 = vpop.f32.mrf.mxu0
  %v8078 = vadd.f32 0.0, %v8077
  %8079 = vmatmul.bf16.gmra.mxu0 %v7837
  %v8080 = vpop.f32.mrf.mxu0
  %v8081 = vadd.f32 0.0, %v8080
  %v8082 = vpop.f32.mrf.mxu0
  %v8083 = vadd.f32 0.0, %v8082
  %8084 = vdwg.mxu0
  %8085 = vmatpush.bf16.msra.mxu0 0
  %8086 = vmatpush.bf16.msra.mxu0 0
  %8087 = vmatpush.bf16.msra.mxu0 0
  %8088 = vmatpush.bf16.msra.mxu0 0
  %8089 = vmatpush.bf16.msra.mxu0 0
  %8090 = vmatpush.bf16.msra.mxu0 0
  %8091 = vmatpush.bf16.msra.mxu0 %v8026
  %8092 = vmatpush.bf16.msra.mxu0 %v8021
  %8093 = vmatmul.bf16.gmra.mxu0 %v7834
  %v8094 = vpop.f32.mrf.mxu0
  %v8095 = vadd.f32 0.0, %v8094
  %v8096 = vpop.f32.mrf.mxu0
  %v8097 = vadd.f32 0.0, %v8096
  %8098 = vmatmul.bf16.gmra.mxu0 %v7837
  %v8099 = vpop.f32.mrf.mxu0
  %v8100 = vadd.f32 0.0, %v8099
  %v8101 = vpop.f32.mrf.mxu0
  %v8102 = vadd.f32 0.0, %v8101
  %8103 = vdwg.mxu0
  %8104 = vmatpush.bf16.msra.mxu0 0
  %8105 = vmatpush.bf16.msra.mxu0 0
  %8106 = vmatpush.bf16.msra.mxu0 0
  %8107 = vmatpush.bf16.msra.mxu0 0
  %8108 = vmatpush.bf16.msra.mxu0 0
  %8109 = vmatpush.bf16.msra.mxu0 0
  %8110 = vmatpush.bf16.msra.mxu0 %v8027
  %8111 = vmatpush.bf16.msra.mxu0 %v8022
  %8112 = vmatmul.bf16.gmra.mxu0 %v7834
  %v8113 = vpop.f32.mrf.mxu0
  %v8114 = vadd.f32 0.0, %v8113
  %v8115 = vpop.f32.mrf.mxu0
  %v8116 = vadd.f32 0.0, %v8115
  %8117 = vmatmul.bf16.gmra.mxu0 %v7837
  %v8118 = vpop.f32.mrf.mxu0
  %v8119 = vadd.f32 0.0, %v8118
  %v8120 = vpop.f32.mrf.mxu0
  %v8121 = vadd.f32 0.0, %v8120
  %8122 = vdwg.mxu0
  %v8123 = vmax.f32 %v8038, 0.0
  %v8124 = vmax.f32 %v8057, 0.0
  %v8125 = vmax.f32 %v8076, 0.0
  %v8126 = vmax.f32 %v8095, 0.0
  %v8127 = vmax.f32 %v8114, 0.0
  %v8128 = vmax.f32 %v8040, 0.0
  %v8129 = vmax.f32 %v8059, 0.0
  %v8130 = vmax.f32 %v8078, 0.0
  %v8131 = vmax.f32 %v8097, 0.0
  %v8132 = vmax.f32 %v8116, 0.0
  %v8133 = vmax.f32 %v8043, 0.0
  %v8134 = vmax.f32 %v8062, 0.0
  %v8135 = vmax.f32 %v8081, 0.0
  %v8136 = vmax.f32 %v8100, 0.0
  %v8137 = vmax.f32 %v8119, 0.0
  %v8138 = vmax.f32 %v8045, 0.0
  %v8139 = vmax.f32 %v8064, 0.0
  %v8140 = vmax.f32 %v8083, 0.0
  %v8141 = vmax.f32 %v8102, 0.0
  %v8142 = vmax.f32 %v8121, 0.0
  %v8143 = vmul.f32 %v8123, %v3318
  %v8144 = vmul.f32 %v8124, %v3319
  %v8145 = vmul.f32 %v8125, %v3320
  %v8146 = vmul.f32 %v8126, %v3321
  %v8147 = vmul.f32 %v8127, %v3322
  %v8148 = vmul.f32 %v8128, %v3318
  %v8149 = vmul.f32 %v8129, %v3319
  %v8150 = vmul.f32 %v8130, %v3320
  %v8151 = vmul.f32 %v8131, %v3321
  %v8152 = vmul.f32 %v8132, %v3322
  %v8153 = vmul.f32 %v8133, %v3318
  %v8154 = vmul.f32 %v8134, %v3319
  %v8155 = vmul.f32 %v8135, %v3320
  %v8156 = vmul.f32 %v8136, %v3321
  %v8157 = vmul.f32 %v8137, %v3322
  %v8158 = vmul.f32 %v8138, %v3318
  %v8159 = vmul.f32 %v8139, %v3319
  %v8160 = vmul.f32 %v8140, %v3320
  %v8161 = vmul.f32 %v8141, %v3321
  %v8162 = vmul.f32 %v8142, %v3322
  %v8163 = vadd.f32 %v8143, %v8144
  %v8164 = vadd.f32 %v8163, %v8145
  %v8165 = vadd.f32 %v8164, %v8146
  %v8166 = vadd.f32 %v8165, %v8147
  %8167 = vadd.xlane.f32.xlu0 %v8166
  %v8168 = vpop.xlane.xlu0 %8167
  %v8169 = vadd.f32 %v8148, %v8149
  %v8170 = vadd.f32 %v8169, %v8150
  %v8171 = vadd.f32 %v8170, %v8151
  %v8172 = vadd.f32 %v8171, %v8152
  %8173 = vadd.xlane.f32.xlu0 %v8172
  %v8174 = vpop.xlane.xlu0 %8173
  %v8175 = vadd.f32 %v8153, %v8154
  %v8176 = vadd.f32 %v8175, %v8155
  %v8177 = vadd.f32 %v8176, %v8156
  %v8178 = vadd.f32 %v8177, %v8157
  %8179 = vadd.xlane.f32.xlu0 %v8178
  %v8180 = vpop.xlane.xlu0 %8179
  %v8181 = vadd.f32 %v8158, %v8159
  %v8182 = vadd.f32 %v8181, %v8160
  %v8183 = vadd.f32 %v8182, %v8161
  %v8184 = vadd.f32 %v8183, %v8162
  %8185 = vadd.xlane.f32.xlu0 %v8184
  %v8186 = vpop.xlane.xlu0 %8185
  %v8187 = vld [vmem:[#allocation2 + $0x50] sm:$0xff]
  %v8188 = vld [vmem:[#allocation2 + $0x58] sm:$0xff]
  %v8189 = vld [vmem:[#allocation2 + $0x60] sm:$0xff]
  %v8190 = vld [vmem:[#allocation2 + $0x68] sm:$0xff]
  %v8191 = vld [vmem:[#allocation2 + $0x70] sm:$0xff]
  %v8192 = vld [vmem:[#allocation2 + $0x198] sm:$0xff]
  %v8193 = vld [vmem:[#allocation2 + $0x1a0] sm:$0xff]
  %v8194 = vld [vmem:[#allocation2 + $0x1a8] sm:$0xff]
  %v8195 = vld [vmem:[#allocation2 + $0x1b0] sm:$0xff]
  %v8196 = vld [vmem:[#allocation2 + $0x1b8] sm:$0xff]
  %v8197 = vld [vmem:[#allocation2 + $0x2e0] sm:$0xff]
  %v8198 = vld [vmem:[#allocation2 + $0x2e8] sm:$0xff]
  %v8199 = vld [vmem:[#allocation2 + $0x2f0] sm:$0xff]
  %v8200 = vld [vmem:[#allocation2 + $0x2f8] sm:$0xff]
  %v8201 = vld [vmem:[#allocation2 + $0x300] sm:$0xff]
  %v8202 = vld [vmem:[#allocation2 + $0x428] sm:$0xff]
  %v8203 = vld [vmem:[#allocation2 + $0x430] sm:$0xff]
  %v8204 = vld [vmem:[#allocation2 + $0x438] sm:$0xff]
  %v8205 = vld [vmem:[#allocation2 + $0x440] sm:$0xff]
  %v8206 = vld [vmem:[#allocation2 + $0x448] sm:$0xff]
  %v8207 = vpack.c.bf16 %v8192, %v8187
  %v8208 = vpack.c.bf16 %v8193, %v8188
  %v8209 = vpack.c.bf16 %v8194, %v8189
  %v8210 = vpack.c.bf16 %v8195, %v8190
  %v8211 = vpack.c.bf16 %v8196, %v8191
  %v8212 = vpack.c.bf16 %v8202, %v8197
  %v8213 = vpack.c.bf16 %v8203, %v8198
  %v8214 = vpack.c.bf16 %v8204, %v8199
  %v8215 = vpack.c.bf16 %v8205, %v8200
  %v8216 = vpack.c.bf16 %v8206, %v8201
  %8217 = vmatpush.bf16.msra.mxu0 0
  %8218 = vmatpush.bf16.msra.mxu0 0
  %8219 = vmatpush.bf16.msra.mxu0 0
  %8220 = vmatpush.bf16.msra.mxu0 0
  %8221 = vmatpush.bf16.msra.mxu0 0
  %8222 = vmatpush.bf16.msra.mxu0 0
  %8223 = vmatpush.bf16.msra.mxu0 %v8212
  %8224 = vmatpush.bf16.msra.mxu0 %v8207
  %8225 = vmatmul.bf16.gmra.mxu0 %v7834
  %v8226 = vpop.f32.mrf.mxu0
  %v8227 = vadd.f32 0.0, %v8226
  %v8228 = vpop.f32.mrf.mxu0
  %v8229 = vadd.f32 0.0, %v8228
  %8230 = vmatmul.bf16.gmra.mxu0 %v7837
  %v8231 = vpop.f32.mrf.mxu0
  %v8232 = vadd.f32 0.0, %v8231
  %v8233 = vpop.f32.mrf.mxu0
  %v8234 = vadd.f32 0.0, %v8233
  %8235 = vdwg.mxu0
  %8236 = vmatpush.bf16.msra.mxu0 0
  %8237 = vmatpush.bf16.msra.mxu0 0
  %8238 = vmatpush.bf16.msra.mxu0 0
  %8239 = vmatpush.bf16.msra.mxu0 0
  %8240 = vmatpush.bf16.msra.mxu0 0
  %8241 = vmatpush.bf16.msra.mxu0 0
  %8242 = vmatpush.bf16.msra.mxu0 %v8213
  %8243 = vmatpush.bf16.msra.mxu0 %v8208
  %8244 = vmatmul.bf16.gmra.mxu0 %v7834
  %v8245 = vpop.f32.mrf.mxu0
  %v8246 = vadd.f32 0.0, %v8245
  %v8247 = vpop.f32.mrf.mxu0
  %v8248 = vadd.f32 0.0, %v8247
  %8249 = vmatmul.bf16.gmra.mxu0 %v7837
  %v8250 = vpop.f32.mrf.mxu0
  %v8251 = vadd.f32 0.0, %v8250
  %v8252 = vpop.f32.mrf.mxu0
  %v8253 = vadd.f32 0.0, %v8252
  %8254 = vdwg.mxu0
  %8255 = vmatpush.bf16.msra.mxu0 0
  %8256 = vmatpush.bf16.msra.mxu0 0
  %8257 = vmatpush.bf16.msra.mxu0 0
  %8258 = vmatpush.bf16.msra.mxu0 0
  %8259 = vmatpush.bf16.msra.mxu0 0
  %8260 = vmatpush.bf16.msra.mxu0 0
  %8261 = vmatpush.bf16.msra.mxu0 %v8214
  %8262 = vmatpush.bf16.msra.mxu0 %v8209
  %8263 = vmatmul.bf16.gmra.mxu0 %v7834
  %v8264 = vpop.f32.mrf.mxu0
  %v8265 = vadd.f32 0.0, %v8264
  %v8266 = vpop.f32.mrf.mxu0
  %v8267 = vadd.f32 0.0, %v8266
  %8268 = vmatmul.bf16.gmra.mxu0 %v7837
  %v8269 = vpop.f32.mrf.mxu0
  %v8270 = vadd.f32 0.0, %v8269
  %v8271 = vpop.f32.mrf.mxu0
  %v8272 = vadd.f32 0.0, %v8271
  %8273 = vdwg.mxu0
  %8274 = vmatpush.bf16.msra.mxu0 0
  %8275 = vmatpush.bf16.msra.mxu0 0
  %8276 = vmatpush.bf16.msra.mxu0 0
  %8277 = vmatpush.bf16.msra.mxu0 0
  %8278 = vmatpush.bf16.msra.mxu0 0
  %8279 = vmatpush.bf16.msra.mxu0 0
  %8280 = vmatpush.bf16.msra.mxu0 %v8215
  %8281 = vmatpush.bf16.msra.mxu0 %v8210
  %8282 = vmatmul.bf16.gmra.mxu0 %v7834
  %v8283 = vpop.f32.mrf.mxu0
  %v8284 = vadd.f32 0.0, %v8283
  %v8285 = vpop.f32.mrf.mxu0
  %v8286 = vadd.f32 0.0, %v8285
  %8287 = vmatmul.bf16.gmra.mxu0 %v7837
  %v8288 = vpop.f32.mrf.mxu0
  %v8289 = vadd.f32 0.0, %v8288
  %v8290 = vpop.f32.mrf.mxu0
  %v8291 = vadd.f32 0.0, %v8290
  %8292 = vdwg.mxu0
  %8293 = vmatpush.bf16.msra.mxu0 0
  %8294 = vmatpush.bf16.msra.mxu0 0
  %8295 = vmatpush.bf16.msra.mxu0 0
  %8296 = vmatpush.bf16.msra.mxu0 0
  %8297 = vmatpush.bf16.msra.mxu0 0
  %8298 = vmatpush.bf16.msra.mxu0 0
  %8299 = vmatpush.bf16.msra.mxu0 %v8216
  %8300 = vmatpush.bf16.msra.mxu0 %v8211
  %8301 = vmatmul.bf16.gmra.mxu0 %v7834
  %v8302 = vpop.f32.mrf.mxu0
  %v8303 = vadd.f32 0.0, %v8302
  %v8304 = vpop.f32.mrf.mxu0
  %v8305 = vadd.f32 0.0, %v8304
  %8306 = vmatmul.bf16.gmra.mxu0 %v7837
  %v8307 = vpop.f32.mrf.mxu0
  %v8308 = vadd.f32 0.0, %v8307
  %v8309 = vpop.f32.mrf.mxu0
  %v8310 = vadd.f32 0.0, %v8309
  %8311 = vdwg.mxu0
  %v8312 = vmax.f32 %v8227, 0.0
  %v8313 = vmax.f32 %v8246, 0.0
  %v8314 = vmax.f32 %v8265, 0.0
  %v8315 = vmax.f32 %v8284, 0.0
  %v8316 = vmax.f32 %v8303, 0.0
  %v8317 = vmax.f32 %v8229, 0.0
  %v8318 = vmax.f32 %v8248, 0.0
  %v8319 = vmax.f32 %v8267, 0.0
  %v8320 = vmax.f32 %v8286, 0.0
  %v8321 = vmax.f32 %v8305, 0.0
  %v8322 = vmax.f32 %v8232, 0.0
  %v8323 = vmax.f32 %v8251, 0.0
  %v8324 = vmax.f32 %v8270, 0.0
  %v8325 = vmax.f32 %v8289, 0.0
  %v8326 = vmax.f32 %v8308, 0.0
  %v8327 = vmax.f32 %v8234, 0.0
  %v8328 = vmax.f32 %v8253, 0.0
  %v8329 = vmax.f32 %v8272, 0.0
  %v8330 = vmax.f32 %v8291, 0.0
  %v8331 = vmax.f32 %v8310, 0.0
  %v8332 = vmul.f32 %v8312, %v3318
  %v8333 = vmul.f32 %v8313, %v3319
  %v8334 = vmul.f32 %v8314, %v3320
  %v8335 = vmul.f32 %v8315, %v3321
  %v8336 = vmul.f32 %v8316, %v3322
  %v8337 = vmul.f32 %v8317, %v3318
  %v8338 = vmul.f32 %v8318, %v3319
  %v8339 = vmul.f32 %v8319, %v3320
  %v8340 = vmul.f32 %v8320, %v3321
  %v8341 = vmul.f32 %v8321, %v3322
  %v8342 = vmul.f32 %v8322, %v3318
  %v8343 = vmul.f32 %v8323, %v3319
  %v8344 = vmul.f32 %v8324, %v3320
  %v8345 = vmul.f32 %v8325, %v3321
  %v8346 = vmul.f32 %v8326, %v3322
  %v8347 = vmul.f32 %v8327, %v3318
  %v8348 = vmul.f32 %v8328, %v3319
  %v8349 = vmul.f32 %v8329, %v3320
  %v8350 = vmul.f32 %v8330, %v3321
  %v8351 = vmul.f32 %v8331, %v3322
  %v8352 = vadd.f32 %v8332, %v8333
  %v8353 = vadd.f32 %v8352, %v8334
  %v8354 = vadd.f32 %v8353, %v8335
  %v8355 = vadd.f32 %v8354, %v8336
  %8356 = vadd.xlane.f32.xlu0 %v8355
  %v8357 = vpop.xlane.xlu0 %8356
  %v8358 = vadd.f32 %v8337, %v8338
  %v8359 = vadd.f32 %v8358, %v8339
  %v8360 = vadd.f32 %v8359, %v8340
  %v8361 = vadd.f32 %v8360, %v8341
  %8362 = vadd.xlane.f32.xlu0 %v8361
  %v8363 = vpop.xlane.xlu0 %8362
  %v8364 = vadd.f32 %v8342, %v8343
  %v8365 = vadd.f32 %v8364, %v8344
  %v8366 = vadd.f32 %v8365, %v8345
  %v8367 = vadd.f32 %v8366, %v8346
  %8368 = vadd.xlane.f32.xlu0 %v8367
  %v8369 = vpop.xlane.xlu0 %8368
  %v8370 = vadd.f32 %v8347, %v8348
  %v8371 = vadd.f32 %v8370, %v8349
  %v8372 = vadd.f32 %v8371, %v8350
  %v8373 = vadd.f32 %v8372, %v8351
  %8374 = vadd.xlane.f32.xlu0 %v8373
  %v8375 = vpop.xlane.xlu0 %8374
  %v8376 = vld [vmem:[#allocation2 + $0x78] sm:$0xff]
  %v8377 = vld [vmem:[#allocation2 + $0x80] sm:$0xff]
  %v8378 = vld [vmem:[#allocation2 + $0x88] sm:$0xff]
  %v8379 = vld [vmem:[#allocation2 + $0x90] sm:$0xff]
  %v8380 = vld [vmem:[#allocation2 + $0x98] sm:$0xff]
  %v8381 = vld [vmem:[#allocation2 + $0x1c0] sm:$0xff]
  %v8382 = vld [vmem:[#allocation2 + $0x1c8] sm:$0xff]
  %v8383 = vld [vmem:[#allocation2 + $0x1d0] sm:$0xff]
  %v8384 = vld [vmem:[#allocation2 + $0x1d8] sm:$0xff]
  %v8385 = vld [vmem:[#allocation2 + $0x1e0] sm:$0xff]
  %v8386 = vld [vmem:[#allocation2 + $0x308] sm:$0xff]
  %v8387 = vld [vmem:[#allocation2 + $0x310] sm:$0xff]
  %v8388 = vld [vmem:[#allocation2 + $0x318] sm:$0xff]
  %v8389 = vld [vmem:[#allocation2 + $0x320] sm:$0xff]
  %v8390 = vld [vmem:[#allocation2 + $0x328] sm:$0xff]
  %v8391 = vld [vmem:[#allocation2 + $0x450] sm:$0xff]
  %v8392 = vld [vmem:[#allocation2 + $0x458] sm:$0xff]
  %v8393 = vld [vmem:[#allocation2 + $0x460] sm:$0xff]
  %v8394 = vld [vmem:[#allocation2 + $0x468] sm:$0xff]
  %v8395 = vld [vmem:[#allocation2 + $0x470] sm:$0xff]
  %v8396 = vpack.c.bf16 %v8381, %v8376
  %v8397 = vpack.c.bf16 %v8382, %v8377
  %v8398 = vpack.c.bf16 %v8383, %v8378
  %v8399 = vpack.c.bf16 %v8384, %v8379
  %v8400 = vpack.c.bf16 %v8385, %v8380
  %v8401 = vpack.c.bf16 %v8391, %v8386
  %v8402 = vpack.c.bf16 %v8392, %v8387
  %v8403 = vpack.c.bf16 %v8393, %v8388
  %v8404 = vpack.c.bf16 %v8394, %v8389
  %v8405 = vpack.c.bf16 %v8395, %v8390
  %8406 = vmatpush.bf16.msra.mxu0 0
  %8407 = vmatpush.bf16.msra.mxu0 0
  %8408 = vmatpush.bf16.msra.mxu0 0
  %8409 = vmatpush.bf16.msra.mxu0 0
  %8410 = vmatpush.bf16.msra.mxu0 0
  %8411 = vmatpush.bf16.msra.mxu0 0
  %8412 = vmatpush.bf16.msra.mxu0 %v8401
  %8413 = vmatpush.bf16.msra.mxu0 %v8396
  %8414 = vmatmul.bf16.gmra.mxu0 %v7834
  %v8415 = vpop.f32.mrf.mxu0
  %v8416 = vadd.f32 0.0, %v8415
  %v8417 = vpop.f32.mrf.mxu0
  %v8418 = vadd.f32 0.0, %v8417
  %8419 = vmatmul.bf16.gmra.mxu0 %v7837
  %v8420 = vpop.f32.mrf.mxu0
  %v8421 = vadd.f32 0.0, %v8420
  %v8422 = vpop.f32.mrf.mxu0
  %v8423 = vadd.f32 0.0, %v8422
  %8424 = vdwg.mxu0
  %8425 = vmatpush.bf16.msra.mxu0 0
  %8426 = vmatpush.bf16.msra.mxu0 0
  %8427 = vmatpush.bf16.msra.mxu0 0
  %8428 = vmatpush.bf16.msra.mxu0 0
  %8429 = vmatpush.bf16.msra.mxu0 0
  %8430 = vmatpush.bf16.msra.mxu0 0
  %8431 = vmatpush.bf16.msra.mxu0 %v8402
  %8432 = vmatpush.bf16.msra.mxu0 %v8397
  %8433 = vmatmul.bf16.gmra.mxu0 %v7834
  %v8434 = vpop.f32.mrf.mxu0
  %v8435 = vadd.f32 0.0, %v8434
  %v8436 = vpop.f32.mrf.mxu0
  %v8437 = vadd.f32 0.0, %v8436
  %8438 = vmatmul.bf16.gmra.mxu0 %v7837
  %v8439 = vpop.f32.mrf.mxu0
  %v8440 = vadd.f32 0.0, %v8439
  %v8441 = vpop.f32.mrf.mxu0
  %v8442 = vadd.f32 0.0, %v8441
  %8443 = vdwg.mxu0
  %8444 = vmatpush.bf16.msra.mxu0 0
  %8445 = vmatpush.bf16.msra.mxu0 0
  %8446 = vmatpush.bf16.msra.mxu0 0
  %8447 = vmatpush.bf16.msra.mxu0 0
  %8448 = vmatpush.bf16.msra.mxu0 0
  %8449 = vmatpush.bf16.msra.mxu0 0
  %8450 = vmatpush.bf16.msra.mxu0 %v8403
  %8451 = vmatpush.bf16.msra.mxu0 %v8398
  %8452 = vmatmul.bf16.gmra.mxu0 %v7834
  %v8453 = vpop.f32.mrf.mxu0
  %v8454 = vadd.f32 0.0, %v8453
  %v8455 = vpop.f32.mrf.mxu0
  %v8456 = vadd.f32 0.0, %v8455
  %8457 = vmatmul.bf16.gmra.mxu0 %v7837
  %v8458 = vpop.f32.mrf.mxu0
  %v8459 = vadd.f32 0.0, %v8458
  %v8460 = vpop.f32.mrf.mxu0
  %v8461 = vadd.f32 0.0, %v8460
  %8462 = vdwg.mxu0
  %8463 = vmatpush.bf16.msra.mxu0 0
  %8464 = vmatpush.bf16.msra.mxu0 0
  %8465 = vmatpush.bf16.msra.mxu0 0
  %8466 = vmatpush.bf16.msra.mxu0 0
  %8467 = vmatpush.bf16.msra.mxu0 0
  %8468 = vmatpush.bf16.msra.mxu0 0
  %8469 = vmatpush.bf16.msra.mxu0 %v8404
  %8470 = vmatpush.bf16.msra.mxu0 %v8399
  %8471 = vmatmul.bf16.gmra.mxu0 %v7834
  %v8472 = vpop.f32.mrf.mxu0
  %v8473 = vadd.f32 0.0, %v8472
  %v8474 = vpop.f32.mrf.mxu0
  %v8475 = vadd.f32 0.0, %v8474
  %8476 = vmatmul.bf16.gmra.mxu0 %v7837
  %v8477 = vpop.f32.mrf.mxu0
  %v8478 = vadd.f32 0.0, %v8477
  %v8479 = vpop.f32.mrf.mxu0
  %v8480 = vadd.f32 0.0, %v8479
  %8481 = vdwg.mxu0
  %8482 = vmatpush.bf16.msra.mxu0 0
  %8483 = vmatpush.bf16.msra.mxu0 0
  %8484 = vmatpush.bf16.msra.mxu0 0
  %8485 = vmatpush.bf16.msra.mxu0 0
  %8486 = vmatpush.bf16.msra.mxu0 0
  %8487 = vmatpush.bf16.msra.mxu0 0
  %8488 = vmatpush.bf16.msra.mxu0 %v8405
  %8489 = vmatpush.bf16.msra.mxu0 %v8400
  %8490 = vmatmul.bf16.gmra.mxu0 %v7834
  %v8491 = vpop.f32.mrf.mxu0
  %v8492 = vadd.f32 0.0, %v8491
  %v8493 = vpop.f32.mrf.mxu0
  %v8494 = vadd.f32 0.0, %v8493
  %8495 = vmatmul.bf16.gmra.mxu0 %v7837
  %v8496 = vpop.f32.mrf.mxu0
  %v8497 = vadd.f32 0.0, %v8496
  %v8498 = vpop.f32.mrf.mxu0
  %v8499 = vadd.f32 0.0, %v8498
  %8500 = vdwg.mxu0
  %v8501 = vmax.f32 %v8416, 0.0
  %v8502 = vmax.f32 %v8435, 0.0
  %v8503 = vmax.f32 %v8454, 0.0
  %v8504 = vmax.f32 %v8473, 0.0
  %v8505 = vmax.f32 %v8492, 0.0
  %v8506 = vmax.f32 %v8418, 0.0
  %v8507 = vmax.f32 %v8437, 0.0
  %v8508 = vmax.f32 %v8456, 0.0
  %v8509 = vmax.f32 %v8475, 0.0
  %v8510 = vmax.f32 %v8494, 0.0
  %v8511 = vmax.f32 %v8421, 0.0
  %v8512 = vmax.f32 %v8440, 0.0
  %v8513 = vmax.f32 %v8459, 0.0
  %v8514 = vmax.f32 %v8478, 0.0
  %v8515 = vmax.f32 %v8497, 0.0
  %v8516 = vmax.f32 %v8423, 0.0
  %v8517 = vmax.f32 %v8442, 0.0
  %v8518 = vmax.f32 %v8461, 0.0
  %v8519 = vmax.f32 %v8480, 0.0
  %v8520 = vmax.f32 %v8499, 0.0
  %v8521 = vmul.f32 %v8501, %v3318
  %v8522 = vmul.f32 %v8502, %v3319
  %v8523 = vmul.f32 %v8503, %v3320
  %v8524 = vmul.f32 %v8504, %v3321
  %v8525 = vmul.f32 %v8505, %v3322
  %v8526 = vmul.f32 %v8506, %v3318
  %v8527 = vmul.f32 %v8507, %v3319
  %v8528 = vmul.f32 %v8508, %v3320
  %v8529 = vmul.f32 %v8509, %v3321
  %v8530 = vmul.f32 %v8510, %v3322
  %v8531 = vmul.f32 %v8511, %v3318
  %v8532 = vmul.f32 %v8512, %v3319
  %v8533 = vmul.f32 %v8513, %v3320
  %v8534 = vmul.f32 %v8514, %v3321
  %v8535 = vmul.f32 %v8515, %v3322
  %v8536 = vmul.f32 %v8516, %v3318
  %v8537 = vmul.f32 %v8517, %v3319
  %v8538 = vmul.f32 %v8518, %v3320
  %v8539 = vmul.f32 %v8519, %v3321
  %v8540 = vmul.f32 %v8520, %v3322
  %v8541 = vadd.f32 %v8521, %v8522
  %v8542 = vadd.f32 %v8541, %v8523
  %v8543 = vadd.f32 %v8542, %v8524
  %v8544 = vadd.f32 %v8543, %v8525
  %8545 = vadd.xlane.f32.xlu0 %v8544
  %v8546 = vpop.xlane.xlu0 %8545
  %v8547 = vadd.f32 %v8526, %v8527
  %v8548 = vadd.f32 %v8547, %v8528
  %v8549 = vadd.f32 %v8548, %v8529
  %v8550 = vadd.f32 %v8549, %v8530
  %8551 = vadd.xlane.f32.xlu0 %v8550
  %v8552 = vpop.xlane.xlu0 %8551
  %v8553 = vadd.f32 %v8531, %v8532
  %v8554 = vadd.f32 %v8553, %v8533
  %v8555 = vadd.f32 %v8554, %v8534
  %v8556 = vadd.f32 %v8555, %v8535
  %8557 = vadd.xlane.f32.xlu0 %v8556
  %v8558 = vpop.xlane.xlu0 %8557
  %v8559 = vadd.f32 %v8536, %v8537
  %v8560 = vadd.f32 %v8559, %v8538
  %v8561 = vadd.f32 %v8560, %v8539
  %v8562 = vadd.f32 %v8561, %v8540
  %8563 = vadd.xlane.f32.xlu0 %v8562
  %v8564 = vpop.xlane.xlu0 %8563
  %v8565 = vld [vmem:[#allocation2 + $0xa0] sm:$0xff]
  %v8566 = vld [vmem:[#allocation2 + $0xa8] sm:$0xff]
  %v8567 = vld [vmem:[#allocation2 + $0xb0] sm:$0xff]
  %v8568 = vld [vmem:[#allocation2 + $0xb8] sm:$0xff]
  %v8569 = vld [vmem:[#allocation2 + $0xc0] sm:$0xff]
  %v8570 = vld [vmem:[#allocation2 + $0x1e8] sm:$0xff]
  %v8571 = vld [vmem:[#allocation2 + $0x1f0] sm:$0xff]
  %v8572 = vld [vmem:[#allocation2 + $0x1f8] sm:$0xff]
  %v8573 = vld [vmem:[#allocation2 + $0x200] sm:$0xff]
  %v8574 = vld [vmem:[#allocation2 + $0x208] sm:$0xff]
  %v8575 = vld [vmem:[#allocation2 + $0x330] sm:$0xff]
  %v8576 = vld [vmem:[#allocation2 + $0x338] sm:$0xff]
  %v8577 = vld [vmem:[#allocation2 + $0x340] sm:$0xff]
  %v8578 = vld [vmem:[#allocation2 + $0x348] sm:$0xff]
  %v8579 = vld [vmem:[#allocation2 + $0x350] sm:$0xff]
  %v8580 = vld [vmem:[#allocation2 + $0x478] sm:$0xff]
  %v8581 = vld [vmem:[#allocation2 + $0x480] sm:$0xff]
  %v8582 = vld [vmem:[#allocation2 + $0x488] sm:$0xff]
  %v8583 = vld [vmem:[#allocation2 + $0x490] sm:$0xff]
  %v8584 = vld [vmem:[#allocation2 + $0x498] sm:$0xff]
  %v8585 = vpack.c.bf16 %v8570, %v8565
  %v8586 = vpack.c.bf16 %v8571, %v8566
  %v8587 = vpack.c.bf16 %v8572, %v8567
  %v8588 = vpack.c.bf16 %v8573, %v8568
  %v8589 = vpack.c.bf16 %v8574, %v8569
  %v8590 = vpack.c.bf16 %v8580, %v8575
  %v8591 = vpack.c.bf16 %v8581, %v8576
  %v8592 = vpack.c.bf16 %v8582, %v8577
  %v8593 = vpack.c.bf16 %v8583, %v8578
  %v8594 = vpack.c.bf16 %v8584, %v8579
  %8595 = vmatpush.bf16.msra.mxu0 0
  %8596 = vmatpush.bf16.msra.mxu0 0
  %8597 = vmatpush.bf16.msra.mxu0 0
  %8598 = vmatpush.bf16.msra.mxu0 0
  %8599 = vmatpush.bf16.msra.mxu0 0
  %8600 = vmatpush.bf16.msra.mxu0 0
  %8601 = vmatpush.bf16.msra.mxu0 %v8590
  %8602 = vmatpush.bf16.msra.mxu0 %v8585
  %8603 = vmatmul.bf16.gmra.mxu0 %v7834
  %v8604 = vpop.f32.mrf.mxu0
  %v8605 = vadd.f32 0.0, %v8604
  %v8606 = vpop.f32.mrf.mxu0
  %v8607 = vadd.f32 0.0, %v8606
  %8608 = vmatmul.bf16.gmra.mxu0 %v7837
  %v8609 = vpop.f32.mrf.mxu0
  %v8610 = vadd.f32 0.0, %v8609
  %v8611 = vpop.f32.mrf.mxu0
  %v8612 = vadd.f32 0.0, %v8611
  %8613 = vdwg.mxu0
  %8614 = vmatpush.bf16.msra.mxu0 0
  %8615 = vmatpush.bf16.msra.mxu0 0
  %8616 = vmatpush.bf16.msra.mxu0 0
  %8617 = vmatpush.bf16.msra.mxu0 0
  %8618 = vmatpush.bf16.msra.mxu0 0
  %8619 = vmatpush.bf16.msra.mxu0 0
  %8620 = vmatpush.bf16.msra.mxu0 %v8591
  %8621 = vmatpush.bf16.msra.mxu0 %v8586
  %8622 = vmatmul.bf16.gmra.mxu0 %v7834
  %v8623 = vpop.f32.mrf.mxu0
  %v8624 = vadd.f32 0.0, %v8623
  %v8625 = vpop.f32.mrf.mxu0
  %v8626 = vadd.f32 0.0, %v8625
  %8627 = vmatmul.bf16.gmra.mxu0 %v7837
  %v8628 = vpop.f32.mrf.mxu0
  %v8629 = vadd.f32 0.0, %v8628
  %v8630 = vpop.f32.mrf.mxu0
  %v8631 = vadd.f32 0.0, %v8630
  %8632 = vdwg.mxu0
  %8633 = vmatpush.bf16.msra.mxu0 0
  %8634 = vmatpush.bf16.msra.mxu0 0
  %8635 = vmatpush.bf16.msra.mxu0 0
  %8636 = vmatpush.bf16.msra.mxu0 0
  %8637 = vmatpush.bf16.msra.mxu0 0
  %8638 = vmatpush.bf16.msra.mxu0 0
  %8639 = vmatpush.bf16.msra.mxu0 %v8592
  %8640 = vmatpush.bf16.msra.mxu0 %v8587
  %8641 = vmatmul.bf16.gmra.mxu0 %v7834
  %v8642 = vpop.f32.mrf.mxu0
  %v8643 = vadd.f32 0.0, %v8642
  %v8644 = vpop.f32.mrf.mxu0
  %v8645 = vadd.f32 0.0, %v8644
  %8646 = vmatmul.bf16.gmra.mxu0 %v7837
  %v8647 = vpop.f32.mrf.mxu0
  %v8648 = vadd.f32 0.0, %v8647
  %v8649 = vpop.f32.mrf.mxu0
  %v8650 = vadd.f32 0.0, %v8649
  %8651 = vdwg.mxu0
  %8652 = vmatpush.bf16.msra.mxu0 0
  %8653 = vmatpush.bf16.msra.mxu0 0
  %8654 = vmatpush.bf16.msra.mxu0 0
  %8655 = vmatpush.bf16.msra.mxu0 0
  %8656 = vmatpush.bf16.msra.mxu0 0
  %8657 = vmatpush.bf16.msra.mxu0 0
  %8658 = vmatpush.bf16.msra.mxu0 %v8593
  %8659 = vmatpush.bf16.msra.mxu0 %v8588
  %8660 = vmatmul.bf16.gmra.mxu0 %v7834
  %v8661 = vpop.f32.mrf.mxu0
  %v8662 = vadd.f32 0.0, %v8661
  %v8663 = vpop.f32.mrf.mxu0
  %v8664 = vadd.f32 0.0, %v8663
  %8665 = vmatmul.bf16.gmra.mxu0 %v7837
  %v8666 = vpop.f32.mrf.mxu0
  %v8667 = vadd.f32 0.0, %v8666
  %v8668 = vpop.f32.mrf.mxu0
  %v8669 = vadd.f32 0.0, %v8668
  %8670 = vdwg.mxu0
  %8671 = vmatpush.bf16.msra.mxu0 0
  %8672 = vmatpush.bf16.msra.mxu0 0
  %8673 = vmatpush.bf16.msra.mxu0 0
  %8674 = vmatpush.bf16.msra.mxu0 0
  %8675 = vmatpush.bf16.msra.mxu0 0
  %8676 = vmatpush.bf16.msra.mxu0 0
  %8677 = vmatpush.bf16.msra.mxu0 %v8594
  %8678 = vmatpush.bf16.msra.mxu0 %v8589
  %8679 = vmatmul.bf16.gmra.mxu0 %v7834
  %v8680 = vpop.f32.mrf.mxu0
  %v8681 = vadd.f32 0.0, %v8680
  %v8682 = vpop.f32.mrf.mxu0
  %v8683 = vadd.f32 0.0, %v8682
  %8684 = vmatmul.bf16.gmra.mxu0 %v7837
  %v8685 = vpop.f32.mrf.mxu0
  %v8686 = vadd.f32 0.0, %v8685
  %v8687 = vpop.f32.mrf.mxu0
  %v8688 = vadd.f32 0.0, %v8687
  %8689 = vdwg.mxu0
  %v8690 = vmax.f32 %v8605, 0.0
  %v8691 = vmax.f32 %v8624, 0.0
  %v8692 = vmax.f32 %v8643, 0.0
  %v8693 = vmax.f32 %v8662, 0.0
  %v8694 = vmax.f32 %v8681, 0.0
  %v8695 = vmax.f32 %v8607, 0.0
  %v8696 = vmax.f32 %v8626, 0.0
  %v8697 = vmax.f32 %v8645, 0.0
  %v8698 = vmax.f32 %v8664, 0.0
  %v8699 = vmax.f32 %v8683, 0.0
  %v8700 = vmax.f32 %v8610, 0.0
  %v8701 = vmax.f32 %v8629, 0.0
  %v8702 = vmax.f32 %v8648, 0.0
  %v8703 = vmax.f32 %v8667, 0.0
  %v8704 = vmax.f32 %v8686, 0.0
  %v8705 = vmax.f32 %v8612, 0.0
  %v8706 = vmax.f32 %v8631, 0.0
  %v8707 = vmax.f32 %v8650, 0.0
  %v8708 = vmax.f32 %v8669, 0.0
  %v8709 = vmax.f32 %v8688, 0.0
  %v8710 = vmul.f32 %v8690, %v3318
  %v8711 = vmul.f32 %v8691, %v3319
  %v8712 = vmul.f32 %v8692, %v3320
  %v8713 = vmul.f32 %v8693, %v3321
  %v8714 = vmul.f32 %v8694, %v3322
  %v8715 = vmul.f32 %v8695, %v3318
  %v8716 = vmul.f32 %v8696, %v3319
  %v8717 = vmul.f32 %v8697, %v3320
  %v8718 = vmul.f32 %v8698, %v3321
  %v8719 = vmul.f32 %v8699, %v3322
  %v8720 = vmul.f32 %v8700, %v3318
  %v8721 = vmul.f32 %v8701, %v3319
  %v8722 = vmul.f32 %v8702, %v3320
  %v8723 = vmul.f32 %v8703, %v3321
  %v8724 = vmul.f32 %v8704, %v3322
  %v8725 = vmul.f32 %v8705, %v3318
  %v8726 = vmul.f32 %v8706, %v3319
  %v8727 = vmul.f32 %v8707, %v3320
  %v8728 = vmul.f32 %v8708, %v3321
  %v8729 = vmul.f32 %v8709, %v3322
  %v8730 = vadd.f32 %v8710, %v8711
  %v8731 = vadd.f32 %v8730, %v8712
  %v8732 = vadd.f32 %v8731, %v8713
  %v8733 = vadd.f32 %v8732, %v8714
  %8734 = vadd.xlane.f32.xlu0 %v8733
  %v8735 = vpop.xlane.xlu0 %8734
  %v8736 = vadd.f32 %v8715, %v8716
  %v8737 = vadd.f32 %v8736, %v8717
  %v8738 = vadd.f32 %v8737, %v8718
  %v8739 = vadd.f32 %v8738, %v8719
  %8740 = vadd.xlane.f32.xlu0 %v8739
  %v8741 = vpop.xlane.xlu0 %8740
  %v8742 = vadd.f32 %v8720, %v8721
  %v8743 = vadd.f32 %v8742, %v8722
  %v8744 = vadd.f32 %v8743, %v8723
  %v8745 = vadd.f32 %v8744, %v8724
  %8746 = vadd.xlane.f32.xlu0 %v8745
  %v8747 = vpop.xlane.xlu0 %8746
  %v8748 = vadd.f32 %v8725, %v8726
  %v8749 = vadd.f32 %v8748, %v8727
  %v8750 = vadd.f32 %v8749, %v8728
  %v8751 = vadd.f32 %v8750, %v8729
  %8752 = vadd.xlane.f32.xlu0 %v8751
  %v8753 = vpop.xlane.xlu0 %8752
  %v8754 = vld [vmem:[#allocation2 + $0xc8] sm:$0xff]
  %v8755 = vld [vmem:[#allocation2 + $0xd0] sm:$0xff]
  %v8756 = vld [vmem:[#allocation2 + $0xd8] sm:$0xff]
  %v8757 = vld [vmem:[#allocation2 + $0xe0] sm:$0xff]
  %v8758 = vld [vmem:[#allocation2 + $0xe8] sm:$0xff]
  %v8759 = vld [vmem:[#allocation2 + $0x210] sm:$0xff]
  %v8760 = vld [vmem:[#allocation2 + $0x218] sm:$0xff]
  %v8761 = vld [vmem:[#allocation2 + $0x220] sm:$0xff]
  %v8762 = vld [vmem:[#allocation2 + $0x228] sm:$0xff]
  %v8763 = vld [vmem:[#allocation2 + $0x230] sm:$0xff]
  %v8764 = vld [vmem:[#allocation2 + $0x358] sm:$0xff]
  %v8765 = vld [vmem:[#allocation2 + $0x360] sm:$0xff]
  %v8766 = vld [vmem:[#allocation2 + $0x368] sm:$0xff]
  %v8767 = vld [vmem:[#allocation2 + $0x370] sm:$0xff]
  %v8768 = vld [vmem:[#allocation2 + $0x378] sm:$0xff]
  %v8769 = vld [vmem:[#allocation2 + $0x4a0] sm:$0xff]
  %v8770 = vld [vmem:[#allocation2 + $0x4a8] sm:$0xff]
  %v8771 = vld [vmem:[#allocation2 + $0x4b0] sm:$0xff]
  %v8772 = vld [vmem:[#allocation2 + $0x4b8] sm:$0xff]
  %v8773 = vld [vmem:[#allocation2 + $0x4c0] sm:$0xff]
  %v8774 = vpack.c.bf16 %v8759, %v8754
  %v8775 = vpack.c.bf16 %v8760, %v8755
  %v8776 = vpack.c.bf16 %v8761, %v8756
  %v8777 = vpack.c.bf16 %v8762, %v8757
  %v8778 = vpack.c.bf16 %v8763, %v8758
  %v8779 = vpack.c.bf16 %v8769, %v8764
  %v8780 = vpack.c.bf16 %v8770, %v8765
  %v8781 = vpack.c.bf16 %v8771, %v8766
  %v8782 = vpack.c.bf16 %v8772, %v8767
  %v8783 = vpack.c.bf16 %v8773, %v8768
  %8784 = vmatpush.bf16.msra.mxu0 0
  %8785 = vmatpush.bf16.msra.mxu0 0
  %8786 = vmatpush.bf16.msra.mxu0 0
  %8787 = vmatpush.bf16.msra.mxu0 0
  %8788 = vmatpush.bf16.msra.mxu0 0
  %8789 = vmatpush.bf16.msra.mxu0 0
  %8790 = vmatpush.bf16.msra.mxu0 %v8779
  %8791 = vmatpush.bf16.msra.mxu0 %v8774
  %8792 = vmatmul.bf16.gmra.mxu0 %v7834
  %v8793 = vpop.f32.mrf.mxu0
  %v8794 = vadd.f32 0.0, %v8793
  %v8795 = vpop.f32.mrf.mxu0
  %v8796 = vadd.f32 0.0, %v8795
  %8797 = vmatmul.bf16.gmra.mxu0 %v7837
  %v8798 = vpop.f32.mrf.mxu0
  %v8799 = vadd.f32 0.0, %v8798
  %v8800 = vpop.f32.mrf.mxu0
  %v8801 = vadd.f32 0.0, %v8800
  %8802 = vdwg.mxu0
  %8803 = vmatpush.bf16.msra.mxu0 0
  %8804 = vmatpush.bf16.msra.mxu0 0
  %8805 = vmatpush.bf16.msra.mxu0 0
  %8806 = vmatpush.bf16.msra.mxu0 0
  %8807 = vmatpush.bf16.msra.mxu0 0
  %8808 = vmatpush.bf16.msra.mxu0 0
  %8809 = vmatpush.bf16.msra.mxu0 %v8780
  %8810 = vmatpush.bf16.msra.mxu0 %v8775
  %8811 = vmatmul.bf16.gmra.mxu0 %v7834
  %v8812 = vpop.f32.mrf.mxu0
  %v8813 = vadd.f32 0.0, %v8812
  %v8814 = vpop.f32.mrf.mxu0
  %v8815 = vadd.f32 0.0, %v8814
  %8816 = vmatmul.bf16.gmra.mxu0 %v7837
  %v8817 = vpop.f32.mrf.mxu0
  %v8818 = vadd.f32 0.0, %v8817
  %v8819 = vpop.f32.mrf.mxu0
  %v8820 = vadd.f32 0.0, %v8819
  %8821 = vdwg.mxu0
  %8822 = vmatpush.bf16.msra.mxu0 0
  %8823 = vmatpush.bf16.msra.mxu0 0
  %8824 = vmatpush.bf16.msra.mxu0 0
  %8825 = vmatpush.bf16.msra.mxu0 0
  %8826 = vmatpush.bf16.msra.mxu0 0
  %8827 = vmatpush.bf16.msra.mxu0 0
  %8828 = vmatpush.bf16.msra.mxu0 %v8781
  %8829 = vmatpush.bf16.msra.mxu0 %v8776
  %8830 = vmatmul.bf16.gmra.mxu0 %v7834
  %v8831 = vpop.f32.mrf.mxu0
  %v8832 = vadd.f32 0.0, %v8831
  %v8833 = vpop.f32.mrf.mxu0
  %v8834 = vadd.f32 0.0, %v8833
  %8835 = vmatmul.bf16.gmra.mxu0 %v7837
  %v8836 = vpop.f32.mrf.mxu0
  %v8837 = vadd.f32 0.0, %v8836
  %v8838 = vpop.f32.mrf.mxu0
  %v8839 = vadd.f32 0.0, %v8838
  %8840 = vdwg.mxu0
  %8841 = vmatpush.bf16.msra.mxu0 0
  %8842 = vmatpush.bf16.msra.mxu0 0
  %8843 = vmatpush.bf16.msra.mxu0 0
  %8844 = vmatpush.bf16.msra.mxu0 0
  %8845 = vmatpush.bf16.msra.mxu0 0
  %8846 = vmatpush.bf16.msra.mxu0 0
  %8847 = vmatpush.bf16.msra.mxu0 %v8782
  %8848 = vmatpush.bf16.msra.mxu0 %v8777
  %8849 = vmatmul.bf16.gmra.mxu0 %v7834
  %v8850 = vpop.f32.mrf.mxu0
  %v8851 = vadd.f32 0.0, %v8850
  %v8852 = vpop.f32.mrf.mxu0
  %v8853 = vadd.f32 0.0, %v8852
  %8854 = vmatmul.bf16.gmra.mxu0 %v7837
  %v8855 = vpop.f32.mrf.mxu0
  %v8856 = vadd.f32 0.0, %v8855
  %v8857 = vpop.f32.mrf.mxu0
  %v8858 = vadd.f32 0.0, %v8857
  %8859 = vdwg.mxu0
  %8860 = vmatpush.bf16.msra.mxu0 0
  %8861 = vmatpush.bf16.msra.mxu0 0
  %8862 = vmatpush.bf16.msra.mxu0 0
  %8863 = vmatpush.bf16.msra.mxu0 0
  %8864 = vmatpush.bf16.msra.mxu0 0
  %8865 = vmatpush.bf16.msra.mxu0 0
  %8866 = vmatpush.bf16.msra.mxu0 %v8783
  %8867 = vmatpush.bf16.msra.mxu0 %v8778
  %8868 = vmatmul.bf16.gmra.mxu0 %v7834
  %v8869 = vpop.f32.mrf.mxu0
  %v8870 = vadd.f32 0.0, %v8869
  %v8871 = vpop.f32.mrf.mxu0
  %v8872 = vadd.f32 0.0, %v8871
  %8873 = vmatmul.bf16.gmra.mxu0 %v7837
  %v8874 = vpop.f32.mrf.mxu0
  %v8875 = vadd.f32 0.0, %v8874
  %v8876 = vpop.f32.mrf.mxu0
  %v8877 = vadd.f32 0.0, %v8876
  %8878 = vdwg.mxu0
  %v8879 = vmax.f32 %v8794, 0.0
  %v8880 = vmax.f32 %v8813, 0.0
  %v8881 = vmax.f32 %v8832, 0.0
  %v8882 = vmax.f32 %v8851, 0.0
  %v8883 = vmax.f32 %v8870, 0.0
  %v8884 = vmax.f32 %v8796, 0.0
  %v8885 = vmax.f32 %v8815, 0.0
  %v8886 = vmax.f32 %v8834, 0.0
  %v8887 = vmax.f32 %v8853, 0.0
  %v8888 = vmax.f32 %v8872, 0.0
  %v8889 = vmax.f32 %v8799, 0.0
  %v8890 = vmax.f32 %v8818, 0.0
  %v8891 = vmax.f32 %v8837, 0.0
  %v8892 = vmax.f32 %v8856, 0.0
  %v8893 = vmax.f32 %v8875, 0.0
  %v8894 = vmax.f32 %v8801, 0.0
  %v8895 = vmax.f32 %v8820, 0.0
  %v8896 = vmax.f32 %v8839, 0.0
  %v8897 = vmax.f32 %v8858, 0.0
  %v8898 = vmax.f32 %v8877, 0.0
  %v8899 = vmul.f32 %v8879, %v3318
  %v8900 = vmul.f32 %v8880, %v3319
  %v8901 = vmul.f32 %v8881, %v3320
  %v8902 = vmul.f32 %v8882, %v3321
  %v8903 = vmul.f32 %v8883, %v3322
  %v8904 = vmul.f32 %v8884, %v3318
  %v8905 = vmul.f32 %v8885, %v3319
  %v8906 = vmul.f32 %v8886, %v3320
  %v8907 = vmul.f32 %v8887, %v3321
  %v8908 = vmul.f32 %v8888, %v3322
  %v8909 = vmul.f32 %v8889, %v3318
  %v8910 = vmul.f32 %v8890, %v3319
  %v8911 = vmul.f32 %v8891, %v3320
  %v8912 = vmul.f32 %v8892, %v3321
  %v8913 = vmul.f32 %v8893, %v3322
  %v8914 = vmul.f32 %v8894, %v3318
  %v8915 = vmul.f32 %v8895, %v3319
  %v8916 = vmul.f32 %v8896, %v3320
  %v8917 = vmul.f32 %v8897, %v3321
  %v8918 = vmul.f32 %v8898, %v3322
  %v8919 = vadd.f32 %v8899, %v8900
  %v8920 = vadd.f32 %v8919, %v8901
  %v8921 = vadd.f32 %v8920, %v8902
  %v8922 = vadd.f32 %v8921, %v8903
  %8923 = vadd.xlane.f32.xlu0 %v8922
  %v8924 = vpop.xlane.xlu0 %8923
  %v8925 = vadd.f32 %v8904, %v8905
  %v8926 = vadd.f32 %v8925, %v8906
  %v8927 = vadd.f32 %v8926, %v8907
  %v8928 = vadd.f32 %v8927, %v8908
  %8929 = vadd.xlane.f32.xlu0 %v8928
  %v8930 = vpop.xlane.xlu0 %8929
  %v8931 = vadd.f32 %v8909, %v8910
  %v8932 = vadd.f32 %v8931, %v8911
  %v8933 = vadd.f32 %v8932, %v8912
  %v8934 = vadd.f32 %v8933, %v8913
  %8935 = vadd.xlane.f32.xlu0 %v8934
  %v8936 = vpop.xlane.xlu0 %8935
  %v8937 = vadd.f32 %v8914, %v8915
  %v8938 = vadd.f32 %v8937, %v8916
  %v8939 = vadd.f32 %v8938, %v8917
  %v8940 = vadd.f32 %v8939, %v8918
  %8941 = vadd.xlane.f32.xlu0 %v8940
  %v8942 = vpop.xlane.xlu0 %8941
  %v8943 = vld [vmem:[#allocation2 + $0xf0] sm:$0xff]
  %v8944 = vld [vmem:[#allocation2 + $0xf8] sm:$0xff]
  %v8945 = vld [vmem:[#allocation2 + $0x100] sm:$0xff]
  %v8946 = vld [vmem:[#allocation2 + $0x108] sm:$0xff]
  %v8947 = vld [vmem:[#allocation2 + $0x110] sm:$0xff]
  %v8948 = vld [vmem:[#allocation2 + $0x238] sm:$0xff]
  %v8949 = vld [vmem:[#allocation2 + $0x240] sm:$0xff]
  %v8950 = vld [vmem:[#allocation2 + $0x248] sm:$0xff]
  %v8951 = vld [vmem:[#allocation2 + $0x250] sm:$0xff]
  %v8952 = vld [vmem:[#allocation2 + $0x258] sm:$0xff]
  %v8953 = vld [vmem:[#allocation2 + $0x380] sm:$0xff]
  %v8954 = vld [vmem:[#allocation2 + $0x388] sm:$0xff]
  %v8955 = vld [vmem:[#allocation2 + $0x390] sm:$0xff]
  %v8956 = vld [vmem:[#allocation2 + $0x398] sm:$0xff]
  %v8957 = vld [vmem:[#allocation2 + $0x3a0] sm:$0xff]
  %v8958 = vld [vmem:[#allocation2 + $0x4c8] sm:$0xff]
  %v8959 = vld [vmem:[#allocation2 + $0x4d0] sm:$0xff]
  %v8960 = vld [vmem:[#allocation2 + $0x4d8] sm:$0xff]
  %v8961 = vld [vmem:[#allocation2 + $0x4e0] sm:$0xff]
  %v8962 = vld [vmem:[#allocation2 + $0x4e8] sm:$0xff]
  %v8963 = vpack.c.bf16 %v8948, %v8943
  %v8964 = vpack.c.bf16 %v8949, %v8944
  %v8965 = vpack.c.bf16 %v8950, %v8945
  %v8966 = vpack.c.bf16 %v8951, %v8946
  %v8967 = vpack.c.bf16 %v8952, %v8947
  %v8968 = vpack.c.bf16 %v8958, %v8953
  %v8969 = vpack.c.bf16 %v8959, %v8954
  %v8970 = vpack.c.bf16 %v8960, %v8955
  %v8971 = vpack.c.bf16 %v8961, %v8956
  %v8972 = vpack.c.bf16 %v8962, %v8957
  %8973 = vmatpush.bf16.msra.mxu0 0
  %8974 = vmatpush.bf16.msra.mxu0 0
  %8975 = vmatpush.bf16.msra.mxu0 0
  %8976 = vmatpush.bf16.msra.mxu0 0
  %8977 = vmatpush.bf16.msra.mxu0 0
  %8978 = vmatpush.bf16.msra.mxu0 0
  %8979 = vmatpush.bf16.msra.mxu0 %v8968
  %8980 = vmatpush.bf16.msra.mxu0 %v8963
  %8981 = vmatmul.bf16.gmra.mxu0 %v7834
  %v8982 = vpop.f32.mrf.mxu0
  %v8983 = vadd.f32 0.0, %v8982
  %v8984 = vpop.f32.mrf.mxu0
  %v8985 = vadd.f32 0.0, %v8984
  %8986 = vmatmul.bf16.gmra.mxu0 %v7837
  %v8987 = vpop.f32.mrf.mxu0
  %v8988 = vadd.f32 0.0, %v8987
  %v8989 = vpop.f32.mrf.mxu0
  %v8990 = vadd.f32 0.0, %v8989
  %8991 = vdwg.mxu0
  %8992 = vmatpush.bf16.msra.mxu0 0
  %8993 = vmatpush.bf16.msra.mxu0 0
  %8994 = vmatpush.bf16.msra.mxu0 0
  %8995 = vmatpush.bf16.msra.mxu0 0
  %8996 = vmatpush.bf16.msra.mxu0 0
  %8997 = vmatpush.bf16.msra.mxu0 0
  %8998 = vmatpush.bf16.msra.mxu0 %v8969
  %8999 = vmatpush.bf16.msra.mxu0 %v8964
  %9000 = vmatmul.bf16.gmra.mxu0 %v7834
  %v9001 = vpop.f32.mrf.mxu0
  %v9002 = vadd.f32 0.0, %v9001
  %v9003 = vpop.f32.mrf.mxu0
  %v9004 = vadd.f32 0.0, %v9003
  %9005 = vmatmul.bf16.gmra.mxu0 %v7837
  %v9006 = vpop.f32.mrf.mxu0
  %v9007 = vadd.f32 0.0, %v9006
  %v9008 = vpop.f32.mrf.mxu0
  %v9009 = vadd.f32 0.0, %v9008
  %9010 = vdwg.mxu0
  %9011 = vmatpush.bf16.msra.mxu0 0
  %9012 = vmatpush.bf16.msra.mxu0 0
  %9013 = vmatpush.bf16.msra.mxu0 0
  %9014 = vmatpush.bf16.msra.mxu0 0
  %9015 = vmatpush.bf16.msra.mxu0 0
  %9016 = vmatpush.bf16.msra.mxu0 0
  %9017 = vmatpush.bf16.msra.mxu0 %v8970
  %9018 = vmatpush.bf16.msra.mxu0 %v8965
  %9019 = vmatmul.bf16.gmra.mxu0 %v7834
  %v9020 = vpop.f32.mrf.mxu0
  %v9021 = vadd.f32 0.0, %v9020
  %v9022 = vpop.f32.mrf.mxu0
  %v9023 = vadd.f32 0.0, %v9022
  %9024 = vmatmul.bf16.gmra.mxu0 %v7837
  %v9025 = vpop.f32.mrf.mxu0
  %v9026 = vadd.f32 0.0, %v9025
  %v9027 = vpop.f32.mrf.mxu0
  %v9028 = vadd.f32 0.0, %v9027
  %9029 = vdwg.mxu0
  %9030 = vmatpush.bf16.msra.mxu0 0
  %9031 = vmatpush.bf16.msra.mxu0 0
  %9032 = vmatpush.bf16.msra.mxu0 0
  %9033 = vmatpush.bf16.msra.mxu0 0
  %9034 = vmatpush.bf16.msra.mxu0 0
  %9035 = vmatpush.bf16.msra.mxu0 0
  %9036 = vmatpush.bf16.msra.mxu0 %v8971
  %9037 = vmatpush.bf16.msra.mxu0 %v8966
  %9038 = vmatmul.bf16.gmra.mxu0 %v7834
  %v9039 = vpop.f32.mrf.mxu0
  %v9040 = vadd.f32 0.0, %v9039
  %v9041 = vpop.f32.mrf.mxu0
  %v9042 = vadd.f32 0.0, %v9041
  %9043 = vmatmul.bf16.gmra.mxu0 %v7837
  %v9044 = vpop.f32.mrf.mxu0
  %v9045 = vadd.f32 0.0, %v9044
  %v9046 = vpop.f32.mrf.mxu0
  %v9047 = vadd.f32 0.0, %v9046
  %9048 = vdwg.mxu0
  %9049 = vmatpush.bf16.msra.mxu0 0
  %9050 = vmatpush.bf16.msra.mxu0 0
  %9051 = vmatpush.bf16.msra.mxu0 0
  %9052 = vmatpush.bf16.msra.mxu0 0
  %9053 = vmatpush.bf16.msra.mxu0 0
  %9054 = vmatpush.bf16.msra.mxu0 0
  %9055 = vmatpush.bf16.msra.mxu0 %v8972
  %9056 = vmatpush.bf16.msra.mxu0 %v8967
  %9057 = vmatmul.bf16.gmra.mxu0 %v7834
  %v9058 = vpop.f32.mrf.mxu0
  %v9059 = vadd.f32 0.0, %v9058
  %v9060 = vpop.f32.mrf.mxu0
  %v9061 = vadd.f32 0.0, %v9060
  %9062 = vmatmul.bf16.gmra.mxu0 %v7837
  %v9063 = vpop.f32.mrf.mxu0
  %v9064 = vadd.f32 0.0, %v9063
  %v9065 = vpop.f32.mrf.mxu0
  %v9066 = vadd.f32 0.0, %v9065
  %9067 = vdwg.mxu0
  %v9068 = vmax.f32 %v8983, 0.0
  %v9069 = vmax.f32 %v9002, 0.0
  %v9070 = vmax.f32 %v9021, 0.0
  %v9071 = vmax.f32 %v9040, 0.0
  %v9072 = vmax.f32 %v9059, 0.0
  %v9073 = vmax.f32 %v8985, 0.0
  %v9074 = vmax.f32 %v9004, 0.0
  %v9075 = vmax.f32 %v9023, 0.0
  %v9076 = vmax.f32 %v9042, 0.0
  %v9077 = vmax.f32 %v9061, 0.0
  %v9078 = vmax.f32 %v8988, 0.0
  %v9079 = vmax.f32 %v9007, 0.0
  %v9080 = vmax.f32 %v9026, 0.0
  %v9081 = vmax.f32 %v9045, 0.0
  %v9082 = vmax.f32 %v9064, 0.0
  %v9083 = vmax.f32 %v8990, 0.0
  %v9084 = vmax.f32 %v9009, 0.0
  %v9085 = vmax.f32 %v9028, 0.0
  %v9086 = vmax.f32 %v9047, 0.0
  %v9087 = vmax.f32 %v9066, 0.0
  %v9088 = vmul.f32 %v9068, %v3318
  %v9089 = vmul.f32 %v9069, %v3319
  %v9090 = vmul.f32 %v9070, %v3320
  %v9091 = vmul.f32 %v9071, %v3321
  %v9092 = vmul.f32 %v9072, %v3322
  %v9093 = vmul.f32 %v9073, %v3318
  %v9094 = vmul.f32 %v9074, %v3319
  %v9095 = vmul.f32 %v9075, %v3320
  %v9096 = vmul.f32 %v9076, %v3321
  %v9097 = vmul.f32 %v9077, %v3322
  %v9098 = vmul.f32 %v9078, %v3318
  %v9099 = vmul.f32 %v9079, %v3319
  %v9100 = vmul.f32 %v9080, %v3320
  %v9101 = vmul.f32 %v9081, %v3321
  %v9102 = vmul.f32 %v9082, %v3322
  %v9103 = vmul.f32 %v9083, %v3318
  %v9104 = vmul.f32 %v9084, %v3319
  %v9105 = vmul.f32 %v9085, %v3320
  %v9106 = vmul.f32 %v9086, %v3321
  %v9107 = vmul.f32 %v9087, %v3322
  %v9108 = vadd.f32 %v9088, %v9089
  %v9109 = vadd.f32 %v9108, %v9090
  %v9110 = vadd.f32 %v9109, %v9091
  %v9111 = vadd.f32 %v9110, %v9092
  %9112 = vadd.xlane.f32.xlu0 %v9111
  %v9113 = vpop.xlane.xlu0 %9112
  %v9114 = vadd.f32 %v9093, %v9094
  %v9115 = vadd.f32 %v9114, %v9095
  %v9116 = vadd.f32 %v9115, %v9096
  %v9117 = vadd.f32 %v9116, %v9097
  %9118 = vadd.xlane.f32.xlu0 %v9117
  %v9119 = vpop.xlane.xlu0 %9118
  %v9120 = vadd.f32 %v9098, %v9099
  %v9121 = vadd.f32 %v9120, %v9100
  %v9122 = vadd.f32 %v9121, %v9101
  %v9123 = vadd.f32 %v9122, %v9102
  %9124 = vadd.xlane.f32.xlu0 %v9123
  %v9125 = vpop.xlane.xlu0 %9124
  %v9126 = vadd.f32 %v9103, %v9104
  %v9127 = vadd.f32 %v9126, %v9105
  %v9128 = vadd.f32 %v9127, %v9106
  %v9129 = vadd.f32 %v9128, %v9107
  %9130 = vadd.xlane.f32.xlu0 %v9129
  %v9131 = vpop.xlane.xlu0 %9130
  %v9132 = vld [vmem:[#allocation2 + $0x118] sm:$0xff]
  %v9133 = vld [vmem:[#allocation2 + $0x120] sm:$0xff]
  %v9134 = vld [vmem:[#allocation2 + $0x128] sm:$0xff]
  %v9135 = vld [vmem:[#allocation2 + $0x130] sm:$0xff]
  %v9136 = vld [vmem:[#allocation2 + $0x138] sm:$0xff]
  %v9137 = vld [vmem:[#allocation2 + $0x260] sm:$0xff]
  %v9138 = vld [vmem:[#allocation2 + $0x268] sm:$0xff]
  %v9139 = vld [vmem:[#allocation2 + $0x270] sm:$0xff]
  %v9140 = vld [vmem:[#allocation2 + $0x278] sm:$0xff]
  %v9141 = vld [vmem:[#allocation2 + $0x280] sm:$0xff]
  %v9142 = vld [vmem:[#allocation2 + $0x3a8] sm:$0xff]
  %v9143 = vld [vmem:[#allocation2 + $0x3b0] sm:$0xff]
  %v9144 = vld [vmem:[#allocation2 + $0x3b8] sm:$0xff]
  %v9145 = vld [vmem:[#allocation2 + $0x3c0] sm:$0xff]
  %v9146 = vld [vmem:[#allocation2 + $0x3c8] sm:$0xff]
  %v9147 = vld [vmem:[#allocation2 + $0x4f0] sm:$0xff]
  %v9148 = vld [vmem:[#allocation2 + $0x4f8] sm:$0xff]
  %v9149 = vld [vmem:[#allocation2 + $0x500] sm:$0xff]
  %v9150 = vld [vmem:[#allocation2 + $0x508] sm:$0xff]
  %v9151 = vld [vmem:[#allocation2 + $0x510] sm:$0xff]
  %v9152 = vpack.c.bf16 %v9137, %v9132
  %v9153 = vpack.c.bf16 %v9138, %v9133
  %v9154 = vpack.c.bf16 %v9139, %v9134
  %v9155 = vpack.c.bf16 %v9140, %v9135
  %v9156 = vpack.c.bf16 %v9141, %v9136
  %v9157 = vpack.c.bf16 %v9147, %v9142
  %v9158 = vpack.c.bf16 %v9148, %v9143
  %v9159 = vpack.c.bf16 %v9149, %v9144
  %v9160 = vpack.c.bf16 %v9150, %v9145
  %v9161 = vpack.c.bf16 %v9151, %v9146
  %9162 = vmatpush.bf16.msra.mxu0 0
  %9163 = vmatpush.bf16.msra.mxu0 0
  %9164 = vmatpush.bf16.msra.mxu0 0
  %9165 = vmatpush.bf16.msra.mxu0 0
  %9166 = vmatpush.bf16.msra.mxu0 0
  %9167 = vmatpush.bf16.msra.mxu0 0
  %9168 = vmatpush.bf16.msra.mxu0 %v9157
  %9169 = vmatpush.bf16.msra.mxu0 %v9152
  %9170 = vmatmul.bf16.gmra.mxu0 %v7834
  %v9171 = vpop.f32.mrf.mxu0
  %v9172 = vadd.f32 0.0, %v9171
  %v9173 = vpop.f32.mrf.mxu0
  %v9174 = vadd.f32 0.0, %v9173
  %9175 = vmatmul.bf16.gmra.mxu0 %v7837
  %v9176 = vpop.f32.mrf.mxu0
  %v9177 = vadd.f32 0.0, %v9176
  %v9178 = vpop.f32.mrf.mxu0
  %v9179 = vadd.f32 0.0, %v9178
  %9180 = vdwg.mxu0
  %9181 = vmatpush.bf16.msra.mxu0 0
  %9182 = vmatpush.bf16.msra.mxu0 0
  %9183 = vmatpush.bf16.msra.mxu0 0
  %9184 = vmatpush.bf16.msra.mxu0 0
  %9185 = vmatpush.bf16.msra.mxu0 0
  %9186 = vmatpush.bf16.msra.mxu0 0
  %9187 = vmatpush.bf16.msra.mxu0 %v9158
  %9188 = vmatpush.bf16.msra.mxu0 %v9153
  %9189 = vmatmul.bf16.gmra.mxu0 %v7834
  %v9190 = vpop.f32.mrf.mxu0
  %v9191 = vadd.f32 0.0, %v9190
  %v9192 = vpop.f32.mrf.mxu0
  %v9193 = vadd.f32 0.0, %v9192
  %9194 = vmatmul.bf16.gmra.mxu0 %v7837
  %v9195 = vpop.f32.mrf.mxu0
  %v9196 = vadd.f32 0.0, %v9195
  %v9197 = vpop.f32.mrf.mxu0
  %v9198 = vadd.f32 0.0, %v9197
  %9199 = vdwg.mxu0
  %9200 = vmatpush.bf16.msra.mxu0 0
  %9201 = vmatpush.bf16.msra.mxu0 0
  %9202 = vmatpush.bf16.msra.mxu0 0
  %9203 = vmatpush.bf16.msra.mxu0 0
  %9204 = vmatpush.bf16.msra.mxu0 0
  %9205 = vmatpush.bf16.msra.mxu0 0
  %9206 = vmatpush.bf16.msra.mxu0 %v9159
  %9207 = vmatpush.bf16.msra.mxu0 %v9154
  %9208 = vmatmul.bf16.gmra.mxu0 %v7834
  %v9209 = vpop.f32.mrf.mxu0
  %v9210 = vadd.f32 0.0, %v9209
  %v9211 = vpop.f32.mrf.mxu0
  %v9212 = vadd.f32 0.0, %v9211
  %9213 = vmatmul.bf16.gmra.mxu0 %v7837
  %v9214 = vpop.f32.mrf.mxu0
  %v9215 = vadd.f32 0.0, %v9214
  %v9216 = vpop.f32.mrf.mxu0
  %v9217 = vadd.f32 0.0, %v9216
  %9218 = vdwg.mxu0
  %9219 = vmatpush.bf16.msra.mxu0 0
  %9220 = vmatpush.bf16.msra.mxu0 0
  %9221 = vmatpush.bf16.msra.mxu0 0
  %9222 = vmatpush.bf16.msra.mxu0 0
  %9223 = vmatpush.bf16.msra.mxu0 0
  %9224 = vmatpush.bf16.msra.mxu0 0
  %9225 = vmatpush.bf16.msra.mxu0 %v9160
  %9226 = vmatpush.bf16.msra.mxu0 %v9155
  %9227 = vmatmul.bf16.gmra.mxu0 %v7834
  %v9228 = vpop.f32.mrf.mxu0
  %v9229 = vadd.f32 0.0, %v9228
  %v9230 = vpop.f32.mrf.mxu0
  %v9231 = vadd.f32 0.0, %v9230
  %9232 = vmatmul.bf16.gmra.mxu0 %v7837
  %v9233 = vpop.f32.mrf.mxu0
  %v9234 = vadd.f32 0.0, %v9233
  %v9235 = vpop.f32.mrf.mxu0
  %v9236 = vadd.f32 0.0, %v9235
  %9237 = vdwg.mxu0
  %9238 = vmatpush.bf16.msra.mxu0 0
  %9239 = vmatpush.bf16.msra.mxu0 0
  %9240 = vmatpush.bf16.msra.mxu0 0
  %9241 = vmatpush.bf16.msra.mxu0 0
  %9242 = vmatpush.bf16.msra.mxu0 0
  %9243 = vmatpush.bf16.msra.mxu0 0
  %9244 = vmatpush.bf16.msra.mxu0 %v9161
  %9245 = vmatpush.bf16.msra.mxu0 %v9156
  %9246 = vmatmul.bf16.gmra.mxu0 %v7834
  %v9247 = vpop.f32.mrf.mxu0
  %v9248 = vadd.f32 0.0, %v9247
  %v9249 = vpop.f32.mrf.mxu0
  %v9250 = vadd.f32 0.0, %v9249
  %9251 = vmatmul.bf16.gmra.mxu0 %v7837
  %v9252 = vpop.f32.mrf.mxu0
  %v9253 = vadd.f32 0.0, %v9252
  %v9254 = vpop.f32.mrf.mxu0
  %v9255 = vadd.f32 0.0, %v9254
  %9256 = vdwg.mxu0
  %v9257 = vmax.f32 %v9172, 0.0
  %v9258 = vmax.f32 %v9191, 0.0
  %v9259 = vmax.f32 %v9210, 0.0
  %v9260 = vmax.f32 %v9229, 0.0
  %v9261 = vmax.f32 %v9248, 0.0
  %v9262 = vmax.f32 %v9174, 0.0
  %v9263 = vmax.f32 %v9193, 0.0
  %v9264 = vmax.f32 %v9212, 0.0
  %v9265 = vmax.f32 %v9231, 0.0
  %v9266 = vmax.f32 %v9250, 0.0
  %v9267 = vmax.f32 %v9177, 0.0
  %v9268 = vmax.f32 %v9196, 0.0
  %v9269 = vmax.f32 %v9215, 0.0
  %v9270 = vmax.f32 %v9234, 0.0
  %v9271 = vmax.f32 %v9253, 0.0
  %v9272 = vmax.f32 %v9179, 0.0
  %v9273 = vmax.f32 %v9198, 0.0
  %v9274 = vmax.f32 %v9217, 0.0
  %v9275 = vmax.f32 %v9236, 0.0
  %v9276 = vmax.f32 %v9255, 0.0
  %v9277 = vmul.f32 %v9257, %v3318
  %v9278 = vmul.f32 %v9258, %v3319
  %v9279 = vmul.f32 %v9259, %v3320
  %v9280 = vmul.f32 %v9260, %v3321
  %v9281 = vmul.f32 %v9261, %v3322
  %v9282 = vmul.f32 %v9262, %v3318
  %v9283 = vmul.f32 %v9263, %v3319
  %v9284 = vmul.f32 %v9264, %v3320
  %v9285 = vmul.f32 %v9265, %v3321
  %v9286 = vmul.f32 %v9266, %v3322
  %v9287 = vmul.f32 %v9267, %v3318
  %v9288 = vmul.f32 %v9268, %v3319
  %v9289 = vmul.f32 %v9269, %v3320
  %v9290 = vmul.f32 %v9270, %v3321
  %v9291 = vmul.f32 %v9271, %v3322
  %v9292 = vmul.f32 %v9272, %v3318
  %v9293 = vmul.f32 %v9273, %v3319
  %v9294 = vmul.f32 %v9274, %v3320
  %v9295 = vmul.f32 %v9275, %v3321
  %v9296 = vmul.f32 %v9276, %v3322
  %v9297 = vadd.f32 %v9277, %v9278
  %v9298 = vadd.f32 %v9297, %v9279
  %v9299 = vadd.f32 %v9298, %v9280
  %v9300 = vadd.f32 %v9299, %v9281
  %9301 = vadd.xlane.f32.xlu0 %v9300
  %v9302 = vpop.xlane.xlu0 %9301
  %v9303 = vadd.f32 %v9282, %v9283
  %v9304 = vadd.f32 %v9303, %v9284
  %v9305 = vadd.f32 %v9304, %v9285
  %v9306 = vadd.f32 %v9305, %v9286
  %9307 = vadd.xlane.f32.xlu0 %v9306
  %v9308 = vpop.xlane.xlu0 %9307
  %v9309 = vadd.f32 %v9287, %v9288
  %v9310 = vadd.f32 %v9309, %v9289
  %v9311 = vadd.f32 %v9310, %v9290
  %v9312 = vadd.f32 %v9311, %v9291
  %9313 = vadd.xlane.f32.xlu0 %v9312
  %v9314 = vpop.xlane.xlu0 %9313
  %v9315 = vadd.f32 %v9292, %v9293
  %v9316 = vadd.f32 %v9315, %v9294
  %v9317 = vadd.f32 %v9316, %v9295
  %v9318 = vadd.f32 %v9317, %v9296
  %9319 = vadd.xlane.f32.xlu0 %v9318
  %v9320 = vpop.xlane.xlu0 %9319
  %v9321 = vsel %vm4695, %v7979, %v8168
  %v9322 = vsel %vm4695, %v7985, %v8174
  %v9323 = vsel %vm4695, %v7991, %v8180
  %v9324 = vsel %vm4695, %v7997, %v8186
  %v9325 = vsel %vm4700, %v9321, %v8357
  %v9326 = vsel %vm4700, %v9322, %v8363
  %v9327 = vsel %vm4700, %v9323, %v8369
  %v9328 = vsel %vm4700, %v9324, %v8375
  %v9329 = vsel %vm4705, %v9325, %v8546
  %v9330 = vsel %vm4705, %v9326, %v8552
  %v9331 = vsel %vm4705, %v9327, %v8558
  %v9332 = vsel %vm4705, %v9328, %v8564
  %v9333 = vsel %vm4710, %v9329, %v8735
  %v9334 = vsel %vm4710, %v9330, %v8741
  %v9335 = vsel %vm4710, %v9331, %v8747
  %v9336 = vsel %vm4710, %v9332, %v8753
  %v9337 = vsel %vm4715, %v9333, %v8924
  %v9338 = vsel %vm4715, %v9334, %v8930
  %v9339 = vsel %vm4715, %v9335, %v8936
  %v9340 = vsel %vm4715, %v9336, %v8942
  %v9341 = vsel %vm4720, %v9337, %v9113
  %v9342 = vsel %vm4720, %v9338, %v9119
  %v9343 = vsel %vm4720, %v9339, %v9125
  %v9344 = vsel %vm4720, %v9340, %v9131
  %v9345 = vsel %vm4725, %v9341, %v9302
  %v9346 = vsel %vm4725, %v9342, %v9308
  %v9347 = vsel %vm4725, %v9343, %v9314
  %v9348 = vsel %vm4725, %v9344, %v9320
  %9353 = vrot.lane.b32.xlu0 %v9345, 8
  %v9354 = vpop.permute.xlu0 %9353
  %9355 = vrot.lane.b32.xlu0 %v9346, 8
  %v9356 = vpop.permute.xlu0 %9355
  %9357 = vrot.lane.b32.xlu0 %v9347, 8
  %v9358 = vpop.permute.xlu0 %9357
  %9359 = vrot.lane.b32.xlu0 %v9348, 8
  %v9360 = vpop.permute.xlu0 %9359
  %vm9365 = vcmask 64512
  %v9366 = vsel %vm9365, %v4726, %v9354
  %v9367 = vsel %vm9365, %v4727, %v9356
  %v9368 = vsel %vm9365, %v4728, %v9358
  %v9369 = vsel %vm9365, %v4729, %v9360
  %v9370 = vld [vmem:[%s4] sm:$0xff]
  %v9371 = vld [vmem:[%s4 + $0x8] sm:$0xff]
  %v9372 = vld [vmem:[%s4 + $0x10] sm:$0xff]
  %v9373 = vld [vmem:[%s4 + $0x18] sm:$0xff]
  %v9374 = vld [vmem:[%s4 + $0x20] sm:$0xff]
  %v9375 = vld [vmem:[%s4 + $0x28] sm:$0xff]
  %v9376 = vld [vmem:[%s4 + $0x30] sm:$0xff]
  %v9377 = vld [vmem:[%s4 + $0x38] sm:$0xff]
  %v9379 = vsel %vm3195, %v9370, 0
  %v9382 = vsel %vm3195, %v9371, 0
  %v9385 = vsel %vm3195, %v9372, 0
  %v9388 = vsel %vm3195, %v9373, 0
  %v9391 = vsel %vm3195, %v9374, 0
  %v9394 = vsel %vm3195, %v9375, 0
  %v9397 = vsel %vm3195, %v9376, 0
  %v9400 = vsel %vm3195, %v9377, 0
  %9402 = vmatpush.msra.mxu0 0.0
  %9403 = vmatpush.msra.mxu0 0.0
  %9404 = vmatpush.msra.mxu0 0.0
  %9405 = vmatpush.msra.mxu0 0.0
  %9406 = vmatpush.msra.mxu0 0.0
  %9407 = vmatpush.msra.mxu0 0.0
  %9408 = vmatpush.msra.mxu0 0.0
  %9409 = vmatpush.msra.mxu0 0.0
  %9410 = vmatpush.msra.mxu0 0.0
  %9411 = vmatpush.msra.mxu0 0.0
  %9412 = vmatpush.msra.mxu0 0.0
  %9413 = vmatpush.msra.mxu0 0.0
  %9414 = vmatpush.msra.mxu0 %v9369
  %9415 = vmatpush.msra.mxu0 %v9368
  %9416 = vmatpush.msra.mxu0 %v9367
  %9417 = vmatpush.msra.mxu0 %v9366
  %9418 = vmatmul.f32.gmra.mxu0 %v9379
  %v9419 = vpop.f32.mrf.mxu0
  %v9420 = vadd.f32 0.0, %v9419
  %9421 = vmatmul.f32.gmra.mxu0 %v9382
  %v9422 = vpop.f32.mrf.mxu0
  %v9423 = vadd.f32 0.0, %v9422
  %9424 = vmatmul.f32.gmra.mxu0 %v9385
  %v9425 = vpop.f32.mrf.mxu0
  %v9426 = vadd.f32 0.0, %v9425
  %9427 = vmatmul.f32.gmra.mxu0 %v9388
  %v9428 = vpop.f32.mrf.mxu0
  %v9429 = vadd.f32 0.0, %v9428
  %9430 = vmatmul.f32.gmra.mxu0 %v9391
  %v9431 = vpop.f32.mrf.mxu0
  %v9432 = vadd.f32 0.0, %v9431
  %9433 = vmatmul.f32.gmra.mxu0 %v9394
  %v9434 = vpop.f32.mrf.mxu0
  %v9435 = vadd.f32 0.0, %v9434
  %9436 = vmatmul.f32.gmra.mxu0 %v9397
  %v9437 = vpop.f32.mrf.mxu0
  %v9438 = vadd.f32 0.0, %v9437
  %9439 = vmatmul.f32.gmra.mxu0 %v9400
  %v9440 = vpop.f32.mrf.mxu0
  %v9441 = vadd.f32 0.0, %v9440
  %9442 = vdwg.mxu0
  %v9443 = vld [vmem:[%s5] sm:$0xff]
  %v9444 = vld [vmem:[%s5 + $0x8] sm:$0xff]
  %v9445 = vld [vmem:[%s5 + $0x10] sm:$0xff]
  %v9446 = vld [vmem:[%s5 + $0x18] sm:$0xff]
  %v9447 = vld [vmem:[%s5 + $0x20] sm:$0xff]
  %v9448 = vld [vmem:[%s5 + $0x28] sm:$0xff]
  %v9449 = vld [vmem:[%s5 + $0x30] sm:$0xff]
  %v9450 = vld [vmem:[%s5 + $0x38] sm:$0xff]
  %9452 = vset.pattern.permute.xlu0 1
  %9453 = vperm.xlu0 %9452, %v9443
  %v9454 = vpop.permute.xlu0 %9453
  %9457 = vset.pattern.permute.xlu0 1
  %9458 = vperm.xlu0 %9457, %v9444
  %v9459 = vpop.permute.xlu0 %9458
  %9462 = vset.pattern.permute.xlu0 1
  %9463 = vperm.xlu0 %9462, %v9445
  %v9464 = vpop.permute.xlu0 %9463
  %9467 = vset.pattern.permute.xlu0 1
  %9468 = vperm.xlu0 %9467, %v9446
  %v9469 = vpop.permute.xlu0 %9468
  %9472 = vset.pattern.permute.xlu0 1
  %9473 = vperm.xlu0 %9472, %v9447
  %v9474 = vpop.permute.xlu0 %9473
  %9477 = vset.pattern.permute.xlu0 1
  %9478 = vperm.xlu0 %9477, %v9448
  %v9479 = vpop.permute.xlu0 %9478
  %9482 = vset.pattern.permute.xlu0 1
  %9483 = vperm.xlu0 %9482, %v9449
  %v9484 = vpop.permute.xlu0 %9483
  %9487 = vset.pattern.permute.xlu0 1
  %9488 = vperm.xlu0 %9487, %v9450
  %v9489 = vpop.permute.xlu0 %9488
  %v9491 = vadd.f32 %v9420, %v9454
  %v9492 = vadd.f32 %v9423, %v9459
  %v9493 = vadd.f32 %v9426, %v9464
  %v9494 = vadd.f32 %v9429, %v9469
  %v9495 = vadd.f32 %v9432, %v9474
  %v9496 = vadd.f32 %v9435, %v9479
  %v9497 = vadd.f32 %v9438, %v9484
  %v9498 = vadd.f32 %v9441, %v9489
  %9499 = vset.pattern.permute.xlu0 2
  %9500 = vperm.xlu0 %9499, %v9443
  %v9501 = vpop.permute.xlu0 %9500
  %9503 = vset.pattern.permute.xlu0 2
  %9504 = vperm.xlu0 %9503, %v9444
  %v9505 = vpop.permute.xlu0 %9504
  %9507 = vset.pattern.permute.xlu0 2
  %9508 = vperm.xlu0 %9507, %v9445
  %v9509 = vpop.permute.xlu0 %9508
  %9511 = vset.pattern.permute.xlu0 2
  %9512 = vperm.xlu0 %9511, %v9446
  %v9513 = vpop.permute.xlu0 %9512
  %9515 = vset.pattern.permute.xlu0 2
  %9516 = vperm.xlu0 %9515, %v9447
  %v9517 = vpop.permute.xlu0 %9516
  %9519 = vset.pattern.permute.xlu0 2
  %9520 = vperm.xlu0 %9519, %v9448
  %v9521 = vpop.permute.xlu0 %9520
  %9523 = vset.pattern.permute.xlu0 2
  %9524 = vperm.xlu0 %9523, %v9449
  %v9525 = vpop.permute.xlu0 %9524
  %9527 = vset.pattern.permute.xlu0 2
  %9528 = vperm.xlu0 %9527, %v9450
  %v9529 = vpop.permute.xlu0 %9528
  %v9531 = vadd.f32 %v9420, %v9501
  %v9532 = vadd.f32 %v9423, %v9505
  %v9533 = vadd.f32 %v9426, %v9509
  %v9534 = vadd.f32 %v9429, %v9513
  %v9535 = vadd.f32 %v9432, %v9517
  %v9536 = vadd.f32 %v9435, %v9521
  %v9537 = vadd.f32 %v9438, %v9525
  %v9538 = vadd.f32 %v9441, %v9529
  %v9539 = vld [vmem:[%s6] sm:$0x1]
  %9544 = vrot.lane.b32.xlu0 %v9491, 1
  %v9545 = vpop.permute.xlu0 %9544
  %9546 = vrot.lane.b32.xlu0 %v9492, 1
  %v9547 = vpop.permute.xlu0 %9546
  %9548 = vrot.lane.b32.xlu0 %v9493, 1
  %v9549 = vpop.permute.xlu0 %9548
  %9550 = vrot.lane.b32.xlu0 %v9494, 1
  %v9551 = vpop.permute.xlu0 %9550
  %9560 = vrot.lane.b32.xlu0 %v9531, 1
  %v9561 = vpop.permute.xlu0 %9560
  %9562 = vrot.lane.b32.xlu0 %v9532, 1
  %v9563 = vpop.permute.xlu0 %9562
  %9564 = vrot.lane.b32.xlu0 %v9533, 1
  %v9565 = vpop.permute.xlu0 %9564
  %9566 = vrot.lane.b32.xlu0 %v9534, 1
  %v9567 = vpop.permute.xlu0 %9566
  %v9572 = vsel %vm4695, %v9443, %v9545
  %v9573 = vsel %vm4695, %v9444, %v9547
  %v9574 = vsel %vm4695, %v9445, %v9549
  %v9575 = vsel %vm4695, %v9446, %v9551
  %vm9576 = vcmask 72704
  %v9577 = vsel %vm9576, %v9572, %v9561
  %v9578 = vsel %vm9576, %v9573, %v9563
  %v9579 = vsel %vm9576, %v9574, %v9565
  %v9580 = vsel %vm9576, %v9575, %v9567
  %v9582 = vsel %vm3195, %v9539, 0
  %9584 = vmatpush.msra.mxu0 0.0
  %9585 = vmatpush.msra.mxu0 0.0
  %9586 = vmatpush.msra.mxu0 0.0
  %9587 = vmatpush.msra.mxu0 0.0
  %9588 = vmatpush.msra.mxu0 0.0
  %9589 = vmatpush.msra.mxu0 0.0
  %9590 = vmatpush.msra.mxu0 0.0
  %9591 = vmatpush.msra.mxu0 0.0
  %9592 = vmatpush.msra.mxu0 0.0
  %9593 = vmatpush.msra.mxu0 0.0
  %9594 = vmatpush.msra.mxu0 0.0
  %9595 = vmatpush.msra.mxu0 0.0
  %9596 = vmatpush.msra.mxu0 %v9580
  %9597 = vmatpush.msra.mxu0 %v9579
  %9598 = vmatpush.msra.mxu0 %v9578
  %9599 = vmatpush.msra.mxu0 %v9577
  %9600 = vmatmul.f32.gmra.mxu0 %v9582
  %v9601 = vpop.f32.mrf.mxu0
  %v9602 = vadd.f32 0.0, %v9601
  %9603 = vdwg.mxu0
  %v9604 = vmul.f32 %v9602, 0.17677669
  %9606 = vrot.lane.b32.xlu0 %v9604, 120
  %v9607 = vpop.permute.xlu0 %9606
  %v9609 = vmax.f32 %v9604, %v9607
  %9610 = vset.pattern.permute.xlu0 0
  %9611 = vperm.xlu0 %9610, %v9604
  %v9612 = vpop.permute.xlu0 %9611
  %v9614 = vmax.f32 %v9609, %v9612
  %v9615 = vsub.f32 %v9612, %v9614
  %v9616 = vmul.f32 %v9615, 1.442695
  %v9617 = vpow.pop %v9616
  %v9618 = vsub.f32 %v9604, %v9614
  %v9619 = vmul.f32 %v9618, 1.442695
  %v9620 = vpow.pop %v9619
  %9622 = vrot.lane.b32.xlu0 %v9614, 8
  %v9623 = vpop.permute.xlu0 %9622
  %v9625 = vsub.f32 %v9604, %v9623
  %v9626 = vmul.f32 %v9625, 1.442695
  %v9627 = vpow.pop %v9626
  %v9628 = vperm.slane %v9617, 0
  %9629 = vset.pattern.permute.xlu0 0
  %9630 = vperm.xlu0 %9629, %v9447
  %v9631 = vpop.permute.xlu0 %9630
  %9633 = vset.pattern.permute.xlu0 0
  %9634 = vperm.xlu0 %9633, %v9448
  %v9635 = vpop.permute.xlu0 %9634
  %9637 = vset.pattern.permute.xlu0 0
  %9638 = vperm.xlu0 %9637, %v9449
  %v9639 = vpop.permute.xlu0 %9638
  %9641 = vset.pattern.permute.xlu0 0
  %9642 = vperm.xlu0 %9641, %v9450
  %v9643 = vpop.permute.xlu0 %9642
  %v9645 = vmul.f32 %v9628, %v9631
  %v9646 = vmul.f32 %v9628, %v9635
  %v9647 = vmul.f32 %v9628, %v9639
  %v9648 = vmul.f32 %v9628, %v9643
  %v9649 = vperm.slane %v9620, 0
  %9654 = vrot.lane.b32.xlu0 %v9495, 1
  %v9655 = vpop.permute.xlu0 %9654
  %9656 = vrot.lane.b32.xlu0 %v9496, 1
  %v9657 = vpop.permute.xlu0 %9656
  %9658 = vrot.lane.b32.xlu0 %v9497, 1
  %v9659 = vpop.permute.xlu0 %9658
  %9660 = vrot.lane.b32.xlu0 %v9498, 1
  %v9661 = vpop.permute.xlu0 %9660
  %v9666 = vmul.f32 %v9649, %v9655
  %v9667 = vmul.f32 %v9649, %v9657
  %v9668 = vmul.f32 %v9649, %v9659
  %v9669 = vmul.f32 %v9649, %v9661
  %v9670 = vadd.f32 %v9645, %v9666
  %v9671 = vadd.f32 %v9646, %v9667
  %v9672 = vadd.f32 %v9647, %v9668
  %v9673 = vadd.f32 %v9648, %v9669
  %v9674 = vperm.slane %v9627, 0
  %9679 = vrot.lane.b32.xlu0 %v9535, 1
  %v9680 = vpop.permute.xlu0 %9679
  %9681 = vrot.lane.b32.xlu0 %v9536, 1
  %v9682 = vpop.permute.xlu0 %9681
  %9683 = vrot.lane.b32.xlu0 %v9537, 1
  %v9684 = vpop.permute.xlu0 %9683
  %9685 = vrot.lane.b32.xlu0 %v9538, 1
  %v9686 = vpop.permute.xlu0 %9685
  %v9691 = vmul.f32 %v9674, %v9680
  %v9692 = vmul.f32 %v9674, %v9682
  %v9693 = vmul.f32 %v9674, %v9684
  %v9694 = vmul.f32 %v9674, %v9686
  %9699 = vrot.lane.b32.xlu0 %v9691, 120
  %v9700 = vpop.permute.xlu0 %9699
  %9701 = vrot.lane.b32.xlu0 %v9692, 120
  %v9702 = vpop.permute.xlu0 %9701
  %9703 = vrot.lane.b32.xlu0 %v9693, 120
  %v9704 = vpop.permute.xlu0 %9703
  %9705 = vrot.lane.b32.xlu0 %v9694, 120
  %v9706 = vpop.permute.xlu0 %9705
  %v9711 = vadd.f32 %v9670, %v9700
  %v9712 = vadd.f32 %v9671, %v9702
  %v9713 = vadd.f32 %v9672, %v9704
  %v9714 = vadd.f32 %v9673, %v9706
  %v9715 = vadd.f32 %v9617, %v9620
  %9717 = vrot.lane.b32.xlu0 %v9627, 120
  %v9718 = vpop.permute.xlu0 %9717
  %v9720 = vadd.f32 %v9715, %v9718
  %v9721 = vperm.slane %v9720, 0
  %v9722 = vrcp.pop %v9721
  %v9723 = vmul.f32 %v9721, %v9722
  %v9724 = vsub.f32 1.0, %v9723
  %v9725 = vmul.f32 %v9722, %v9724
  %v9726 = vadd.f32 %v9722, %v9725
  %vm9727 = vweird.f32 %v9721
  %vm9728 = vweird.f32 %v9722
  %vm9729 = vmor %vm9727, %vm9728
  %v9730 = vsel %vm9729, %v9722, %v9726
  %v9731 = vand.u32 2147483647, %v9721
  %vm9732 = vcmp.eq.f32.partialorder %v9731, 8.507059e+37
  %v9733 = vand.u32 %v9721, 2147483648
  %v9734 = vor.u32 1.1754944e-38, %v9733
  %v9735 = vsel %vm9732, %v9734, %v9730
  %v9736 = vmul.f32 %v9711, %v9735
  %v9737 = vmul.f32 %v9712, %v9735
  %v9738 = vmul.f32 %v9713, %v9735
  %v9739 = vmul.f32 %v9714, %v9735
  %v9740 = vld [vmem:[%s7] sm:$0xff]
  %v9741 = vld [vmem:[%s7 + $0x8] sm:$0xff]
  %v9742 = vld [vmem:[%s7 + $0x10] sm:$0xff]
  %v9743 = vld [vmem:[%s7 + $0x18] sm:$0xff]
  %9745 = vset.pattern.permute.xlu0 32
  %9746 = vperm.xlu0 %9745, %v9740
  %v9747 = vpop.permute.xlu0 %9746
  %9750 = vset.pattern.permute.xlu0 32
  %9751 = vperm.xlu0 %9750, %v9741
  %v9752 = vpop.permute.xlu0 %9751
  %9755 = vset.pattern.permute.xlu0 32
  %9756 = vperm.xlu0 %9755, %v9742
  %v9757 = vpop.permute.xlu0 %9756
  %9760 = vset.pattern.permute.xlu0 32
  %9761 = vperm.xlu0 %9760, %v9743
  %v9762 = vpop.permute.xlu0 %9761
  %9768 = vrot.lane.b32.xlu0 %v9736, 127
  %v9769 = vpop.permute.xlu0 %9768
  %9770 = vrot.lane.b32.xlu0 %v9737, 127
  %v9771 = vpop.permute.xlu0 %9770
  %9772 = vrot.lane.b32.xlu0 %v9738, 127
  %v9773 = vpop.permute.xlu0 %9772
  %9774 = vrot.lane.b32.xlu0 %v9739, 127
  %v9775 = vpop.permute.xlu0 %9774
  %v9780 = vsel %vm3195, %v9740, 0
  %v9782 = vsel %vm3195, %v9741, 0
  %v9784 = vsel %vm3195, %v9742, 0
  %v9786 = vsel %vm3195, %v9743, 0
  %9788 = vmatpush.msra.mxu0 0.0
  %9789 = vmatpush.msra.mxu0 0.0
  %9790 = vmatpush.msra.mxu0 0.0
  %9791 = vmatpush.msra.mxu0 0.0
  %9792 = vmatpush.msra.mxu0 0.0
  %9793 = vmatpush.msra.mxu0 0.0
  %9794 = vmatpush.msra.mxu0 0.0
  %9795 = vmatpush.msra.mxu0 0.0
  %9796 = vmatpush.msra.mxu0 0.0
  %9797 = vmatpush.msra.mxu0 0.0
  %9798 = vmatpush.msra.mxu0 0.0
  %9799 = vmatpush.msra.mxu0 0.0
  %9800 = vmatpush.msra.mxu0 %v9775
  %9801 = vmatpush.msra.mxu0 %v9773
  %9802 = vmatpush.msra.mxu0 %v9771
  %9803 = vmatpush.msra.mxu0 %v9769
  %9804 = vmatmul.f32.gmra.mxu0 %v9780
  %v9805 = vpop.f32.mrf.mxu0
  %v9806 = vadd.f32 %v9747, %v9805
  %9807 = vmatmul.f32.gmra.mxu0 %v9782
  %v9808 = vpop.f32.mrf.mxu0
  %v9809 = vadd.f32 %v9752, %v9808
  %9810 = vmatmul.f32.gmra.mxu0 %v9784
  %v9811 = vpop.f32.mrf.mxu0
  %v9812 = vadd.f32 %v9757, %v9811
  %9813 = vmatmul.f32.gmra.mxu0 %v9786
  %v9814 = vpop.f32.mrf.mxu0
  %v9815 = vadd.f32 %v9762, %v9814
  %9816 = vdwg.mxu0
  %v9817 = vsel %vm4710, %v9806, 0.0
  %v9818 = vsel %vm4710, %v9809, 0.0
  %v9819 = vadd.f32 %v9817, %v9818
  %v9820 = vsel %vm4710, %v9812, 0.0
  %v9821 = vadd.f32 %v9819, %v9820
  %v9822 = vsel %vm4710, %v9815, 0.0
  %v9823 = vadd.f32 %v9821, %v9822
  %9824 = vadd.xlane.f32.xlu0 %v9823
  %v9825 = vpop.xlane.xlu0 %9824
  %v9826 = vrot.slane %v9825, 4
  %v9827 = vadd.f32 %v9825, %v9826
  %v9828 = vrot.slane %v9827, 2
  %v9829 = vadd.f32 %v9827, %v9828
  %v9830 = vrot.slane %v9829, 1
  %v9831 = vadd.f32 %v9829, %v9830
  %s9832 = vtos %v9831
  %v9833 = vstv %s9832
  %v9834 = vrcp.pop 128.0
  %v9835 = vmul.f32 128.0, %v9834
  %v9836 = vsub.f32 1.0, %v9835
  %v9837 = vmul.f32 %v9834, %v9836
  %v9838 = vadd.f32 %v9834, %v9837
  %vm9839 = vweird.f32 %v9834
  %v9840 = vsel %vm9839, %v9834, %v9838
  %v9841 = vmul.f32 %v9833, %v9840
  %v9842 = vsub.f32 %v9806, %v9841
  %v9843 = vsub.f32 %v9809, %v9841
  %v9844 = vsub.f32 %v9812, %v9841
  %v9845 = vsub.f32 %v9815, %v9841
  %v9846 = vmul.f32 %v9842, %v9842
  %v9847 = vmul.f32 %v9843, %v9843
  %v9848 = vmul.f32 %v9844, %v9844
  %v9849 = vmul.f32 %v9845, %v9845
  %v9850 = vsel %vm4710, %v9846, 0.0
  %v9851 = vsel %vm4710, %v9847, 0.0
  %v9852 = vadd.f32 %v9850, %v9851
  %v9853 = vsel %vm4710, %v9848, 0.0
  %v9854 = vadd.f32 %v9852, %v9853
  %v9855 = vsel %vm4710, %v9849, 0.0
  %v9856 = vadd.f32 %v9854, %v9855
  %9857 = vadd.xlane.f32.xlu0 %v9856
  %v9858 = vpop.xlane.xlu0 %9857
  %v9859 = vrot.slane %v9858, 4
  %v9860 = vadd.f32 %v9858, %v9859
  %v9861 = vrot.slane %v9860, 2
  %v9862 = vadd.f32 %v9860, %v9861
  %v9863 = vrot.slane %v9862, 1
  %v9864 = vadd.f32 %v9862, %v9863
  %s9865 = vtos %v9864
  %v9866 = vstv %s9865
  %v9867 = vmul.f32 %v9866, 0.007874016
  %v9868 = vrsqrt.pop %v9867
  %v9869 = vmul.f32 %v9868, %v9867
  %v9870 = vmul.f32 %v9869, %v9868
  %v9871 = vmul.f32 0.5, %v9870
  %v9872 = vsub.f32 1.5, %v9871
  %v9873 = vmul.f32 %v9868, %v9872
  %vm9874 = vweird.f32 %v9867
  %vm9875 = vweird.f32 %v9868
  %vm9876 = vmor %vm9874, %vm9875
  %v9877 = vsel %vm9876, %v9868, %v9873
  %v9878 = vmul.f32 %v9842, %v9877
  %v9879 = vmul.f32 %v9843, %v9877
  %v9880 = vmul.f32 %v9844, %v9877
  %v9881 = vmul.f32 %v9845, %v9877
  %9886 = vrot.lane.b32.xlu0 %v9806, 124
  %v9887 = vpop.permute.xlu0 %9886
  %9888 = vrot.lane.b32.xlu0 %v9809, 124
  %v9889 = vpop.permute.xlu0 %9888
  %9890 = vrot.lane.b32.xlu0 %v9812, 124
  %v9891 = vpop.permute.xlu0 %9890
  %9892 = vrot.lane.b32.xlu0 %v9815, 124
  %v9893 = vpop.permute.xlu0 %9892
  %v9898 = vsel %vm4710, %v9887, 0.0
  %v9899 = vsel %vm4710, %v9889, 0.0
  %v9900 = vadd.f32 %v9898, %v9899
  %v9901 = vsel %vm4710, %v9891, 0.0
  %v9902 = vadd.f32 %v9900, %v9901
  %v9903 = vsel %vm4710, %v9893, 0.0
  %v9904 = vadd.f32 %v9902, %v9903
  %9905 = vadd.xlane.f32.xlu0 %v9904
  %v9906 = vpop.xlane.xlu0 %9905
  %v9907 = vrot.slane %v9906, 4
  %v9908 = vadd.f32 %v9906, %v9907
  %v9909 = vrot.slane %v9908, 2
  %v9910 = vadd.f32 %v9908, %v9909
  %v9911 = vrot.slane %v9910, 1
  %v9912 = vadd.f32 %v9910, %v9911
  %s9913 = vtos %v9912
  %v9914 = vstv %s9913
  %v9915 = vmul.f32 %v9914, %v9840
  %v9916 = vsub.f32 %v9806, %v9915
  %v9917 = vsub.f32 %v9809, %v9915
  %v9918 = vsub.f32 %v9812, %v9915
  %v9919 = vsub.f32 %v9815, %v9915
  %v9920 = vmul.f32 %v9916, %v9916
  %v9921 = vmul.f32 %v9917, %v9917
  %v9922 = vmul.f32 %v9918, %v9918
  %v9923 = vmul.f32 %v9919, %v9919
  %9928 = vrot.lane.b32.xlu0 %v9920, 124
  %v9929 = vpop.permute.xlu0 %9928
  %9930 = vrot.lane.b32.xlu0 %v9921, 124
  %v9931 = vpop.permute.xlu0 %9930
  %9932 = vrot.lane.b32.xlu0 %v9922, 124
  %v9933 = vpop.permute.xlu0 %9932
  %9934 = vrot.lane.b32.xlu0 %v9923, 124
  %v9935 = vpop.permute.xlu0 %9934
  %v9940 = vsel %vm4710, %v9929, 0.0
  %v9941 = vsel %vm4710, %v9931, 0.0
  %v9942 = vadd.f32 %v9940, %v9941
  %v9943 = vsel %vm4710, %v9933, 0.0
  %v9944 = vadd.f32 %v9942, %v9943
  %v9945 = vsel %vm4710, %v9935, 0.0
  %v9946 = vadd.f32 %v9944, %v9945
  %9947 = vadd.xlane.f32.xlu0 %v9946
  %v9948 = vpop.xlane.xlu0 %9947
  %v9949 = vrot.slane %v9948, 4
  %v9950 = vadd.f32 %v9948, %v9949
  %v9951 = vrot.slane %v9950, 2
  %v9952 = vadd.f32 %v9950, %v9951
  %v9953 = vrot.slane %v9952, 1
  %v9954 = vadd.f32 %v9952, %v9953
  %s9955 = vtos %v9954
  %v9956 = vstv %s9955
  %v9957 = vmul.f32 %v9956, 0.007874016
  %v9958 = vrsqrt.pop %v9957
  %v9959 = vmul.f32 %v9958, %v9957
  %v9960 = vmul.f32 %v9959, %v9958
  %v9961 = vmul.f32 0.5, %v9960
  %v9962 = vsub.f32 1.5, %v9961
  %v9963 = vmul.f32 %v9958, %v9962
  %vm9964 = vweird.f32 %v9957
  %vm9965 = vweird.f32 %v9958
  %vm9966 = vmor %vm9964, %vm9965
  %v9967 = vsel %vm9966, %v9958, %v9963
  %v9968 = vmul.f32 %v9916, %v9967
  %v9969 = vmul.f32 %v9917, %v9967
  %v9970 = vmul.f32 %v9918, %v9967
  %v9971 = vmul.f32 %v9919, %v9967
  %v9972 = vsel %vm4710, %v9878, %v9968
  %v9973 = vsel %vm4710, %v9879, %v9969
  %v9974 = vsel %vm4710, %v9880, %v9970
  %v9975 = vsel %vm4710, %v9881, %v9971
  %v9976 = vld [vmem:[%s6 + $0x1] sm:$0x1]
  %9978 = vset.pattern.permute.xlu0 32
  %9979 = vperm.xlu0 %9978, %v9976
  %v9980 = vpop.permute.xlu0 %9979
  %v9982 = vsel %vm3195, %v9976, 0
  %9984 = vmatpush.msra.mxu0 0.0
  %9985 = vmatpush.msra.mxu0 0.0
  %9986 = vmatpush.msra.mxu0 0.0
  %9987 = vmatpush.msra.mxu0 0.0
  %9988 = vmatpush.msra.mxu0 0.0
  %9989 = vmatpush.msra.mxu0 0.0
  %9990 = vmatpush.msra.mxu0 0.0
  %9991 = vmatpush.msra.mxu0 0.0
  %9992 = vmatpush.msra.mxu0 0.0
  %9993 = vmatpush.msra.mxu0 0.0
  %9994 = vmatpush.msra.mxu0 0.0
  %9995 = vmatpush.msra.mxu0 0.0
  %9996 = vmatpush.msra.mxu0 %v9975
  %9997 = vmatpush.msra.mxu0 %v9974
  %9998 = vmatpush.msra.mxu0 %v9973
  %9999 = vmatpush.msra.mxu0 %v9972
  %10000 = vmatmul.f32.gmra.mxu0 %v9982
  %v10001 = vpop.f32.mrf.mxu0
  %v10002 = vadd.f32 %v9980, %v10001
  %10003 = vdwg.mxu0
  %vm10004 = vcmask 57344
  %10005 = vst.msk [vmem:[%s8] sm:$0x1] %vm10004, %v10002
  // Predicated region
  $region34: #{lineage_detector_forward.1} parent=0 // pred_check
    _
  $region35: #{lineage_detector_forward.1} parent=0 // pred_check_branch
    %10007 = sbr.rel (0) target = $region37
  $region36: #{lineage_detector_forward.1} parent=0 // pred_region
    _
  $region37: #{lineage_detector_forward.1} parent=0 // pred_fallthru
    _
  // Predicated region
  $region38: #{lineage_detector_forward.1} parent=0 // pred_check
    _
  $region39: #{lineage_detector_forward.1} parent=0 // pred_check_branch
    %10009 = sbr.rel (0) target = $region41
  $region40: #{lineage_detector_forward.1} parent=0 // pred_region
    _
  $region41: #{lineage_detector_forward.1} parent=0 // pred_fallthru
    _

</llo_original>
